<compile_context>
chip_gen: v5e
topology: v5e:2x2
jax: 0.10.0
libtpu: 0.0.40
codegen_flags: <defaults>
</compile_context>

<pallas_src>
import functools
import math

import jax
import jax.numpy as jnp
from jax.experimental import pallas as pl
from jax.experimental.pallas import tpu as pltpu

LEAKY_SLOPE = 0.2
BN_EPS = 1e-5
COMPUTE_DTYPE = jnp.bfloat16


# ----------------------------------------------------------------------------
# Pallas kernel: one output row (Wo, Cout_total) per grid step, kd reduction.
# ----------------------------------------------------------------------------
def _conv_row_kernel(*refs, stride, cin, wo, splits, act, has_res, reparam):
    """refs layout:
        [input row refs (3 for stride 1, 6 for stride 2)]
        + [w, bias] + [slope if act] + [residual if has_res]
        + [mu, eps if reparam] + outputs + [acc scratch]
    """
    n_rows = 3 if stride == 1 else 6
    row_refs = refs[:n_rows]
    i = n_rows
    w_ref = refs[i]; i += 1
    b_ref = refs[i]; i += 1
    if act:
        s_ref = refs[i]; i += 1
    if has_res:
        r_ref = refs[i]; i += 1
    if reparam:
        mu_ref = refs[i]; i += 1
        eps_ref = refs[i]; i += 1
        n_out = 2
    else:
        n_out = len(splits)
    out_refs = refs[i:i + n_out]
    acc_ref = refs[i + n_out]

    kd = pl.program_id(3)

    @pl.when(kd == 0)
    def _init():
        acc_ref[...] = jnp.zeros_like(acc_ref)

    # Accumulate the 9 (kh, kw) taps of this depth slice.  Each tap is a
    # contiguous static slice of a padded input row already in VMEM; the
    # contraction over Cin runs on the MXU (bf16 in, f32 accumulate).
    w_kd = w_ref[...]                         # (9*cin, cout_total) bf16
    rows = [r[...] for r in row_refs]         # each (pw, cin) bf16
    part = None
    for kh in range(3):
        for kw in range(3):
            if stride == 1:
                tap = rows[kh][kw:kw + wo, :]                       # (wo, cin)
            else:
                tap = rows[2 * kh + (kw % 2)][kw // 2:kw // 2 + wo, :]
            t = kh * 3 + kw
            contrib = jnp.dot(tap, w_kd[t * cin:(t + 1) * cin, :],
                              preferred_element_type=jnp.float32)
            part = contrib if part is None else part + contrib
    acc_ref[...] += part

    @pl.when(kd == 2)
    def _finalize():
        y = acc_ref[...] + b_ref[...]
        if act:
            y = jnp.where(y >= 0.0, y, s_ref[...] * y)
        if has_res:
            y = y + r_ref[...].astype(jnp.float32)
        if reparam:
            std_ref, z_ref = out_refs
            std_ref[...] = y.astype(std_ref.dtype)
            z = (mu_ref[...].astype(jnp.float32)
                 + eps_ref[...].astype(jnp.float32) * jnp.exp(y))
            z_ref[...] = z.astype(z_ref.dtype)
        else:
            off = 0
            for o_ref, c in zip(out_refs, splits):
                o_ref[...] = y[:, off:off + c].astype(o_ref.dtype)
                off += c


# ----------------------------------------------------------------------------
# pallas_call wrapper for a 3x3x3 conv (pad 1, stride (1, s, s)) + folded BN
# + LeakyReLU + optional residual / reparameterize epilogue.
# ----------------------------------------------------------------------------
def _conv3d(x, p, *, stride, splits, act=True, residual=None, mu=None, eps=None,
            out_dtypes=None):
    """x: (N, D, H, W, Cin) channels-last bf16.

    Returns one (N, D, H//s, W//s, c) array per entry of `splits`, or
    (std, z) when mu/eps are given (reparameterize fused)."""
    N, D, H, W, C = x.shape
    assert H % stride == 0 and W % stride == 0
    ho, wo = H // stride, W // stride
    reparam = mu is not None
    cout_total = p["w"].shape[-1]
    assert sum(splits) == cout_total

    # Pad spatially once (~1x activation, vs 27x for full im2col).  Stride-2
    # convs additionally get even/odd W-parity views so every in-kernel tap
    # is a contiguous slice.
    xp = jnp.pad(x, ((0, 0), (1, 1), (1, 1), (1, 1), (0, 0)))
    if stride == 1:
        srcs = [xp, xp, xp]                    # one stream per kh
        pw = W + 2
    else:
        xe = xp[:, :, :, 0::2, :]              # even padded-W columns
        xo = xp[:, :, :, 1::2, :]              # odd padded-W columns
        srcs = [xe, xo, xe, xo, xe, xo]        # (kh=0..2) x (W parity)
        pw = wo + 1

    in_specs, args = [], []
    for idx, src in enumerate(srcs):
        kh = idx if stride == 1 else idx // 2
        in_specs.append(pl.BlockSpec(
            (None, None, None, pw, C),
            lambda n, d, h, kd, kh=kh: (n, d + kd, stride * h + kh, 0, 0)))
        args.append(src)

    in_specs.append(pl.BlockSpec((None, 9 * C, cout_total),
                                 lambda n, d, h, kd: (kd, 0, 0)))
    args.append(p["w"])
    vec_spec = pl.BlockSpec((1, cout_total), lambda n, d, h, kd: (0, 0))
    in_specs.append(vec_spec)
    args.append(p["bias"].reshape(1, cout_total))
    if act:
        in_specs.append(vec_spec)
        args.append(p["slope"].reshape(1, cout_total))

    def row_spec(c):
        return pl.BlockSpec((None, None, None, wo, c),
                            lambda n, d, h, kd: (n, d, h, 0, 0))

    if residual is not None:
        in_specs.append(row_spec(residual.shape[-1]))
        args.append(residual)
    if reparam:
        in_specs.append(row_spec(mu.shape[-1]))
        args.append(mu)
        in_specs.append(row_spec(eps.shape[-1]))
        args.append(eps)

    out_cs = (cout_total, cout_total) if reparam else tuple(splits)
    if out_dtypes is None:
        out_dtypes = (COMPUTE_DTYPE,) * len(out_cs)
    out_shape = tuple(jax.ShapeDtypeStruct((N, D, ho, wo, c), dt)
                      for c, dt in zip(out_cs, out_dtypes))
    out_specs = tuple(row_spec(c) for c in out_cs)

    kernel = functools.partial(
        _conv_row_kernel, stride=stride, cin=C, wo=wo, splits=tuple(splits),
        act=act, has_res=residual is not None, reparam=reparam)

    # Rough per-step VMEM need (streams double-buffered + f32 accumulator).
    res_bytes = 0
    if residual is not None:
        res_bytes += wo * residual.shape[-1] * residual.dtype.itemsize
    if reparam:
        res_bytes += wo * mu.shape[-1] * mu.dtype.itemsize
        res_bytes += wo * eps.shape[-1] * eps.dtype.itemsize
    out_row_bytes = sum(wo * c * jnp.dtype(dt).itemsize
                        for c, dt in zip(out_cs, out_dtypes))
    step_bytes = (len(srcs) * pw * C * 2 + 9 * C * cout_total * 2
                  + 2 * cout_total * 4 + wo * cout_total * 4
                  + res_bytes + out_row_bytes)
    vmem_limit = int(min(max(6 * step_bytes, 4 << 20), 32 << 20))

    m_total = N * D * ho * wo
    cost = pl.CostEstimate(
        flops=2 * m_total * 27 * C * cout_total,
        transcendentals=m_total * cout_total if reparam else 0,
        bytes_accessed=int(sum(int(a.size) * a.dtype.itemsize for a in args)
                           + sum(math.prod(s.shape) * s.dtype.itemsize
                                 for s in out_shape)))

    outs = pl.pallas_call(
        kernel,
        out_shape=out_shape,
        grid=(N, D, ho, 3),
        in_specs=in_specs,
        out_specs=out_specs,
        scratch_shapes=[pltpu.VMEM((wo, cout_total), jnp.float32)],
        compiler_params=pltpu.CompilerParams(
            dimension_semantics=("parallel", "parallel", "parallel", "arbitrary"),
            vmem_limit_bytes=vmem_limit),
        cost_estimate=cost,
    )(*args)
    return list(outs)


# ----------------------------------------------------------------------------
# Deterministic synthetic parameters (shapes from Encoder.__init__)
# ----------------------------------------------------------------------------
def _make_conv_bn(key, cin, cout, act):
    kw_, kb, kg, kbe, km, kv = jax.random.split(key, 6)
    w = jax.random.normal(kw_, (3, 3, 3, cin, cout), jnp.float32) * 0.05
    b = jax.random.normal(kb, (cout,), jnp.float32) * 0.05
    gamma = 1.0 + 0.2 * jax.random.normal(kg, (cout,), jnp.float32)
    beta = 0.1 * jax.random.normal(kbe, (cout,), jnp.float32)
    run_mean = 0.1 * jax.random.normal(km, (cout,), jnp.float32)
    run_var = 1.0 + 0.5 * jax.random.uniform(kv, (cout,), jnp.float32)
    scale = gamma / jnp.sqrt(run_var + BN_EPS)
    # Fold the BN scale into the conv weights and conv-bias + BN shift into a
    # single bias; kernel epilogue is bias + per-channel LeakyReLU slope only.
    w_folded = (w * scale).reshape(3, 9 * cin, cout).astype(COMPUTE_DTYPE)
    bias = beta - run_mean * scale + b * scale
    slope = jnp.full((cout,), LEAKY_SLOPE if act else 1.0, jnp.float32)
    return {"w": w_folded, "bias": bias, "slope": slope}


def _fuse(parts):
    # Concatenate sibling convs (same input, same stride) along Cout.
    return {"w": jnp.concatenate([p["w"] for p in parts], axis=-1),
            "bias": jnp.concatenate([p["bias"] for p in parts]),
            "slope": jnp.concatenate([p["slope"] for p in parts])}


def init_encoder_params(key, n_channels, gf_dim):
    ks = jax.random.split(key, 10)
    conv1 = _make_conv_bn(ks[0], n_channels, gf_dim, act=True)
    r1c1 = _make_conv_bn(ks[1], gf_dim, gf_dim, act=True)       # conv1_block LReLU
    r1c2 = _make_conv_bn(ks[2], gf_dim, gf_dim, act=True)       # res1.act=True
    r1c3 = _make_conv_bn(ks[3], gf_dim, gf_dim, act=True)
    r2c1 = _make_conv_bn(ks[4], gf_dim, gf_dim, act=True)
    r2c2 = _make_conv_bn(ks[5], gf_dim, 2 * gf_dim, act=True)   # res2.act=True
    r2c3 = _make_conv_bn(ks[6], gf_dim, 2 * gf_dim, act=True)
    # TODO(synk): the PyTorch source declares res2_stdev with filters_in=2*gf_dim
    # but Encoder.encode() feeds it a gf_dim-channel tensor (shape bug in the
    # reference); instantiate with filters_in=gf_dim so forward() is runnable.
    sdc1 = _make_conv_bn(ks[7], gf_dim, gf_dim, act=True)        # conv1_block LReLU
    sdc2 = _make_conv_bn(ks[8], gf_dim, 2 * gf_dim, act=False)   # res2_stdev.act=False
    sdc3 = _make_conv_bn(ks[9], gf_dim, 2 * gf_dim, act=False)
    return {
        "conv1": conv1,
        # res1: conv1 & conv3 share their input -> one fused kernel, 2 outputs.
        "res1_c13": _fuse([r1c1, r1c3]),
        "res1_c2": r1c2,
        # res2 and res2_stdev both read z -> one fused kernel, 4 outputs.
        "res2_g": _fuse([r2c1, sdc1, r2c3, sdc3]),
        "res2_c2": r2c2,
        "std_c2": sdc2,
        # res2_mu exists in __init__ but is unused by forward(); omitted.
    }


# ----------------------------------------------------------------------------
# Encoder.forward
# ----------------------------------------------------------------------------
def encoder_forward(params, x_ncdhw, eps_key):
    gf = params["conv1"]["w"].shape[-1]
    # NCDHW -> NDHWC bf16 for the channels-last kernels.
    x = jnp.transpose(x_ncdhw, (0, 2, 3, 4, 1)).astype(COMPUTE_DTYPE)

    # Encoder.conv1_block: Conv + BN + LReLU (stride 1).
    (c1,) = _conv3d(x, params["conv1"], stride=1, splits=(gf,))

    # res1: fused conv1 | conv3, stride (1,2,2), two lane-separate outputs
    # (both LeakyReLU'd since res1.act=True).
    r1c1, r1c3 = _conv3d(c1, params["res1_c13"], stride=2, splits=(gf, gf))

    # res1.conv2 (stride 1) + LReLU, residual add fused -> z.
    (z,) = _conv3d(r1c1, params["res1_c2"], stride=1, splits=(gf,), residual=r1c3)

    # res2 & res2_stdev share z -> one fused stride-(1,2,2) kernel, 4 outputs
    # (res2_stdev.conv3 has no activation: slope folded to 1.0).
    r2c1, sdc1, r2c3, sdc3 = _conv3d(
        z, params["res2_g"], stride=2, splits=(gf, gf, 2 * gf, 2 * gf))

    # res2.conv2 + LReLU + residual -> mu (z_mean).
    (mu,) = _conv3d(r2c1, params["res2_c2"], stride=1, splits=(2 * gf,),
                    residual=r2c3, out_dtypes=(jnp.float32,))

    # res2_stdev.conv2 (no act) + residual -> std; reparameterize fused into
    # the same epilogue: z = mu + eps * exp(std).
    # TODO(synk): generate eps in-kernel with the pltpu PRNG.
    eps = jax.random.normal(eps_key, mu.shape, jnp.float32)
    std, zz = _conv3d(sdc1, params["std_c2"], stride=1, splits=(2 * gf,),
                      act=False, residual=sdc3, mu=mu, eps=eps,
                      out_dtypes=(jnp.float32, jnp.float32))

    def to_ncdhw(a):
        return jnp.transpose(a, (0, 4, 1, 2, 3)).astype(jnp.float32)

    return to_ncdhw(zz), to_ncdhw(mu), to_ncdhw(std)


if __name__ == "__main__":
    key = jax.random.PRNGKey(0)
    k_x, k_p, k_eps = jax.random.split(key, 3)

    N, C, D, H, W = 2, 2, 4, 16, 16     # NCDHW input, small but representative
    gf_dim = 8

    x = jax.random.normal(k_x, (N, C, D, H, W), jnp.float32)
    params = init_encoder_params(k_p, C, gf_dim)

    fwd = jax.jit(encoder_forward)
    z, mu, std = fwd(params, x, k_eps)
    jax.block_until_ready((z, mu, std))

    expected = (N, 2 * gf_dim, D, H // 4, W // 4)
    assert z.shape == expected and mu.shape == expected and std.shape == expected
    assert jnp.all(jnp.isfinite(z)) and jnp.all(jnp.isfinite(mu)) and jnp.all(jnp.isfinite(std))
    print("KERNEL_OK")
</pallas_src>

<mosaic_0001>
module attributes {stable_mosaic.version = 11 : i64} {
  func.func @_conv_row_kernel(%arg0: i32, %arg1: i32, %arg2: i32, %arg3: i32, %arg4: memref<1x1x1x18x2xbf16, #tpu.memory_space<vmem>>, %arg5: memref<1x1x1x18x2xbf16, #tpu.memory_space<vmem>>, %arg6: memref<1x1x1x18x2xbf16, #tpu.memory_space<vmem>>, %arg7: memref<1x18x8xbf16, #tpu.memory_space<vmem>>, %arg8: memref<1x8xf32, #tpu.memory_space<vmem>>, %arg9: memref<1x8xf32, #tpu.memory_space<vmem>>, %arg10: memref<1x1x1x16x8xbf16, #tpu.memory_space<vmem>>, %arg11: memref<16x8xf32, #tpu.memory_space<vmem>>) attributes {dimension_semantics = [#tpu.dimension_semantics<parallel>, #tpu.dimension_semantics<parallel>, #tpu.dimension_semantics<parallel>, #tpu.dimension_semantics<arbitrary>], iteration_bounds = array<i64: 2, 4, 16, 3>, scalar_prefetch = 0 : i64, scratch_operands = 1 : i64, tpu.core_type = #tpu.core_type<tc>, window_params = [{transform_indices = @transform_0, window_bounds = array<i64: 1, 1, 1, 18, 2>}, {transform_indices = @transform_1, window_bounds = array<i64: 1, 1, 1, 18, 2>}, {transform_indices = @transform_2, window_bounds = array<i64: 1, 1, 1, 18, 2>}, {transform_indices = @transform_3, window_bounds = array<i64: 1, 18, 8>}, {pipeline_mode = #tpu.pipeline_mode<synchronous>, transform_indices = @transform_4, window_bounds = array<i64: 1, 8>}, {pipeline_mode = #tpu.pipeline_mode<synchronous>, transform_indices = @transform_5, window_bounds = array<i64: 1, 8>}, {transform_indices = @transform_6, window_bounds = array<i64: 1, 1, 1, 16, 8>}]} {
    %c0_i32 = arith.constant 0 : i32
    %0 = arith.cmpi eq, %arg3, %c0_i32 : i32
    %1 = arith.extui %0 : i1 to i32
    %c0_i32_0 = arith.constant 0 : i32
    %2 = arith.cmpi ne, %1, %c0_i32_0 : i32
    scf.if %2 {
      %cst_31 = arith.constant 0.000000e+00 : f32
      %52 = vector.broadcast %cst_31 : f32 to vector<16x8xf32>
      %c0_32 = arith.constant 0 : index
      %c0_33 = arith.constant 0 : index
      %53 = vector.load %arg11[%c0_32, %c0_33] : memref<16x8xf32, #tpu.memory_space<vmem>>, vector<16x8xf32>
      tpu.vector_store %arg11[%c0_32, %c0_33], %52 {strides = array<i32>} : memref<16x8xf32, #tpu.memory_space<vmem>>, vector<16x8xf32>,
    } else {
    }
    %c0 = arith.constant 0 : index
    %c0_1 = arith.constant 0 : index
    %c0_2 = arith.constant 0 : index
    %3 = vector.load %arg7[%c0, %c0_1, %c0_2] : memref<1x18x8xbf16, #tpu.memory_space<vmem>>, vector<1x18x8xbf16>
    %4 = vector.shape_cast %3 : vector<1x18x8xbf16> to vector<18x8xbf16>
    %c0_3 = arith.constant 0 : index
    %c0_4 = arith.constant 0 : index
    %c0_5 = arith.constant 0 : index
    %c0_6 = arith.constant 0 : index
    %c0_7 = arith.constant 0 : index
    %5 = vector.load %arg4[%c0_3, %c0_4, %c0_5, %c0_6, %c0_7] : memref<1x1x1x18x2xbf16, #tpu.memory_space<vmem>>, vector<1x1x1x18x2xbf16>
    %6 = vector.shape_cast %5 : vector<1x1x1x18x2xbf16> to vector<18x2xbf16>
    %c0_8 = arith.constant 0 : index
    %c0_9 = arith.constant 0 : index
    %c0_10 = arith.constant 0 : index
    %c0_11 = arith.constant 0 : index
    %c0_12 = arith.constant 0 : index
    %7 = vector.load %arg5[%c0_8, %c0_9, %c0_10, %c0_11, %c0_12] : memref<1x1x1x18x2xbf16, #tpu.memory_space<vmem>>, vector<1x1x1x18x2xbf16>
    %8 = vector.shape_cast %7 : vector<1x1x1x18x2xbf16> to vector<18x2xbf16>
    %c0_13 = arith.constant 0 : index
    %c0_14 = arith.constant 0 : index
    %c0_15 = arith.constant 0 : index
    %c0_16 = arith.constant 0 : index
    %c0_17 = arith.constant 0 : index
    %9 = vector.load %arg6[%c0_13, %c0_14, %c0_15, %c0_16, %c0_17] : memref<1x1x1x18x2xbf16, #tpu.memory_space<vmem>>, vector<1x1x1x18x2xbf16>
    %10 = vector.shape_cast %9 : vector<1x1x1x18x2xbf16> to vector<18x2xbf16>
    %11 = vector.extract_strided_slice %6 {offsets = [0, 0], sizes = [16, 2], strides = [1, 1]} : vector<18x2xbf16> to vector<16x2xbf16>
    %12 = vector.extract_strided_slice %4 {offsets = [0, 0], sizes = [2, 8], strides = [1, 1]} : vector<18x8xbf16> to vector<2x8xbf16>
    %cst = arith.constant dense<0.000000e+00> : vector<16x8xf32>
    %13 = tpu.matmul %11, %12, %cst {dimension_numbers = #tpu.dot_dimension_numbers<[1], [0], [0], [1], [0, 0, 1, 1], [], []>} : vector<16x2xbf16>, vector<2x8xbf16>, vector<16x8xf32> -> vector<16x8xf32>
    %14 = vector.extract_strided_slice %6 {offsets = [1, 0], sizes = [16, 2], strides = [1, 1]} : vector<18x2xbf16> to vector<16x2xbf16>
    %15 = vector.extract_strided_slice %4 {offsets = [2, 0], sizes = [2, 8], strides = [1, 1]} : vector<18x8xbf16> to vector<2x8xbf16>
    %cst_18 = arith.constant dense<0.000000e+00> : vector<16x8xf32>
    %16 = tpu.matmul %14, %15, %cst_18 {dimension_numbers = #tpu.dot_dimension_numbers<[1], [0], [0], [1], [0, 0, 1, 1], [], []>} : vector<16x2xbf16>, vector<2x8xbf16>, vector<16x8xf32> -> vector<16x8xf32>
    %17 = arith.addf %13, %16 : vector<16x8xf32>
    %18 = vector.extract_strided_slice %6 {offsets = [2, 0], sizes = [16, 2], strides = [1, 1]} : vector<18x2xbf16> to vector<16x2xbf16>
    %19 = vector.extract_strided_slice %4 {offsets = [4, 0], sizes = [2, 8], strides = [1, 1]} : vector<18x8xbf16> to vector<2x8xbf16>
    %cst_19 = arith.constant dense<0.000000e+00> : vector<16x8xf32>
    %20 = tpu.matmul %18, %19, %cst_19 {dimension_numbers = #tpu.dot_dimension_numbers<[1], [0], [0], [1], [0, 0, 1, 1], [], []>} : vector<16x2xbf16>, vector<2x8xbf16>, vector<16x8xf32> -> vector<16x8xf32>
    %21 = arith.addf %17, %20 : vector<16x8xf32>
    %22 = vector.extract_strided_slice %8 {offsets = [0, 0], sizes = [16, 2], strides = [1, 1]} : vector<18x2xbf16> to vector<16x2xbf16>
    %23 = vector.extract_strided_slice %4 {offsets = [6, 0], sizes = [2, 8], strides = [1, 1]} : vector<18x8xbf16> to vector<2x8xbf16>
    %cst_20 = arith.constant dense<0.000000e+00> : vector<16x8xf32>
    %24 = tpu.matmul %22, %23, %cst_20 {dimension_numbers = #tpu.dot_dimension_numbers<[1], [0], [0], [1], [0, 0, 1, 1], [], []>} : vector<16x2xbf16>, vector<2x8xbf16>, vector<16x8xf32> -> vector<16x8xf32>
    %25 = arith.addf %21, %24 : vector<16x8xf32>
    %26 = vector.extract_strided_slice %8 {offsets = [1, 0], sizes = [16, 2], strides = [1, 1]} : vector<18x2xbf16> to vector<16x2xbf16>
    %27 = vector.extract_strided_slice %4 {offsets = [8, 0], sizes = [2, 8], strides = [1, 1]} : vector<18x8xbf16> to vector<2x8xbf16>
    %cst_21 = arith.constant dense<0.000000e+00> : vector<16x8xf32>
    %28 = tpu.matmul %26, %27, %cst_21 {dimension_numbers = #tpu.dot_dimension_numbers<[1], [0], [0], [1], [0, 0, 1, 1], [], []>} : vector<16x2xbf16>, vector<2x8xbf16>, vector<16x8xf32> -> vector<16x8xf32>
    %29 = arith.addf %25, %28 : vector<16x8xf32>
    %30 = vector.extract_strided_slice %8 {offsets = [2, 0], sizes = [16, 2], strides = [1, 1]} : vector<18x2xbf16> to vector<16x2xbf16>
    %31 = vector.extract_strided_slice %4 {offsets = [10, 0], sizes = [2, 8], strides = [1, 1]} : vector<18x8xbf16> to vector<2x8xbf16>
    %cst_22 = arith.constant dense<0.000000e+00> : vector<16x8xf32>
    %32 = tpu.matmul %30, %31, %cst_22 {dimension_numbers = #tpu.dot_dimension_numbers<[1], [0], [0], [1], [0, 0, 1, 1], [], []>} : vector<16x2xbf16>, vector<2x8xbf16>, vector<16x8xf32> -> vector<16x8xf32>
    %33 = arith.addf %29, %32 : vector<16x8xf32>
    %34 = vector.extract_strided_slice %10 {offsets = [0, 0], sizes = [16, 2], strides = [1, 1]} : vector<18x2xbf16> to vector<16x2xbf16>
    %35 = vector.extract_strided_slice %4 {offsets = [12, 0], sizes = [2, 8], strides = [1, 1]} : vector<18x8xbf16> to vector<2x8xbf16>
    %cst_23 = arith.constant dense<0.000000e+00> : vector<16x8xf32>
    %36 = tpu.matmul %34, %35, %cst_23 {dimension_numbers = #tpu.dot_dimension_numbers<[1], [0], [0], [1], [0, 0, 1, 1], [], []>} : vector<16x2xbf16>, vector<2x8xbf16>, vector<16x8xf32> -> vector<16x8xf32>
    %37 = arith.addf %33, %36 : vector<16x8xf32>
    %38 = vector.extract_strided_slice %10 {offsets = [1, 0], sizes = [16, 2], strides = [1, 1]} : vector<18x2xbf16> to vector<16x2xbf16>
    %39 = vector.extract_strided_slice %4 {offsets = [14, 0], sizes = [2, 8], strides = [1, 1]} : vector<18x8xbf16> to vector<2x8xbf16>
    %cst_24 = arith.constant dense<0.000000e+00> : vector<16x8xf32>
    %40 = tpu.matmul %38, %39, %cst_24 {dimension_numbers = #tpu.dot_dimension_numbers<[1], [0], [0], [1], [0, 0, 1, 1], [], []>} : vector<16x2xbf16>, vector<2x8xbf16>, vector<16x8xf32> -> vector<16x8xf32>
    %41 = arith.addf %37, %40 : vector<16x8xf32>
    %42 = vector.extract_strided_slice %10 {offsets = [2, 0], sizes = [16, 2], strides = [1, 1]} : vector<18x2xbf16> to vector<16x2xbf16>
    %43 = vector.extract_strided_slice %4 {offsets = [16, 0], sizes = [2, 8], strides = [1, 1]} : vector<18x8xbf16> to vector<2x8xbf16>
    %cst_25 = arith.constant dense<0.000000e+00> : vector<16x8xf32>
    %44 = tpu.matmul %42, %43, %cst_25 {dimension_numbers = #tpu.dot_dimension_numbers<[1], [0], [0], [1], [0, 0, 1, 1], [], []>} : vector<16x2xbf16>, vector<2x8xbf16>, vector<16x8xf32> -> vector<16x8xf32>
    %45 = arith.addf %41, %44 : vector<16x8xf32>
    %c0_26 = arith.constant 0 : index
    %c0_27 = arith.constant 0 : index
    %46 = vector.load %arg11[%c0_26, %c0_27] : memref<16x8xf32, #tpu.memory_space<vmem>>, vector<16x8xf32>
    %47 = arith.addf %46, %45 : vector<16x8xf32>
    %c0_28 = arith.constant 0 : index
    %c0_29 = arith.constant 0 : index
    %48 = vector.load %arg11[%c0_28, %c0_29] : memref<16x8xf32, #tpu.memory_space<vmem>>, vector<16x8xf32>
    tpu.vector_store %arg11[%c0_28, %c0_29], %47 {strides = array<i32>} : memref<16x8xf32, #tpu.memory_space<vmem>>, vector<16x8xf32>,
    %c2_i32 = arith.constant 2 : i32
    %49 = arith.cmpi eq, %arg3, %c2_i32 : i32
    %50 = arith.extui %49 : i1 to i32
    %c0_i32_30 = arith.constant 0 : i32
    %51 = arith.cmpi ne, %50, %c0_i32_30 : i32
    scf.if %51 {
      %c0_31 = arith.constant 0 : index
      %c0_32 = arith.constant 0 : index
      %52 = vector.load %arg11[%c0_31, %c0_32] : memref<16x8xf32, #tpu.memory_space<vmem>>, vector<16x8xf32>
      %c0_33 = arith.constant 0 : index
      %c0_34 = arith.constant 0 : index
      %53 = vector.load %arg8[%c0_33, %c0_34] : memref<1x8xf32, #tpu.memory_space<vmem>>, vector<1x8xf32>
      %54 = vector.broadcast %53 : vector<1x8xf32> to vector<16x8xf32>
      %55 = arith.addf %52, %54 : vector<16x8xf32>
      %cst_35 = arith.constant 0.000000e+00 : f32
      %56 = vector.broadcast %cst_35 : f32 to vector<16x8xf32>
      %57 = arith.cmpf oge, %55, %56 : vector<16x8xf32>
      %c0_36 = arith.constant 0 : index
      %c0_37 = arith.constant 0 : index
      %58 = vector.load %arg9[%c0_36, %c0_37] : memref<1x8xf32, #tpu.memory_space<vmem>>, vector<1x8xf32>
      %59 = vector.broadcast %58 : vector<1x8xf32> to vector<16x8xf32>
      %60 = arith.mulf %59, %55 : vector<16x8xf32>
      %61 = arith.select %57, %55, %60 : vector<16x8xi1>, vector<16x8xf32>
      %62 = arith.truncf %61 : vector<16x8xf32> to vector<16x8xbf16>
      %c0_38 = arith.constant 0 : index
      %c0_39 = arith.constant 0 : index
      %c0_40 = arith.constant 0 : index
      %c0_41 = arith.constant 0 : index
      %c0_42 = arith.constant 0 : index
      %63 = vector.load %arg10[%c0_38, %c0_39, %c0_40, %c0_41, %c0_42] : memref<1x1x1x16x8xbf16, #tpu.memory_space<vmem>>, vector<1x1x1x16x8xbf16>
      %64 = vector.shape_cast %63 : vector<1x1x1x16x8xbf16> to vector<16x8xbf16>
      %65 = vector.shape_cast %62 : vector<16x8xbf16> to vector<1x1x1x16x8xbf16>
      tpu.vector_store %arg10[%c0_38, %c0_39, %c0_40, %c0_41, %c0_42], %65 {strides = array<i32>} : memref<1x1x1x16x8xbf16, #tpu.memory_space<vmem>>, vector<1x1x1x16x8xbf16>,
    } else {
    }
    return
  }
  func.func @transform_0(%arg0: i32, %arg1: i32, %arg2: i32, %arg3: i32) -> (i32, i32, i32, i32, i32) {
    %0 = arith.addi %arg1, %arg3 : i32
    %c1_i32 = arith.constant 1 : i32
    %1 = arith.muli %c1_i32, %arg2 : i32
    %c0_i32 = arith.constant 0 : i32
    %2 = arith.addi %1, %c0_i32 : i32
    %c0_i32_0 = arith.constant 0 : i32
    %c0_i32_1 = arith.constant 0 : i32
    %c0_i32_2 = arith.constant 0 : i32
    return %arg0, %0, %2, %c0_i32_0, %c0_i32_1 : i32, i32, i32, i32, i32
  }
  func.func @transform_1(%arg0: i32, %arg1: i32, %arg2: i32, %arg3: i32) -> (i32, i32, i32, i32, i32) {
    %0 = arith.addi %arg1, %arg3 : i32
    %c1_i32 = arith.constant 1 : i32
    %1 = arith.muli %c1_i32, %arg2 : i32
    %c1_i32_0 = arith.constant 1 : i32
    %2 = arith.addi %1, %c1_i32_0 : i32
    %c0_i32 = arith.constant 0 : i32
    %c0_i32_1 = arith.constant 0 : i32
    %c0_i32_2 = arith.constant 0 : i32
    return %arg0, %0, %2, %c0_i32, %c0_i32_1 : i32, i32, i32, i32, i32
  }
  func.func @transform_2(%arg0: i32, %arg1: i32, %arg2: i32, %arg3: i32) -> (i32, i32, i32, i32, i32) {
    %0 = arith.addi %arg1, %arg3 : i32
    %c1_i32 = arith.constant 1 : i32
    %1 = arith.muli %c1_i32, %arg2 : i32
    %c2_i32 = arith.constant 2 : i32
    %2 = arith.addi %1, %c2_i32 : i32
    %c0_i32 = arith.constant 0 : i32
    %c0_i32_0 = arith.constant 0 : i32
    %c0_i32_1 = arith.constant 0 : i32
    return %arg0, %0, %2, %c0_i32, %c0_i32_0 : i32, i32, i32, i32, i32
  }
  func.func @transform_3(%arg0: i32, %arg1: i32, %arg2: i32, %arg3: i32) -> (i32, i32, i32) {
    %c0_i32 = arith.constant 0 : i32
    %c0_i32_0 = arith.constant 0 : i32
    %c0_i32_1 = arith.constant 0 : i32
    return %arg3, %c0_i32, %c0_i32_0 : i32, i32, i32
  }
  func.func @transform_4(%arg0: i32, %arg1: i32, %arg2: i32, %arg3: i32) -> (i32, i32) {
    %c0_i32 = arith.constant 0 : i32
    %c0_i32_0 = arith.constant 0 : i32
    %c0_i32_1 = arith.constant 0 : i32
    return %c0_i32, %c0_i32_0 : i32, i32
  }
  func.func @transform_5(%arg0: i32, %arg1: i32, %arg2: i32, %arg3: i32) -> (i32, i32) {
    %c0_i32 = arith.constant 0 : i32
    %c0_i32_0 = arith.constant 0 : i32
    %c0_i32_1 = arith.constant 0 : i32
    return %c0_i32, %c0_i32_0 : i32, i32
  }
  func.func @transform_6(%arg0: i32, %arg1: i32, %arg2: i32, %arg3: i32) -> (i32, i32, i32, i32, i32) {
    %c0_i32 = arith.constant 0 : i32
    %c0_i32_0 = arith.constant 0 : i32
    %c0_i32_1 = arith.constant 0 : i32
    return %arg0, %arg1, %arg2, %c0_i32, %c0_i32_0 : i32, i32, i32, i32, i32
  }
}

module attributes {stable_mosaic.version = 11 : i64} {
  func.func @_conv_row_kernel(%arg0: i32, %arg1: i32, %arg2: i32, %arg3: i32, %arg4: memref<1x1x1x9x8xbf16, #tpu.memory_space<vmem>>, %arg5: memref<1x1x1x9x8xbf16, #tpu.memory_space<vmem>>, %arg6: memref<1x1x1x9x8xbf16, #tpu.memory_space<vmem>>, %arg7: memref<1x1x1x9x8xbf16, #tpu.memory_space<vmem>>, %arg8: memref<1x1x1x9x8xbf16, #tpu.memory_space<vmem>>, %arg9: memref<1x1x1x9x8xbf16, #tpu.memory_space<vmem>>, %arg10: memref<1x72x16xbf16, #tpu.memory_space<vmem>>, %arg11: memref<1x16xf32, #tpu.memory_space<vmem>>, %arg12: memref<1x16xf32, #tpu.memory_space<vmem>>, %arg13: memref<1x1x1x8x8xbf16, #tpu.memory_space<vmem>>, %arg14: memref<1x1x1x8x8xbf16, #tpu.memory_space<vmem>>, %arg15: memref<8x16xf32, #tpu.memory_space<vmem>>) attributes {dimension_semantics = [#tpu.dimension_semantics<parallel>, #tpu.dimension_semantics<parallel>, #tpu.dimension_semantics<parallel>, #tpu.dimension_semantics<arbitrary>], iteration_bounds = array<i64: 2, 4, 8, 3>, scalar_prefetch = 0 : i64, scratch_operands = 1 : i64, tpu.core_type = #tpu.core_type<tc>, window_params = [{transform_indices = @transform_0, window_bounds = array<i64: 1, 1, 1, 9, 8>}, {transform_indices = @transform_1, window_bounds = array<i64: 1, 1, 1, 9, 8>}, {transform_indices = @transform_2, window_bounds = array<i64: 1, 1, 1, 9, 8>}, {transform_indices = @transform_3, window_bounds = array<i64: 1, 1, 1, 9, 8>}, {transform_indices = @transform_4, window_bounds = array<i64: 1, 1, 1, 9, 8>}, {transform_indices = @transform_5, window_bounds = array<i64: 1, 1, 1, 9, 8>}, {transform_indices = @transform_6, window_bounds = array<i64: 1, 72, 16>}, {pipeline_mode = #tpu.pipeline_mode<synchronous>, transform_indices = @transform_7, window_bounds = array<i64: 1, 16>}, {pipeline_mode = #tpu.pipeline_mode<synchronous>, transform_indices = @transform_8, window_bounds = array<i64: 1, 16>}, {transform_indices = @transform_9, window_bounds = array<i64: 1, 1, 1, 8, 8>}, {transform_indices = @transform_10, window_bounds = array<i64: 1, 1, 1, 8, 8>}]} {
    %c0_i32 = arith.constant 0 : i32
    %0 = arith.cmpi eq, %arg3, %c0_i32 : i32
    %1 = arith.extui %0 : i1 to i32
    %c0_i32_0 = arith.constant 0 : i32
    %2 = arith.cmpi ne, %1, %c0_i32_0 : i32
    scf.if %2 {
      %cst_46 = arith.constant 0.000000e+00 : f32
      %58 = vector.broadcast %cst_46 : f32 to vector<8x16xf32>
      %c0_47 = arith.constant 0 : index
      %c0_48 = arith.constant 0 : index
      %59 = vector.load %arg15[%c0_47, %c0_48] : memref<8x16xf32, #tpu.memory_space<vmem>>, vector<8x16xf32>
      tpu.vector_store %arg15[%c0_47, %c0_48], %58 {strides = array<i32>} : memref<8x16xf32, #tpu.memory_space<vmem>>, vector<8x16xf32>,
    } else {
    }
    %c0 = arith.constant 0 : index
    %c0_1 = arith.constant 0 : index
    %c0_2 = arith.constant 0 : index
    %3 = vector.load %arg10[%c0, %c0_1, %c0_2] : memref<1x72x16xbf16, #tpu.memory_space<vmem>>, vector<1x72x16xbf16>
    %4 = vector.shape_cast %3 : vector<1x72x16xbf16> to vector<72x16xbf16>
    %c0_3 = arith.constant 0 : index
    %c0_4 = arith.constant 0 : index
    %c0_5 = arith.constant 0 : index
    %c0_6 = arith.constant 0 : index
    %c0_7 = arith.constant 0 : index
    %5 = vector.load %arg4[%c0_3, %c0_4, %c0_5, %c0_6, %c0_7] : memref<1x1x1x9x8xbf16, #tpu.memory_space<vmem>>, vector<1x1x1x9x8xbf16>
    %6 = vector.shape_cast %5 : vector<1x1x1x9x8xbf16> to vector<9x8xbf16>
    %c0_8 = arith.constant 0 : index
    %c0_9 = arith.constant 0 : index
    %c0_10 = arith.constant 0 : index
    %c0_11 = arith.constant 0 : index
    %c0_12 = arith.constant 0 : index
    %7 = vector.load %arg5[%c0_8, %c0_9, %c0_10, %c0_11, %c0_12] : memref<1x1x1x9x8xbf16, #tpu.memory_space<vmem>>, vector<1x1x1x9x8xbf16>
    %8 = vector.shape_cast %7 : vector<1x1x1x9x8xbf16> to vector<9x8xbf16>
    %c0_13 = arith.constant 0 : index
    %c0_14 = arith.constant 0 : index
    %c0_15 = arith.constant 0 : index
    %c0_16 = arith.constant 0 : index
    %c0_17 = arith.constant 0 : index
    %9 = vector.load %arg6[%c0_13, %c0_14, %c0_15, %c0_16, %c0_17] : memref<1x1x1x9x8xbf16, #tpu.memory_space<vmem>>, vector<1x1x1x9x8xbf16>
    %10 = vector.shape_cast %9 : vector<1x1x1x9x8xbf16> to vector<9x8xbf16>
    %c0_18 = arith.constant 0 : index
    %c0_19 = arith.constant 0 : index
    %c0_20 = arith.constant 0 : index
    %c0_21 = arith.constant 0 : index
    %c0_22 = arith.constant 0 : index
    %11 = vector.load %arg7[%c0_18, %c0_19, %c0_20, %c0_21, %c0_22] : memref<1x1x1x9x8xbf16, #tpu.memory_space<vmem>>, vector<1x1x1x9x8xbf16>
    %12 = vector.shape_cast %11 : vector<1x1x1x9x8xbf16> to vector<9x8xbf16>
    %c0_23 = arith.constant 0 : index
    %c0_24 = arith.constant 0 : index
    %c0_25 = arith.constant 0 : index
    %c0_26 = arith.constant 0 : index
    %c0_27 = arith.constant 0 : index
    %13 = vector.load %arg8[%c0_23, %c0_24, %c0_25, %c0_26, %c0_27] : memref<1x1x1x9x8xbf16, #tpu.memory_space<vmem>>, vector<1x1x1x9x8xbf16>
    %14 = vector.shape_cast %13 : vector<1x1x1x9x8xbf16> to vector<9x8xbf16>
    %c0_28 = arith.constant 0 : index
    %c0_29 = arith.constant 0 : index
    %c0_30 = arith.constant 0 : index
    %c0_31 = arith.constant 0 : index
    %c0_32 = arith.constant 0 : index
    %15 = vector.load %arg9[%c0_28, %c0_29, %c0_30, %c0_31, %c0_32] : memref<1x1x1x9x8xbf16, #tpu.memory_space<vmem>>, vector<1x1x1x9x8xbf16>
    %16 = vector.shape_cast %15 : vector<1x1x1x9x8xbf16> to vector<9x8xbf16>
    %17 = vector.extract_strided_slice %6 {offsets = [0, 0], sizes = [8, 8], strides = [1, 1]} : vector<9x8xbf16> to vector<8x8xbf16>
    %18 = vector.extract_strided_slice %4 {offsets = [0, 0], sizes = [8, 16], strides = [1, 1]} : vector<72x16xbf16> to vector<8x16xbf16>
    %cst = arith.constant dense<0.000000e+00> : vector<8x16xf32>
    %19 = tpu.matmul %17, %18, %cst {dimension_numbers = #tpu.dot_dimension_numbers<[1], [0], [0], [1], [0, 0, 1, 1], [], []>} : vector<8x8xbf16>, vector<8x16xbf16>, vector<8x16xf32> -> vector<8x16xf32>
    %20 = vector.extract_strided_slice %8 {offsets = [0, 0], sizes = [8, 8], strides = [1, 1]} : vector<9x8xbf16> to vector<8x8xbf16>
    %21 = vector.extract_strided_slice %4 {offsets = [8, 0], sizes = [8, 16], strides = [1, 1]} : vector<72x16xbf16> to vector<8x16xbf16>
    %cst_33 = arith.constant dense<0.000000e+00> : vector<8x16xf32>
    %22 = tpu.matmul %20, %21, %cst_33 {dimension_numbers = #tpu.dot_dimension_numbers<[1], [0], [0], [1], [0, 0, 1, 1], [], []>} : vector<8x8xbf16>, vector<8x16xbf16>, vector<8x16xf32> -> vector<8x16xf32>
    %23 = arith.addf %19, %22 : vector<8x16xf32>
    %24 = vector.extract_strided_slice %6 {offsets = [1, 0], sizes = [8, 8], strides = [1, 1]} : vector<9x8xbf16> to vector<8x8xbf16>
    %25 = vector.extract_strided_slice %4 {offsets = [16, 0], sizes = [8, 16], strides = [1, 1]} : vector<72x16xbf16> to vector<8x16xbf16>
    %cst_34 = arith.constant dense<0.000000e+00> : vector<8x16xf32>
    %26 = tpu.matmul %24, %25, %cst_34 {dimension_numbers = #tpu.dot_dimension_numbers<[1], [0], [0], [1], [0, 0, 1, 1], [], []>} : vector<8x8xbf16>, vector<8x16xbf16>, vector<8x16xf32> -> vector<8x16xf32>
    %27 = arith.addf %23, %26 : vector<8x16xf32>
    %28 = vector.extract_strided_slice %10 {offsets = [0, 0], sizes = [8, 8], strides = [1, 1]} : vector<9x8xbf16> to vector<8x8xbf16>
    %29 = vector.extract_strided_slice %4 {offsets = [24, 0], sizes = [8, 16], strides = [1, 1]} : vector<72x16xbf16> to vector<8x16xbf16>
    %cst_35 = arith.constant dense<0.000000e+00> : vector<8x16xf32>
    %30 = tpu.matmul %28, %29, %cst_35 {dimension_numbers = #tpu.dot_dimension_numbers<[1], [0], [0], [1], [0, 0, 1, 1], [], []>} : vector<8x8xbf16>, vector<8x16xbf16>, vector<8x16xf32> -> vector<8x16xf32>
    %31 = arith.addf %27, %30 : vector<8x16xf32>
    %32 = vector.extract_strided_slice %12 {offsets = [0, 0], sizes = [8, 8], strides = [1, 1]} : vector<9x8xbf16> to vector<8x8xbf16>
    %33 = vector.extract_strided_slice %4 {offsets = [32, 0], sizes = [8, 16], strides = [1, 1]} : vector<72x16xbf16> to vector<8x16xbf16>
    %cst_36 = arith.constant dense<0.000000e+00> : vector<8x16xf32>
    %34 = tpu.matmul %32, %33, %cst_36 {dimension_numbers = #tpu.dot_dimension_numbers<[1], [0], [0], [1], [0, 0, 1, 1], [], []>} : vector<8x8xbf16>, vector<8x16xbf16>, vector<8x16xf32> -> vector<8x16xf32>
    %35 = arith.addf %31, %34 : vector<8x16xf32>
    %36 = vector.extract_strided_slice %10 {offsets = [1, 0], sizes = [8, 8], strides = [1, 1]} : vector<9x8xbf16> to vector<8x8xbf16>
    %37 = vector.extract_strided_slice %4 {offsets = [40, 0], sizes = [8, 16], strides = [1, 1]} : vector<72x16xbf16> to vector<8x16xbf16>
    %cst_37 = arith.constant dense<0.000000e+00> : vector<8x16xf32>
    %38 = tpu.matmul %36, %37, %cst_37 {dimension_numbers = #tpu.dot_dimension_numbers<[1], [0], [0], [1], [0, 0, 1, 1], [], []>} : vector<8x8xbf16>, vector<8x16xbf16>, vector<8x16xf32> -> vector<8x16xf32>
    %39 = arith.addf %35, %38 : vector<8x16xf32>
    %40 = vector.extract_strided_slice %14 {offsets = [0, 0], sizes = [8, 8], strides = [1, 1]} : vector<9x8xbf16> to vector<8x8xbf16>
    %41 = vector.extract_strided_slice %4 {offsets = [48, 0], sizes = [8, 16], strides = [1, 1]} : vector<72x16xbf16> to vector<8x16xbf16>
    %cst_38 = arith.constant dense<0.000000e+00> : vector<8x16xf32>
    %42 = tpu.matmul %40, %41, %cst_38 {dimension_numbers = #tpu.dot_dimension_numbers<[1], [0], [0], [1], [0, 0, 1, 1], [], []>} : vector<8x8xbf16>, vector<8x16xbf16>, vector<8x16xf32> -> vector<8x16xf32>
    %43 = arith.addf %39, %42 : vector<8x16xf32>
    %44 = vector.extract_strided_slice %16 {offsets = [0, 0], sizes = [8, 8], strides = [1, 1]} : vector<9x8xbf16> to vector<8x8xbf16>
    %45 = vector.extract_strided_slice %4 {offsets = [56, 0], sizes = [8, 16], strides = [1, 1]} : vector<72x16xbf16> to vector<8x16xbf16>
    %cst_39 = arith.constant dense<0.000000e+00> : vector<8x16xf32>
    %46 = tpu.matmul %44, %45, %cst_39 {dimension_numbers = #tpu.dot_dimension_numbers<[1], [0], [0], [1], [0, 0, 1, 1], [], []>} : vector<8x8xbf16>, vector<8x16xbf16>, vector<8x16xf32> -> vector<8x16xf32>
    %47 = arith.addf %43, %46 : vector<8x16xf32>
    %48 = vector.extract_strided_slice %14 {offsets = [1, 0], sizes = [8, 8], strides = [1, 1]} : vector<9x8xbf16> to vector<8x8xbf16>
    %49 = vector.extract_strided_slice %4 {offsets = [64, 0], sizes = [8, 16], strides = [1, 1]} : vector<72x16xbf16> to vector<8x16xbf16>
    %cst_40 = arith.constant dense<0.000000e+00> : vector<8x16xf32>
    %50 = tpu.matmul %48, %49, %cst_40 {dimension_numbers = #tpu.dot_dimension_numbers<[1], [0], [0], [1], [0, 0, 1, 1], [], []>} : vector<8x8xbf16>, vector<8x16xbf16>, vector<8x16xf32> -> vector<8x16xf32>
    %51 = arith.addf %47, %50 : vector<8x16xf32>
    %c0_41 = arith.constant 0 : index
    %c0_42 = arith.constant 0 : index
    %52 = vector.load %arg15[%c0_41, %c0_42] : memref<8x16xf32, #tpu.memory_space<vmem>>, vector<8x16xf32>
    %53 = arith.addf %52, %51 : vector<8x16xf32>
    %c0_43 = arith.constant 0 : index
    %c0_44 = arith.constant 0 : index
    %54 = vector.load %arg15[%c0_43, %c0_44] : memref<8x16xf32, #tpu.memory_space<vmem>>, vector<8x16xf32>
    tpu.vector_store %arg15[%c0_43, %c0_44], %53 {strides = array<i32>} : memref<8x16xf32, #tpu.memory_space<vmem>>, vector<8x16xf32>,
    %c2_i32 = arith.constant 2 : i32
    %55 = arith.cmpi eq, %arg3, %c2_i32 : i32
    %56 = arith.extui %55 : i1 to i32
    %c0_i32_45 = arith.constant 0 : i32
    %57 = arith.cmpi ne, %56, %c0_i32_45 : i32
    scf.if %57 {
      %c0_46 = arith.constant 0 : index
      %c0_47 = arith.constant 0 : index
      %58 = vector.load %arg15[%c0_46, %c0_47] : memref<8x16xf32, #tpu.memory_space<vmem>>, vector<8x16xf32>
      %c0_48 = arith.constant 0 : index
      %c0_49 = arith.constant 0 : index
      %59 = vector.load %arg11[%c0_48, %c0_49] : memref<1x16xf32, #tpu.memory_space<vmem>>, vector<1x16xf32>
      %60 = vector.broadcast %59 : vector<1x16xf32> to vector<8x16xf32>
      %61 = arith.addf %58, %60 : vector<8x16xf32>
      %cst_50 = arith.constant 0.000000e+00 : f32
      %62 = vector.broadcast %cst_50 : f32 to vector<8x16xf32>
      %63 = arith.cmpf oge, %61, %62 : vector<8x16xf32>
      %c0_51 = arith.constant 0 : index
      %c0_52 = arith.constant 0 : index
      %64 = vector.load %arg12[%c0_51, %c0_52] : memref<1x16xf32, #tpu.memory_space<vmem>>, vector<1x16xf32>
      %65 = vector.broadcast %64 : vector<1x16xf32> to vector<8x16xf32>
      %66 = arith.mulf %65, %61 : vector<8x16xf32>
      %67 = arith.select %63, %61, %66 : vector<8x16xi1>, vector<8x16xf32>
      %68 = vector.extract_strided_slice %67 {offsets = [0, 0], sizes = [8, 8], strides = [1, 1]} : vector<8x16xf32> to vector<8x8xf32>
      %69 = arith.truncf %68 : vector<8x8xf32> to vector<8x8xbf16>
      %c0_53 = arith.constant 0 : index
      %c0_54 = arith.constant 0 : index
      %c0_55 = arith.constant 0 : index
      %c0_56 = arith.constant 0 : index
      %c0_57 = arith.constant 0 : index
      %70 = vector.load %arg13[%c0_53, %c0_54, %c0_55, %c0_56, %c0_57] : memref<1x1x1x8x8xbf16, #tpu.memory_space<vmem>>, vector<1x1x1x8x8xbf16>
      %71 = vector.shape_cast %70 : vector<1x1x1x8x8xbf16> to vector<8x8xbf16>
      %72 = vector.shape_cast %69 : vector<8x8xbf16> to vector<1x1x1x8x8xbf16>
      tpu.vector_store %arg13[%c0_53, %c0_54, %c0_55, %c0_56, %c0_57], %72 {strides = array<i32>} : memref<1x1x1x8x8xbf16, #tpu.memory_space<vmem>>, vector<1x1x1x8x8xbf16>,
      %73 = vector.extract_strided_slice %67 {offsets = [0, 8], sizes = [8, 8], strides = [1, 1]} : vector<8x16xf32> to vector<8x8xf32>
      %74 = arith.truncf %73 : vector<8x8xf32> to vector<8x8xbf16>
      %c0_58 = arith.constant 0 : index
      %c0_59 = arith.constant 0 : index
      %c0_60 = arith.constant 0 : index
      %c0_61 = arith.constant 0 : index
      %c0_62 = arith.constant 0 : index
      %75 = vector.load %arg14[%c0_58, %c0_59, %c0_60, %c0_61, %c0_62] : memref<1x1x1x8x8xbf16, #tpu.memory_space<vmem>>, vector<1x1x1x8x8xbf16>
      %76 = vector.shape_cast %75 : vector<1x1x1x8x8xbf16> to vector<8x8xbf16>
      %77 = vector.shape_cast %74 : vector<8x8xbf16> to vector<1x1x1x8x8xbf16>
      tpu.vector_store %arg14[%c0_58, %c0_59, %c0_60, %c0_61, %c0_62], %77 {strides = array<i32>} : memref<1x1x1x8x8xbf16, #tpu.memory_space<vmem>>, vector<1x1x1x8x8xbf16>,
    } else {
    }
    return
  }
  func.func @transform_0(%arg0: i32, %arg1: i32, %arg2: i32, %arg3: i32) -> (i32, i32, i32, i32, i32) {
    %0 = arith.addi %arg1, %arg3 : i32
    %c2_i32 = arith.constant 2 : i32
    %1 = arith.muli %c2_i32, %arg2 : i32
    %c0_i32 = arith.constant 0 : i32
    %2 = arith.addi %1, %c0_i32 : i32
    %c0_i32_0 = arith.constant 0 : i32
    %c0_i32_1 = arith.constant 0 : i32
    %c0_i32_2 = arith.constant 0 : i32
    return %arg0, %0, %2, %c0_i32_0, %c0_i32_1 : i32, i32, i32, i32, i32
  }
  func.func @transform_1(%arg0: i32, %arg1: i32, %arg2: i32, %arg3: i32) -> (i32, i32, i32, i32, i32) {
    %0 = arith.addi %arg1, %arg3 : i32
    %c2_i32 = arith.constant 2 : i32
    %1 = arith.muli %c2_i32, %arg2 : i32
    %c0_i32 = arith.constant 0 : i32
    %2 = arith.addi %1, %c0_i32 : i32
    %c0_i32_0 = arith.constant 0 : i32
    %c0_i32_1 = arith.constant 0 : i32
    %c0_i32_2 = arith.constant 0 : i32
    return %arg0, %0, %2, %c0_i32_0, %c0_i32_1 : i32, i32, i32, i32, i32
  }
  func.func @transform_2(%arg0: i32, %arg1: i32, %arg2: i32, %arg3: i32) -> (i32, i32, i32, i32, i32) {
    %0 = arith.addi %arg1, %arg3 : i32
    %c2_i32 = arith.constant 2 : i32
    %1 = arith.muli %c2_i32, %arg2 : i32
    %c1_i32 = arith.constant 1 : i32
    %2 = arith.addi %1, %c1_i32 : i32
    %c0_i32 = arith.constant 0 : i32
    %c0_i32_0 = arith.constant 0 : i32
    %c0_i32_1 = arith.constant 0 : i32
    return %arg0, %0, %2, %c0_i32, %c0_i32_0 : i32, i32, i32, i32, i32
  }
  func.func @transform_3(%arg0: i32, %arg1: i32, %arg2: i32, %arg3: i32) -> (i32, i32, i32, i32, i32) {
    %0 = arith.addi %arg1, %arg3 : i32
    %c2_i32 = arith.constant 2 : i32
    %1 = arith.muli %c2_i32, %arg2 : i32
    %c1_i32 = arith.constant 1 : i32
    %2 = arith.addi %1, %c1_i32 : i32
    %c0_i32 = arith.constant 0 : i32
    %c0_i32_0 = arith.constant 0 : i32
    %c0_i32_1 = arith.constant 0 : i32
    return %arg0, %0, %2, %c0_i32, %c0_i32_0 : i32, i32, i32, i32, i32
  }
  func.func @transform_4(%arg0: i32, %arg1: i32, %arg2: i32, %arg3: i32) -> (i32, i32, i32, i32, i32) {
    %0 = arith.addi %arg1, %arg3 : i32
    %c2_i32 = arith.constant 2 : i32
    %1 = arith.muli %c2_i32, %arg2 : i32
    %c2_i32_0 = arith.constant 2 : i32
    %2 = arith.addi %1, %c2_i32_0 : i32
    %c0_i32 = arith.constant 0 : i32
    %c0_i32_1 = arith.constant 0 : i32
    %c0_i32_2 = arith.constant 0 : i32
    return %arg0, %0, %2, %c0_i32, %c0_i32_1 : i32, i32, i32, i32, i32
  }
  func.func @transform_5(%arg0: i32, %arg1: i32, %arg2: i32, %arg3: i32) -> (i32, i32, i32, i32, i32) {
    %0 = arith.addi %arg1, %arg3 : i32
    %c2_i32 = arith.constant 2 : i32
    %1 = arith.muli %c2_i32, %arg2 : i32
    %c2_i32_0 = arith.constant 2 : i32
    %2 = arith.addi %1, %c2_i32_0 : i32
    %c0_i32 = arith.constant 0 : i32
    %c0_i32_1 = arith.constant 0 : i32
    %c0_i32_2 = arith.constant 0 : i32
    return %arg0, %0, %2, %c0_i32, %c0_i32_1 : i32, i32, i32, i32, i32
  }
  func.func @transform_6(%arg0: i32, %arg1: i32, %arg2: i32, %arg3: i32) -> (i32, i32, i32) {
    %c0_i32 = arith.constant 0 : i32
    %c0_i32_0 = arith.constant 0 : i32
    %c0_i32_1 = arith.constant 0 : i32
    return %arg3, %c0_i32, %c0_i32_0 : i32, i32, i32
  }
  func.func @transform_7(%arg0: i32, %arg1: i32, %arg2: i32, %arg3: i32) -> (i32, i32) {
    %c0_i32 = arith.constant 0 : i32
    %c0_i32_0 = arith.constant 0 : i32
    %c0_i32_1 = arith.constant 0 : i32
    return %c0_i32, %c0_i32_0 : i32, i32
  }
  func.func @transform_8(%arg0: i32, %arg1: i32, %arg2: i32, %arg3: i32) -> (i32, i32) {
    %c0_i32 = arith.constant 0 : i32
    %c0_i32_0 = arith.constant 0 : i32
    %c0_i32_1 = arith.constant 0 : i32
    return %c0_i32, %c0_i32_0 : i32, i32
  }
  func.func @transform_9(%arg0: i32, %arg1: i32, %arg2: i32, %arg3: i32) -> (i32, i32, i32, i32, i32) {
    %c0_i32 = arith.constant 0 : i32
    %c0_i32_0 = arith.constant 0 : i32
    %c0_i32_1 = arith.constant 0 : i32
    return %arg0, %arg1, %arg2, %c0_i32, %c0_i32_0 : i32, i32, i32, i32, i32
  }
  func.func @transform_10(%arg0: i32, %arg1: i32, %arg2: i32, %arg3: i32) -> (i32, i32, i32, i32, i32) {
    %c0_i32 = arith.constant 0 : i32
    %c0_i32_0 = arith.constant 0 : i32
    %c0_i32_1 = arith.constant 0 : i32
    return %arg0, %arg1, %arg2, %c0_i32, %c0_i32_0 : i32, i32, i32, i32, i32
  }
}

module attributes {stable_mosaic.version = 11 : i64} {
  func.func @_conv_row_kernel(%arg0: i32, %arg1: i32, %arg2: i32, %arg3: i32, %arg4: memref<1x1x1x10x8xbf16, #tpu.memory_space<vmem>>, %arg5: memref<1x1x1x10x8xbf16, #tpu.memory_space<vmem>>, %arg6: memref<1x1x1x10x8xbf16, #tpu.memory_space<vmem>>, %arg7: memref<1x72x8xbf16, #tpu.memory_space<vmem>>, %arg8: memref<1x8xf32, #tpu.memory_space<vmem>>, %arg9: memref<1x8xf32, #tpu.memory_space<vmem>>, %arg10: memref<1x1x1x8x8xbf16, #tpu.memory_space<vmem>>, %arg11: memref<1x1x1x8x8xbf16, #tpu.memory_space<vmem>>, %arg12: memref<8x8xf32, #tpu.memory_space<vmem>>) attributes {dimension_semantics = [#tpu.dimension_semantics<parallel>, #tpu.dimension_semantics<parallel>, #tpu.dimension_semantics<parallel>, #tpu.dimension_semantics<arbitrary>], iteration_bounds = array<i64: 2, 4, 8, 3>, scalar_prefetch = 0 : i64, scratch_operands = 1 : i64, tpu.core_type = #tpu.core_type<tc>, window_params = [{transform_indices = @transform_0, window_bounds = array<i64: 1, 1, 1, 10, 8>}, {transform_indices = @transform_1, window_bounds = array<i64: 1, 1, 1, 10, 8>}, {transform_indices = @transform_2, window_bounds = array<i64: 1, 1, 1, 10, 8>}, {transform_indices = @transform_3, window_bounds = array<i64: 1, 72, 8>}, {pipeline_mode = #tpu.pipeline_mode<synchronous>, transform_indices = @transform_4, window_bounds = array<i64: 1, 8>}, {pipeline_mode = #tpu.pipeline_mode<synchronous>, transform_indices = @transform_5, window_bounds = array<i64: 1, 8>}, {transform_indices = @transform_6, window_bounds = array<i64: 1, 1, 1, 8, 8>}, {transform_indices = @transform_7, window_bounds = array<i64: 1, 1, 1, 8, 8>}]} {
    %c0_i32 = arith.constant 0 : i32
    %0 = arith.cmpi eq, %arg3, %c0_i32 : i32
    %1 = arith.extui %0 : i1 to i32
    %c0_i32_0 = arith.constant 0 : i32
    %2 = arith.cmpi ne, %1, %c0_i32_0 : i32
    scf.if %2 {
      %cst_31 = arith.constant 0.000000e+00 : f32
      %52 = vector.broadcast %cst_31 : f32 to vector<8x8xf32>
      %c0_32 = arith.constant 0 : index
      %c0_33 = arith.constant 0 : index
      %53 = vector.load %arg12[%c0_32, %c0_33] : memref<8x8xf32, #tpu.memory_space<vmem>>, vector<8x8xf32>
      tpu.vector_store %arg12[%c0_32, %c0_33], %52 {strides = array<i32>} : memref<8x8xf32, #tpu.memory_space<vmem>>, vector<8x8xf32>,
    } else {
    }
    %c0 = arith.constant 0 : index
    %c0_1 = arith.constant 0 : index
    %c0_2 = arith.constant 0 : index
    %3 = vector.load %arg7[%c0, %c0_1, %c0_2] : memref<1x72x8xbf16, #tpu.memory_space<vmem>>, vector<1x72x8xbf16>
    %4 = vector.shape_cast %3 : vector<1x72x8xbf16> to vector<72x8xbf16>
    %c0_3 = arith.constant 0 : index
    %c0_4 = arith.constant 0 : index
    %c0_5 = arith.constant 0 : index
    %c0_6 = arith.constant 0 : index
    %c0_7 = arith.constant 0 : index
    %5 = vector.load %arg4[%c0_3, %c0_4, %c0_5, %c0_6, %c0_7] : memref<1x1x1x10x8xbf16, #tpu.memory_space<vmem>>, vector<1x1x1x10x8xbf16>
    %6 = vector.shape_cast %5 : vector<1x1x1x10x8xbf16> to vector<10x8xbf16>
    %c0_8 = arith.constant 0 : index
    %c0_9 = arith.constant 0 : index
    %c0_10 = arith.constant 0 : index
    %c0_11 = arith.constant 0 : index
    %c0_12 = arith.constant 0 : index
    %7 = vector.load %arg5[%c0_8, %c0_9, %c0_10, %c0_11, %c0_12] : memref<1x1x1x10x8xbf16, #tpu.memory_space<vmem>>, vector<1x1x1x10x8xbf16>
    %8 = vector.shape_cast %7 : vector<1x1x1x10x8xbf16> to vector<10x8xbf16>
    %c0_13 = arith.constant 0 : index
    %c0_14 = arith.constant 0 : index
    %c0_15 = arith.constant 0 : index
    %c0_16 = arith.constant 0 : index
    %c0_17 = arith.constant 0 : index
    %9 = vector.load %arg6[%c0_13, %c0_14, %c0_15, %c0_16, %c0_17] : memref<1x1x1x10x8xbf16, #tpu.memory_space<vmem>>, vector<1x1x1x10x8xbf16>
    %10 = vector.shape_cast %9 : vector<1x1x1x10x8xbf16> to vector<10x8xbf16>
    %11 = vector.extract_strided_slice %6 {offsets = [0, 0], sizes = [8, 8], strides = [1, 1]} : vector<10x8xbf16> to vector<8x8xbf16>
    %12 = vector.extract_strided_slice %4 {offsets = [0, 0], sizes = [8, 8], strides = [1, 1]} : vector<72x8xbf16> to vector<8x8xbf16>
    %cst = arith.constant dense<0.000000e+00> : vector<8x8xf32>
    %13 = tpu.matmul %11, %12, %cst {dimension_numbers = #tpu.dot_dimension_numbers<[1], [0], [0], [1], [0, 0, 1, 1], [], []>} : vector<8x8xbf16>, vector<8x8xbf16>, vector<8x8xf32> -> vector<8x8xf32>
    %14 = vector.extract_strided_slice %6 {offsets = [1, 0], sizes = [8, 8], strides = [1, 1]} : vector<10x8xbf16> to vector<8x8xbf16>
    %15 = vector.extract_strided_slice %4 {offsets = [8, 0], sizes = [8, 8], strides = [1, 1]} : vector<72x8xbf16> to vector<8x8xbf16>
    %cst_18 = arith.constant dense<0.000000e+00> : vector<8x8xf32>
    %16 = tpu.matmul %14, %15, %cst_18 {dimension_numbers = #tpu.dot_dimension_numbers<[1], [0], [0], [1], [0, 0, 1, 1], [], []>} : vector<8x8xbf16>, vector<8x8xbf16>, vector<8x8xf32> -> vector<8x8xf32>
    %17 = arith.addf %13, %16 : vector<8x8xf32>
    %18 = vector.extract_strided_slice %6 {offsets = [2, 0], sizes = [8, 8], strides = [1, 1]} : vector<10x8xbf16> to vector<8x8xbf16>
    %19 = vector.extract_strided_slice %4 {offsets = [16, 0], sizes = [8, 8], strides = [1, 1]} : vector<72x8xbf16> to vector<8x8xbf16>
    %cst_19 = arith.constant dense<0.000000e+00> : vector<8x8xf32>
    %20 = tpu.matmul %18, %19, %cst_19 {dimension_numbers = #tpu.dot_dimension_numbers<[1], [0], [0], [1], [0, 0, 1, 1], [], []>} : vector<8x8xbf16>, vector<8x8xbf16>, vector<8x8xf32> -> vector<8x8xf32>
    %21 = arith.addf %17, %20 : vector<8x8xf32>
    %22 = vector.extract_strided_slice %8 {offsets = [0, 0], sizes = [8, 8], strides = [1, 1]} : vector<10x8xbf16> to vector<8x8xbf16>
    %23 = vector.extract_strided_slice %4 {offsets = [24, 0], sizes = [8, 8], strides = [1, 1]} : vector<72x8xbf16> to vector<8x8xbf16>
    %cst_20 = arith.constant dense<0.000000e+00> : vector<8x8xf32>
    %24 = tpu.matmul %22, %23, %cst_20 {dimension_numbers = #tpu.dot_dimension_numbers<[1], [0], [0], [1], [0, 0, 1, 1], [], []>} : vector<8x8xbf16>, vector<8x8xbf16>, vector<8x8xf32> -> vector<8x8xf32>
    %25 = arith.addf %21, %24 : vector<8x8xf32>
    %26 = vector.extract_strided_slice %8 {offsets = [1, 0], sizes = [8, 8], strides = [1, 1]} : vector<10x8xbf16> to vector<8x8xbf16>
    %27 = vector.extract_strided_slice %4 {offsets = [32, 0], sizes = [8, 8], strides = [1, 1]} : vector<72x8xbf16> to vector<8x8xbf16>
    %cst_21 = arith.constant dense<0.000000e+00> : vector<8x8xf32>
    %28 = tpu.matmul %26, %27, %cst_21 {dimension_numbers = #tpu.dot_dimension_numbers<[1], [0], [0], [1], [0, 0, 1, 1], [], []>} : vector<8x8xbf16>, vector<8x8xbf16>, vector<8x8xf32> -> vector<8x8xf32>
    %29 = arith.addf %25, %28 : vector<8x8xf32>
    %30 = vector.extract_strided_slice %8 {offsets = [2, 0], sizes = [8, 8], strides = [1, 1]} : vector<10x8xbf16> to vector<8x8xbf16>
    %31 = vector.extract_strided_slice %4 {offsets = [40, 0], sizes = [8, 8], strides = [1, 1]} : vector<72x8xbf16> to vector<8x8xbf16>
    %cst_22 = arith.constant dense<0.000000e+00> : vector<8x8xf32>
    %32 = tpu.matmul %30, %31, %cst_22 {dimension_numbers = #tpu.dot_dimension_numbers<[1], [0], [0], [1], [0, 0, 1, 1], [], []>} : vector<8x8xbf16>, vector<8x8xbf16>, vector<8x8xf32> -> vector<8x8xf32>
    %33 = arith.addf %29, %32 : vector<8x8xf32>
    %34 = vector.extract_strided_slice %10 {offsets = [0, 0], sizes = [8, 8], strides = [1, 1]} : vector<10x8xbf16> to vector<8x8xbf16>
    %35 = vector.extract_strided_slice %4 {offsets = [48, 0], sizes = [8, 8], strides = [1, 1]} : vector<72x8xbf16> to vector<8x8xbf16>
    %cst_23 = arith.constant dense<0.000000e+00> : vector<8x8xf32>
    %36 = tpu.matmul %34, %35, %cst_23 {dimension_numbers = #tpu.dot_dimension_numbers<[1], [0], [0], [1], [0, 0, 1, 1], [], []>} : vector<8x8xbf16>, vector<8x8xbf16>, vector<8x8xf32> -> vector<8x8xf32>
    %37 = arith.addf %33, %36 : vector<8x8xf32>
    %38 = vector.extract_strided_slice %10 {offsets = [1, 0], sizes = [8, 8], strides = [1, 1]} : vector<10x8xbf16> to vector<8x8xbf16>
    %39 = vector.extract_strided_slice %4 {offsets = [56, 0], sizes = [8, 8], strides = [1, 1]} : vector<72x8xbf16> to vector<8x8xbf16>
    %cst_24 = arith.constant dense<0.000000e+00> : vector<8x8xf32>
    %40 = tpu.matmul %38, %39, %cst_24 {dimension_numbers = #tpu.dot_dimension_numbers<[1], [0], [0], [1], [0, 0, 1, 1], [], []>} : vector<8x8xbf16>, vector<8x8xbf16>, vector<8x8xf32> -> vector<8x8xf32>
    %41 = arith.addf %37, %40 : vector<8x8xf32>
    %42 = vector.extract_strided_slice %10 {offsets = [2, 0], sizes = [8, 8], strides = [1, 1]} : vector<10x8xbf16> to vector<8x8xbf16>
    %43 = vector.extract_strided_slice %4 {offsets = [64, 0], sizes = [8, 8], strides = [1, 1]} : vector<72x8xbf16> to vector<8x8xbf16>
    %cst_25 = arith.constant dense<0.000000e+00> : vector<8x8xf32>
    %44 = tpu.matmul %42, %43, %cst_25 {dimension_numbers = #tpu.dot_dimension_numbers<[1], [0], [0], [1], [0, 0, 1, 1], [], []>} : vector<8x8xbf16>, vector<8x8xbf16>, vector<8x8xf32> -> vector<8x8xf32>
    %45 = arith.addf %41, %44 : vector<8x8xf32>
    %c0_26 = arith.constant 0 : index
    %c0_27 = arith.constant 0 : index
    %46 = vector.load %arg12[%c0_26, %c0_27] : memref<8x8xf32, #tpu.memory_space<vmem>>, vector<8x8xf32>
    %47 = arith.addf %46, %45 : vector<8x8xf32>
    %c0_28 = arith.constant 0 : index
    %c0_29 = arith.constant 0 : index
    %48 = vector.load %arg12[%c0_28, %c0_29] : memref<8x8xf32, #tpu.memory_space<vmem>>, vector<8x8xf32>
    tpu.vector_store %arg12[%c0_28, %c0_29], %47 {strides = array<i32>} : memref<8x8xf32, #tpu.memory_space<vmem>>, vector<8x8xf32>,
    %c2_i32 = arith.constant 2 : i32
    %49 = arith.cmpi eq, %arg3, %c2_i32 : i32
    %50 = arith.extui %49 : i1 to i32
    %c0_i32_30 = arith.constant 0 : i32
    %51 = arith.cmpi ne, %50, %c0_i32_30 : i32
    scf.if %51 {
      %c0_31 = arith.constant 0 : index
      %c0_32 = arith.constant 0 : index
      %52 = vector.load %arg12[%c0_31, %c0_32] : memref<8x8xf32, #tpu.memory_space<vmem>>, vector<8x8xf32>
      %c0_33 = arith.constant 0 : index
      %c0_34 = arith.constant 0 : index
      %53 = vector.load %arg8[%c0_33, %c0_34] : memref<1x8xf32, #tpu.memory_space<vmem>>, vector<1x8xf32>
      %54 = vector.broadcast %53 : vector<1x8xf32> to vector<8x8xf32>
      %55 = arith.addf %52, %54 : vector<8x8xf32>
      %cst_35 = arith.constant 0.000000e+00 : f32
      %56 = vector.broadcast %cst_35 : f32 to vector<8x8xf32>
      %57 = arith.cmpf oge, %55, %56 : vector<8x8xf32>
      %c0_36 = arith.constant 0 : index
      %c0_37 = arith.constant 0 : index
      %58 = vector.load %arg9[%c0_36, %c0_37] : memref<1x8xf32, #tpu.memory_space<vmem>>, vector<1x8xf32>
      %59 = vector.broadcast %58 : vector<1x8xf32> to vector<8x8xf32>
      %60 = arith.mulf %59, %55 : vector<8x8xf32>
      %61 = arith.select %57, %55, %60 : vector<8x8xi1>, vector<8x8xf32>
      %c0_38 = arith.constant 0 : index
      %c0_39 = arith.constant 0 : index
      %c0_40 = arith.constant 0 : index
      %c0_41 = arith.constant 0 : index
      %c0_42 = arith.constant 0 : index
      %62 = vector.load %arg10[%c0_38, %c0_39, %c0_40, %c0_41, %c0_42] : memref<1x1x1x8x8xbf16, #tpu.memory_space<vmem>>, vector<1x1x1x8x8xbf16>
      %63 = vector.shape_cast %62 : vector<1x1x1x8x8xbf16> to vector<8x8xbf16>
      %64 = arith.extf %63 : vector<8x8xbf16> to vector<8x8xf32>
      %65 = arith.addf %61, %64 : vector<8x8xf32>
      %66 = arith.truncf %65 : vector<8x8xf32> to vector<8x8xbf16>
      %c0_43 = arith.constant 0 : index
      %c0_44 = arith.constant 0 : index
      %c0_45 = arith.constant 0 : index
      %c0_46 = arith.constant 0 : index
      %c0_47 = arith.constant 0 : index
      %67 = vector.load %arg11[%c0_43, %c0_44, %c0_45, %c0_46, %c0_47] : memref<1x1x1x8x8xbf16, #tpu.memory_space<vmem>>, vector<1x1x1x8x8xbf16>
      %68 = vector.shape_cast %67 : vector<1x1x1x8x8xbf16> to vector<8x8xbf16>
      %69 = vector.shape_cast %66 : vector<8x8xbf16> to vector<1x1x1x8x8xbf16>
      tpu.vector_store %arg11[%c0_43, %c0_44, %c0_45, %c0_46, %c0_47], %69 {strides = array<i32>} : memref<1x1x1x8x8xbf16, #tpu.memory_space<vmem>>, vector<1x1x1x8x8xbf16>,
    } else {
    }
    return
  }
  func.func @transform_0(%arg0: i32, %arg1: i32, %arg2: i32, %arg3: i32) -> (i32, i32, i32, i32, i32) {
    %0 = arith.addi %arg1, %arg3 : i32
    %c1_i32 = arith.constant 1 : i32
    %1 = arith.muli %c1_i32, %arg2 : i32
    %c0_i32 = arith.constant 0 : i32
    %2 = arith.addi %1, %c0_i32 : i32
    %c0_i32_0 = arith.constant 0 : i32
    %c0_i32_1 = arith.constant 0 : i32
    %c0_i32_2 = arith.constant 0 : i32
    return %arg0, %0, %2, %c0_i32_0, %c0_i32_1 : i32, i32, i32, i32, i32
  }
  func.func @transform_1(%arg0: i32, %arg1: i32, %arg2: i32, %arg3: i32) -> (i32, i32, i32, i32, i32) {
    %0 = arith.addi %arg1, %arg3 : i32
    %c1_i32 = arith.constant 1 : i32
    %1 = arith.muli %c1_i32, %arg2 : i32
    %c1_i32_0 = arith.constant 1 : i32
    %2 = arith.addi %1, %c1_i32_0 : i32
    %c0_i32 = arith.constant 0 : i32
    %c0_i32_1 = arith.constant 0 : i32
    %c0_i32_2 = arith.constant 0 : i32
    return %arg0, %0, %2, %c0_i32, %c0_i32_1 : i32, i32, i32, i32, i32
  }
  func.func @transform_2(%arg0: i32, %arg1: i32, %arg2: i32, %arg3: i32) -> (i32, i32, i32, i32, i32) {
    %0 = arith.addi %arg1, %arg3 : i32
    %c1_i32 = arith.constant 1 : i32
    %1 = arith.muli %c1_i32, %arg2 : i32
    %c2_i32 = arith.constant 2 : i32
    %2 = arith.addi %1, %c2_i32 : i32
    %c0_i32 = arith.constant 0 : i32
    %c0_i32_0 = arith.constant 0 : i32
    %c0_i32_1 = arith.constant 0 : i32
    return %arg0, %0, %2, %c0_i32, %c0_i32_0 : i32, i32, i32, i32, i32
  }
  func.func @transform_3(%arg0: i32, %arg1: i32, %arg2: i32, %arg3: i32) -> (i32, i32, i32) {
    %c0_i32 = arith.constant 0 : i32
    %c0_i32_0 = arith.constant 0 : i32
    %c0_i32_1 = arith.constant 0 : i32
    return %arg3, %c0_i32, %c0_i32_0 : i32, i32, i32
  }
  func.func @transform_4(%arg0: i32, %arg1: i32, %arg2: i32, %arg3: i32) -> (i32, i32) {
    %c0_i32 = arith.constant 0 : i32
    %c0_i32_0 = arith.constant 0 : i32
    %c0_i32_1 = arith.constant 0 : i32
    return %c0_i32, %c0_i32_0 : i32, i32
  }
  func.func @transform_5(%arg0: i32, %arg1: i32, %arg2: i32, %arg3: i32) -> (i32, i32) {
    %c0_i32 = arith.constant 0 : i32
    %c0_i32_0 = arith.constant 0 : i32
    %c0_i32_1 = arith.constant 0 : i32
    return %c0_i32, %c0_i32_0 : i32, i32
  }
  func.func @transform_6(%arg0: i32, %arg1: i32, %arg2: i32, %arg3: i32) -> (i32, i32, i32, i32, i32) {
    %c0_i32 = arith.constant 0 : i32
    %c0_i32_0 = arith.constant 0 : i32
    %c0_i32_1 = arith.constant 0 : i32
    return %arg0, %arg1, %arg2, %c0_i32, %c0_i32_0 : i32, i32, i32, i32, i32
  }
  func.func @transform_7(%arg0: i32, %arg1: i32, %arg2: i32, %arg3: i32) -> (i32, i32, i32, i32, i32) {
    %c0_i32 = arith.constant 0 : i32
    %c0_i32_0 = arith.constant 0 : i32
    %c0_i32_1 = arith.constant 0 : i32
    return %arg0, %arg1, %arg2, %c0_i32, %c0_i32_0 : i32, i32, i32, i32, i32
  }
}

module attributes {stable_mosaic.version = 11 : i64} {
  func.func @_conv_row_kernel(%arg0: i32, %arg1: i32, %arg2: i32, %arg3: i32, %arg4: memref<1x1x1x5x8xbf16, #tpu.memory_space<vmem>>, %arg5: memref<1x1x1x5x8xbf16, #tpu.memory_space<vmem>>, %arg6: memref<1x1x1x5x8xbf16, #tpu.memory_space<vmem>>, %arg7: memref<1x1x1x5x8xbf16, #tpu.memory_space<vmem>>, %arg8: memref<1x1x1x5x8xbf16, #tpu.memory_space<vmem>>, %arg9: memref<1x1x1x5x8xbf16, #tpu.memory_space<vmem>>, %arg10: memref<1x72x48xbf16, #tpu.memory_space<vmem>>, %arg11: memref<1x48xf32, #tpu.memory_space<vmem>>, %arg12: memref<1x48xf32, #tpu.memory_space<vmem>>, %arg13: memref<1x1x1x4x8xbf16, #tpu.memory_space<vmem>>, %arg14: memref<1x1x1x4x8xbf16, #tpu.memory_space<vmem>>, %arg15: memref<1x1x1x4x16xbf16, #tpu.memory_space<vmem>>, %arg16: memref<1x1x1x4x16xbf16, #tpu.memory_space<vmem>>, %arg17: memref<4x48xf32, #tpu.memory_space<vmem>>) attributes {dimension_semantics = [#tpu.dimension_semantics<parallel>, #tpu.dimension_semantics<parallel>, #tpu.dimension_semantics<parallel>, #tpu.dimension_semantics<arbitrary>], iteration_bounds = array<i64: 2, 4, 4, 3>, scalar_prefetch = 0 : i64, scratch_operands = 1 : i64, tpu.core_type = #tpu.core_type<tc>, window_params = [{transform_indices = @transform_0, window_bounds = array<i64: 1, 1, 1, 5, 8>}, {transform_indices = @transform_1, window_bounds = array<i64: 1, 1, 1, 5, 8>}, {transform_indices = @transform_2, window_bounds = array<i64: 1, 1, 1, 5, 8>}, {transform_indices = @transform_3, window_bounds = array<i64: 1, 1, 1, 5, 8>}, {transform_indices = @transform_4, window_bounds = array<i64: 1, 1, 1, 5, 8>}, {transform_indices = @transform_5, window_bounds = array<i64: 1, 1, 1, 5, 8>}, {transform_indices = @transform_6, window_bounds = array<i64: 1, 72, 48>}, {pipeline_mode = #tpu.pipeline_mode<synchronous>, transform_indices = @transform_7, window_bounds = array<i64: 1, 48>}, {pipeline_mode = #tpu.pipeline_mode<synchronous>, transform_indices = @transform_8, window_bounds = array<i64: 1, 48>}, {transform_indices = @transform_9, window_bounds = array<i64: 1, 1, 1, 4, 8>}, {transform_indices = @transform_10, window_bounds = array<i64: 1, 1, 1, 4, 8>}, {transform_indices = @transform_11, window_bounds = array<i64: 1, 1, 1, 4, 16>}, {transform_indices = @transform_12, window_bounds = array<i64: 1, 1, 1, 4, 16>}]} {
    %c0_i32 = arith.constant 0 : i32
    %0 = arith.cmpi eq, %arg3, %c0_i32 : i32
    %1 = arith.extui %0 : i1 to i32
    %c0_i32_0 = arith.constant 0 : i32
    %2 = arith.cmpi ne, %1, %c0_i32_0 : i32
    scf.if %2 {
      %cst_46 = arith.constant 0.000000e+00 : f32
      %58 = vector.broadcast %cst_46 : f32 to vector<4x48xf32>
      %c0_47 = arith.constant 0 : index
      %c0_48 = arith.constant 0 : index
      %59 = vector.load %arg17[%c0_47, %c0_48] : memref<4x48xf32, #tpu.memory_space<vmem>>, vector<4x48xf32>
      tpu.vector_store %arg17[%c0_47, %c0_48], %58 {strides = array<i32>} : memref<4x48xf32, #tpu.memory_space<vmem>>, vector<4x48xf32>,
    } else {
    }
    %c0 = arith.constant 0 : index
    %c0_1 = arith.constant 0 : index
    %c0_2 = arith.constant 0 : index
    %3 = vector.load %arg10[%c0, %c0_1, %c0_2] : memref<1x72x48xbf16, #tpu.memory_space<vmem>>, vector<1x72x48xbf16>
    %4 = vector.shape_cast %3 : vector<1x72x48xbf16> to vector<72x48xbf16>
    %c0_3 = arith.constant 0 : index
    %c0_4 = arith.constant 0 : index
    %c0_5 = arith.constant 0 : index
    %c0_6 = arith.constant 0 : index
    %c0_7 = arith.constant 0 : index
    %5 = vector.load %arg4[%c0_3, %c0_4, %c0_5, %c0_6, %c0_7] : memref<1x1x1x5x8xbf16, #tpu.memory_space<vmem>>, vector<1x1x1x5x8xbf16>
    %6 = vector.shape_cast %5 : vector<1x1x1x5x8xbf16> to vector<5x8xbf16>
    %c0_8 = arith.constant 0 : index
    %c0_9 = arith.constant 0 : index
    %c0_10 = arith.constant 0 : index
    %c0_11 = arith.constant 0 : index
    %c0_12 = arith.constant 0 : index
    %7 = vector.load %arg5[%c0_8, %c0_9, %c0_10, %c0_11, %c0_12] : memref<1x1x1x5x8xbf16, #tpu.memory_space<vmem>>, vector<1x1x1x5x8xbf16>
    %8 = vector.shape_cast %7 : vector<1x1x1x5x8xbf16> to vector<5x8xbf16>
    %c0_13 = arith.constant 0 : index
    %c0_14 = arith.constant 0 : index
    %c0_15 = arith.constant 0 : index
    %c0_16 = arith.constant 0 : index
    %c0_17 = arith.constant 0 : index
    %9 = vector.load %arg6[%c0_13, %c0_14, %c0_15, %c0_16, %c0_17] : memref<1x1x1x5x8xbf16, #tpu.memory_space<vmem>>, vector<1x1x1x5x8xbf16>
    %10 = vector.shape_cast %9 : vector<1x1x1x5x8xbf16> to vector<5x8xbf16>
    %c0_18 = arith.constant 0 : index
    %c0_19 = arith.constant 0 : index
    %c0_20 = arith.constant 0 : index
    %c0_21 = arith.constant 0 : index
    %c0_22 = arith.constant 0 : index
    %11 = vector.load %arg7[%c0_18, %c0_19, %c0_20, %c0_21, %c0_22] : memref<1x1x1x5x8xbf16, #tpu.memory_space<vmem>>, vector<1x1x1x5x8xbf16>
    %12 = vector.shape_cast %11 : vector<1x1x1x5x8xbf16> to vector<5x8xbf16>
    %c0_23 = arith.constant 0 : index
    %c0_24 = arith.constant 0 : index
    %c0_25 = arith.constant 0 : index
    %c0_26 = arith.constant 0 : index
    %c0_27 = arith.constant 0 : index
    %13 = vector.load %arg8[%c0_23, %c0_24, %c0_25, %c0_26, %c0_27] : memref<1x1x1x5x8xbf16, #tpu.memory_space<vmem>>, vector<1x1x1x5x8xbf16>
    %14 = vector.shape_cast %13 : vector<1x1x1x5x8xbf16> to vector<5x8xbf16>
    %c0_28 = arith.constant 0 : index
    %c0_29 = arith.constant 0 : index
    %c0_30 = arith.constant 0 : index
    %c0_31 = arith.constant 0 : index
    %c0_32 = arith.constant 0 : index
    %15 = vector.load %arg9[%c0_28, %c0_29, %c0_30, %c0_31, %c0_32] : memref<1x1x1x5x8xbf16, #tpu.memory_space<vmem>>, vector<1x1x1x5x8xbf16>
    %16 = vector.shape_cast %15 : vector<1x1x1x5x8xbf16> to vector<5x8xbf16>
    %17 = vector.extract_strided_slice %6 {offsets = [0, 0], sizes = [4, 8], strides = [1, 1]} : vector<5x8xbf16> to vector<4x8xbf16>
    %18 = vector.extract_strided_slice %4 {offsets = [0, 0], sizes = [8, 48], strides = [1, 1]} : vector<72x48xbf16> to vector<8x48xbf16>
    %cst = arith.constant dense<0.000000e+00> : vector<4x48xf32>
    %19 = tpu.matmul %17, %18, %cst {dimension_numbers = #tpu.dot_dimension_numbers<[1], [0], [0], [1], [0, 0, 1, 1], [], []>} : vector<4x8xbf16>, vector<8x48xbf16>, vector<4x48xf32> -> vector<4x48xf32>
    %20 = vector.extract_strided_slice %8 {offsets = [0, 0], sizes = [4, 8], strides = [1, 1]} : vector<5x8xbf16> to vector<4x8xbf16>
    %21 = vector.extract_strided_slice %4 {offsets = [8, 0], sizes = [8, 48], strides = [1, 1]} : vector<72x48xbf16> to vector<8x48xbf16>
    %cst_33 = arith.constant dense<0.000000e+00> : vector<4x48xf32>
    %22 = tpu.matmul %20, %21, %cst_33 {dimension_numbers = #tpu.dot_dimension_numbers<[1], [0], [0], [1], [0, 0, 1, 1], [], []>} : vector<4x8xbf16>, vector<8x48xbf16>, vector<4x48xf32> -> vector<4x48xf32>
    %23 = arith.addf %19, %22 : vector<4x48xf32>
    %24 = vector.extract_strided_slice %6 {offsets = [1, 0], sizes = [4, 8], strides = [1, 1]} : vector<5x8xbf16> to vector<4x8xbf16>
    %25 = vector.extract_strided_slice %4 {offsets = [16, 0], sizes = [8, 48], strides = [1, 1]} : vector<72x48xbf16> to vector<8x48xbf16>
    %cst_34 = arith.constant dense<0.000000e+00> : vector<4x48xf32>
    %26 = tpu.matmul %24, %25, %cst_34 {dimension_numbers = #tpu.dot_dimension_numbers<[1], [0], [0], [1], [0, 0, 1, 1], [], []>} : vector<4x8xbf16>, vector<8x48xbf16>, vector<4x48xf32> -> vector<4x48xf32>
    %27 = arith.addf %23, %26 : vector<4x48xf32>
    %28 = vector.extract_strided_slice %10 {offsets = [0, 0], sizes = [4, 8], strides = [1, 1]} : vector<5x8xbf16> to vector<4x8xbf16>
    %29 = vector.extract_strided_slice %4 {offsets = [24, 0], sizes = [8, 48], strides = [1, 1]} : vector<72x48xbf16> to vector<8x48xbf16>
    %cst_35 = arith.constant dense<0.000000e+00> : vector<4x48xf32>
    %30 = tpu.matmul %28, %29, %cst_35 {dimension_numbers = #tpu.dot_dimension_numbers<[1], [0], [0], [1], [0, 0, 1, 1], [], []>} : vector<4x8xbf16>, vector<8x48xbf16>, vector<4x48xf32> -> vector<4x48xf32>
    %31 = arith.addf %27, %30 : vector<4x48xf32>
    %32 = vector.extract_strided_slice %12 {offsets = [0, 0], sizes = [4, 8], strides = [1, 1]} : vector<5x8xbf16> to vector<4x8xbf16>
    %33 = vector.extract_strided_slice %4 {offsets = [32, 0], sizes = [8, 48], strides = [1, 1]} : vector<72x48xbf16> to vector<8x48xbf16>
    %cst_36 = arith.constant dense<0.000000e+00> : vector<4x48xf32>
    %34 = tpu.matmul %32, %33, %cst_36 {dimension_numbers = #tpu.dot_dimension_numbers<[1], [0], [0], [1], [0, 0, 1, 1], [], []>} : vector<4x8xbf16>, vector<8x48xbf16>, vector<4x48xf32> -> vector<4x48xf32>
    %35 = arith.addf %31, %34 : vector<4x48xf32>
    %36 = vector.extract_strided_slice %10 {offsets = [1, 0], sizes = [4, 8], strides = [1, 1]} : vector<5x8xbf16> to vector<4x8xbf16>
    %37 = vector.extract_strided_slice %4 {offsets = [40, 0], sizes = [8, 48], strides = [1, 1]} : vector<72x48xbf16> to vector<8x48xbf16>
    %cst_37 = arith.constant dense<0.000000e+00> : vector<4x48xf32>
    %38 = tpu.matmul %36, %37, %cst_37 {dimension_numbers = #tpu.dot_dimension_numbers<[1], [0], [0], [1], [0, 0, 1, 1], [], []>} : vector<4x8xbf16>, vector<8x48xbf16>, vector<4x48xf32> -> vector<4x48xf32>
    %39 = arith.addf %35, %38 : vector<4x48xf32>
    %40 = vector.extract_strided_slice %14 {offsets = [0, 0], sizes = [4, 8], strides = [1, 1]} : vector<5x8xbf16> to vector<4x8xbf16>
    %41 = vector.extract_strided_slice %4 {offsets = [48, 0], sizes = [8, 48], strides = [1, 1]} : vector<72x48xbf16> to vector<8x48xbf16>
    %cst_38 = arith.constant dense<0.000000e+00> : vector<4x48xf32>
    %42 = tpu.matmul %40, %41, %cst_38 {dimension_numbers = #tpu.dot_dimension_numbers<[1], [0], [0], [1], [0, 0, 1, 1], [], []>} : vector<4x8xbf16>, vector<8x48xbf16>, vector<4x48xf32> -> vector<4x48xf32>
    %43 = arith.addf %39, %42 : vector<4x48xf32>
    %44 = vector.extract_strided_slice %16 {offsets = [0, 0], sizes = [4, 8], strides = [1, 1]} : vector<5x8xbf16> to vector<4x8xbf16>
    %45 = vector.extract_strided_slice %4 {offsets = [56, 0], sizes = [8, 48], strides = [1, 1]} : vector<72x48xbf16> to vector<8x48xbf16>
    %cst_39 = arith.constant dense<0.000000e+00> : vector<4x48xf32>
    %46 = tpu.matmul %44, %45, %cst_39 {dimension_numbers = #tpu.dot_dimension_numbers<[1], [0], [0], [1], [0, 0, 1, 1], [], []>} : vector<4x8xbf16>, vector<8x48xbf16>, vector<4x48xf32> -> vector<4x48xf32>
    %47 = arith.addf %43, %46 : vector<4x48xf32>
    %48 = vector.extract_strided_slice %14 {offsets = [1, 0], sizes = [4, 8], strides = [1, 1]} : vector<5x8xbf16> to vector<4x8xbf16>
    %49 = vector.extract_strided_slice %4 {offsets = [64, 0], sizes = [8, 48], strides = [1, 1]} : vector<72x48xbf16> to vector<8x48xbf16>
    %cst_40 = arith.constant dense<0.000000e+00> : vector<4x48xf32>
    %50 = tpu.matmul %48, %49, %cst_40 {dimension_numbers = #tpu.dot_dimension_numbers<[1], [0], [0], [1], [0, 0, 1, 1], [], []>} : vector<4x8xbf16>, vector<8x48xbf16>, vector<4x48xf32> -> vector<4x48xf32>
    %51 = arith.addf %47, %50 : vector<4x48xf32>
    %c0_41 = arith.constant 0 : index
    %c0_42 = arith.constant 0 : index
    %52 = vector.load %arg17[%c0_41, %c0_42] : memref<4x48xf32, #tpu.memory_space<vmem>>, vector<4x48xf32>
    %53 = arith.addf %52, %51 : vector<4x48xf32>
    %c0_43 = arith.constant 0 : index
    %c0_44 = arith.constant 0 : index
    %54 = vector.load %arg17[%c0_43, %c0_44] : memref<4x48xf32, #tpu.memory_space<vmem>>, vector<4x48xf32>
    tpu.vector_store %arg17[%c0_43, %c0_44], %53 {strides = array<i32>} : memref<4x48xf32, #tpu.memory_space<vmem>>, vector<4x48xf32>,
    %c2_i32 = arith.constant 2 : i32
    %55 = arith.cmpi eq, %arg3, %c2_i32 : i32
    %56 = arith.extui %55 : i1 to i32
    %c0_i32_45 = arith.constant 0 : i32
    %57 = arith.cmpi ne, %56, %c0_i32_45 : i32
    scf.if %57 {
      %c0_46 = arith.constant 0 : index
      %c0_47 = arith.constant 0 : index
      %58 = vector.load %arg17[%c0_46, %c0_47] : memref<4x48xf32, #tpu.memory_space<vmem>>, vector<4x48xf32>
      %c0_48 = arith.constant 0 : index
      %c0_49 = arith.constant 0 : index
      %59 = vector.load %arg11[%c0_48, %c0_49] : memref<1x48xf32, #tpu.memory_space<vmem>>, vector<1x48xf32>
      %60 = vector.broadcast %59 : vector<1x48xf32> to vector<4x48xf32>
      %61 = arith.addf %58, %60 : vector<4x48xf32>
      %cst_50 = arith.constant 0.000000e+00 : f32
      %62 = vector.broadcast %cst_50 : f32 to vector<4x48xf32>
      %63 = arith.cmpf oge, %61, %62 : vector<4x48xf32>
      %c0_51 = arith.constant 0 : index
      %c0_52 = arith.constant 0 : index
      %64 = vector.load %arg12[%c0_51, %c0_52] : memref<1x48xf32, #tpu.memory_space<vmem>>, vector<1x48xf32>
      %65 = vector.broadcast %64 : vector<1x48xf32> to vector<4x48xf32>
      %66 = arith.mulf %65, %61 : vector<4x48xf32>
      %67 = arith.select %63, %61, %66 : vector<4x48xi1>, vector<4x48xf32>
      %68 = vector.extract_strided_slice %67 {offsets = [0, 0], sizes = [4, 8], strides = [1, 1]} : vector<4x48xf32> to vector<4x8xf32>
      %69 = arith.truncf %68 : vector<4x8xf32> to vector<4x8xbf16>
      %c0_53 = arith.constant 0 : index
      %c0_54 = arith.constant 0 : index
      %c0_55 = arith.constant 0 : index
      %c0_56 = arith.constant 0 : index
      %c0_57 = arith.constant 0 : index
      %70 = vector.load %arg13[%c0_53, %c0_54, %c0_55, %c0_56, %c0_57] : memref<1x1x1x4x8xbf16, #tpu.memory_space<vmem>>, vector<1x1x1x4x8xbf16>
      %71 = vector.shape_cast %70 : vector<1x1x1x4x8xbf16> to vector<4x8xbf16>
      %72 = vector.shape_cast %69 : vector<4x8xbf16> to vector<1x1x1x4x8xbf16>
      tpu.vector_store %arg13[%c0_53, %c0_54, %c0_55, %c0_56, %c0_57], %72 {strides = array<i32>} : memref<1x1x1x4x8xbf16, #tpu.memory_space<vmem>>, vector<1x1x1x4x8xbf16>,
      %73 = vector.extract_strided_slice %67 {offsets = [0, 8], sizes = [4, 8], strides = [1, 1]} : vector<4x48xf32> to vector<4x8xf32>
      %74 = arith.truncf %73 : vector<4x8xf32> to vector<4x8xbf16>
      %c0_58 = arith.constant 0 : index
      %c0_59 = arith.constant 0 : index
      %c0_60 = arith.constant 0 : index
      %c0_61 = arith.constant 0 : index
      %c0_62 = arith.constant 0 : index
      %75 = vector.load %arg14[%c0_58, %c0_59, %c0_60, %c0_61, %c0_62] : memref<1x1x1x4x8xbf16, #tpu.memory_space<vmem>>, vector<1x1x1x4x8xbf16>
      %76 = vector.shape_cast %75 : vector<1x1x1x4x8xbf16> to vector<4x8xbf16>
      %77 = vector.shape_cast %74 : vector<4x8xbf16> to vector<1x1x1x4x8xbf16>
      tpu.vector_store %arg14[%c0_58, %c0_59, %c0_60, %c0_61, %c0_62], %77 {strides = array<i32>} : memref<1x1x1x4x8xbf16, #tpu.memory_space<vmem>>, vector<1x1x1x4x8xbf16>,
      %78 = vector.extract_strided_slice %67 {offsets = [0, 16], sizes = [4, 16], strides = [1, 1]} : vector<4x48xf32> to vector<4x16xf32>
      %79 = arith.truncf %78 : vector<4x16xf32> to vector<4x16xbf16>
      %c0_63 = arith.constant 0 : index
      %c0_64 = arith.constant 0 : index
      %c0_65 = arith.constant 0 : index
      %c0_66 = arith.constant 0 : index
      %c0_67 = arith.constant 0 : index
      %80 = vector.load %arg15[%c0_63, %c0_64, %c0_65, %c0_66, %c0_67] : memref<1x1x1x4x16xbf16, #tpu.memory_space<vmem>>, vector<1x1x1x4x16xbf16>
      %81 = vector.shape_cast %80 : vector<1x1x1x4x16xbf16> to vector<4x16xbf16>
      %82 = vector.shape_cast %79 : vector<4x16xbf16> to vector<1x1x1x4x16xbf16>
      tpu.vector_store %arg15[%c0_63, %c0_64, %c0_65, %c0_66, %c0_67], %82 {strides = array<i32>} : memref<1x1x1x4x16xbf16, #tpu.memory_space<vmem>>, vector<1x1x1x4x16xbf16>,
      %83 = vector.extract_strided_slice %67 {offsets = [0, 32], sizes = [4, 16], strides = [1, 1]} : vector<4x48xf32> to vector<4x16xf32>
      %84 = arith.truncf %83 : vector<4x16xf32> to vector<4x16xbf16>
      %c0_68 = arith.constant 0 : index
      %c0_69 = arith.constant 0 : index
      %c0_70 = arith.constant 0 : index
      %c0_71 = arith.constant 0 : index
      %c0_72 = arith.constant 0 : index
      %85 = vector.load %arg16[%c0_68, %c0_69, %c0_70, %c0_71, %c0_72] : memref<1x1x1x4x16xbf16, #tpu.memory_space<vmem>>, vector<1x1x1x4x16xbf16>
      %86 = vector.shape_cast %85 : vector<1x1x1x4x16xbf16> to vector<4x16xbf16>
      %87 = vector.shape_cast %84 : vector<4x16xbf16> to vector<1x1x1x4x16xbf16>
      tpu.vector_store %arg16[%c0_68, %c0_69, %c0_70, %c0_71, %c0_72], %87 {strides = array<i32>} : memref<1x1x1x4x16xbf16, #tpu.memory_space<vmem>>, vector<1x1x1x4x16xbf16>,
    } else {
    }
    return
  }
  func.func @transform_0(%arg0: i32, %arg1: i32, %arg2: i32, %arg3: i32) -> (i32, i32, i32, i32, i32) {
    %0 = arith.addi %arg1, %arg3 : i32
    %c2_i32 = arith.constant 2 : i32
    %1 = arith.muli %c2_i32, %arg2 : i32
    %c0_i32 = arith.constant 0 : i32
    %2 = arith.addi %1, %c0_i32 : i32
    %c0_i32_0 = arith.constant 0 : i32
    %c0_i32_1 = arith.constant 0 : i32
    %c0_i32_2 = arith.constant 0 : i32
    return %arg0, %0, %2, %c0_i32_0, %c0_i32_1 : i32, i32, i32, i32, i32
  }
  func.func @transform_1(%arg0: i32, %arg1: i32, %arg2: i32, %arg3: i32) -> (i32, i32, i32, i32, i32) {
    %0 = arith.addi %arg1, %arg3 : i32
    %c2_i32 = arith.constant 2 : i32
    %1 = arith.muli %c2_i32, %arg2 : i32
    %c0_i32 = arith.constant 0 : i32
    %2 = arith.addi %1, %c0_i32 : i32
    %c0_i32_0 = arith.constant 0 : i32
    %c0_i32_1 = arith.constant 0 : i32
    %c0_i32_2 = arith.constant 0 : i32
    return %arg0, %0, %2, %c0_i32_0, %c0_i32_1 : i32, i32, i32, i32, i32
  }
  func.func @transform_2(%arg0: i32, %arg1: i32, %arg2: i32, %arg3: i32) -> (i32, i32, i32, i32, i32) {
    %0 = arith.addi %arg1, %arg3 : i32
    %c2_i32 = arith.constant 2 : i32
    %1 = arith.muli %c2_i32, %arg2 : i32
    %c1_i32 = arith.constant 1 : i32
    %2 = arith.addi %1, %c1_i32 : i32
    %c0_i32 = arith.constant 0 : i32
    %c0_i32_0 = arith.constant 0 : i32
    %c0_i32_1 = arith.constant 0 : i32
    return %arg0, %0, %2, %c0_i32, %c0_i32_0 : i32, i32, i32, i32, i32
  }
  func.func @transform_3(%arg0: i32, %arg1: i32, %arg2: i32, %arg3: i32) -> (i32, i32, i32, i32, i32) {
    %0 = arith.addi %arg1, %arg3 : i32
    %c2_i32 = arith.constant 2 : i32
    %1 = arith.muli %c2_i32, %arg2 : i32
    %c1_i32 = arith.constant 1 : i32
    %2 = arith.addi %1, %c1_i32 : i32
    %c0_i32 = arith.constant 0 : i32
    %c0_i32_0 = arith.constant 0 : i32
    %c0_i32_1 = arith.constant 0 : i32
    return %arg0, %0, %2, %c0_i32, %c0_i32_0 : i32, i32, i32, i32, i32
  }
  func.func @transform_4(%arg0: i32, %arg1: i32, %arg2: i32, %arg3: i32) -> (i32, i32, i32, i32, i32) {
    %0 = arith.addi %arg1, %arg3 : i32
    %c2_i32 = arith.constant 2 : i32
    %1 = arith.muli %c2_i32, %arg2 : i32
    %c2_i32_0 = arith.constant 2 : i32
    %2 = arith.addi %1, %c2_i32_0 : i32
    %c0_i32 = arith.constant 0 : i32
    %c0_i32_1 = arith.constant 0 : i32
    %c0_i32_2 = arith.constant 0 : i32
    return %arg0, %0, %2, %c0_i32, %c0_i32_1 : i32, i32, i32, i32, i32
  }
  func.func @transform_5(%arg0: i32, %arg1: i32, %arg2: i32, %arg3: i32) -> (i32, i32, i32, i32, i32) {
    %0 = arith.addi %arg1, %arg3 : i32
    %c2_i32 = arith.constant 2 : i32
    %1 = arith.muli %c2_i32, %arg2 : i32
    %c2_i32_0 = arith.constant 2 : i32
    %2 = arith.addi %1, %c2_i32_0 : i32
    %c0_i32 = arith.constant 0 : i32
    %c0_i32_1 = arith.constant 0 : i32
    %c0_i32_2 = arith.constant 0 : i32
    return %arg0, %0, %2, %c0_i32, %c0_i32_1 : i32, i32, i32, i32, i32
  }
  func.func @transform_6(%arg0: i32, %arg1: i32, %arg2: i32, %arg3: i32) -> (i32, i32, i32) {
    %c0_i32 = arith.constant 0 : i32
    %c0_i32_0 = arith.constant 0 : i32
    %c0_i32_1 = arith.constant 0 : i32
    return %arg3, %c0_i32, %c0_i32_0 : i32, i32, i32
  }
  func.func @transform_7(%arg0: i32, %arg1: i32, %arg2: i32, %arg3: i32) -> (i32, i32) {
    %c0_i32 = arith.constant 0 : i32
    %c0_i32_0 = arith.constant 0 : i32
    %c0_i32_1 = arith.constant 0 : i32
    return %c0_i32, %c0_i32_0 : i32, i32
  }
  func.func @transform_8(%arg0: i32, %arg1: i32, %arg2: i32, %arg3: i32) -> (i32, i32) {
    %c0_i32 = arith.constant 0 : i32
    %c0_i32_0 = arith.constant 0 : i32
    %c0_i32_1 = arith.constant 0 : i32
    return %c0_i32, %c0_i32_0 : i32, i32
  }
  func.func @transform_9(%arg0: i32, %arg1: i32, %arg2: i32, %arg3: i32) -> (i32, i32, i32, i32, i32) {
    %c0_i32 = arith.constant 0 : i32
    %c0_i32_0 = arith.constant 0 : i32
    %c0_i32_1 = arith.constant 0 : i32
    return %arg0, %arg1, %arg2, %c0_i32, %c0_i32_0 : i32, i32, i32, i32, i32
  }
  func.func @transform_10(%arg0: i32, %arg1: i32, %arg2: i32, %arg3: i32) -> (i32, i32, i32, i32, i32) {
    %c0_i32 = arith.constant 0 : i32
    %c0_i32_0 = arith.constant 0 : i32
    %c0_i32_1 = arith.constant 0 : i32
    return %arg0, %arg1, %arg2, %c0_i32, %c0_i32_0 : i32, i32, i32, i32, i32
  }
  func.func @transform_11(%arg0: i32, %arg1: i32, %arg2: i32, %arg3: i32) -> (i32, i32, i32, i32, i32) {
    %c0_i32 = arith.constant 0 : i32
    %c0_i32_0 = arith.constant 0 : i32
    %c0_i32_1 = arith.constant 0 : i32
    return %arg0, %arg1, %arg2, %c0_i32, %c0_i32_0 : i32, i32, i32, i32, i32
  }
  func.func @transform_12(%arg0: i32, %arg1: i32, %arg2: i32, %arg3: i32) -> (i32, i32, i32, i32, i32) {
    %c0_i32 = arith.constant 0 : i32
    %c0_i32_0 = arith.constant 0 : i32
    %c0_i32_1 = arith.constant 0 : i32
    return %arg0, %arg1, %arg2, %c0_i32, %c0_i32_0 : i32, i32, i32, i32, i32
  }
}

module attributes {stable_mosaic.version = 11 : i64} {
  func.func @_conv_row_kernel(%arg0: i32, %arg1: i32, %arg2: i32, %arg3: i32, %arg4: memref<1x1x1x6x8xbf16, #tpu.memory_space<vmem>>, %arg5: memref<1x1x1x6x8xbf16, #tpu.memory_space<vmem>>, %arg6: memref<1x1x1x6x8xbf16, #tpu.memory_space<vmem>>, %arg7: memref<1x72x16xbf16, #tpu.memory_space<vmem>>, %arg8: memref<1x16xf32, #tpu.memory_space<vmem>>, %arg9: memref<1x16xf32, #tpu.memory_space<vmem>>, %arg10: memref<1x1x1x4x16xbf16, #tpu.memory_space<vmem>>, %arg11: memref<1x1x1x4x16xf32, #tpu.memory_space<vmem>>, %arg12: memref<4x16xf32, #tpu.memory_space<vmem>>) attributes {dimension_semantics = [#tpu.dimension_semantics<parallel>, #tpu.dimension_semantics<parallel>, #tpu.dimension_semantics<parallel>, #tpu.dimension_semantics<arbitrary>], iteration_bounds = array<i64: 2, 4, 4, 3>, scalar_prefetch = 0 : i64, scratch_operands = 1 : i64, tpu.core_type = #tpu.core_type<tc>, window_params = [{transform_indices = @transform_0, window_bounds = array<i64: 1, 1, 1, 6, 8>}, {transform_indices = @transform_1, window_bounds = array<i64: 1, 1, 1, 6, 8>}, {transform_indices = @transform_2, window_bounds = array<i64: 1, 1, 1, 6, 8>}, {transform_indices = @transform_3, window_bounds = array<i64: 1, 72, 16>}, {pipeline_mode = #tpu.pipeline_mode<synchronous>, transform_indices = @transform_4, window_bounds = array<i64: 1, 16>}, {pipeline_mode = #tpu.pipeline_mode<synchronous>, transform_indices = @transform_5, window_bounds = array<i64: 1, 16>}, {transform_indices = @transform_6, window_bounds = array<i64: 1, 1, 1, 4, 16>}, {transform_indices = @transform_7, window_bounds = array<i64: 1, 1, 1, 4, 16>}]} {
    %c0_i32 = arith.constant 0 : i32
    %0 = arith.cmpi eq, %arg3, %c0_i32 : i32
    %1 = arith.extui %0 : i1 to i32
    %c0_i32_0 = arith.constant 0 : i32
    %2 = arith.cmpi ne, %1, %c0_i32_0 : i32
    scf.if %2 {
      %cst_31 = arith.constant 0.000000e+00 : f32
      %52 = vector.broadcast %cst_31 : f32 to vector<4x16xf32>
      %c0_32 = arith.constant 0 : index
      %c0_33 = arith.constant 0 : index
      %53 = vector.load %arg12[%c0_32, %c0_33] : memref<4x16xf32, #tpu.memory_space<vmem>>, vector<4x16xf32>
      tpu.vector_store %arg12[%c0_32, %c0_33], %52 {strides = array<i32>} : memref<4x16xf32, #tpu.memory_space<vmem>>, vector<4x16xf32>,
    } else {
    }
    %c0 = arith.constant 0 : index
    %c0_1 = arith.constant 0 : index
    %c0_2 = arith.constant 0 : index
    %3 = vector.load %arg7[%c0, %c0_1, %c0_2] : memref<1x72x16xbf16, #tpu.memory_space<vmem>>, vector<1x72x16xbf16>
    %4 = vector.shape_cast %3 : vector<1x72x16xbf16> to vector<72x16xbf16>
    %c0_3 = arith.constant 0 : index
    %c0_4 = arith.constant 0 : index
    %c0_5 = arith.constant 0 : index
    %c0_6 = arith.constant 0 : index
    %c0_7 = arith.constant 0 : index
    %5 = vector.load %arg4[%c0_3, %c0_4, %c0_5, %c0_6, %c0_7] : memref<1x1x1x6x8xbf16, #tpu.memory_space<vmem>>, vector<1x1x1x6x8xbf16>
    %6 = vector.shape_cast %5 : vector<1x1x1x6x8xbf16> to vector<6x8xbf16>
    %c0_8 = arith.constant 0 : index
    %c0_9 = arith.constant 0 : index
    %c0_10 = arith.constant 0 : index
    %c0_11 = arith.constant 0 : index
    %c0_12 = arith.constant 0 : index
    %7 = vector.load %arg5[%c0_8, %c0_9, %c0_10, %c0_11, %c0_12] : memref<1x1x1x6x8xbf16, #tpu.memory_space<vmem>>, vector<1x1x1x6x8xbf16>
    %8 = vector.shape_cast %7 : vector<1x1x1x6x8xbf16> to vector<6x8xbf16>
    %c0_13 = arith.constant 0 : index
    %c0_14 = arith.constant 0 : index
    %c0_15 = arith.constant 0 : index
    %c0_16 = arith.constant 0 : index
    %c0_17 = arith.constant 0 : index
    %9 = vector.load %arg6[%c0_13, %c0_14, %c0_15, %c0_16, %c0_17] : memref<1x1x1x6x8xbf16, #tpu.memory_space<vmem>>, vector<1x1x1x6x8xbf16>
    %10 = vector.shape_cast %9 : vector<1x1x1x6x8xbf16> to vector<6x8xbf16>
    %11 = vector.extract_strided_slice %6 {offsets = [0, 0], sizes = [4, 8], strides = [1, 1]} : vector<6x8xbf16> to vector<4x8xbf16>
    %12 = vector.extract_strided_slice %4 {offsets = [0, 0], sizes = [8, 16], strides = [1, 1]} : vector<72x16xbf16> to vector<8x16xbf16>
    %cst = arith.constant dense<0.000000e+00> : vector<4x16xf32>
    %13 = tpu.matmul %11, %12, %cst {dimension_numbers = #tpu.dot_dimension_numbers<[1], [0], [0], [1], [0, 0, 1, 1], [], []>} : vector<4x8xbf16>, vector<8x16xbf16>, vector<4x16xf32> -> vector<4x16xf32>
    %14 = vector.extract_strided_slice %6 {offsets = [1, 0], sizes = [4, 8], strides = [1, 1]} : vector<6x8xbf16> to vector<4x8xbf16>
    %15 = vector.extract_strided_slice %4 {offsets = [8, 0], sizes = [8, 16], strides = [1, 1]} : vector<72x16xbf16> to vector<8x16xbf16>
    %cst_18 = arith.constant dense<0.000000e+00> : vector<4x16xf32>
    %16 = tpu.matmul %14, %15, %cst_18 {dimension_numbers = #tpu.dot_dimension_numbers<[1], [0], [0], [1], [0, 0, 1, 1], [], []>} : vector<4x8xbf16>, vector<8x16xbf16>, vector<4x16xf32> -> vector<4x16xf32>
    %17 = arith.addf %13, %16 : vector<4x16xf32>
    %18 = vector.extract_strided_slice %6 {offsets = [2, 0], sizes = [4, 8], strides = [1, 1]} : vector<6x8xbf16> to vector<4x8xbf16>
    %19 = vector.extract_strided_slice %4 {offsets = [16, 0], sizes = [8, 16], strides = [1, 1]} : vector<72x16xbf16> to vector<8x16xbf16>
    %cst_19 = arith.constant dense<0.000000e+00> : vector<4x16xf32>
    %20 = tpu.matmul %18, %19, %cst_19 {dimension_numbers = #tpu.dot_dimension_numbers<[1], [0], [0], [1], [0, 0, 1, 1], [], []>} : vector<4x8xbf16>, vector<8x16xbf16>, vector<4x16xf32> -> vector<4x16xf32>
    %21 = arith.addf %17, %20 : vector<4x16xf32>
    %22 = vector.extract_strided_slice %8 {offsets = [0, 0], sizes = [4, 8], strides = [1, 1]} : vector<6x8xbf16> to vector<4x8xbf16>
    %23 = vector.extract_strided_slice %4 {offsets = [24, 0], sizes = [8, 16], strides = [1, 1]} : vector<72x16xbf16> to vector<8x16xbf16>
    %cst_20 = arith.constant dense<0.000000e+00> : vector<4x16xf32>
    %24 = tpu.matmul %22, %23, %cst_20 {dimension_numbers = #tpu.dot_dimension_numbers<[1], [0], [0], [1], [0, 0, 1, 1], [], []>} : vector<4x8xbf16>, vector<8x16xbf16>, vector<4x16xf32> -> vector<4x16xf32>
    %25 = arith.addf %21, %24 : vector<4x16xf32>
    %26 = vector.extract_strided_slice %8 {offsets = [1, 0], sizes = [4, 8], strides = [1, 1]} : vector<6x8xbf16> to vector<4x8xbf16>
    %27 = vector.extract_strided_slice %4 {offsets = [32, 0], sizes = [8, 16], strides = [1, 1]} : vector<72x16xbf16> to vector<8x16xbf16>
    %cst_21 = arith.constant dense<0.000000e+00> : vector<4x16xf32>
    %28 = tpu.matmul %26, %27, %cst_21 {dimension_numbers = #tpu.dot_dimension_numbers<[1], [0], [0], [1], [0, 0, 1, 1], [], []>} : vector<4x8xbf16>, vector<8x16xbf16>, vector<4x16xf32> -> vector<4x16xf32>
    %29 = arith.addf %25, %28 : vector<4x16xf32>
    %30 = vector.extract_strided_slice %8 {offsets = [2, 0], sizes = [4, 8], strides = [1, 1]} : vector<6x8xbf16> to vector<4x8xbf16>
    %31 = vector.extract_strided_slice %4 {offsets = [40, 0], sizes = [8, 16], strides = [1, 1]} : vector<72x16xbf16> to vector<8x16xbf16>
    %cst_22 = arith.constant dense<0.000000e+00> : vector<4x16xf32>
    %32 = tpu.matmul %30, %31, %cst_22 {dimension_numbers = #tpu.dot_dimension_numbers<[1], [0], [0], [1], [0, 0, 1, 1], [], []>} : vector<4x8xbf16>, vector<8x16xbf16>, vector<4x16xf32> -> vector<4x16xf32>
    %33 = arith.addf %29, %32 : vector<4x16xf32>
    %34 = vector.extract_strided_slice %10 {offsets = [0, 0], sizes = [4, 8], strides = [1, 1]} : vector<6x8xbf16> to vector<4x8xbf16>
    %35 = vector.extract_strided_slice %4 {offsets = [48, 0], sizes = [8, 16], strides = [1, 1]} : vector<72x16xbf16> to vector<8x16xbf16>
    %cst_23 = arith.constant dense<0.000000e+00> : vector<4x16xf32>
    %36 = tpu.matmul %34, %35, %cst_23 {dimension_numbers = #tpu.dot_dimension_numbers<[1], [0], [0], [1], [0, 0, 1, 1], [], []>} : vector<4x8xbf16>, vector<8x16xbf16>, vector<4x16xf32> -> vector<4x16xf32>
    %37 = arith.addf %33, %36 : vector<4x16xf32>
    %38 = vector.extract_strided_slice %10 {offsets = [1, 0], sizes = [4, 8], strides = [1, 1]} : vector<6x8xbf16> to vector<4x8xbf16>
    %39 = vector.extract_strided_slice %4 {offsets = [56, 0], sizes = [8, 16], strides = [1, 1]} : vector<72x16xbf16> to vector<8x16xbf16>
    %cst_24 = arith.constant dense<0.000000e+00> : vector<4x16xf32>
    %40 = tpu.matmul %38, %39, %cst_24 {dimension_numbers = #tpu.dot_dimension_numbers<[1], [0], [0], [1], [0, 0, 1, 1], [], []>} : vector<4x8xbf16>, vector<8x16xbf16>, vector<4x16xf32> -> vector<4x16xf32>
    %41 = arith.addf %37, %40 : vector<4x16xf32>
    %42 = vector.extract_strided_slice %10 {offsets = [2, 0], sizes = [4, 8], strides = [1, 1]} : vector<6x8xbf16> to vector<4x8xbf16>
    %43 = vector.extract_strided_slice %4 {offsets = [64, 0], sizes = [8, 16], strides = [1, 1]} : vector<72x16xbf16> to vector<8x16xbf16>
    %cst_25 = arith.constant dense<0.000000e+00> : vector<4x16xf32>
    %44 = tpu.matmul %42, %43, %cst_25 {dimension_numbers = #tpu.dot_dimension_numbers<[1], [0], [0], [1], [0, 0, 1, 1], [], []>} : vector<4x8xbf16>, vector<8x16xbf16>, vector<4x16xf32> -> vector<4x16xf32>
    %45 = arith.addf %41, %44 : vector<4x16xf32>
    %c0_26 = arith.constant 0 : index
    %c0_27 = arith.constant 0 : index
    %46 = vector.load %arg12[%c0_26, %c0_27] : memref<4x16xf32, #tpu.memory_space<vmem>>, vector<4x16xf32>
    %47 = arith.addf %46, %45 : vector<4x16xf32>
    %c0_28 = arith.constant 0 : index
    %c0_29 = arith.constant 0 : index
    %48 = vector.load %arg12[%c0_28, %c0_29] : memref<4x16xf32, #tpu.memory_space<vmem>>, vector<4x16xf32>
    tpu.vector_store %arg12[%c0_28, %c0_29], %47 {strides = array<i32>} : memref<4x16xf32, #tpu.memory_space<vmem>>, vector<4x16xf32>,
    %c2_i32 = arith.constant 2 : i32
    %49 = arith.cmpi eq, %arg3, %c2_i32 : i32
    %50 = arith.extui %49 : i1 to i32
    %c0_i32_30 = arith.constant 0 : i32
    %51 = arith.cmpi ne, %50, %c0_i32_30 : i32
    scf.if %51 {
      %c0_31 = arith.constant 0 : index
      %c0_32 = arith.constant 0 : index
      %52 = vector.load %arg12[%c0_31, %c0_32] : memref<4x16xf32, #tpu.memory_space<vmem>>, vector<4x16xf32>
      %c0_33 = arith.constant 0 : index
      %c0_34 = arith.constant 0 : index
      %53 = vector.load %arg8[%c0_33, %c0_34] : memref<1x16xf32, #tpu.memory_space<vmem>>, vector<1x16xf32>
      %54 = vector.broadcast %53 : vector<1x16xf32> to vector<4x16xf32>
      %55 = arith.addf %52, %54 : vector<4x16xf32>
      %cst_35 = arith.constant 0.000000e+00 : f32
      %56 = vector.broadcast %cst_35 : f32 to vector<4x16xf32>
      %57 = arith.cmpf oge, %55, %56 : vector<4x16xf32>
      %c0_36 = arith.constant 0 : index
      %c0_37 = arith.constant 0 : index
      %58 = vector.load %arg9[%c0_36, %c0_37] : memref<1x16xf32, #tpu.memory_space<vmem>>, vector<1x16xf32>
      %59 = vector.broadcast %58 : vector<1x16xf32> to vector<4x16xf32>
      %60 = arith.mulf %59, %55 : vector<4x16xf32>
      %61 = arith.select %57, %55, %60 : vector<4x16xi1>, vector<4x16xf32>
      %c0_38 = arith.constant 0 : index
      %c0_39 = arith.constant 0 : index
      %c0_40 = arith.constant 0 : index
      %c0_41 = arith.constant 0 : index
      %c0_42 = arith.constant 0 : index
      %62 = vector.load %arg10[%c0_38, %c0_39, %c0_40, %c0_41, %c0_42] : memref<1x1x1x4x16xbf16, #tpu.memory_space<vmem>>, vector<1x1x1x4x16xbf16>
      %63 = vector.shape_cast %62 : vector<1x1x1x4x16xbf16> to vector<4x16xbf16>
      %64 = arith.extf %63 : vector<4x16xbf16> to vector<4x16xf32>
      %65 = arith.addf %61, %64 : vector<4x16xf32>
      %c0_43 = arith.constant 0 : index
      %c0_44 = arith.constant 0 : index
      %c0_45 = arith.constant 0 : index
      %c0_46 = arith.constant 0 : index
      %c0_47 = arith.constant 0 : index
      %66 = vector.load %arg11[%c0_43, %c0_44, %c0_45, %c0_46, %c0_47] : memref<1x1x1x4x16xf32, #tpu.memory_space<vmem>>, vector<1x1x1x4x16xf32>
      %67 = vector.shape_cast %66 : vector<1x1x1x4x16xf32> to vector<4x16xf32>
      %68 = vector.shape_cast %65 : vector<4x16xf32> to vector<1x1x1x4x16xf32>
      tpu.vector_store %arg11[%c0_43, %c0_44, %c0_45, %c0_46, %c0_47], %68 {strides = array<i32>} : memref<1x1x1x4x16xf32, #tpu.memory_space<vmem>>, vector<1x1x1x4x16xf32>,
    } else {
    }
    return
  }
  func.func @transform_0(%arg0: i32, %arg1: i32, %arg2: i32, %arg3: i32) -> (i32, i32, i32, i32, i32) {
    %0 = arith.addi %arg1, %arg3 : i32
    %c1_i32 = arith.constant 1 : i32
    %1 = arith.muli %c1_i32, %arg2 : i32
    %c0_i32 = arith.constant 0 : i32
    %2 = arith.addi %1, %c0_i32 : i32
    %c0_i32_0 = arith.constant 0 : i32
    %c0_i32_1 = arith.constant 0 : i32
    %c0_i32_2 = arith.constant 0 : i32
    return %arg0, %0, %2, %c0_i32_0, %c0_i32_1 : i32, i32, i32, i32, i32
  }
  func.func @transform_1(%arg0: i32, %arg1: i32, %arg2: i32, %arg3: i32) -> (i32, i32, i32, i32, i32) {
    %0 = arith.addi %arg1, %arg3 : i32
    %c1_i32 = arith.constant 1 : i32
    %1 = arith.muli %c1_i32, %arg2 : i32
    %c1_i32_0 = arith.constant 1 : i32
    %2 = arith.addi %1, %c1_i32_0 : i32
    %c0_i32 = arith.constant 0 : i32
    %c0_i32_1 = arith.constant 0 : i32
    %c0_i32_2 = arith.constant 0 : i32
    return %arg0, %0, %2, %c0_i32, %c0_i32_1 : i32, i32, i32, i32, i32
  }
  func.func @transform_2(%arg0: i32, %arg1: i32, %arg2: i32, %arg3: i32) -> (i32, i32, i32, i32, i32) {
    %0 = arith.addi %arg1, %arg3 : i32
    %c1_i32 = arith.constant 1 : i32
    %1 = arith.muli %c1_i32, %arg2 : i32
    %c2_i32 = arith.constant 2 : i32
    %2 = arith.addi %1, %c2_i32 : i32
    %c0_i32 = arith.constant 0 : i32
    %c0_i32_0 = arith.constant 0 : i32
    %c0_i32_1 = arith.constant 0 : i32
    return %arg0, %0, %2, %c0_i32, %c0_i32_0 : i32, i32, i32, i32, i32
  }
  func.func @transform_3(%arg0: i32, %arg1: i32, %arg2: i32, %arg3: i32) -> (i32, i32, i32) {
    %c0_i32 = arith.constant 0 : i32
    %c0_i32_0 = arith.constant 0 : i32
    %c0_i32_1 = arith.constant 0 : i32
    return %arg3, %c0_i32, %c0_i32_0 : i32, i32, i32
  }
  func.func @transform_4(%arg0: i32, %arg1: i32, %arg2: i32, %arg3: i32) -> (i32, i32) {
    %c0_i32 = arith.constant 0 : i32
    %c0_i32_0 = arith.constant 0 : i32
    %c0_i32_1 = arith.constant 0 : i32
    return %c0_i32, %c0_i32_0 : i32, i32
  }
  func.func @transform_5(%arg0: i32, %arg1: i32, %arg2: i32, %arg3: i32) -> (i32, i32) {
    %c0_i32 = arith.constant 0 : i32
    %c0_i32_0 = arith.constant 0 : i32
    %c0_i32_1 = arith.constant 0 : i32
    return %c0_i32, %c0_i32_0 : i32, i32
  }
  func.func @transform_6(%arg0: i32, %arg1: i32, %arg2: i32, %arg3: i32) -> (i32, i32, i32, i32, i32) {
    %c0_i32 = arith.constant 0 : i32
    %c0_i32_0 = arith.constant 0 : i32
    %c0_i32_1 = arith.constant 0 : i32
    return %arg0, %arg1, %arg2, %c0_i32, %c0_i32_0 : i32, i32, i32, i32, i32
  }
  func.func @transform_7(%arg0: i32, %arg1: i32, %arg2: i32, %arg3: i32) -> (i32, i32, i32, i32, i32) {
    %c0_i32 = arith.constant 0 : i32
    %c0_i32_0 = arith.constant 0 : i32
    %c0_i32_1 = arith.constant 0 : i32
    return %arg0, %arg1, %arg2, %c0_i32, %c0_i32_0 : i32, i32, i32, i32, i32
  }
}

module attributes {stable_mosaic.version = 11 : i64} {
  func.func @_conv_row_kernel(%arg0: i32, %arg1: i32, %arg2: i32, %arg3: i32, %arg4: memref<1x1x1x6x8xbf16, #tpu.memory_space<vmem>>, %arg5: memref<1x1x1x6x8xbf16, #tpu.memory_space<vmem>>, %arg6: memref<1x1x1x6x8xbf16, #tpu.memory_space<vmem>>, %arg7: memref<1x72x16xbf16, #tpu.memory_space<vmem>>, %arg8: memref<1x16xf32, #tpu.memory_space<vmem>>, %arg9: memref<1x1x1x4x16xbf16, #tpu.memory_space<vmem>>, %arg10: memref<1x1x1x4x16xf32, #tpu.memory_space<vmem>>, %arg11: memref<1x1x1x4x16xf32, #tpu.memory_space<vmem>>, %arg12: memref<1x1x1x4x16xf32, #tpu.memory_space<vmem>>, %arg13: memref<1x1x1x4x16xf32, #tpu.memory_space<vmem>>, %arg14: memref<4x16xf32, #tpu.memory_space<vmem>>) attributes {dimension_semantics = [#tpu.dimension_semantics<parallel>, #tpu.dimension_semantics<parallel>, #tpu.dimension_semantics<parallel>, #tpu.dimension_semantics<arbitrary>], iteration_bounds = array<i64: 2, 4, 4, 3>, scalar_prefetch = 0 : i64, scratch_operands = 1 : i64, tpu.core_type = #tpu.core_type<tc>, window_params = [{transform_indices = @transform_0, window_bounds = array<i64: 1, 1, 1, 6, 8>}, {transform_indices = @transform_1, window_bounds = array<i64: 1, 1, 1, 6, 8>}, {transform_indices = @transform_2, window_bounds = array<i64: 1, 1, 1, 6, 8>}, {transform_indices = @transform_3, window_bounds = array<i64: 1, 72, 16>}, {pipeline_mode = #tpu.pipeline_mode<synchronous>, transform_indices = @transform_4, window_bounds = array<i64: 1, 16>}, {transform_indices = @transform_5, window_bounds = array<i64: 1, 1, 1, 4, 16>}, {transform_indices = @transform_6, window_bounds = array<i64: 1, 1, 1, 4, 16>}, {transform_indices = @transform_7, window_bounds = array<i64: 1, 1, 1, 4, 16>}, {transform_indices = @transform_8, window_bounds = array<i64: 1, 1, 1, 4, 16>}, {transform_indices = @transform_9, window_bounds = array<i64: 1, 1, 1, 4, 16>}]} {
    %c0_i32 = arith.constant 0 : i32
    %0 = arith.cmpi eq, %arg3, %c0_i32 : i32
    %1 = arith.extui %0 : i1 to i32
    %c0_i32_0 = arith.constant 0 : i32
    %2 = arith.cmpi ne, %1, %c0_i32_0 : i32
    scf.if %2 {
      %cst_31 = arith.constant 0.000000e+00 : f32
      %52 = vector.broadcast %cst_31 : f32 to vector<4x16xf32>
      %c0_32 = arith.constant 0 : index
      %c0_33 = arith.constant 0 : index
      %53 = vector.load %arg14[%c0_32, %c0_33] : memref<4x16xf32, #tpu.memory_space<vmem>>, vector<4x16xf32>
      tpu.vector_store %arg14[%c0_32, %c0_33], %52 {strides = array<i32>} : memref<4x16xf32, #tpu.memory_space<vmem>>, vector<4x16xf32>,
    } else {
    }
    %c0 = arith.constant 0 : index
    %c0_1 = arith.constant 0 : index
    %c0_2 = arith.constant 0 : index
    %3 = vector.load %arg7[%c0, %c0_1, %c0_2] : memref<1x72x16xbf16, #tpu.memory_space<vmem>>, vector<1x72x16xbf16>
    %4 = vector.shape_cast %3 : vector<1x72x16xbf16> to vector<72x16xbf16>
    %c0_3 = arith.constant 0 : index
    %c0_4 = arith.constant 0 : index
    %c0_5 = arith.constant 0 : index
    %c0_6 = arith.constant 0 : index
    %c0_7 = arith.constant 0 : index
    %5 = vector.load %arg4[%c0_3, %c0_4, %c0_5, %c0_6, %c0_7] : memref<1x1x1x6x8xbf16, #tpu.memory_space<vmem>>, vector<1x1x1x6x8xbf16>
    %6 = vector.shape_cast %5 : vector<1x1x1x6x8xbf16> to vector<6x8xbf16>
    %c0_8 = arith.constant 0 : index
    %c0_9 = arith.constant 0 : index
    %c0_10 = arith.constant 0 : index
    %c0_11 = arith.constant 0 : index
    %c0_12 = arith.constant 0 : index
    %7 = vector.load %arg5[%c0_8, %c0_9, %c0_10, %c0_11, %c0_12] : memref<1x1x1x6x8xbf16, #tpu.memory_space<vmem>>, vector<1x1x1x6x8xbf16>
    %8 = vector.shape_cast %7 : vector<1x1x1x6x8xbf16> to vector<6x8xbf16>
    %c0_13 = arith.constant 0 : index
    %c0_14 = arith.constant 0 : index
    %c0_15 = arith.constant 0 : index
    %c0_16 = arith.constant 0 : index
    %c0_17 = arith.constant 0 : index
    %9 = vector.load %arg6[%c0_13, %c0_14, %c0_15, %c0_16, %c0_17] : memref<1x1x1x6x8xbf16, #tpu.memory_space<vmem>>, vector<1x1x1x6x8xbf16>
    %10 = vector.shape_cast %9 : vector<1x1x1x6x8xbf16> to vector<6x8xbf16>
    %11 = vector.extract_strided_slice %6 {offsets = [0, 0], sizes = [4, 8], strides = [1, 1]} : vector<6x8xbf16> to vector<4x8xbf16>
    %12 = vector.extract_strided_slice %4 {offsets = [0, 0], sizes = [8, 16], strides = [1, 1]} : vector<72x16xbf16> to vector<8x16xbf16>
    %cst = arith.constant dense<0.000000e+00> : vector<4x16xf32>
    %13 = tpu.matmul %11, %12, %cst {dimension_numbers = #tpu.dot_dimension_numbers<[1], [0], [0], [1], [0, 0, 1, 1], [], []>} : vector<4x8xbf16>, vector<8x16xbf16>, vector<4x16xf32> -> vector<4x16xf32>
    %14 = vector.extract_strided_slice %6 {offsets = [1, 0], sizes = [4, 8], strides = [1, 1]} : vector<6x8xbf16> to vector<4x8xbf16>
    %15 = vector.extract_strided_slice %4 {offsets = [8, 0], sizes = [8, 16], strides = [1, 1]} : vector<72x16xbf16> to vector<8x16xbf16>
    %cst_18 = arith.constant dense<0.000000e+00> : vector<4x16xf32>
    %16 = tpu.matmul %14, %15, %cst_18 {dimension_numbers = #tpu.dot_dimension_numbers<[1], [0], [0], [1], [0, 0, 1, 1], [], []>} : vector<4x8xbf16>, vector<8x16xbf16>, vector<4x16xf32> -> vector<4x16xf32>
    %17 = arith.addf %13, %16 : vector<4x16xf32>
    %18 = vector.extract_strided_slice %6 {offsets = [2, 0], sizes = [4, 8], strides = [1, 1]} : vector<6x8xbf16> to vector<4x8xbf16>
    %19 = vector.extract_strided_slice %4 {offsets = [16, 0], sizes = [8, 16], strides = [1, 1]} : vector<72x16xbf16> to vector<8x16xbf16>
    %cst_19 = arith.constant dense<0.000000e+00> : vector<4x16xf32>
    %20 = tpu.matmul %18, %19, %cst_19 {dimension_numbers = #tpu.dot_dimension_numbers<[1], [0], [0], [1], [0, 0, 1, 1], [], []>} : vector<4x8xbf16>, vector<8x16xbf16>, vector<4x16xf32> -> vector<4x16xf32>
    %21 = arith.addf %17, %20 : vector<4x16xf32>
    %22 = vector.extract_strided_slice %8 {offsets = [0, 0], sizes = [4, 8], strides = [1, 1]} : vector<6x8xbf16> to vector<4x8xbf16>
    %23 = vector.extract_strided_slice %4 {offsets = [24, 0], sizes = [8, 16], strides = [1, 1]} : vector<72x16xbf16> to vector<8x16xbf16>
    %cst_20 = arith.constant dense<0.000000e+00> : vector<4x16xf32>
    %24 = tpu.matmul %22, %23, %cst_20 {dimension_numbers = #tpu.dot_dimension_numbers<[1], [0], [0], [1], [0, 0, 1, 1], [], []>} : vector<4x8xbf16>, vector<8x16xbf16>, vector<4x16xf32> -> vector<4x16xf32>
    %25 = arith.addf %21, %24 : vector<4x16xf32>
    %26 = vector.extract_strided_slice %8 {offsets = [1, 0], sizes = [4, 8], strides = [1, 1]} : vector<6x8xbf16> to vector<4x8xbf16>
    %27 = vector.extract_strided_slice %4 {offsets = [32, 0], sizes = [8, 16], strides = [1, 1]} : vector<72x16xbf16> to vector<8x16xbf16>
    %cst_21 = arith.constant dense<0.000000e+00> : vector<4x16xf32>
    %28 = tpu.matmul %26, %27, %cst_21 {dimension_numbers = #tpu.dot_dimension_numbers<[1], [0], [0], [1], [0, 0, 1, 1], [], []>} : vector<4x8xbf16>, vector<8x16xbf16>, vector<4x16xf32> -> vector<4x16xf32>
    %29 = arith.addf %25, %28 : vector<4x16xf32>
    %30 = vector.extract_strided_slice %8 {offsets = [2, 0], sizes = [4, 8], strides = [1, 1]} : vector<6x8xbf16> to vector<4x8xbf16>
    %31 = vector.extract_strided_slice %4 {offsets = [40, 0], sizes = [8, 16], strides = [1, 1]} : vector<72x16xbf16> to vector<8x16xbf16>
    %cst_22 = arith.constant dense<0.000000e+00> : vector<4x16xf32>
    %32 = tpu.matmul %30, %31, %cst_22 {dimension_numbers = #tpu.dot_dimension_numbers<[1], [0], [0], [1], [0, 0, 1, 1], [], []>} : vector<4x8xbf16>, vector<8x16xbf16>, vector<4x16xf32> -> vector<4x16xf32>
    %33 = arith.addf %29, %32 : vector<4x16xf32>
    %34 = vector.extract_strided_slice %10 {offsets = [0, 0], sizes = [4, 8], strides = [1, 1]} : vector<6x8xbf16> to vector<4x8xbf16>
    %35 = vector.extract_strided_slice %4 {offsets = [48, 0], sizes = [8, 16], strides = [1, 1]} : vector<72x16xbf16> to vector<8x16xbf16>
    %cst_23 = arith.constant dense<0.000000e+00> : vector<4x16xf32>
    %36 = tpu.matmul %34, %35, %cst_23 {dimension_numbers = #tpu.dot_dimension_numbers<[1], [0], [0], [1], [0, 0, 1, 1], [], []>} : vector<4x8xbf16>, vector<8x16xbf16>, vector<4x16xf32> -> vector<4x16xf32>
    %37 = arith.addf %33, %36 : vector<4x16xf32>
    %38 = vector.extract_strided_slice %10 {offsets = [1, 0], sizes = [4, 8], strides = [1, 1]} : vector<6x8xbf16> to vector<4x8xbf16>
    %39 = vector.extract_strided_slice %4 {offsets = [56, 0], sizes = [8, 16], strides = [1, 1]} : vector<72x16xbf16> to vector<8x16xbf16>
    %cst_24 = arith.constant dense<0.000000e+00> : vector<4x16xf32>
    %40 = tpu.matmul %38, %39, %cst_24 {dimension_numbers = #tpu.dot_dimension_numbers<[1], [0], [0], [1], [0, 0, 1, 1], [], []>} : vector<4x8xbf16>, vector<8x16xbf16>, vector<4x16xf32> -> vector<4x16xf32>
    %41 = arith.addf %37, %40 : vector<4x16xf32>
    %42 = vector.extract_strided_slice %10 {offsets = [2, 0], sizes = [4, 8], strides = [1, 1]} : vector<6x8xbf16> to vector<4x8xbf16>
    %43 = vector.extract_strided_slice %4 {offsets = [64, 0], sizes = [8, 16], strides = [1, 1]} : vector<72x16xbf16> to vector<8x16xbf16>
    %cst_25 = arith.constant dense<0.000000e+00> : vector<4x16xf32>
    %44 = tpu.matmul %42, %43, %cst_25 {dimension_numbers = #tpu.dot_dimension_numbers<[1], [0], [0], [1], [0, 0, 1, 1], [], []>} : vector<4x8xbf16>, vector<8x16xbf16>, vector<4x16xf32> -> vector<4x16xf32>
    %45 = arith.addf %41, %44 : vector<4x16xf32>
    %c0_26 = arith.constant 0 : index
    %c0_27 = arith.constant 0 : index
    %46 = vector.load %arg14[%c0_26, %c0_27] : memref<4x16xf32, #tpu.memory_space<vmem>>, vector<4x16xf32>
    %47 = arith.addf %46, %45 : vector<4x16xf32>
    %c0_28 = arith.constant 0 : index
    %c0_29 = arith.constant 0 : index
    %48 = vector.load %arg14[%c0_28, %c0_29] : memref<4x16xf32, #tpu.memory_space<vmem>>, vector<4x16xf32>
    tpu.vector_store %arg14[%c0_28, %c0_29], %47 {strides = array<i32>} : memref<4x16xf32, #tpu.memory_space<vmem>>, vector<4x16xf32>,
    %c2_i32 = arith.constant 2 : i32
    %49 = arith.cmpi eq, %arg3, %c2_i32 : i32
    %50 = arith.extui %49 : i1 to i32
    %c0_i32_30 = arith.constant 0 : i32
    %51 = arith.cmpi ne, %50, %c0_i32_30 : i32
    scf.if %51 {
      %c0_31 = arith.constant 0 : index
      %c0_32 = arith.constant 0 : index
      %52 = vector.load %arg14[%c0_31, %c0_32] : memref<4x16xf32, #tpu.memory_space<vmem>>, vector<4x16xf32>
      %c0_33 = arith.constant 0 : index
      %c0_34 = arith.constant 0 : index
      %53 = vector.load %arg8[%c0_33, %c0_34] : memref<1x16xf32, #tpu.memory_space<vmem>>, vector<1x16xf32>
      %54 = vector.broadcast %53 : vector<1x16xf32> to vector<4x16xf32>
      %55 = arith.addf %52, %54 : vector<4x16xf32>
      %c0_35 = arith.constant 0 : index
      %c0_36 = arith.constant 0 : index
      %c0_37 = arith.constant 0 : index
      %c0_38 = arith.constant 0 : index
      %c0_39 = arith.constant 0 : index
      %56 = vector.load %arg9[%c0_35, %c0_36, %c0_37, %c0_38, %c0_39] : memref<1x1x1x4x16xbf16, #tpu.memory_space<vmem>>, vector<1x1x1x4x16xbf16>
      %57 = vector.shape_cast %56 : vector<1x1x1x4x16xbf16> to vector<4x16xbf16>
      %58 = arith.extf %57 : vector<4x16xbf16> to vector<4x16xf32>
      %59 = arith.addf %55, %58 : vector<4x16xf32>
      %c0_40 = arith.constant 0 : index
      %c0_41 = arith.constant 0 : index
      %c0_42 = arith.constant 0 : index
      %c0_43 = arith.constant 0 : index
      %c0_44 = arith.constant 0 : index
      %60 = vector.load %arg12[%c0_40, %c0_41, %c0_42, %c0_43, %c0_44] : memref<1x1x1x4x16xf32, #tpu.memory_space<vmem>>, vector<1x1x1x4x16xf32>
      %61 = vector.shape_cast %60 : vector<1x1x1x4x16xf32> to vector<4x16xf32>
      %62 = vector.shape_cast %59 : vector<4x16xf32> to vector<1x1x1x4x16xf32>
      tpu.vector_store %arg12[%c0_40, %c0_41, %c0_42, %c0_43, %c0_44], %62 {strides = array<i32>} : memref<1x1x1x4x16xf32, #tpu.memory_space<vmem>>, vector<1x1x1x4x16xf32>,
      %c0_45 = arith.constant 0 : index
      %c0_46 = arith.constant 0 : index
      %c0_47 = arith.constant 0 : index
      %c0_48 = arith.constant 0 : index
      %c0_49 = arith.constant 0 : index
      %63 = vector.load %arg10[%c0_45, %c0_46, %c0_47, %c0_48, %c0_49] : memref<1x1x1x4x16xf32, #tpu.memory_space<vmem>>, vector<1x1x1x4x16xf32>
      %64 = vector.shape_cast %63 : vector<1x1x1x4x16xf32> to vector<4x16xf32>
      %c0_50 = arith.constant 0 : index
      %c0_51 = arith.constant 0 : index
      %c0_52 = arith.constant 0 : index
      %c0_53 = arith.constant 0 : index
      %c0_54 = arith.constant 0 : index
      %65 = vector.load %arg11[%c0_50, %c0_51, %c0_52, %c0_53, %c0_54] : memref<1x1x1x4x16xf32, #tpu.memory_space<vmem>>, vector<1x1x1x4x16xf32>
      %66 = vector.shape_cast %65 : vector<1x1x1x4x16xf32> to vector<4x16xf32>
      %67 = math.exp %59 : vector<4x16xf32>
      %68 = arith.mulf %66, %67 : vector<4x16xf32>
      %69 = arith.addf %64, %68 : vector<4x16xf32>
      %c0_55 = arith.constant 0 : index
      %c0_56 = arith.constant 0 : index
      %c0_57 = arith.constant 0 : index
      %c0_58 = arith.constant 0 : index
      %c0_59 = arith.constant 0 : index
      %70 = vector.load %arg13[%c0_55, %c0_56, %c0_57, %c0_58, %c0_59] : memref<1x1x1x4x16xf32, #tpu.memory_space<vmem>>, vector<1x1x1x4x16xf32>
      %71 = vector.shape_cast %70 : vector<1x1x1x4x16xf32> to vector<4x16xf32>
      %72 = vector.shape_cast %69 : vector<4x16xf32> to vector<1x1x1x4x16xf32>
      tpu.vector_store %arg13[%c0_55, %c0_56, %c0_57, %c0_58, %c0_59], %72 {strides = array<i32>} : memref<1x1x1x4x16xf32, #tpu.memory_space<vmem>>, vector<1x1x1x4x16xf32>,
    } else {
    }
    return
  }
  func.func @transform_0(%arg0: i32, %arg1: i32, %arg2: i32, %arg3: i32) -> (i32, i32, i32, i32, i32) {
    %0 = arith.addi %arg1, %arg3 : i32
    %c1_i32 = arith.constant 1 : i32
    %1 = arith.muli %c1_i32, %arg2 : i32
    %c0_i32 = arith.constant 0 : i32
    %2 = arith.addi %1, %c0_i32 : i32
    %c0_i32_0 = arith.constant 0 : i32
    %c0_i32_1 = arith.constant 0 : i32
    %c0_i32_2 = arith.constant 0 : i32
    return %arg0, %0, %2, %c0_i32_0, %c0_i32_1 : i32, i32, i32, i32, i32
  }
  func.func @transform_1(%arg0: i32, %arg1: i32, %arg2: i32, %arg3: i32) -> (i32, i32, i32, i32, i32) {
    %0 = arith.addi %arg1, %arg3 : i32
    %c1_i32 = arith.constant 1 : i32
    %1 = arith.muli %c1_i32, %arg2 : i32
    %c1_i32_0 = arith.constant 1 : i32
    %2 = arith.addi %1, %c1_i32_0 : i32
    %c0_i32 = arith.constant 0 : i32
    %c0_i32_1 = arith.constant 0 : i32
    %c0_i32_2 = arith.constant 0 : i32
    return %arg0, %0, %2, %c0_i32, %c0_i32_1 : i32, i32, i32, i32, i32
  }
  func.func @transform_2(%arg0: i32, %arg1: i32, %arg2: i32, %arg3: i32) -> (i32, i32, i32, i32, i32) {
    %0 = arith.addi %arg1, %arg3 : i32
    %c1_i32 = arith.constant 1 : i32
    %1 = arith.muli %c1_i32, %arg2 : i32
    %c2_i32 = arith.constant 2 : i32
    %2 = arith.addi %1, %c2_i32 : i32
    %c0_i32 = arith.constant 0 : i32
    %c0_i32_0 = arith.constant 0 : i32
    %c0_i32_1 = arith.constant 0 : i32
    return %arg0, %0, %2, %c0_i32, %c0_i32_0 : i32, i32, i32, i32, i32
  }
  func.func @transform_3(%arg0: i32, %arg1: i32, %arg2: i32, %arg3: i32) -> (i32, i32, i32) {
    %c0_i32 = arith.constant 0 : i32
    %c0_i32_0 = arith.constant 0 : i32
    %c0_i32_1 = arith.constant 0 : i32
    return %arg3, %c0_i32, %c0_i32_0 : i32, i32, i32
  }
  func.func @transform_4(%arg0: i32, %arg1: i32, %arg2: i32, %arg3: i32) -> (i32, i32) {
    %c0_i32 = arith.constant 0 : i32
    %c0_i32_0 = arith.constant 0 : i32
    %c0_i32_1 = arith.constant 0 : i32
    return %c0_i32, %c0_i32_0 : i32, i32
  }
  func.func @transform_5(%arg0: i32, %arg1: i32, %arg2: i32, %arg3: i32) -> (i32, i32, i32, i32, i32) {
    %c0_i32 = arith.constant 0 : i32
    %c0_i32_0 = arith.constant 0 : i32
    %c0_i32_1 = arith.constant 0 : i32
    return %arg0, %arg1, %arg2, %c0_i32, %c0_i32_0 : i32, i32, i32, i32, i32
  }
  func.func @transform_6(%arg0: i32, %arg1: i32, %arg2: i32, %arg3: i32) -> (i32, i32, i32, i32, i32) {
    %c0_i32 = arith.constant 0 : i32
    %c0_i32_0 = arith.constant 0 : i32
    %c0_i32_1 = arith.constant 0 : i32
    return %arg0, %arg1, %arg2, %c0_i32, %c0_i32_0 : i32, i32, i32, i32, i32
  }
  func.func @transform_7(%arg0: i32, %arg1: i32, %arg2: i32, %arg3: i32) -> (i32, i32, i32, i32, i32) {
    %c0_i32 = arith.constant 0 : i32
    %c0_i32_0 = arith.constant 0 : i32
    %c0_i32_1 = arith.constant 0 : i32
    return %arg0, %arg1, %arg2, %c0_i32, %c0_i32_0 : i32, i32, i32, i32, i32
  }
  func.func @transform_8(%arg0: i32, %arg1: i32, %arg2: i32, %arg3: i32) -> (i32, i32, i32, i32, i32) {
    %c0_i32 = arith.constant 0 : i32
    %c0_i32_0 = arith.constant 0 : i32
    %c0_i32_1 = arith.constant 0 : i32
    return %arg0, %arg1, %arg2, %c0_i32, %c0_i32_0 : i32, i32, i32, i32, i32
  }
  func.func @transform_9(%arg0: i32, %arg1: i32, %arg2: i32, %arg3: i32) -> (i32, i32, i32, i32, i32) {
    %c0_i32 = arith.constant 0 : i32
    %c0_i32_0 = arith.constant 0 : i32
    %c0_i32_1 = arith.constant 0 : i32
    return %arg0, %arg1, %arg2, %c0_i32, %c0_i32_0 : i32, i32, i32, i32, i32
  }
}

</mosaic_0001>

<llo_original>
// kernel: encoder_forward.6
$region0: #{encoder_forward.6}
  #allocation0 [shape = 'u32[]', space=smem, size = 0x4, offset = 0x4, fixed_abs, tag = 'smem constant byte address 0x4 - core index']
  #allocation1 [shape = 'u32[72,128]{1,0:T(1,128)}', space=vmem, size = 0x9000, scoped, tag = 'internal scratch']
  #allocation2 [shape = 'f32[16,8]{1,0:T(8,128)}', space=vmem, size = 0x2000, scoped, tag = 'scratch operand']
  %s0 = inlined_call_operand.vmem [shape: bf16[2,6,18,18,2], index: 0, kind: input, shape index: {}, may-alias: {0,1,2}]
  %s1 = inlined_call_operand.vmem [shape: bf16[2,6,18,18,2], index: 1, kind: input, shape index: {}, may-alias: {0,1,2}]
  %s2 = inlined_call_operand.vmem [shape: bf16[2,6,18,18,2], index: 2, kind: input, shape index: {}, may-alias: {0,1,2}]
  %s3 = inlined_call_operand.vmem [shape: bf16[3,18,8], index: 3, kind: input, shape index: {}]
  %s4 = inlined_call_operand.vmem [shape: f32[1,8], index: 4, kind: input, shape index: {}]
  %s5 = inlined_call_operand.vmem [shape: f32[1,8], index: 5, kind: input, shape index: {}]
  %s6 = inlined_call_operand.vmem [shape: bf16[2,4,16,16,8], index: 6, kind: output, shape index: {}]
  %s7 = sld [smem:[#allocation0]]
  $region65: #{encoder_forward.6} parent=0
    _
  %s9 = ssub.s32 1, %s7
  %s10 = scalar_select 0, %s9, %s7
  loop: start=0, step=1, limit=386
  $region2: #{encoder_forward.6} parent=0 // loop_pre_header
    _
  $region3: #{encoder_forward.6} parent=0 // loop_header
    %s12 = sphi 0, %s16
    %p13 = scmp.ge.s32.totalorder %s12, 386
    %s19 = sphi 0, %s45
    %s20 = sphi 0, %s41
    %s21 = sphi 0, %s37
    %s22 = sphi 0, %s33
    %s23 = sphi 0, %s19
    %s24 = sphi 0, %s20
    %s25 = sphi 0, %s21
    %s26 = sphi 0, %s22
    %s27 = sphi 0, %s23
    %s28 = sphi 0, %s24
    %s29 = sphi 0, %s25
    %s30 = sphi 0, %s26
    %s54 = sphi 0, %s56
    %s57 = sphi 0, %s54
    %s58 = sphi 0, %s57
    %s74 = sphi 0, %s58
    %s88 = sphi 0, %s90
    %s91 = sphi 0, %s88
    %s92 = sphi 0, %s91
    %s108 = sphi 0, %s92
    %s122 = sphi 0, %s124
    %s125 = sphi 0, %s122
    %s126 = sphi 0, %s125
    %s142 = sphi 0, %s126
    %s148 = sphi 0, %s150
    %s151 = sphi 0, %s148
    %s152 = sphi 0, %s151
    %s168 = sphi 0, %s152
    %s172 = sphi 0, %s172
    %s174 = sphi 0, %s172
    %s175 = sphi 0, %s174
    %s189 = sphi 0, %s175
    %s193 = sphi 0, %s193
    %s195 = sphi 0, %s193
    %s196 = sphi 0, %s195
    %s210 = sphi 0, %s196
    %s220 = sphi 0, %s222
    %s223 = sphi 0, %s220
    %s224 = sphi 0, %s223
    %s240 = sphi 0, %s224
  $region4: #{encoder_forward.6} parent=0 // loop_header_branch
    %15 = sbr.rel (%p13) target = $region8
  $region5: #{encoder_forward.6} parent=0 // loop_body
    %s17 = ssub.s32 %s12, 1
    %s18 = ssub.s32 %s12, 2
    %s31 = sadd.s32 1, %s22
    %p32 = scmp.ge.s32.totalorder %s31, 3
    %s33 = scalar_select %p32, 0, %s31
    %s34 = sadd.s32 1, %s21
    %s35 = scalar_select %p32, %s34, %s21
    %p36 = scmp.ge.s32.totalorder %s35, 16
    %s37 = scalar_select %p36, 0, %s35
    %s38 = sadd.s32 1, %s20
    %s39 = scalar_select %p36, %s38, %s20
    %p40 = scmp.ge.s32.totalorder %s39, 4
    %s41 = scalar_select %p40, 0, %s39
    %s42 = sadd.s32 1, %s19
    %s43 = scalar_select %p40, %s42, %s19
    %p44 = scmp.ge.s32.totalorder %s43, 2
    %s45 = scalar_select %p44, 0, %s43
    %s46 = sadd.s32 %s20, %s22
    %s47 = sadd.s32 %s41, %s33
    %s48 = ssub.s32 %s19, %s45
    %s49 = ssub.s32 %s46, %s47
    %s50 = sor.u32 %s48, %s49
    %s51 = ssub.s32 %s21, %s37
    %s52 = sor.u32 %s50, %s51
    %p53 = scmp.eq.s32.totalorder %s52, 0
    %s55 = sadd.s32 %s54, 1
    %s56 = scalar_select %p53, %s54, %s55
    %p59 = pneg %p53
    %p60 = scmp.eq.s32.totalorder %s12, 383
    %p61 = por %p59, %p60
    %p62 = scmp.ne.s32.totalorder %s54, %s57
    %p63 = scmp.eq.s32.totalorder %s12, 0
    %p64 = por %p62, %p63
    %p65 = scmp.ne.s32.totalorder %s54, %s57
    %p66 = scmp.eq.s32.totalorder %s17, 383
    %p67 = por %p65, %p66
    %p68 = scmp.ne.s32.totalorder %s57, %s58
    %p69 = scmp.eq.s32.totalorder %s17, 0
    %p70 = por %p68, %p69
    %p71 = scmp.ne.s32.totalorder %s57, %s58
    %p72 = scmp.eq.s32.totalorder %s18, 383
    %p73 = por %p71, %p72
    %p75 = scmp.ne.s32.totalorder %s58, %s74
    %p76 = scmp.eq.s32.totalorder %s18, 0
    %p77 = por %p75, %p76
    %s78 = sadd.s32 %s20, %s22
    %s79 = sadd.s32 %s21, 1
    %s80 = sadd.s32 %s41, %s33
    %s81 = sadd.s32 %s37, 1
    %s82 = ssub.s32 %s19, %s45
    %s83 = ssub.s32 %s78, %s80
    %s84 = sor.u32 %s82, %s83
    %s85 = ssub.s32 %s79, %s81
    %s86 = sor.u32 %s84, %s85
    %p87 = scmp.eq.s32.totalorder %s86, 0
    %s89 = sadd.s32 %s88, 1
    %s90 = scalar_select %p87, %s88, %s89
    %p93 = pneg %p87
    %p94 = scmp.eq.s32.totalorder %s12, 383
    %p95 = por %p93, %p94
    %p96 = scmp.ne.s32.totalorder %s88, %s91
    %p97 = scmp.eq.s32.totalorder %s12, 0
    %p98 = por %p96, %p97
    %p99 = scmp.ne.s32.totalorder %s88, %s91
    %p100 = scmp.eq.s32.totalorder %s17, 383
    %p101 = por %p99, %p100
    %p102 = scmp.ne.s32.totalorder %s91, %s92
    %p103 = scmp.eq.s32.totalorder %s17, 0
    %p104 = por %p102, %p103
    %p105 = scmp.ne.s32.totalorder %s91, %s92
    %p106 = scmp.eq.s32.totalorder %s18, 383
    %p107 = por %p105, %p106
    %p109 = scmp.ne.s32.totalorder %s92, %s108
    %p110 = scmp.eq.s32.totalorder %s18, 0
    %p111 = por %p109, %p110
    %s112 = sadd.s32 %s20, %s22
    %s113 = sadd.s32 %s21, 2
    %s114 = sadd.s32 %s41, %s33
    %s115 = sadd.s32 %s37, 2
    %s116 = ssub.s32 %s19, %s45
    %s117 = ssub.s32 %s112, %s114
    %s118 = sor.u32 %s116, %s117
    %s119 = ssub.s32 %s113, %s115
    %s120 = sor.u32 %s118, %s119
    %p121 = scmp.eq.s32.totalorder %s120, 0
    %s123 = sadd.s32 %s122, 1
    %s124 = scalar_select %p121, %s122, %s123
    %p127 = pneg %p121
    %p128 = scmp.eq.s32.totalorder %s12, 383
    %p129 = por %p127, %p128
    %p130 = scmp.ne.s32.totalorder %s122, %s125
    %p131 = scmp.eq.s32.totalorder %s12, 0
    %p132 = por %p130, %p131
    %p133 = scmp.ne.s32.totalorder %s122, %s125
    %p134 = scmp.eq.s32.totalorder %s17, 383
    %p135 = por %p133, %p134
    %p136 = scmp.ne.s32.totalorder %s125, %s126
    %p137 = scmp.eq.s32.totalorder %s17, 0
    %p138 = por %p136, %p137
    %p139 = scmp.ne.s32.totalorder %s125, %s126
    %p140 = scmp.eq.s32.totalorder %s18, 383
    %p141 = por %p139, %p140
    %p143 = scmp.ne.s32.totalorder %s126, %s142
    %p144 = scmp.eq.s32.totalorder %s18, 0
    %p145 = por %p143, %p144
    %s146 = ssub.s32 %s22, %s33
    %p147 = scmp.eq.s32.totalorder %s146, 0
    %s149 = sadd.s32 %s148, 1
    %s150 = scalar_select %p147, %s148, %s149
    %p153 = pneg %p147
    %p154 = scmp.eq.s32.totalorder %s12, 383
    %p155 = por %p153, %p154
    %p156 = scmp.ne.s32.totalorder %s148, %s151
    %p157 = scmp.eq.s32.totalorder %s12, 0
    %p158 = por %p156, %p157
    %p159 = scmp.ne.s32.totalorder %s148, %s151
    %p160 = scmp.eq.s32.totalorder %s17, 383
    %p161 = por %p159, %p160
    %p162 = scmp.ne.s32.totalorder %s151, %s152
    %p163 = scmp.eq.s32.totalorder %s17, 0
    %p164 = por %p162, %p163
    %p165 = scmp.ne.s32.totalorder %s151, %s152
    %p166 = scmp.eq.s32.totalorder %s18, 383
    %p167 = por %p165, %p166
    %p169 = scmp.ne.s32.totalorder %s152, %s168
    %p170 = scmp.eq.s32.totalorder %s18, 0
    %p171 = por %p169, %p170
    %s173 = sadd.s32 %s172, 1
    %p176 = scmp.eq.s32.totalorder %s12, 383
    %p177 = scmp.ne.s32.totalorder %s172, %s174
    %p178 = scmp.eq.s32.totalorder %s12, 0
    %p179 = por %p177, %p178
    %p180 = scmp.ne.s32.totalorder %s172, %s174
    %p181 = scmp.eq.s32.totalorder %s17, 383
    %p182 = por %p180, %p181
    %p183 = scmp.ne.s32.totalorder %s174, %s175
    %p184 = scmp.eq.s32.totalorder %s17, 0
    %p185 = por %p183, %p184
    %p186 = scmp.ne.s32.totalorder %s174, %s175
    %p187 = scmp.eq.s32.totalorder %s18, 383
    %p188 = por %p186, %p187
    %p190 = scmp.ne.s32.totalorder %s175, %s189
    %p191 = scmp.eq.s32.totalorder %s18, 0
    %p192 = por %p190, %p191
    %s194 = sadd.s32 %s193, 1
    %p197 = scmp.eq.s32.totalorder %s12, 383
    %p198 = scmp.ne.s32.totalorder %s193, %s195
    %p199 = scmp.eq.s32.totalorder %s12, 0
    %p200 = por %p198, %p199
    %p201 = scmp.ne.s32.totalorder %s193, %s195
    %p202 = scmp.eq.s32.totalorder %s17, 383
    %p203 = por %p201, %p202
    %p204 = scmp.ne.s32.totalorder %s195, %s196
    %p205 = scmp.eq.s32.totalorder %s17, 0
    %p206 = por %p204, %p205
    %p207 = scmp.ne.s32.totalorder %s195, %s196
    %p208 = scmp.eq.s32.totalorder %s18, 383
    %p209 = por %p207, %p208
    %p211 = scmp.ne.s32.totalorder %s196, %s210
    %p212 = scmp.eq.s32.totalorder %s18, 0
    %p213 = por %p211, %p212
    %s214 = ssub.s32 %s19, %s45
    %s215 = ssub.s32 %s20, %s41
    %s216 = sor.u32 %s214, %s215
    %s217 = ssub.s32 %s21, %s37
    %s218 = sor.u32 %s216, %s217
    %p219 = scmp.eq.s32.totalorder %s218, 0
    %s221 = sadd.s32 %s220, 1
    %s222 = scalar_select %p219, %s220, %s221
    %p225 = pneg %p219
    %p226 = scmp.eq.s32.totalorder %s12, 383
    %p227 = por %p225, %p226
    %p228 = scmp.ne.s32.totalorder %s220, %s223
    %p229 = scmp.eq.s32.totalorder %s12, 0
    %p230 = por %p228, %p229
    %p231 = scmp.ne.s32.totalorder %s220, %s223
    %p232 = scmp.eq.s32.totalorder %s17, 383
    %p233 = por %p231, %p232
    %p234 = scmp.ne.s32.totalorder %s223, %s224
    %p235 = scmp.eq.s32.totalorder %s17, 0
    %p236 = por %p234, %p235
    %p237 = scmp.ne.s32.totalorder %s223, %s224
    %p238 = scmp.eq.s32.totalorder %s18, 383
    %p239 = por %p237, %p238
    %p241 = scmp.ne.s32.totalorder %s224, %s240
    %p242 = scmp.eq.s32.totalorder %s18, 0
    %p243 = por %p241, %p242
    %p244 = scmp.le.s32.totalorder 1, %s12
    %p245 = scmp.lt.s32.totalorder %s12, 385
    %p246 = pnand %p244, %p245
    %p247 = pneg %p246
    // Predicated region
    $region9: #{encoder_forward.6} parent=5 // pred_check
      _
    $region10: #{encoder_forward.6} parent=5 // pred_check_branch
      %249 = sbr.rel (%p246) target = $region12
    $region11: #{encoder_forward.6} parent=5 // pred_region
      %s250 = ssub.s32 %s12, 1
      // Predicated region
      $region13: #{encoder_forward.6} parent=11 // pred_check
        %p251 = pneg %p185
      $region14: #{encoder_forward.6} parent=11 // pred_check_branch
        %253 = sbr.rel (%p251) target = $region16
      $region15: #{encoder_forward.6} parent=11 // pred_region
        _
      $region16: #{encoder_forward.6} parent=11 // pred_fallthru
        _
      // Predicated region
      $region17: #{encoder_forward.6} parent=11 // pred_check
        %p254 = pneg %p206
      $region18: #{encoder_forward.6} parent=11 // pred_check_branch
        %256 = sbr.rel (%p254) target = $region20
      $region19: #{encoder_forward.6} parent=11 // pred_region
        _
      $region20: #{encoder_forward.6} parent=11 // pred_fallthru
        _
    $region12: #{encoder_forward.6} parent=5 // pred_fallthru
      _
    %p257 = scmp.lt.s32.totalorder %s12, 384
    // Predicated region
    $region21: #{encoder_forward.6} parent=5 // pred_check
      %p258 = pneg %p257
    $region22: #{encoder_forward.6} parent=5 // pred_check_branch
      %260 = sbr.rel (%p258) target = $region24
    $region23: #{encoder_forward.6} parent=5 // pred_region
      // Predicated region
      $region25: #{encoder_forward.6} parent=23 // pred_check
        %p261 = pneg %p64
      $region26: #{encoder_forward.6} parent=23 // pred_check_branch
        %263 = sbr.rel (%p261) target = $region28
      $region27: #{encoder_forward.6} parent=23 // pred_region
        %s264 = sadd.s32 %s20, %s22
        %p265 = scmp.lt.s32.totalorder %s19, 1
        %s266 = scalar_select %p265, %s19, 1
        %p267 = scmp.lt.s32.totalorder %s264, 5
        %s268 = scalar_select %p267, %s264, 5
        %p269 = scmp.lt.s32.totalorder %s21, 17
        %s270 = scalar_select %p269, %s21, 17
        %s271 = smul.addr %s270, 3
        %s272 = smul.addr %s268, 54
        %s273 = sadd.s32 %s271, %s272
        %s274 = smul.addr %s266, 324
        %s275 = sadd.s32 %s273, %s274
        %s276 = smul.addr %s275, 4
        %s277 = scalar_lea.vmem %s0, %s276
        %s278 = sadd.s32 %s20, %s22
      $region28: #{encoder_forward.6} parent=23 // pred_fallthru
        _
      // Predicated region
      $region29: #{encoder_forward.6} parent=23 // pred_check
        %p279 = pneg %p98
      $region30: #{encoder_forward.6} parent=23 // pred_check_branch
        %281 = sbr.rel (%p279) target = $region32
      $region31: #{encoder_forward.6} parent=23 // pred_region
        %s282 = sadd.s32 %s20, %s22
        %s283 = sadd.s32 %s21, 1
        %p284 = scmp.lt.s32.totalorder %s19, 1
        %s285 = scalar_select %p284, %s19, 1
        %p286 = scmp.lt.s32.totalorder %s282, 5
        %s287 = scalar_select %p286, %s282, 5
        %p288 = scmp.lt.s32.totalorder %s283, 17
        %s289 = scalar_select %p288, %s283, 17
        %s290 = smul.addr %s289, 3
        %s291 = smul.addr %s287, 54
        %s292 = sadd.s32 %s290, %s291
        %s293 = smul.addr %s285, 324
        %s294 = sadd.s32 %s292, %s293
        %s295 = smul.addr %s294, 4
        %s296 = scalar_lea.vmem %s1, %s295
        %s297 = sadd.s32 %s20, %s22
        %s298 = sadd.s32 %s21, 1
      $region32: #{encoder_forward.6} parent=23 // pred_fallthru
        _
      // Predicated region
      $region33: #{encoder_forward.6} parent=23 // pred_check
        %p299 = pneg %p132
      $region34: #{encoder_forward.6} parent=23 // pred_check_branch
        %301 = sbr.rel (%p299) target = $region36
      $region35: #{encoder_forward.6} parent=23 // pred_region
        %s302 = sadd.s32 %s20, %s22
        %s303 = sadd.s32 %s21, 2
        %p304 = scmp.lt.s32.totalorder %s19, 1
        %s305 = scalar_select %p304, %s19, 1
        %p306 = scmp.lt.s32.totalorder %s302, 5
        %s307 = scalar_select %p306, %s302, 5
        %p308 = scmp.lt.s32.totalorder %s303, 17
        %s309 = scalar_select %p308, %s303, 17
        %s310 = smul.addr %s309, 3
        %s311 = smul.addr %s307, 54
        %s312 = sadd.s32 %s310, %s311
        %s313 = smul.addr %s305, 324
        %s314 = sadd.s32 %s312, %s313
        %s315 = smul.addr %s314, 4
        %s316 = scalar_lea.vmem %s2, %s315
        %s317 = sadd.s32 %s20, %s22
        %s318 = sadd.s32 %s21, 2
      $region36: #{encoder_forward.6} parent=23 // pred_fallthru
        _
      // Predicated region
      $region37: #{encoder_forward.6} parent=23 // pred_check
        %p319 = pneg %p158
      $region38: #{encoder_forward.6} parent=23 // pred_check_branch
        %321 = sbr.rel (%p319) target = $region40
      $region39: #{encoder_forward.6} parent=23 // pred_region
        %p322 = scmp.lt.s32.totalorder %s22, 2
        %s323 = scalar_select %p322, %s22, 2
        %s324 = smul.addr %s323, 3
        %s325 = smul.addr %s324, 4
        %s326 = scalar_lea.vmem %s3, %s325
      $region40: #{encoder_forward.6} parent=23 // pred_fallthru
        _
    $region24: #{encoder_forward.6} parent=5 // pred_fallthru
      _
    %p327 = scmp.le.s32.totalorder 1, %s12
    %p328 = scmp.lt.s32.totalorder %s12, 385
    %p329 = pnand %p327, %p328
    %p330 = pneg %p329
    // Predicated region
    $region41: #{encoder_forward.6} parent=5 // pred_check
      _
    $region42: #{encoder_forward.6} parent=5 // pred_check_branch
      %332 = sbr.rel (%p329) target = $region44
    $region43: #{encoder_forward.6} parent=5 // pred_region
      %s333 = ssub.s32 %s12, 1
      %s334 = sadd.s32 %s24, %s26
      %p335 = scmp.lt.s32.totalorder %s23, 1
      %s336 = scalar_select %p335, %s23, 1
      %p337 = scmp.lt.s32.totalorder %s334, 5
      %s338 = scalar_select %p337, %s334, 5
      %p339 = scmp.lt.s32.totalorder %s25, 17
      %s340 = scalar_select %p339, %s25, 17
      %s341 = smul.addr %s340, 3
      %s342 = smul.addr %s338, 54
      %s343 = sadd.s32 %s341, %s342
      %s344 = smul.addr %s336, 324
      %s345 = sadd.s32 %s343, %s344
      %s346 = smul.addr %s345, 4
      %s347 = scalar_lea.vmem %s0, %s346
      %p348 = pneg %p70
      %p349 = pneg %p67
      %s350 = sadd.s32 %s24, %s26
      %s351 = sadd.s32 %s25, 1
      %p352 = scmp.lt.s32.totalorder %s23, 1
      %s353 = scalar_select %p352, %s23, 1
      %p354 = scmp.lt.s32.totalorder %s350, 5
      %s355 = scalar_select %p354, %s350, 5
      %p356 = scmp.lt.s32.totalorder %s351, 17
      %s357 = scalar_select %p356, %s351, 17
      %s358 = smul.addr %s357, 3
      %s359 = smul.addr %s355, 54
      %s360 = sadd.s32 %s358, %s359
      %s361 = smul.addr %s353, 324
      %s362 = sadd.s32 %s360, %s361
      %s363 = smul.addr %s362, 4
      %s364 = scalar_lea.vmem %s1, %s363
      %p365 = pneg %p104
      %p366 = pneg %p101
      %s367 = sadd.s32 %s24, %s26
      %s368 = sadd.s32 %s25, 2
      %p369 = scmp.lt.s32.totalorder %s23, 1
      %s370 = scalar_select %p369, %s23, 1
      %p371 = scmp.lt.s32.totalorder %s367, 5
      %s372 = scalar_select %p371, %s367, 5
      %p373 = scmp.lt.s32.totalorder %s368, 17
      %s374 = scalar_select %p373, %s368, 17
      %s375 = smul.addr %s374, 3
      %s376 = smul.addr %s372, 54
      %s377 = sadd.s32 %s375, %s376
      %s378 = smul.addr %s370, 324
      %s379 = sadd.s32 %s377, %s378
      %s380 = smul.addr %s379, 4
      %s381 = scalar_lea.vmem %s2, %s380
      %p382 = pneg %p138
      %p383 = pneg %p135
      %p384 = scmp.lt.s32.totalorder %s26, 2
      %s385 = scalar_select %p384, %s26, 2
      %s386 = smul.addr %s385, 3
      %s387 = smul.addr %s386, 4
      %s388 = scalar_lea.vmem %s3, %s387
      %p389 = pneg %p164
      %p390 = pneg %p161
      %p391 = pneg %p185
      %p392 = pneg %p182
      %p393 = pneg %p206
      %p394 = pneg %p203
      %p395 = pneg %p236
      %p396 = pneg %p233
      %p397 = scmp.lt.s32.totalorder %s23, 1
      %s398 = scalar_select %p397, %s23, 1
      %p399 = scmp.lt.s32.totalorder %s24, 3
      %s400 = scalar_select %p399, %s24, 3
      %p401 = scmp.lt.s32.totalorder %s25, 15
      %s402 = scalar_select %p401, %s25, 15
      %s403 = smul.addr %s402, 2
      %s404 = smul.addr %s400, 32
      %s405 = sadd.s32 %s403, %s404
      %s406 = smul.addr %s398, 128
      %s407 = sadd.s32 %s405, %s406
      %s408 = smul.addr %s407, 4
      %s409 = scalar_lea.vmem %s6, %s408
      %s410 = sadd.s32 %s24, %s26
      %p411 = scmp.lt.s32.totalorder %s23, 1
      %s412 = scalar_select %p411, %s23, 1
      %p413 = scmp.lt.s32.totalorder %s410, 5
      %s414 = scalar_select %p413, %s410, 5
      %p415 = scmp.lt.s32.totalorder %s25, 17
      %s416 = scalar_select %p415, %s25, 17
      %s417 = smul.addr %s416, 3
      %s418 = smul.addr %s414, 54
      %s419 = sadd.s32 %s417, %s418
      %s420 = smul.addr %s412, 324
      %s421 = sadd.s32 %s419, %s420
      %s422 = smul.addr %s421, 4
      %s423 = scalar_lea.vmem %s0, %s422
      %s424 = sadd.s32 %s24, %s26
      %s425 = sadd.s32 %s24, %s26
      %s426 = sadd.s32 %s25, 1
      %p427 = scmp.lt.s32.totalorder %s23, 1
      %s428 = scalar_select %p427, %s23, 1
      %p429 = scmp.lt.s32.totalorder %s425, 5
      %s430 = scalar_select %p429, %s425, 5
      %p431 = scmp.lt.s32.totalorder %s426, 17
      %s432 = scalar_select %p431, %s426, 17
      %s433 = smul.addr %s432, 3
      %s434 = smul.addr %s430, 54
      %s435 = sadd.s32 %s433, %s434
      %s436 = smul.addr %s428, 324
      %s437 = sadd.s32 %s435, %s436
      %s438 = smul.addr %s437, 4
      %s439 = scalar_lea.vmem %s1, %s438
      %s440 = sadd.s32 %s24, %s26
      %s441 = sadd.s32 %s25, 1
      %s442 = sadd.s32 %s24, %s26
      %s443 = sadd.s32 %s25, 2
      %p444 = scmp.lt.s32.totalorder %s23, 1
      %s445 = scalar_select %p444, %s23, 1
      %p446 = scmp.lt.s32.totalorder %s442, 5
      %s447 = scalar_select %p446, %s442, 5
      %p448 = scmp.lt.s32.totalorder %s443, 17
      %s449 = scalar_select %p448, %s443, 17
      %s450 = smul.addr %s449, 3
      %s451 = smul.addr %s447, 54
      %s452 = sadd.s32 %s450, %s451
      %s453 = smul.addr %s445, 324
      %s454 = sadd.s32 %s452, %s453
      %s455 = smul.addr %s454, 4
      %s456 = scalar_lea.vmem %s2, %s455
      %s457 = sadd.s32 %s24, %s26
      %s458 = sadd.s32 %s25, 2
      %p459 = scmp.lt.s32.totalorder %s26, 2
      %s460 = scalar_select %p459, %s26, 2
      %s461 = smul.addr %s460, 3
      %s462 = smul.addr %s461, 4
      %s463 = scalar_lea.vmem %s3, %s462
      %p464 = scmp.lt.s32.totalorder %s23, 1
      %s465 = scalar_select %p464, %s23, 1
      %p466 = scmp.lt.s32.totalorder %s24, 3
      %s467 = scalar_select %p466, %s24, 3
      %p468 = scmp.lt.s32.totalorder %s25, 15
      %s469 = scalar_select %p468, %s25, 15
      %s470 = smul.addr %s469, 2
      %s471 = smul.addr %s467, 32
      %s472 = sadd.s32 %s470, %s471
      %s473 = smul.addr %s465, 128
      %s474 = sadd.s32 %s472, %s473
      %s475 = smul.addr %s474, 4
      %s476 = scalar_lea.vmem %s6, %s475
      %p478 = scmp.eq.s32.totalorder %s26, 0
      // Predicated region
      $region45: #{encoder_forward.6} parent=43 // pred_check
        %p479 = pneg %p478
      $region46: #{encoder_forward.6} parent=43 // pred_check_branch
        %481 = sbr.rel (%p479) target = $region48
      $region47: #{encoder_forward.6} parent=43 // pred_region
        %vm482 = vcmask 64512
        %483 = vst.msk [vmem:[#allocation2] sm:$0xff] %vm482, 0.0
        %484 = vst.msk [vmem:[#allocation2 + $0x8] sm:$0xff] %vm482, 0.0
      $region48: #{encoder_forward.6} parent=43 // pred_fallthru
        _
      %v485 = vld [vmem:[%s463] sm:$0xf]
      %v486 = vld [vmem:[%s463 + $0x4] sm:$0xf]
      %v487 = vld [vmem:[%s463 + $0x8] sm:$0x1]
      %v488 = vld [vmem:[%s423] sm:$0xf]
      %v489 = vld [vmem:[%s423 + $0x4] sm:$0xf]
      %v490 = vld [vmem:[%s423 + $0x8] sm:$0x1]
      %v491 = vld [vmem:[%s439] sm:$0xf]
      %v492 = vld [vmem:[%s439 + $0x4] sm:$0xf]
      %v493 = vld [vmem:[%s439 + $0x8] sm:$0x1]
      %v494 = vld [vmem:[%s456] sm:$0xf]
      %v495 = vld [vmem:[%s456 + $0x4] sm:$0xf]
      %v496 = vld [vmem:[%s456 + $0x8] sm:$0x1]
      %v500 = vunpack.c.l.b16 %v488
      %v501 = vunpack.c.l.b16 %v489
      %v502 = vunpack.c.l.b16 %v490
      %v503 = vpack.c.b16 %v501, %v500
      %v504 = vpack.c.b16 %v502, %v502
      %vm505 = vsmask.f32 7424
      %v507 = vshrl.u32 %v503, 16
      %v509 = vshll.u32 %v503, 16
      %v511 = vrot.slane %v509, 1
      %v512 = vor.u32 %v507, %v511
      %v514 = vshll.u32 %v504, 16
      %v516 = vrot.slane %v514, 1
      %v517 = vsel %vm505, %v512, %v516
      %v519 = vunpack.c.l.b16 %v485
      %v520 = vpack.c.b16 %v519, %v519
      %v521 = vrot.slane %v520, 1
      %vm522 = vcmask 15360
      %v524 = vsel %vm522, %v517, 0
      %vm526 = vcmask 1040384
      %v528 = vsel %vm526, %v521, 0
      %530 = vmatpush.bf16.msra.mxu0 0
      %531 = vmatpush.bf16.msra.mxu0 0
      %532 = vmatpush.bf16.msra.mxu0 0
      %533 = vmatpush.bf16.msra.mxu0 0
      %534 = vmatpush.bf16.msra.mxu0 0
      %535 = vmatpush.bf16.msra.mxu0 0
      %536 = vmatpush.bf16.msra.mxu0 0
      %537 = vmatpush.bf16.msra.mxu0 %v528
      %538 = vmatmul.bf16.gmra.mxu0 %v524
      %v539 = vpop.f32.mrf.mxu0
      %v540 = vadd.f32 0.0, %v539
      %v541 = vpop.f32.mrf.mxu0
      %v542 = vadd.f32 0.0, %v541
      %543 = vdwg.mxu0
      %v544 = vsel %vm522, %v503, 0
      %v547 = vsel %vm526, %v485, 0
      %549 = vmatpush.bf16.msra.mxu0 0
      %550 = vmatpush.bf16.msra.mxu0 0
      %551 = vmatpush.bf16.msra.mxu0 0
      %552 = vmatpush.bf16.msra.mxu0 0
      %553 = vmatpush.bf16.msra.mxu0 0
      %554 = vmatpush.bf16.msra.mxu0 0
      %555 = vmatpush.bf16.msra.mxu0 0
      %556 = vmatpush.bf16.msra.mxu0 %v547
      %557 = vmatmul.bf16.gmra.mxu0 %v544
      %v558 = vpop.f32.mrf.mxu0
      %v559 = vadd.f32 %v540, %v558
      %v560 = vpop.f32.mrf.mxu0
      %v561 = vadd.f32 %v542, %v560
      %562 = vdwg.mxu0
      %vm563 = vcmask 1046528
      %v564 = vrot.slane %v503, 1
      %v565 = vrot.slane %v504, 1
      %v566 = vsel %vm563, %v564, %v565
      %v567 = vrot.slane %v520, 2
      %v569 = vsel %vm522, %v566, 0
      %v572 = vsel %vm526, %v567, 0
      %574 = vmatpush.bf16.msra.mxu0 0
      %575 = vmatpush.bf16.msra.mxu0 0
      %576 = vmatpush.bf16.msra.mxu0 0
      %577 = vmatpush.bf16.msra.mxu0 0
      %578 = vmatpush.bf16.msra.mxu0 0
      %579 = vmatpush.bf16.msra.mxu0 0
      %580 = vmatpush.bf16.msra.mxu0 0
      %581 = vmatpush.bf16.msra.mxu0 %v572
      %582 = vmatmul.bf16.gmra.mxu0 %v569
      %v583 = vpop.f32.mrf.mxu0
      %v584 = vadd.f32 0.0, %v583
      %v585 = vpop.f32.mrf.mxu0
      %v586 = vadd.f32 0.0, %v585
      %587 = vdwg.mxu0
      %v588 = vadd.f32 %v559, %v584
      %v589 = vadd.f32 %v561, %v586
      %v592 = vunpack.c.l.b16 %v491
      %v593 = vunpack.c.l.b16 %v492
      %v594 = vpack.c.b16 %v593, %v592
      %v595 = vrot.slane %v520, 3
      %v597 = vsel %vm522, %v594, 0
      %v600 = vsel %vm526, %v595, 0
      %602 = vmatpush.bf16.msra.mxu0 0
      %603 = vmatpush.bf16.msra.mxu0 0
      %604 = vmatpush.bf16.msra.mxu0 0
      %605 = vmatpush.bf16.msra.mxu0 0
      %606 = vmatpush.bf16.msra.mxu0 0
      %607 = vmatpush.bf16.msra.mxu0 0
      %608 = vmatpush.bf16.msra.mxu0 0
      %609 = vmatpush.bf16.msra.mxu0 %v600
      %610 = vmatmul.bf16.gmra.mxu0 %v597
      %v611 = vpop.f32.mrf.mxu0
      %v612 = vadd.f32 0.0, %v611
      %v613 = vpop.f32.mrf.mxu0
      %v614 = vadd.f32 0.0, %v613
      %615 = vdwg.mxu0
      %v616 = vadd.f32 %v588, %v612
      %v617 = vadd.f32 %v589, %v614
      %v619 = vunpack.c.l.b16 %v493
      %v620 = vpack.c.b16 %v619, %v619
      %v621 = vshrl.u32 %v594, 16
      %v623 = vshll.u32 %v594, 16
      %v625 = vrot.slane %v623, 1
      %v626 = vor.u32 %v621, %v625
      %v628 = vshll.u32 %v620, 16
      %v630 = vrot.slane %v628, 1
      %v631 = vsel %vm505, %v626, %v630
      %v633 = vsel %vm522, %v631, 0
      %v636 = vsel %vm526, %v486, 0
      %638 = vmatpush.bf16.msra.mxu0 0
      %639 = vmatpush.bf16.msra.mxu0 0
      %640 = vmatpush.bf16.msra.mxu0 0
      %641 = vmatpush.bf16.msra.mxu0 0
      %642 = vmatpush.bf16.msra.mxu0 0
      %643 = vmatpush.bf16.msra.mxu0 0
      %644 = vmatpush.bf16.msra.mxu0 0
      %645 = vmatpush.bf16.msra.mxu0 %v636
      %646 = vmatmul.bf16.gmra.mxu0 %v633
      %v647 = vpop.f32.mrf.mxu0
      %v648 = vadd.f32 0.0, %v647
      %v649 = vpop.f32.mrf.mxu0
      %v650 = vadd.f32 0.0, %v649
      %651 = vdwg.mxu0
      %v652 = vadd.f32 %v616, %v648
      %v653 = vadd.f32 %v617, %v650
      %v654 = vrot.slane %v594, 1
      %v655 = vrot.slane %v620, 1
      %v656 = vsel %vm563, %v654, %v655
      %v658 = vunpack.c.l.b16 %v486
      %v659 = vpack.c.b16 %v658, %v658
      %v660 = vrot.slane %v659, 1
      %v662 = vsel %vm522, %v656, 0
      %v665 = vsel %vm526, %v660, 0
      %667 = vmatpush.bf16.msra.mxu0 0
      %668 = vmatpush.bf16.msra.mxu0 0
      %669 = vmatpush.bf16.msra.mxu0 0
      %670 = vmatpush.bf16.msra.mxu0 0
      %671 = vmatpush.bf16.msra.mxu0 0
      %672 = vmatpush.bf16.msra.mxu0 0
      %673 = vmatpush.bf16.msra.mxu0 0
      %674 = vmatpush.bf16.msra.mxu0 %v665
      %675 = vmatmul.bf16.gmra.mxu0 %v662
      %v676 = vpop.f32.mrf.mxu0
      %v677 = vadd.f32 0.0, %v676
      %v678 = vpop.f32.mrf.mxu0
      %v679 = vadd.f32 0.0, %v678
      %680 = vdwg.mxu0
      %v681 = vadd.f32 %v652, %v677
      %v682 = vadd.f32 %v653, %v679
      %v685 = vunpack.c.l.b16 %v494
      %v686 = vunpack.c.l.b16 %v495
      %v687 = vpack.c.b16 %v686, %v685
      %v688 = vrot.slane %v659, 2
      %v690 = vsel %vm522, %v687, 0
      %v693 = vsel %vm526, %v688, 0
      %695 = vmatpush.bf16.msra.mxu0 0
      %696 = vmatpush.bf16.msra.mxu0 0
      %697 = vmatpush.bf16.msra.mxu0 0
      %698 = vmatpush.bf16.msra.mxu0 0
      %699 = vmatpush.bf16.msra.mxu0 0
      %700 = vmatpush.bf16.msra.mxu0 0
      %701 = vmatpush.bf16.msra.mxu0 0
      %702 = vmatpush.bf16.msra.mxu0 %v693
      %703 = vmatmul.bf16.gmra.mxu0 %v690
      %v704 = vpop.f32.mrf.mxu0
      %v705 = vadd.f32 0.0, %v704
      %v706 = vpop.f32.mrf.mxu0
      %v707 = vadd.f32 0.0, %v706
      %708 = vdwg.mxu0
      %v709 = vadd.f32 %v681, %v705
      %v710 = vadd.f32 %v682, %v707
      %v712 = vunpack.c.l.b16 %v496
      %v713 = vpack.c.b16 %v712, %v712
      %v714 = vshrl.u32 %v687, 16
      %v716 = vshll.u32 %v687, 16
      %v718 = vrot.slane %v716, 1
      %v719 = vor.u32 %v714, %v718
      %v721 = vshll.u32 %v713, 16
      %v723 = vrot.slane %v721, 1
      %v724 = vsel %vm505, %v719, %v723
      %v725 = vrot.slane %v659, 3
      %v727 = vsel %vm522, %v724, 0
      %v730 = vsel %vm526, %v725, 0
      %732 = vmatpush.bf16.msra.mxu0 0
      %733 = vmatpush.bf16.msra.mxu0 0
      %734 = vmatpush.bf16.msra.mxu0 0
      %735 = vmatpush.bf16.msra.mxu0 0
      %736 = vmatpush.bf16.msra.mxu0 0
      %737 = vmatpush.bf16.msra.mxu0 0
      %738 = vmatpush.bf16.msra.mxu0 0
      %739 = vmatpush.bf16.msra.mxu0 %v730
      %740 = vmatmul.bf16.gmra.mxu0 %v727
      %v741 = vpop.f32.mrf.mxu0
      %v742 = vadd.f32 0.0, %v741
      %v743 = vpop.f32.mrf.mxu0
      %v744 = vadd.f32 0.0, %v743
      %745 = vdwg.mxu0
      %v746 = vadd.f32 %v709, %v742
      %v747 = vadd.f32 %v710, %v744
      %v748 = vrot.slane %v687, 1
      %v749 = vrot.slane %v713, 1
      %v750 = vsel %vm563, %v748, %v749
      %v752 = vsel %vm522, %v750, 0
      %v755 = vsel %vm526, %v487, 0
      %757 = vmatpush.bf16.msra.mxu0 0
      %758 = vmatpush.bf16.msra.mxu0 0
      %759 = vmatpush.bf16.msra.mxu0 0
      %760 = vmatpush.bf16.msra.mxu0 0
      %761 = vmatpush.bf16.msra.mxu0 0
      %762 = vmatpush.bf16.msra.mxu0 0
      %763 = vmatpush.bf16.msra.mxu0 0
      %764 = vmatpush.bf16.msra.mxu0 %v755
      %765 = vmatmul.bf16.gmra.mxu0 %v752
      %v766 = vpop.f32.mrf.mxu0
      %v767 = vadd.f32 0.0, %v766
      %v768 = vpop.f32.mrf.mxu0
      %v769 = vadd.f32 0.0, %v768
      %770 = vdwg.mxu0
      %v771 = vadd.f32 %v746, %v767
      %v772 = vadd.f32 %v747, %v769
      %v773 = vld [vmem:[#allocation2] sm:$0xff]
      %v774 = vld [vmem:[#allocation2 + $0x8] sm:$0xff]
      %v775 = vadd.f32 %v773, %v771
      %v776 = vadd.f32 %v774, %v772
      %vm777 = vcmask 64512
      %778 = vst.msk [vmem:[#allocation2] sm:$0xff] %vm777, %v775
      %779 = vst.msk [vmem:[#allocation2 + $0x8] sm:$0xff] %vm777, %v776
      %p780 = scmp.eq.s32.totalorder %s26, 2
      // Predicated region
      $region49: #{encoder_forward.6} parent=43 // pred_check
        %p781 = pneg %p780
      $region50: #{encoder_forward.6} parent=43 // pred_check_branch
        %783 = sbr.rel (%p781) target = $region52
      $region51: #{encoder_forward.6} parent=43 // pred_region
        %v784 = vld [vmem:[#allocation2] sm:$0xff]
        %v785 = vld [vmem:[#allocation2 + $0x8] sm:$0xff]
        %v786 = vld [vmem:[%s4] sm:$0x1]
        %v788 = vperm.slane %v786, 0
        %v790 = vadd.f32 %v784, %v788
        %v791 = vadd.f32 %v785, %v788
        %vm792 = vcmp.ge.f32.partialorder %v790, 0.0
        %vm793 = vcmp.ge.f32.partialorder %v791, 0.0
        %v794 = vld [vmem:[%s5] sm:$0x1]
        %v796 = vperm.slane %v794, 0
        %v798 = vmul.f32 %v796, %v790
        %v799 = vmul.f32 %v796, %v791
        %v800 = vsel %vm792, %v790, %v798
        %v801 = vsel %vm793, %v791, %v799
        %v802 = vpack.c.bf16 %v800, %v800
        %v803 = vpack.c.bf16 %v801, %v801
        %vm804 = vcmask 60416
        %805 = vst.msk [vmem:[%s476] sm:$0xf] %vm804, %v802
        %806 = vst.msk [vmem:[%s476 + $0x4] sm:$0xf] %vm804, %v803
      $region52: #{encoder_forward.6} parent=43 // pred_fallthru
        _
      %p807 = scmp.lt.s32.totalorder %s23, 1
      %s808 = scalar_select %p807, %s23, 1
      %p809 = scmp.lt.s32.totalorder %s24, 3
      %s810 = scalar_select %p809, %s24, 3
      %p811 = scmp.lt.s32.totalorder %s25, 15
      %s812 = scalar_select %p811, %s25, 15
      %s813 = smul.addr %s812, 2
      %s814 = smul.addr %s810, 32
      %s815 = sadd.s32 %s813, %s814
      %s816 = smul.addr %s808, 128
      %s817 = sadd.s32 %s815, %s816
      %s818 = smul.addr %s817, 4
      %s819 = scalar_lea.vmem %s6, %s818
      // Predicated region
      $region53: #{encoder_forward.6} parent=43 // pred_check
        %p820 = pneg %p233
      $region54: #{encoder_forward.6} parent=43 // pred_check_branch
        %822 = sbr.rel (%p820) target = $region56
      $region55: #{encoder_forward.6} parent=43 // pred_region
        _
      $region56: #{encoder_forward.6} parent=43 // pred_fallthru
        _
    $region44: #{encoder_forward.6} parent=5 // pred_fallthru
      _
    %p823 = scmp.le.s32.totalorder 2, %s12
    // Predicated region
    $region57: #{encoder_forward.6} parent=5 // pred_check
      %p824 = pneg %p823
    $region58: #{encoder_forward.6} parent=5 // pred_check_branch
      %826 = sbr.rel (%p824) target = $region60
    $region59: #{encoder_forward.6} parent=5 // pred_region
      %s827 = ssub.s32 %s12, 2
      // Predicated region
      $region61: #{encoder_forward.6} parent=59 // pred_check
        %p828 = pneg %p239
      $region62: #{encoder_forward.6} parent=59 // pred_check_branch
        %830 = sbr.rel (%p828) target = $region64
      $region63: #{encoder_forward.6} parent=59 // pred_region
        %p831 = scmp.lt.s32.totalorder %s27, 1
        %s832 = scalar_select %p831, %s27, 1
        %p833 = scmp.lt.s32.totalorder %s28, 3
        %s834 = scalar_select %p833, %s28, 3
        %p835 = scmp.lt.s32.totalorder %s29, 15
        %s836 = scalar_select %p835, %s29, 15
        %s837 = smul.addr %s836, 2
        %s838 = smul.addr %s834, 32
        %s839 = sadd.s32 %s837, %s838
        %s840 = smul.addr %s832, 128
        %s841 = sadd.s32 %s839, %s840
        %s842 = smul.addr %s841, 4
        %s843 = scalar_lea.vmem %s6, %s842
      $region64: #{encoder_forward.6} parent=59 // pred_fallthru
        _
    $region60: #{encoder_forward.6} parent=5 // pred_fallthru
      _
  $region6: #{encoder_forward.6} parent=0 // loop_footer
    %s16 = sadd.s32 1, %s12
  $region7: #{encoder_forward.6} parent=0 // loop_footer_branch
    %11 = sbr.rel target = $region3
  $region8: #{encoder_forward.6} parent=0 // loop_exit
    _

// kernel: encoder_forward.7
$region0: #{encoder_forward.7}
  #allocation0 [shape = 'u32[]', space=smem, size = 0x4, offset = 0x4, fixed_abs, tag = 'smem constant byte address 0x4 - core index']
  #allocation1 [shape = 'u32[72,128]{1,0:T(1,128)}', space=vmem, size = 0x9000, scoped, tag = 'internal scratch']
  #allocation2 [shape = 'f32[8,16]{1,0:T(8,128)}', space=vmem, size = 0x1000, scoped, tag = 'scratch operand']
  %s0 = inlined_call_operand.vmem [shape: bf16[2,6,18,9,8], index: 0, kind: input, shape index: {}, may-alias: {0,2,4}]
  %s1 = inlined_call_operand.vmem [shape: bf16[2,6,18,9,8], index: 1, kind: input, shape index: {}, may-alias: {1,3,5}]
  %s2 = inlined_call_operand.vmem [shape: bf16[2,6,18,9,8], index: 2, kind: input, shape index: {}, may-alias: {0,2,4}]
  %s3 = inlined_call_operand.vmem [shape: bf16[2,6,18,9,8], index: 3, kind: input, shape index: {}, may-alias: {1,3,5}]
  %s4 = inlined_call_operand.vmem [shape: bf16[2,6,18,9,8], index: 4, kind: input, shape index: {}, may-alias: {0,2,4}]
  %s5 = inlined_call_operand.vmem [shape: bf16[2,6,18,9,8], index: 5, kind: input, shape index: {}, may-alias: {1,3,5}]
  %s6 = inlined_call_operand.vmem [shape: bf16[3,72,16], index: 6, kind: input, shape index: {}]
  %s7 = inlined_call_operand.vmem [shape: f32[1,16], index: 7, kind: input, shape index: {}]
  %s8 = inlined_call_operand.vmem [shape: f32[1,16], index: 8, kind: input, shape index: {}]
  %s9 = inlined_call_operand.vmem [shape: bf16[2,4,8,8,8], index: 9, kind: output, shape index: {0}]
  %s10 = inlined_call_operand.vmem [shape: bf16[2,4,8,8,8], index: 10, kind: output, shape index: {1}]
  %11 = xla_tuple %s9, %s10
  %s12 = sld [smem:[#allocation0]]
  $region85: #{encoder_forward.7} parent=0
    _
  %s14 = ssub.s32 1, %s12
  %s15 = scalar_select 0, %s14, %s12
  loop: start=0, step=1, limit=194
  $region2: #{encoder_forward.7} parent=0 // loop_pre_header
    _
  $region3: #{encoder_forward.7} parent=0 // loop_header
    %s17 = sphi 0, %s21
    %p18 = scmp.ge.s32.totalorder %s17, 194
    %s24 = sphi 0, %s50
    %s25 = sphi 0, %s46
    %s26 = sphi 0, %s42
    %s27 = sphi 0, %s38
    %s28 = sphi 0, %s24
    %s29 = sphi 0, %s25
    %s30 = sphi 0, %s26
    %s31 = sphi 0, %s27
    %s32 = sphi 0, %s28
    %s33 = sphi 0, %s29
    %s34 = sphi 0, %s30
    %s35 = sphi 0, %s31
    %s61 = sphi 0, %s63
    %s64 = sphi 0, %s61
    %s65 = sphi 0, %s64
    %s81 = sphi 0, %s65
    %s95 = sphi 0, %s97
    %s98 = sphi 0, %s95
    %s99 = sphi 0, %s98
    %s115 = sphi 0, %s99
    %s131 = sphi 0, %s133
    %s134 = sphi 0, %s131
    %s135 = sphi 0, %s134
    %s151 = sphi 0, %s135
    %s167 = sphi 0, %s169
    %s170 = sphi 0, %s167
    %s171 = sphi 0, %s170
    %s187 = sphi 0, %s171
    %s203 = sphi 0, %s205
    %s206 = sphi 0, %s203
    %s207 = sphi 0, %s206
    %s223 = sphi 0, %s207
    %s239 = sphi 0, %s241
    %s242 = sphi 0, %s239
    %s243 = sphi 0, %s242
    %s259 = sphi 0, %s243
    %s265 = sphi 0, %s267
    %s268 = sphi 0, %s265
    %s269 = sphi 0, %s268
    %s285 = sphi 0, %s269
    %s289 = sphi 0, %s289
    %s291 = sphi 0, %s289
    %s292 = sphi 0, %s291
    %s306 = sphi 0, %s292
    %s310 = sphi 0, %s310
    %s312 = sphi 0, %s310
    %s313 = sphi 0, %s312
    %s327 = sphi 0, %s313
    %s337 = sphi 0, %s339
    %s340 = sphi 0, %s337
    %s341 = sphi 0, %s340
    %s357 = sphi 0, %s341
    %s367 = sphi 0, %s369
    %s370 = sphi 0, %s367
    %s371 = sphi 0, %s370
    %s387 = sphi 0, %s371
  $region4: #{encoder_forward.7} parent=0 // loop_header_branch
    %20 = sbr.rel (%p18) target = $region8
  $region5: #{encoder_forward.7} parent=0 // loop_body
    %s22 = ssub.s32 %s17, 1
    %s23 = ssub.s32 %s17, 2
    %s36 = sadd.s32 1, %s27
    %p37 = scmp.ge.s32.totalorder %s36, 3
    %s38 = scalar_select %p37, 0, %s36
    %s39 = sadd.s32 1, %s26
    %s40 = scalar_select %p37, %s39, %s26
    %p41 = scmp.ge.s32.totalorder %s40, 8
    %s42 = scalar_select %p41, 0, %s40
    %s43 = sadd.s32 1, %s25
    %s44 = scalar_select %p41, %s43, %s25
    %p45 = scmp.ge.s32.totalorder %s44, 4
    %s46 = scalar_select %p45, 0, %s44
    %s47 = sadd.s32 1, %s24
    %s48 = scalar_select %p45, %s47, %s24
    %p49 = scmp.ge.s32.totalorder %s48, 2
    %s50 = scalar_select %p49, 0, %s48
    %s51 = sadd.s32 %s25, %s27
    %s52 = smul.u32 %s26, 2
    %s53 = sadd.s32 %s46, %s38
    %s54 = smul.u32 %s42, 2
    %s55 = ssub.s32 %s24, %s50
    %s56 = ssub.s32 %s51, %s53
    %s57 = sor.u32 %s55, %s56
    %s58 = ssub.s32 %s52, %s54
    %s59 = sor.u32 %s57, %s58
    %p60 = scmp.eq.s32.totalorder %s59, 0
    %s62 = sadd.s32 %s61, 1
    %s63 = scalar_select %p60, %s61, %s62
    %p66 = pneg %p60
    %p67 = scmp.eq.s32.totalorder %s17, 191
    %p68 = por %p66, %p67
    %p69 = scmp.ne.s32.totalorder %s61, %s64
    %p70 = scmp.eq.s32.totalorder %s17, 0
    %p71 = por %p69, %p70
    %p72 = scmp.ne.s32.totalorder %s61, %s64
    %p73 = scmp.eq.s32.totalorder %s22, 191
    %p74 = por %p72, %p73
    %p75 = scmp.ne.s32.totalorder %s64, %s65
    %p76 = scmp.eq.s32.totalorder %s22, 0
    %p77 = por %p75, %p76
    %p78 = scmp.ne.s32.totalorder %s64, %s65
    %p79 = scmp.eq.s32.totalorder %s23, 191
    %p80 = por %p78, %p79
    %p82 = scmp.ne.s32.totalorder %s65, %s81
    %p83 = scmp.eq.s32.totalorder %s23, 0
    %p84 = por %p82, %p83
    %s85 = sadd.s32 %s25, %s27
    %s86 = smul.u32 %s26, 2
    %s87 = sadd.s32 %s46, %s38
    %s88 = smul.u32 %s42, 2
    %s89 = ssub.s32 %s24, %s50
    %s90 = ssub.s32 %s85, %s87
    %s91 = sor.u32 %s89, %s90
    %s92 = ssub.s32 %s86, %s88
    %s93 = sor.u32 %s91, %s92
    %p94 = scmp.eq.s32.totalorder %s93, 0
    %s96 = sadd.s32 %s95, 1
    %s97 = scalar_select %p94, %s95, %s96
    %p100 = pneg %p94
    %p101 = scmp.eq.s32.totalorder %s17, 191
    %p102 = por %p100, %p101
    %p103 = scmp.ne.s32.totalorder %s95, %s98
    %p104 = scmp.eq.s32.totalorder %s17, 0
    %p105 = por %p103, %p104
    %p106 = scmp.ne.s32.totalorder %s95, %s98
    %p107 = scmp.eq.s32.totalorder %s22, 191
    %p108 = por %p106, %p107
    %p109 = scmp.ne.s32.totalorder %s98, %s99
    %p110 = scmp.eq.s32.totalorder %s22, 0
    %p111 = por %p109, %p110
    %p112 = scmp.ne.s32.totalorder %s98, %s99
    %p113 = scmp.eq.s32.totalorder %s23, 191
    %p114 = por %p112, %p113
    %p116 = scmp.ne.s32.totalorder %s99, %s115
    %p117 = scmp.eq.s32.totalorder %s23, 0
    %p118 = por %p116, %p117
    %s119 = sadd.s32 %s25, %s27
    %s120 = smul.u32 %s26, 2
    %s121 = sadd.s32 %s120, 1
    %s122 = sadd.s32 %s46, %s38
    %s123 = smul.u32 %s42, 2
    %s124 = sadd.s32 %s123, 1
    %s125 = ssub.s32 %s24, %s50
    %s126 = ssub.s32 %s119, %s122
    %s127 = sor.u32 %s125, %s126
    %s128 = ssub.s32 %s121, %s124
    %s129 = sor.u32 %s127, %s128
    %p130 = scmp.eq.s32.totalorder %s129, 0
    %s132 = sadd.s32 %s131, 1
    %s133 = scalar_select %p130, %s131, %s132
    %p136 = pneg %p130
    %p137 = scmp.eq.s32.totalorder %s17, 191
    %p138 = por %p136, %p137
    %p139 = scmp.ne.s32.totalorder %s131, %s134
    %p140 = scmp.eq.s32.totalorder %s17, 0
    %p141 = por %p139, %p140
    %p142 = scmp.ne.s32.totalorder %s131, %s134
    %p143 = scmp.eq.s32.totalorder %s22, 191
    %p144 = por %p142, %p143
    %p145 = scmp.ne.s32.totalorder %s134, %s135
    %p146 = scmp.eq.s32.totalorder %s22, 0
    %p147 = por %p145, %p146
    %p148 = scmp.ne.s32.totalorder %s134, %s135
    %p149 = scmp.eq.s32.totalorder %s23, 191
    %p150 = por %p148, %p149
    %p152 = scmp.ne.s32.totalorder %s135, %s151
    %p153 = scmp.eq.s32.totalorder %s23, 0
    %p154 = por %p152, %p153
    %s155 = sadd.s32 %s25, %s27
    %s156 = smul.u32 %s26, 2
    %s157 = sadd.s32 %s156, 1
    %s158 = sadd.s32 %s46, %s38
    %s159 = smul.u32 %s42, 2
    %s160 = sadd.s32 %s159, 1
    %s161 = ssub.s32 %s24, %s50
    %s162 = ssub.s32 %s155, %s158
    %s163 = sor.u32 %s161, %s162
    %s164 = ssub.s32 %s157, %s160
    %s165 = sor.u32 %s163, %s164
    %p166 = scmp.eq.s32.totalorder %s165, 0
    %s168 = sadd.s32 %s167, 1
    %s169 = scalar_select %p166, %s167, %s168
    %p172 = pneg %p166
    %p173 = scmp.eq.s32.totalorder %s17, 191
    %p174 = por %p172, %p173
    %p175 = scmp.ne.s32.totalorder %s167, %s170
    %p176 = scmp.eq.s32.totalorder %s17, 0
    %p177 = por %p175, %p176
    %p178 = scmp.ne.s32.totalorder %s167, %s170
    %p179 = scmp.eq.s32.totalorder %s22, 191
    %p180 = por %p178, %p179
    %p181 = scmp.ne.s32.totalorder %s170, %s171
    %p182 = scmp.eq.s32.totalorder %s22, 0
    %p183 = por %p181, %p182
    %p184 = scmp.ne.s32.totalorder %s170, %s171
    %p185 = scmp.eq.s32.totalorder %s23, 191
    %p186 = por %p184, %p185
    %p188 = scmp.ne.s32.totalorder %s171, %s187
    %p189 = scmp.eq.s32.totalorder %s23, 0
    %p190 = por %p188, %p189
    %s191 = sadd.s32 %s25, %s27
    %s192 = smul.u32 %s26, 2
    %s193 = sadd.s32 %s192, 2
    %s194 = sadd.s32 %s46, %s38
    %s195 = smul.u32 %s42, 2
    %s196 = sadd.s32 %s195, 2
    %s197 = ssub.s32 %s24, %s50
    %s198 = ssub.s32 %s191, %s194
    %s199 = sor.u32 %s197, %s198
    %s200 = ssub.s32 %s193, %s196
    %s201 = sor.u32 %s199, %s200
    %p202 = scmp.eq.s32.totalorder %s201, 0
    %s204 = sadd.s32 %s203, 1
    %s205 = scalar_select %p202, %s203, %s204
    %p208 = pneg %p202
    %p209 = scmp.eq.s32.totalorder %s17, 191
    %p210 = por %p208, %p209
    %p211 = scmp.ne.s32.totalorder %s203, %s206
    %p212 = scmp.eq.s32.totalorder %s17, 0
    %p213 = por %p211, %p212
    %p214 = scmp.ne.s32.totalorder %s203, %s206
    %p215 = scmp.eq.s32.totalorder %s22, 191
    %p216 = por %p214, %p215
    %p217 = scmp.ne.s32.totalorder %s206, %s207
    %p218 = scmp.eq.s32.totalorder %s22, 0
    %p219 = por %p217, %p218
    %p220 = scmp.ne.s32.totalorder %s206, %s207
    %p221 = scmp.eq.s32.totalorder %s23, 191
    %p222 = por %p220, %p221
    %p224 = scmp.ne.s32.totalorder %s207, %s223
    %p225 = scmp.eq.s32.totalorder %s23, 0
    %p226 = por %p224, %p225
    %s227 = sadd.s32 %s25, %s27
    %s228 = smul.u32 %s26, 2
    %s229 = sadd.s32 %s228, 2
    %s230 = sadd.s32 %s46, %s38
    %s231 = smul.u32 %s42, 2
    %s232 = sadd.s32 %s231, 2
    %s233 = ssub.s32 %s24, %s50
    %s234 = ssub.s32 %s227, %s230
    %s235 = sor.u32 %s233, %s234
    %s236 = ssub.s32 %s229, %s232
    %s237 = sor.u32 %s235, %s236
    %p238 = scmp.eq.s32.totalorder %s237, 0
    %s240 = sadd.s32 %s239, 1
    %s241 = scalar_select %p238, %s239, %s240
    %p244 = pneg %p238
    %p245 = scmp.eq.s32.totalorder %s17, 191
    %p246 = por %p244, %p245
    %p247 = scmp.ne.s32.totalorder %s239, %s242
    %p248 = scmp.eq.s32.totalorder %s17, 0
    %p249 = por %p247, %p248
    %p250 = scmp.ne.s32.totalorder %s239, %s242
    %p251 = scmp.eq.s32.totalorder %s22, 191
    %p252 = por %p250, %p251
    %p253 = scmp.ne.s32.totalorder %s242, %s243
    %p254 = scmp.eq.s32.totalorder %s22, 0
    %p255 = por %p253, %p254
    %p256 = scmp.ne.s32.totalorder %s242, %s243
    %p257 = scmp.eq.s32.totalorder %s23, 191
    %p258 = por %p256, %p257
    %p260 = scmp.ne.s32.totalorder %s243, %s259
    %p261 = scmp.eq.s32.totalorder %s23, 0
    %p262 = por %p260, %p261
    %s263 = ssub.s32 %s27, %s38
    %p264 = scmp.eq.s32.totalorder %s263, 0
    %s266 = sadd.s32 %s265, 1
    %s267 = scalar_select %p264, %s265, %s266
    %p270 = pneg %p264
    %p271 = scmp.eq.s32.totalorder %s17, 191
    %p272 = por %p270, %p271
    %p273 = scmp.ne.s32.totalorder %s265, %s268
    %p274 = scmp.eq.s32.totalorder %s17, 0
    %p275 = por %p273, %p274
    %p276 = scmp.ne.s32.totalorder %s265, %s268
    %p277 = scmp.eq.s32.totalorder %s22, 191
    %p278 = por %p276, %p277
    %p279 = scmp.ne.s32.totalorder %s268, %s269
    %p280 = scmp.eq.s32.totalorder %s22, 0
    %p281 = por %p279, %p280
    %p282 = scmp.ne.s32.totalorder %s268, %s269
    %p283 = scmp.eq.s32.totalorder %s23, 191
    %p284 = por %p282, %p283
    %p286 = scmp.ne.s32.totalorder %s269, %s285
    %p287 = scmp.eq.s32.totalorder %s23, 0
    %p288 = por %p286, %p287
    %s290 = sadd.s32 %s289, 1
    %p293 = scmp.eq.s32.totalorder %s17, 191
    %p294 = scmp.ne.s32.totalorder %s289, %s291
    %p295 = scmp.eq.s32.totalorder %s17, 0
    %p296 = por %p294, %p295
    %p297 = scmp.ne.s32.totalorder %s289, %s291
    %p298 = scmp.eq.s32.totalorder %s22, 191
    %p299 = por %p297, %p298
    %p300 = scmp.ne.s32.totalorder %s291, %s292
    %p301 = scmp.eq.s32.totalorder %s22, 0
    %p302 = por %p300, %p301
    %p303 = scmp.ne.s32.totalorder %s291, %s292
    %p304 = scmp.eq.s32.totalorder %s23, 191
    %p305 = por %p303, %p304
    %p307 = scmp.ne.s32.totalorder %s292, %s306
    %p308 = scmp.eq.s32.totalorder %s23, 0
    %p309 = por %p307, %p308
    %s311 = sadd.s32 %s310, 1
    %p314 = scmp.eq.s32.totalorder %s17, 191
    %p315 = scmp.ne.s32.totalorder %s310, %s312
    %p316 = scmp.eq.s32.totalorder %s17, 0
    %p317 = por %p315, %p316
    %p318 = scmp.ne.s32.totalorder %s310, %s312
    %p319 = scmp.eq.s32.totalorder %s22, 191
    %p320 = por %p318, %p319
    %p321 = scmp.ne.s32.totalorder %s312, %s313
    %p322 = scmp.eq.s32.totalorder %s22, 0
    %p323 = por %p321, %p322
    %p324 = scmp.ne.s32.totalorder %s312, %s313
    %p325 = scmp.eq.s32.totalorder %s23, 191
    %p326 = por %p324, %p325
    %p328 = scmp.ne.s32.totalorder %s313, %s327
    %p329 = scmp.eq.s32.totalorder %s23, 0
    %p330 = por %p328, %p329
    %s331 = ssub.s32 %s24, %s50
    %s332 = ssub.s32 %s25, %s46
    %s333 = sor.u32 %s331, %s332
    %s334 = ssub.s32 %s26, %s42
    %s335 = sor.u32 %s333, %s334
    %p336 = scmp.eq.s32.totalorder %s335, 0
    %s338 = sadd.s32 %s337, 1
    %s339 = scalar_select %p336, %s337, %s338
    %p342 = pneg %p336
    %p343 = scmp.eq.s32.totalorder %s17, 191
    %p344 = por %p342, %p343
    %p345 = scmp.ne.s32.totalorder %s337, %s340
    %p346 = scmp.eq.s32.totalorder %s17, 0
    %p347 = por %p345, %p346
    %p348 = scmp.ne.s32.totalorder %s337, %s340
    %p349 = scmp.eq.s32.totalorder %s22, 191
    %p350 = por %p348, %p349
    %p351 = scmp.ne.s32.totalorder %s340, %s341
    %p352 = scmp.eq.s32.totalorder %s22, 0
    %p353 = por %p351, %p352
    %p354 = scmp.ne.s32.totalorder %s340, %s341
    %p355 = scmp.eq.s32.totalorder %s23, 191
    %p356 = por %p354, %p355
    %p358 = scmp.ne.s32.totalorder %s341, %s357
    %p359 = scmp.eq.s32.totalorder %s23, 0
    %p360 = por %p358, %p359
    %s361 = ssub.s32 %s24, %s50
    %s362 = ssub.s32 %s25, %s46
    %s363 = sor.u32 %s361, %s362
    %s364 = ssub.s32 %s26, %s42
    %s365 = sor.u32 %s363, %s364
    %p366 = scmp.eq.s32.totalorder %s365, 0
    %s368 = sadd.s32 %s367, 1
    %s369 = scalar_select %p366, %s367, %s368
    %p372 = pneg %p366
    %p373 = scmp.eq.s32.totalorder %s17, 191
    %p374 = por %p372, %p373
    %p375 = scmp.ne.s32.totalorder %s367, %s370
    %p376 = scmp.eq.s32.totalorder %s17, 0
    %p377 = por %p375, %p376
    %p378 = scmp.ne.s32.totalorder %s367, %s370
    %p379 = scmp.eq.s32.totalorder %s22, 191
    %p380 = por %p378, %p379
    %p381 = scmp.ne.s32.totalorder %s370, %s371
    %p382 = scmp.eq.s32.totalorder %s22, 0
    %p383 = por %p381, %p382
    %p384 = scmp.ne.s32.totalorder %s370, %s371
    %p385 = scmp.eq.s32.totalorder %s23, 191
    %p386 = por %p384, %p385
    %p388 = scmp.ne.s32.totalorder %s371, %s387
    %p389 = scmp.eq.s32.totalorder %s23, 0
    %p390 = por %p388, %p389
    %p391 = scmp.le.s32.totalorder 1, %s17
    %p392 = scmp.lt.s32.totalorder %s17, 193
    %p393 = pnand %p391, %p392
    %p394 = pneg %p393
    // Predicated region
    $region9: #{encoder_forward.7} parent=5 // pred_check
      _
    $region10: #{encoder_forward.7} parent=5 // pred_check_branch
      %396 = sbr.rel (%p393) target = $region12
    $region11: #{encoder_forward.7} parent=5 // pred_region
      %s397 = ssub.s32 %s17, 1
      // Predicated region
      $region13: #{encoder_forward.7} parent=11 // pred_check
        %p398 = pneg %p302
      $region14: #{encoder_forward.7} parent=11 // pred_check_branch
        %400 = sbr.rel (%p398) target = $region16
      $region15: #{encoder_forward.7} parent=11 // pred_region
        _
      $region16: #{encoder_forward.7} parent=11 // pred_fallthru
        _
      // Predicated region
      $region17: #{encoder_forward.7} parent=11 // pred_check
        %p401 = pneg %p323
      $region18: #{encoder_forward.7} parent=11 // pred_check_branch
        %403 = sbr.rel (%p401) target = $region20
      $region19: #{encoder_forward.7} parent=11 // pred_region
        _
      $region20: #{encoder_forward.7} parent=11 // pred_fallthru
        _
    $region12: #{encoder_forward.7} parent=5 // pred_fallthru
      _
    %p404 = scmp.lt.s32.totalorder %s17, 192
    // Predicated region
    $region21: #{encoder_forward.7} parent=5 // pred_check
      %p405 = pneg %p404
    $region22: #{encoder_forward.7} parent=5 // pred_check_branch
      %407 = sbr.rel (%p405) target = $region24
    $region23: #{encoder_forward.7} parent=5 // pred_region
      // Predicated region
      $region25: #{encoder_forward.7} parent=23 // pred_check
        %p408 = pneg %p71
      $region26: #{encoder_forward.7} parent=23 // pred_check_branch
        %410 = sbr.rel (%p408) target = $region28
      $region27: #{encoder_forward.7} parent=23 // pred_region
        %s411 = sadd.s32 %s25, %s27
        %s412 = smul.u32 %s26, 2
        %p413 = scmp.lt.s32.totalorder %s24, 1
        %s414 = scalar_select %p413, %s24, 1
        %p415 = scmp.lt.s32.totalorder %s411, 5
        %s416 = scalar_select %p415, %s411, 5
        %p417 = scmp.lt.s32.totalorder %s412, 17
        %s418 = scalar_select %p417, %s412, 17
        %s419 = smul.addr %s418, 2
        %s420 = smul.addr %s416, 36
        %s421 = sadd.s32 %s419, %s420
        %s422 = smul.addr %s414, 216
        %s423 = sadd.s32 %s421, %s422
        %s424 = smul.addr %s423, 4
        %s425 = scalar_lea.vmem %s0, %s424
        %s426 = sadd.s32 %s25, %s27
        %s427 = smul.u32 %s26, 2
      $region28: #{encoder_forward.7} parent=23 // pred_fallthru
        _
      // Predicated region
      $region29: #{encoder_forward.7} parent=23 // pred_check
        %p428 = pneg %p105
      $region30: #{encoder_forward.7} parent=23 // pred_check_branch
        %430 = sbr.rel (%p428) target = $region32
      $region31: #{encoder_forward.7} parent=23 // pred_region
        %s431 = sadd.s32 %s25, %s27
        %s432 = smul.u32 %s26, 2
        %p433 = scmp.lt.s32.totalorder %s24, 1
        %s434 = scalar_select %p433, %s24, 1
        %p435 = scmp.lt.s32.totalorder %s431, 5
        %s436 = scalar_select %p435, %s431, 5
        %p437 = scmp.lt.s32.totalorder %s432, 17
        %s438 = scalar_select %p437, %s432, 17
        %s439 = smul.addr %s438, 2
        %s440 = smul.addr %s436, 36
        %s441 = sadd.s32 %s439, %s440
        %s442 = smul.addr %s434, 216
        %s443 = sadd.s32 %s441, %s442
        %s444 = smul.addr %s443, 4
        %s445 = scalar_lea.vmem %s1, %s444
        %s446 = sadd.s32 %s25, %s27
        %s447 = smul.u32 %s26, 2
      $region32: #{encoder_forward.7} parent=23 // pred_fallthru
        _
      // Predicated region
      $region33: #{encoder_forward.7} parent=23 // pred_check
        %p448 = pneg %p141
      $region34: #{encoder_forward.7} parent=23 // pred_check_branch
        %450 = sbr.rel (%p448) target = $region36
      $region35: #{encoder_forward.7} parent=23 // pred_region
        %s451 = sadd.s32 %s25, %s27
        %s452 = smul.u32 %s26, 2
        %s453 = sadd.s32 %s452, 1
        %p454 = scmp.lt.s32.totalorder %s24, 1
        %s455 = scalar_select %p454, %s24, 1
        %p456 = scmp.lt.s32.totalorder %s451, 5
        %s457 = scalar_select %p456, %s451, 5
        %p458 = scmp.lt.s32.totalorder %s453, 17
        %s459 = scalar_select %p458, %s453, 17
        %s460 = smul.addr %s459, 2
        %s461 = smul.addr %s457, 36
        %s462 = sadd.s32 %s460, %s461
        %s463 = smul.addr %s455, 216
        %s464 = sadd.s32 %s462, %s463
        %s465 = smul.addr %s464, 4
        %s466 = scalar_lea.vmem %s2, %s465
        %s467 = sadd.s32 %s25, %s27
        %s468 = smul.u32 %s26, 2
        %s469 = sadd.s32 %s468, 1
      $region36: #{encoder_forward.7} parent=23 // pred_fallthru
        _
      // Predicated region
      $region37: #{encoder_forward.7} parent=23 // pred_check
        %p470 = pneg %p177
      $region38: #{encoder_forward.7} parent=23 // pred_check_branch
        %472 = sbr.rel (%p470) target = $region40
      $region39: #{encoder_forward.7} parent=23 // pred_region
        %s473 = sadd.s32 %s25, %s27
        %s474 = smul.u32 %s26, 2
        %s475 = sadd.s32 %s474, 1
        %p476 = scmp.lt.s32.totalorder %s24, 1
        %s477 = scalar_select %p476, %s24, 1
        %p478 = scmp.lt.s32.totalorder %s473, 5
        %s479 = scalar_select %p478, %s473, 5
        %p480 = scmp.lt.s32.totalorder %s475, 17
        %s481 = scalar_select %p480, %s475, 17
        %s482 = smul.addr %s481, 2
        %s483 = smul.addr %s479, 36
        %s484 = sadd.s32 %s482, %s483
        %s485 = smul.addr %s477, 216
        %s486 = sadd.s32 %s484, %s485
        %s487 = smul.addr %s486, 4
        %s488 = scalar_lea.vmem %s3, %s487
        %s489 = sadd.s32 %s25, %s27
        %s490 = smul.u32 %s26, 2
        %s491 = sadd.s32 %s490, 1
      $region40: #{encoder_forward.7} parent=23 // pred_fallthru
        _
      // Predicated region
      $region41: #{encoder_forward.7} parent=23 // pred_check
        %p492 = pneg %p213
      $region42: #{encoder_forward.7} parent=23 // pred_check_branch
        %494 = sbr.rel (%p492) target = $region44
      $region43: #{encoder_forward.7} parent=23 // pred_region
        %s495 = sadd.s32 %s25, %s27
        %s496 = smul.u32 %s26, 2
        %s497 = sadd.s32 %s496, 2
        %p498 = scmp.lt.s32.totalorder %s24, 1
        %s499 = scalar_select %p498, %s24, 1
        %p500 = scmp.lt.s32.totalorder %s495, 5
        %s501 = scalar_select %p500, %s495, 5
        %p502 = scmp.lt.s32.totalorder %s497, 17
        %s503 = scalar_select %p502, %s497, 17
        %s504 = smul.addr %s503, 2
        %s505 = smul.addr %s501, 36
        %s506 = sadd.s32 %s504, %s505
        %s507 = smul.addr %s499, 216
        %s508 = sadd.s32 %s506, %s507
        %s509 = smul.addr %s508, 4
        %s510 = scalar_lea.vmem %s4, %s509
        %s511 = sadd.s32 %s25, %s27
        %s512 = smul.u32 %s26, 2
        %s513 = sadd.s32 %s512, 2
      $region44: #{encoder_forward.7} parent=23 // pred_fallthru
        _
      // Predicated region
      $region45: #{encoder_forward.7} parent=23 // pred_check
        %p514 = pneg %p249
      $region46: #{encoder_forward.7} parent=23 // pred_check_branch
        %516 = sbr.rel (%p514) target = $region48
      $region47: #{encoder_forward.7} parent=23 // pred_region
        %s517 = sadd.s32 %s25, %s27
        %s518 = smul.u32 %s26, 2
        %s519 = sadd.s32 %s518, 2
        %p520 = scmp.lt.s32.totalorder %s24, 1
        %s521 = scalar_select %p520, %s24, 1
        %p522 = scmp.lt.s32.totalorder %s517, 5
        %s523 = scalar_select %p522, %s517, 5
        %p524 = scmp.lt.s32.totalorder %s519, 17
        %s525 = scalar_select %p524, %s519, 17
        %s526 = smul.addr %s525, 2
        %s527 = smul.addr %s523, 36
        %s528 = sadd.s32 %s526, %s527
        %s529 = smul.addr %s521, 216
        %s530 = sadd.s32 %s528, %s529
        %s531 = smul.addr %s530, 4
        %s532 = scalar_lea.vmem %s5, %s531
        %s533 = sadd.s32 %s25, %s27
        %s534 = smul.u32 %s26, 2
        %s535 = sadd.s32 %s534, 2
      $region48: #{encoder_forward.7} parent=23 // pred_fallthru
        _
      // Predicated region
      $region49: #{encoder_forward.7} parent=23 // pred_check
        %p536 = pneg %p275
      $region50: #{encoder_forward.7} parent=23 // pred_check_branch
        %538 = sbr.rel (%p536) target = $region52
      $region51: #{encoder_forward.7} parent=23 // pred_region
        %p539 = scmp.lt.s32.totalorder %s27, 2
        %s540 = scalar_select %p539, %s27, 2
        %s541 = smul.addr %s540, 9
        %s542 = smul.addr %s541, 4
        %s543 = scalar_lea.vmem %s6, %s542
      $region52: #{encoder_forward.7} parent=23 // pred_fallthru
        _
    $region24: #{encoder_forward.7} parent=5 // pred_fallthru
      _
    %p544 = scmp.le.s32.totalorder 1, %s17
    %p545 = scmp.lt.s32.totalorder %s17, 193
    %p546 = pnand %p544, %p545
    %p547 = pneg %p546
    // Predicated region
    $region53: #{encoder_forward.7} parent=5 // pred_check
      _
    $region54: #{encoder_forward.7} parent=5 // pred_check_branch
      %549 = sbr.rel (%p546) target = $region56
    $region55: #{encoder_forward.7} parent=5 // pred_region
      %s550 = ssub.s32 %s17, 1
      %s551 = sadd.s32 %s29, %s31
      %s552 = smul.u32 %s30, 2
      %p553 = scmp.lt.s32.totalorder %s28, 1
      %s554 = scalar_select %p553, %s28, 1
      %p555 = scmp.lt.s32.totalorder %s551, 5
      %s556 = scalar_select %p555, %s551, 5
      %p557 = scmp.lt.s32.totalorder %s552, 17
      %s558 = scalar_select %p557, %s552, 17
      %s559 = smul.addr %s558, 2
      %s560 = smul.addr %s556, 36
      %s561 = sadd.s32 %s559, %s560
      %s562 = smul.addr %s554, 216
      %s563 = sadd.s32 %s561, %s562
      %s564 = smul.addr %s563, 4
      %s565 = scalar_lea.vmem %s0, %s564
      %p566 = pneg %p77
      %p567 = pneg %p74
      %s568 = sadd.s32 %s29, %s31
      %s569 = smul.u32 %s30, 2
      %p570 = scmp.lt.s32.totalorder %s28, 1
      %s571 = scalar_select %p570, %s28, 1
      %p572 = scmp.lt.s32.totalorder %s568, 5
      %s573 = scalar_select %p572, %s568, 5
      %p574 = scmp.lt.s32.totalorder %s569, 17
      %s575 = scalar_select %p574, %s569, 17
      %s576 = smul.addr %s575, 2
      %s577 = smul.addr %s573, 36
      %s578 = sadd.s32 %s576, %s577
      %s579 = smul.addr %s571, 216
      %s580 = sadd.s32 %s578, %s579
      %s581 = smul.addr %s580, 4
      %s582 = scalar_lea.vmem %s1, %s581
      %p583 = pneg %p111
      %p584 = pneg %p108
      %s585 = sadd.s32 %s29, %s31
      %s586 = smul.u32 %s30, 2
      %s587 = sadd.s32 %s586, 1
      %p588 = scmp.lt.s32.totalorder %s28, 1
      %s589 = scalar_select %p588, %s28, 1
      %p590 = scmp.lt.s32.totalorder %s585, 5
      %s591 = scalar_select %p590, %s585, 5
      %p592 = scmp.lt.s32.totalorder %s587, 17
      %s593 = scalar_select %p592, %s587, 17
      %s594 = smul.addr %s593, 2
      %s595 = smul.addr %s591, 36
      %s596 = sadd.s32 %s594, %s595
      %s597 = smul.addr %s589, 216
      %s598 = sadd.s32 %s596, %s597
      %s599 = smul.addr %s598, 4
      %s600 = scalar_lea.vmem %s2, %s599
      %p601 = pneg %p147
      %p602 = pneg %p144
      %s603 = sadd.s32 %s29, %s31
      %s604 = smul.u32 %s30, 2
      %s605 = sadd.s32 %s604, 1
      %p606 = scmp.lt.s32.totalorder %s28, 1
      %s607 = scalar_select %p606, %s28, 1
      %p608 = scmp.lt.s32.totalorder %s603, 5
      %s609 = scalar_select %p608, %s603, 5
      %p610 = scmp.lt.s32.totalorder %s605, 17
      %s611 = scalar_select %p610, %s605, 17
      %s612 = smul.addr %s611, 2
      %s613 = smul.addr %s609, 36
      %s614 = sadd.s32 %s612, %s613
      %s615 = smul.addr %s607, 216
      %s616 = sadd.s32 %s614, %s615
      %s617 = smul.addr %s616, 4
      %s618 = scalar_lea.vmem %s3, %s617
      %p619 = pneg %p183
      %p620 = pneg %p180
      %s621 = sadd.s32 %s29, %s31
      %s622 = smul.u32 %s30, 2
      %s623 = sadd.s32 %s622, 2
      %p624 = scmp.lt.s32.totalorder %s28, 1
      %s625 = scalar_select %p624, %s28, 1
      %p626 = scmp.lt.s32.totalorder %s621, 5
      %s627 = scalar_select %p626, %s621, 5
      %p628 = scmp.lt.s32.totalorder %s623, 17
      %s629 = scalar_select %p628, %s623, 17
      %s630 = smul.addr %s629, 2
      %s631 = smul.addr %s627, 36
      %s632 = sadd.s32 %s630, %s631
      %s633 = smul.addr %s625, 216
      %s634 = sadd.s32 %s632, %s633
      %s635 = smul.addr %s634, 4
      %s636 = scalar_lea.vmem %s4, %s635
      %p637 = pneg %p219
      %p638 = pneg %p216
      %s639 = sadd.s32 %s29, %s31
      %s640 = smul.u32 %s30, 2
      %s641 = sadd.s32 %s640, 2
      %p642 = scmp.lt.s32.totalorder %s28, 1
      %s643 = scalar_select %p642, %s28, 1
      %p644 = scmp.lt.s32.totalorder %s639, 5
      %s645 = scalar_select %p644, %s639, 5
      %p646 = scmp.lt.s32.totalorder %s641, 17
      %s647 = scalar_select %p646, %s641, 17
      %s648 = smul.addr %s647, 2
      %s649 = smul.addr %s645, 36
      %s650 = sadd.s32 %s648, %s649
      %s651 = smul.addr %s643, 216
      %s652 = sadd.s32 %s650, %s651
      %s653 = smul.addr %s652, 4
      %s654 = scalar_lea.vmem %s5, %s653
      %p655 = pneg %p255
      %p656 = pneg %p252
      %p657 = scmp.lt.s32.totalorder %s31, 2
      %s658 = scalar_select %p657, %s31, 2
      %s659 = smul.addr %s658, 9
      %s660 = smul.addr %s659, 4
      %s661 = scalar_lea.vmem %s6, %s660
      %p662 = pneg %p281
      %p663 = pneg %p278
      %p664 = pneg %p302
      %p665 = pneg %p299
      %p666 = pneg %p323
      %p667 = pneg %p320
      %p668 = pneg %p353
      %p669 = pneg %p350
      %p670 = scmp.lt.s32.totalorder %s28, 1
      %s671 = scalar_select %p670, %s28, 1
      %p672 = scmp.lt.s32.totalorder %s29, 3
      %s673 = scalar_select %p672, %s29, 3
      %p674 = scmp.lt.s32.totalorder %s30, 7
      %s675 = scalar_select %p674, %s30, 7
      %s676 = smul.addr %s673, 8
      %s677 = sadd.s32 %s675, %s676
      %s678 = smul.addr %s671, 32
      %s679 = sadd.s32 %s677, %s678
      %s680 = smul.addr %s679, 4
      %s681 = scalar_lea.vmem %s9, %s680
      %p682 = pneg %p383
      %p683 = pneg %p380
      %p684 = scmp.lt.s32.totalorder %s28, 1
      %s685 = scalar_select %p684, %s28, 1
      %p686 = scmp.lt.s32.totalorder %s29, 3
      %s687 = scalar_select %p686, %s29, 3
      %p688 = scmp.lt.s32.totalorder %s30, 7
      %s689 = scalar_select %p688, %s30, 7
      %s690 = smul.addr %s687, 8
      %s691 = sadd.s32 %s689, %s690
      %s692 = smul.addr %s685, 32
      %s693 = sadd.s32 %s691, %s692
      %s694 = smul.addr %s693, 4
      %s695 = scalar_lea.vmem %s10, %s694
      %s696 = sadd.s32 %s29, %s31
      %s697 = smul.u32 %s30, 2
      %p698 = scmp.lt.s32.totalorder %s28, 1
      %s699 = scalar_select %p698, %s28, 1
      %p700 = scmp.lt.s32.totalorder %s696, 5
      %s701 = scalar_select %p700, %s696, 5
      %p702 = scmp.lt.s32.totalorder %s697, 17
      %s703 = scalar_select %p702, %s697, 17
      %s704 = smul.addr %s703, 2
      %s705 = smul.addr %s701, 36
      %s706 = sadd.s32 %s704, %s705
      %s707 = smul.addr %s699, 216
      %s708 = sadd.s32 %s706, %s707
      %s709 = smul.addr %s708, 4
      %s710 = scalar_lea.vmem %s0, %s709
      %s711 = sadd.s32 %s29, %s31
      %s712 = smul.u32 %s30, 2
      %s713 = sadd.s32 %s29, %s31
      %s714 = smul.u32 %s30, 2
      %p715 = scmp.lt.s32.totalorder %s28, 1
      %s716 = scalar_select %p715, %s28, 1
      %p717 = scmp.lt.s32.totalorder %s713, 5
      %s718 = scalar_select %p717, %s713, 5
      %p719 = scmp.lt.s32.totalorder %s714, 17
      %s720 = scalar_select %p719, %s714, 17
      %s721 = smul.addr %s720, 2
      %s722 = smul.addr %s718, 36
      %s723 = sadd.s32 %s721, %s722
      %s724 = smul.addr %s716, 216
      %s725 = sadd.s32 %s723, %s724
      %s726 = smul.addr %s725, 4
      %s727 = scalar_lea.vmem %s1, %s726
      %s728 = sadd.s32 %s29, %s31
      %s729 = smul.u32 %s30, 2
      %s730 = sadd.s32 %s29, %s31
      %s731 = smul.u32 %s30, 2
      %s732 = sadd.s32 %s731, 1
      %p733 = scmp.lt.s32.totalorder %s28, 1
      %s734 = scalar_select %p733, %s28, 1
      %p735 = scmp.lt.s32.totalorder %s730, 5
      %s736 = scalar_select %p735, %s730, 5
      %p737 = scmp.lt.s32.totalorder %s732, 17
      %s738 = scalar_select %p737, %s732, 17
      %s739 = smul.addr %s738, 2
      %s740 = smul.addr %s736, 36
      %s741 = sadd.s32 %s739, %s740
      %s742 = smul.addr %s734, 216
      %s743 = sadd.s32 %s741, %s742
      %s744 = smul.addr %s743, 4
      %s745 = scalar_lea.vmem %s2, %s744
      %s746 = sadd.s32 %s29, %s31
      %s747 = smul.u32 %s30, 2
      %s748 = sadd.s32 %s747, 1
      %s749 = sadd.s32 %s29, %s31
      %s750 = smul.u32 %s30, 2
      %s751 = sadd.s32 %s750, 1
      %p752 = scmp.lt.s32.totalorder %s28, 1
      %s753 = scalar_select %p752, %s28, 1
      %p754 = scmp.lt.s32.totalorder %s749, 5
      %s755 = scalar_select %p754, %s749, 5
      %p756 = scmp.lt.s32.totalorder %s751, 17
      %s757 = scalar_select %p756, %s751, 17
      %s758 = smul.addr %s757, 2
      %s759 = smul.addr %s755, 36
      %s760 = sadd.s32 %s758, %s759
      %s761 = smul.addr %s753, 216
      %s762 = sadd.s32 %s760, %s761
      %s763 = smul.addr %s762, 4
      %s764 = scalar_lea.vmem %s3, %s763
      %s765 = sadd.s32 %s29, %s31
      %s766 = smul.u32 %s30, 2
      %s767 = sadd.s32 %s766, 1
      %s768 = sadd.s32 %s29, %s31
      %s769 = smul.u32 %s30, 2
      %s770 = sadd.s32 %s769, 2
      %p771 = scmp.lt.s32.totalorder %s28, 1
      %s772 = scalar_select %p771, %s28, 1
      %p773 = scmp.lt.s32.totalorder %s768, 5
      %s774 = scalar_select %p773, %s768, 5
      %p775 = scmp.lt.s32.totalorder %s770, 17
      %s776 = scalar_select %p775, %s770, 17
      %s777 = smul.addr %s776, 2
      %s778 = smul.addr %s774, 36
      %s779 = sadd.s32 %s777, %s778
      %s780 = smul.addr %s772, 216
      %s781 = sadd.s32 %s779, %s780
      %s782 = smul.addr %s781, 4
      %s783 = scalar_lea.vmem %s4, %s782
      %s784 = sadd.s32 %s29, %s31
      %s785 = smul.u32 %s30, 2
      %s786 = sadd.s32 %s785, 2
      %s787 = sadd.s32 %s29, %s31
      %s788 = smul.u32 %s30, 2
      %s789 = sadd.s32 %s788, 2
      %p790 = scmp.lt.s32.totalorder %s28, 1
      %s791 = scalar_select %p790, %s28, 1
      %p792 = scmp.lt.s32.totalorder %s787, 5
      %s793 = scalar_select %p792, %s787, 5
      %p794 = scmp.lt.s32.totalorder %s789, 17
      %s795 = scalar_select %p794, %s789, 17
      %s796 = smul.addr %s795, 2
      %s797 = smul.addr %s793, 36
      %s798 = sadd.s32 %s796, %s797
      %s799 = smul.addr %s791, 216
      %s800 = sadd.s32 %s798, %s799
      %s801 = smul.addr %s800, 4
      %s802 = scalar_lea.vmem %s5, %s801
      %s803 = sadd.s32 %s29, %s31
      %s804 = smul.u32 %s30, 2
      %s805 = sadd.s32 %s804, 2
      %p806 = scmp.lt.s32.totalorder %s31, 2
      %s807 = scalar_select %p806, %s31, 2
      %s808 = smul.addr %s807, 9
      %s809 = smul.addr %s808, 4
      %s810 = scalar_lea.vmem %s6, %s809
      %p811 = scmp.lt.s32.totalorder %s28, 1
      %s812 = scalar_select %p811, %s28, 1
      %p813 = scmp.lt.s32.totalorder %s29, 3
      %s814 = scalar_select %p813, %s29, 3
      %p815 = scmp.lt.s32.totalorder %s30, 7
      %s816 = scalar_select %p815, %s30, 7
      %s817 = smul.addr %s814, 8
      %s818 = sadd.s32 %s816, %s817
      %s819 = smul.addr %s812, 32
      %s820 = sadd.s32 %s818, %s819
      %s821 = smul.addr %s820, 4
      %s822 = scalar_lea.vmem %s9, %s821
      %p823 = scmp.lt.s32.totalorder %s28, 1
      %s824 = scalar_select %p823, %s28, 1
      %p825 = scmp.lt.s32.totalorder %s29, 3
      %s826 = scalar_select %p825, %s29, 3
      %p827 = scmp.lt.s32.totalorder %s30, 7
      %s828 = scalar_select %p827, %s30, 7
      %s829 = smul.addr %s826, 8
      %s830 = sadd.s32 %s828, %s829
      %s831 = smul.addr %s824, 32
      %s832 = sadd.s32 %s830, %s831
      %s833 = smul.addr %s832, 4
      %s834 = scalar_lea.vmem %s10, %s833
      %p836 = scmp.eq.s32.totalorder %s31, 0
      // Predicated region
      $region57: #{encoder_forward.7} parent=55 // pred_check
        %p837 = pneg %p836
      $region58: #{encoder_forward.7} parent=55 // pred_check_branch
        %839 = sbr.rel (%p837) target = $region60
      $region59: #{encoder_forward.7} parent=55 // pred_region
        %vm840 = vcmask 130048
        %841 = vst.msk [vmem:[#allocation2] sm:$0xff] %vm840, 0.0
      $region60: #{encoder_forward.7} parent=55 // pred_fallthru
        _
      %v842 = vld [vmem:[%s810] sm:$0xf]
      %v843 = vld [vmem:[%s810 + $0x4] sm:$0xf]
      %v844 = vld [vmem:[%s810 + $0x8] sm:$0xf]
      %v845 = vld [vmem:[%s810 + $0xc] sm:$0xf]
      %v846 = vld [vmem:[%s810 + $0x10] sm:$0xf]
      %v847 = vld [vmem:[%s810 + $0x14] sm:$0xf]
      %v848 = vld [vmem:[%s810 + $0x18] sm:$0xf]
      %v849 = vld [vmem:[%s810 + $0x1c] sm:$0xf]
      %v850 = vld [vmem:[%s810 + $0x20] sm:$0xf]
      %v851 = vld [vmem:[%s710] sm:$0xf]
      %v852 = vld [vmem:[%s710 + $0x4] sm:$0x1]
      %v853 = vld [vmem:[%s727] sm:$0xf]
      %v854 = vld [vmem:[%s745] sm:$0xf]
      %v855 = vld [vmem:[%s745 + $0x4] sm:$0x1]
      %v856 = vld [vmem:[%s764] sm:$0xf]
      %v857 = vld [vmem:[%s783] sm:$0xf]
      %v858 = vld [vmem:[%s783 + $0x4] sm:$0x1]
      %v859 = vld [vmem:[%s802] sm:$0xf]
      %vm860 = vcmask 64512
      %v862 = vsel %vm860, %v853, 0
      %vm864 = vcmask 1043456
      %v866 = vsel %vm864, %v843, 0
      %868 = vmatpush.bf16.msra.mxu0 0
      %869 = vmatpush.bf16.msra.mxu0 0
      %870 = vmatpush.bf16.msra.mxu0 0
      %871 = vmatpush.bf16.msra.mxu0 0
      %872 = vmatpush.bf16.msra.mxu0 0
      %873 = vmatpush.bf16.msra.mxu0 0
      %874 = vmatpush.bf16.msra.mxu0 0
      %875 = vmatpush.bf16.msra.mxu0 %v866
      %876 = vmatmul.bf16.gmra.mxu0 %v862
      %v877 = vpop.f32.mrf.mxu0
      %v878 = vadd.f32 0.0, %v877
      %v879 = vpop.f32.mrf.mxu0
      %880 = vdwg.mxu0
      %v882 = vsel %vm860, %v851, 0
      %v885 = vsel %vm864, %v842, 0
      %887 = vmatpush.bf16.msra.mxu0 0
      %888 = vmatpush.bf16.msra.mxu0 0
      %889 = vmatpush.bf16.msra.mxu0 0
      %890 = vmatpush.bf16.msra.mxu0 0
      %891 = vmatpush.bf16.msra.mxu0 0
      %892 = vmatpush.bf16.msra.mxu0 0
      %893 = vmatpush.bf16.msra.mxu0 0
      %894 = vmatpush.bf16.msra.mxu0 %v885
      %895 = vmatmul.bf16.gmra.mxu0 %v882
      %v896 = vpop.f32.mrf.mxu0
      %v897 = vadd.f32 %v878, %v896
      %v898 = vpop.f32.mrf.mxu0
      %899 = vdwg.mxu0
      %v902 = vunpack.c.l.b16 %v851
      %v903 = vunpack.c.l.b16 %v852
      %v904 = vpack.c.b16 %v903, %v902
      %v906 = vshrl.u32 %v904, 16
      %v908 = vshll.u32 %v904, 16
      %v910 = vrot.slane %v908, 1
      %v911 = vor.u32 %v906, %v910
      %v913 = vsel %vm860, %v911, 0
      %v916 = vsel %vm864, %v844, 0
      %918 = vmatpush.bf16.msra.mxu0 0
      %919 = vmatpush.bf16.msra.mxu0 0
      %920 = vmatpush.bf16.msra.mxu0 0
      %921 = vmatpush.bf16.msra.mxu0 0
      %922 = vmatpush.bf16.msra.mxu0 0
      %923 = vmatpush.bf16.msra.mxu0 0
      %924 = vmatpush.bf16.msra.mxu0 0
      %925 = vmatpush.bf16.msra.mxu0 %v916
      %926 = vmatmul.bf16.gmra.mxu0 %v913
      %v927 = vpop.f32.mrf.mxu0
      %v928 = vadd.f32 0.0, %v927
      %v929 = vpop.f32.mrf.mxu0
      %930 = vdwg.mxu0
      %v931 = vadd.f32 %v897, %v928
      %v933 = vsel %vm860, %v854, 0
      %v936 = vsel %vm864, %v845, 0
      %938 = vmatpush.bf16.msra.mxu0 0
      %939 = vmatpush.bf16.msra.mxu0 0
      %940 = vmatpush.bf16.msra.mxu0 0
      %941 = vmatpush.bf16.msra.mxu0 0
      %942 = vmatpush.bf16.msra.mxu0 0
      %943 = vmatpush.bf16.msra.mxu0 0
      %944 = vmatpush.bf16.msra.mxu0 0
      %945 = vmatpush.bf16.msra.mxu0 %v936
      %946 = vmatmul.bf16.gmra.mxu0 %v933
      %v947 = vpop.f32.mrf.mxu0
      %v948 = vadd.f32 0.0, %v947
      %v949 = vpop.f32.mrf.mxu0
      %950 = vdwg.mxu0
      %v951 = vadd.f32 %v931, %v948
      %v953 = vsel %vm860, %v856, 0
      %v956 = vsel %vm864, %v846, 0
      %958 = vmatpush.bf16.msra.mxu0 0
      %959 = vmatpush.bf16.msra.mxu0 0
      %960 = vmatpush.bf16.msra.mxu0 0
      %961 = vmatpush.bf16.msra.mxu0 0
      %962 = vmatpush.bf16.msra.mxu0 0
      %963 = vmatpush.bf16.msra.mxu0 0
      %964 = vmatpush.bf16.msra.mxu0 0
      %965 = vmatpush.bf16.msra.mxu0 %v956
      %966 = vmatmul.bf16.gmra.mxu0 %v953
      %v967 = vpop.f32.mrf.mxu0
      %v968 = vadd.f32 0.0, %v967
      %v969 = vpop.f32.mrf.mxu0
      %970 = vdwg.mxu0
      %v971 = vadd.f32 %v951, %v968
      %v974 = vunpack.c.l.b16 %v854
      %v975 = vunpack.c.l.b16 %v855
      %v976 = vpack.c.b16 %v975, %v974
      %v978 = vshrl.u32 %v976, 16
      %v980 = vshll.u32 %v976, 16
      %v982 = vrot.slane %v980, 1
      %v983 = vor.u32 %v978, %v982
      %v985 = vsel %vm860, %v983, 0
      %v988 = vsel %vm864, %v847, 0
      %990 = vmatpush.bf16.msra.mxu0 0
      %991 = vmatpush.bf16.msra.mxu0 0
      %992 = vmatpush.bf16.msra.mxu0 0
      %993 = vmatpush.bf16.msra.mxu0 0
      %994 = vmatpush.bf16.msra.mxu0 0
      %995 = vmatpush.bf16.msra.mxu0 0
      %996 = vmatpush.bf16.msra.mxu0 0
      %997 = vmatpush.bf16.msra.mxu0 %v988
      %998 = vmatmul.bf16.gmra.mxu0 %v985
      %v999 = vpop.f32.mrf.mxu0
      %v1000 = vadd.f32 0.0, %v999
      %v1001 = vpop.f32.mrf.mxu0
      %1002 = vdwg.mxu0
      %v1003 = vadd.f32 %v971, %v1000
      %v1005 = vsel %vm860, %v857, 0
      %v1008 = vsel %vm864, %v848, 0
      %1010 = vmatpush.bf16.msra.mxu0 0
      %1011 = vmatpush.bf16.msra.mxu0 0
      %1012 = vmatpush.bf16.msra.mxu0 0
      %1013 = vmatpush.bf16.msra.mxu0 0
      %1014 = vmatpush.bf16.msra.mxu0 0
      %1015 = vmatpush.bf16.msra.mxu0 0
      %1016 = vmatpush.bf16.msra.mxu0 0
      %1017 = vmatpush.bf16.msra.mxu0 %v1008
      %1018 = vmatmul.bf16.gmra.mxu0 %v1005
      %v1019 = vpop.f32.mrf.mxu0
      %v1020 = vadd.f32 0.0, %v1019
      %v1021 = vpop.f32.mrf.mxu0
      %1022 = vdwg.mxu0
      %v1023 = vadd.f32 %v1003, %v1020
      %v1025 = vsel %vm860, %v859, 0
      %v1028 = vsel %vm864, %v849, 0
      %1030 = vmatpush.bf16.msra.mxu0 0
      %1031 = vmatpush.bf16.msra.mxu0 0
      %1032 = vmatpush.bf16.msra.mxu0 0
      %1033 = vmatpush.bf16.msra.mxu0 0
      %1034 = vmatpush.bf16.msra.mxu0 0
      %1035 = vmatpush.bf16.msra.mxu0 0
      %1036 = vmatpush.bf16.msra.mxu0 0
      %1037 = vmatpush.bf16.msra.mxu0 %v1028
      %1038 = vmatmul.bf16.gmra.mxu0 %v1025
      %v1039 = vpop.f32.mrf.mxu0
      %v1040 = vadd.f32 0.0, %v1039
      %v1041 = vpop.f32.mrf.mxu0
      %1042 = vdwg.mxu0
      %v1043 = vadd.f32 %v1023, %v1040
      %v1046 = vunpack.c.l.b16 %v857
      %v1047 = vunpack.c.l.b16 %v858
      %v1048 = vpack.c.b16 %v1047, %v1046
      %v1050 = vshrl.u32 %v1048, 16
      %v1052 = vshll.u32 %v1048, 16
      %v1054 = vrot.slane %v1052, 1
      %v1055 = vor.u32 %v1050, %v1054
      %v1057 = vsel %vm860, %v1055, 0
      %v1060 = vsel %vm864, %v850, 0
      %1062 = vmatpush.bf16.msra.mxu0 0
      %1063 = vmatpush.bf16.msra.mxu0 0
      %1064 = vmatpush.bf16.msra.mxu0 0
      %1065 = vmatpush.bf16.msra.mxu0 0
      %1066 = vmatpush.bf16.msra.mxu0 0
      %1067 = vmatpush.bf16.msra.mxu0 0
      %1068 = vmatpush.bf16.msra.mxu0 0
      %1069 = vmatpush.bf16.msra.mxu0 %v1060
      %1070 = vmatmul.bf16.gmra.mxu0 %v1057
      %v1071 = vpop.f32.mrf.mxu0
      %v1072 = vadd.f32 0.0, %v1071
      %v1073 = vpop.f32.mrf.mxu0
      %1074 = vdwg.mxu0
      %v1075 = vadd.f32 %v1043, %v1072
      %v1076 = vld [vmem:[#allocation2] sm:$0xff]
      %v1077 = vadd.f32 %v1076, %v1075
      %vm1078 = vcmask 130048
      %1079 = vst.msk [vmem:[#allocation2] sm:$0xff] %vm1078, %v1077
      %p1080 = scmp.eq.s32.totalorder %s31, 2
      // Predicated region
      $region61: #{encoder_forward.7} parent=55 // pred_check
        %p1081 = pneg %p1080
      $region62: #{encoder_forward.7} parent=55 // pred_check_branch
        %1083 = sbr.rel (%p1081) target = $region64
      $region63: #{encoder_forward.7} parent=55 // pred_region
        %v1084 = vld [vmem:[#allocation2] sm:$0xff]
        %v1085 = vld [vmem:[%s7] sm:$0x1]
        %v1087 = vperm.slane %v1085, 0
        %v1089 = vadd.f32 %v1084, %v1087
        %vm1090 = vcmp.ge.f32.partialorder %v1089, 0.0
        %v1091 = vld [vmem:[%s8] sm:$0x1]
        %v1093 = vperm.slane %v1091, 0
        %v1095 = vmul.f32 %v1093, %v1089
        %v1096 = vsel %vm1090, %v1089, %v1095
        %v1097 = vpack.c.bf16 %v1096, %v1096
        %vm1098 = vcmask 60416
        %1099 = vst.msk [vmem:[%s822] sm:$0xf] %vm1098, %v1097
        %1101 = vrot.lane.b32.xlu0 %v1097, 120
        %v1102 = vpop.permute.xlu0 %1101
        %1104 = vst.msk [vmem:[%s834] sm:$0xf] %vm1098, %v1102
      $region64: #{encoder_forward.7} parent=55 // pred_fallthru
        _
      %p1105 = scmp.lt.s32.totalorder %s28, 1
      %s1106 = scalar_select %p1105, %s28, 1
      %p1107 = scmp.lt.s32.totalorder %s29, 3
      %s1108 = scalar_select %p1107, %s29, 3
      %p1109 = scmp.lt.s32.totalorder %s30, 7
      %s1110 = scalar_select %p1109, %s30, 7
      %s1111 = smul.addr %s1108, 8
      %s1112 = sadd.s32 %s1110, %s1111
      %s1113 = smul.addr %s1106, 32
      %s1114 = sadd.s32 %s1112, %s1113
      %s1115 = smul.addr %s1114, 4
      %s1116 = scalar_lea.vmem %s9, %s1115
      %p1117 = scmp.lt.s32.totalorder %s28, 1
      %s1118 = scalar_select %p1117, %s28, 1
      %p1119 = scmp.lt.s32.totalorder %s29, 3
      %s1120 = scalar_select %p1119, %s29, 3
      %p1121 = scmp.lt.s32.totalorder %s30, 7
      %s1122 = scalar_select %p1121, %s30, 7
      %s1123 = smul.addr %s1120, 8
      %s1124 = sadd.s32 %s1122, %s1123
      %s1125 = smul.addr %s1118, 32
      %s1126 = sadd.s32 %s1124, %s1125
      %s1127 = smul.addr %s1126, 4
      %s1128 = scalar_lea.vmem %s10, %s1127
      // Predicated region
      $region65: #{encoder_forward.7} parent=55 // pred_check
        %p1129 = pneg %p350
      $region66: #{encoder_forward.7} parent=55 // pred_check_branch
        %1131 = sbr.rel (%p1129) target = $region68
      $region67: #{encoder_forward.7} parent=55 // pred_region
        _
      $region68: #{encoder_forward.7} parent=55 // pred_fallthru
        _
      // Predicated region
      $region69: #{encoder_forward.7} parent=55 // pred_check
        %p1132 = pneg %p380
      $region70: #{encoder_forward.7} parent=55 // pred_check_branch
        %1134 = sbr.rel (%p1132) target = $region72
      $region71: #{encoder_forward.7} parent=55 // pred_region
        _
      $region72: #{encoder_forward.7} parent=55 // pred_fallthru
        _
    $region56: #{encoder_forward.7} parent=5 // pred_fallthru
      _
    %p1135 = scmp.le.s32.totalorder 2, %s17
    // Predicated region
    $region73: #{encoder_forward.7} parent=5 // pred_check
      %p1136 = pneg %p1135
    $region74: #{encoder_forward.7} parent=5 // pred_check_branch
      %1138 = sbr.rel (%p1136) target = $region76
    $region75: #{encoder_forward.7} parent=5 // pred_region
      %s1139 = ssub.s32 %s17, 2
      // Predicated region
      $region77: #{encoder_forward.7} parent=75 // pred_check
        %p1140 = pneg %p356
      $region78: #{encoder_forward.7} parent=75 // pred_check_branch
        %1142 = sbr.rel (%p1140) target = $region80
      $region79: #{encoder_forward.7} parent=75 // pred_region
        %p1143 = scmp.lt.s32.totalorder %s32, 1
        %s1144 = scalar_select %p1143, %s32, 1
        %p1145 = scmp.lt.s32.totalorder %s33, 3
        %s1146 = scalar_select %p1145, %s33, 3
        %p1147 = scmp.lt.s32.totalorder %s34, 7
        %s1148 = scalar_select %p1147, %s34, 7
        %s1149 = smul.addr %s1146, 8
        %s1150 = sadd.s32 %s1148, %s1149
        %s1151 = smul.addr %s1144, 32
        %s1152 = sadd.s32 %s1150, %s1151
        %s1153 = smul.addr %s1152, 4
        %s1154 = scalar_lea.vmem %s9, %s1153
      $region80: #{encoder_forward.7} parent=75 // pred_fallthru
        _
      // Predicated region
      $region81: #{encoder_forward.7} parent=75 // pred_check
        %p1155 = pneg %p386
      $region82: #{encoder_forward.7} parent=75 // pred_check_branch
        %1157 = sbr.rel (%p1155) target = $region84
      $region83: #{encoder_forward.7} parent=75 // pred_region
        %p1158 = scmp.lt.s32.totalorder %s32, 1
        %s1159 = scalar_select %p1158, %s32, 1
        %p1160 = scmp.lt.s32.totalorder %s33, 3
        %s1161 = scalar_select %p1160, %s33, 3
        %p1162 = scmp.lt.s32.totalorder %s34, 7
        %s1163 = scalar_select %p1162, %s34, 7
        %s1164 = smul.addr %s1161, 8
        %s1165 = sadd.s32 %s1163, %s1164
        %s1166 = smul.addr %s1159, 32
        %s1167 = sadd.s32 %s1165, %s1166
        %s1168 = smul.addr %s1167, 4
        %s1169 = scalar_lea.vmem %s10, %s1168
      $region84: #{encoder_forward.7} parent=75 // pred_fallthru
        _
    $region76: #{encoder_forward.7} parent=5 // pred_fallthru
      _
  $region6: #{encoder_forward.7} parent=0 // loop_footer
    %s21 = sadd.s32 1, %s17
  $region7: #{encoder_forward.7} parent=0 // loop_footer_branch
    %16 = sbr.rel target = $region3
  $region8: #{encoder_forward.7} parent=0 // loop_exit
    _

// kernel: encoder_forward.8
$region0: #{encoder_forward.8}
  #allocation0 [shape = 'u32[]', space=smem, size = 0x4, offset = 0x4, fixed_abs, tag = 'smem constant byte address 0x4 - core index']
  #allocation1 [shape = 'u32[72,128]{1,0:T(1,128)}', space=vmem, size = 0x9000, scoped, tag = 'internal scratch']
  #allocation2 [shape = 'f32[8,8]{1,0:T(8,128)}', space=vmem, size = 0x1000, scoped, tag = 'scratch operand']
  %s0 = inlined_call_operand.vmem [shape: bf16[2,6,10,10,8], index: 0, kind: input, shape index: {}, may-alias: {0,1,2}]
  %s1 = inlined_call_operand.vmem [shape: bf16[2,6,10,10,8], index: 1, kind: input, shape index: {}, may-alias: {0,1,2}]
  %s2 = inlined_call_operand.vmem [shape: bf16[2,6,10,10,8], index: 2, kind: input, shape index: {}, may-alias: {0,1,2}]
  %s3 = inlined_call_operand.vmem [shape: bf16[3,72,8], index: 3, kind: input, shape index: {}]
  %s4 = inlined_call_operand.vmem [shape: f32[1,8], index: 4, kind: input, shape index: {}]
  %s5 = inlined_call_operand.vmem [shape: f32[1,8], index: 5, kind: input, shape index: {}]
  %s6 = inlined_call_operand.vmem [shape: bf16[2,4,8,8,8], index: 6, kind: input, shape index: {}]
  %s7 = inlined_call_operand.vmem [shape: bf16[2,4,8,8,8], index: 7, kind: output, shape index: {}]
  %s8 = sld [smem:[#allocation0]]
  $region69: #{encoder_forward.8} parent=0
    _
  %s10 = ssub.s32 1, %s8
  %s11 = scalar_select 0, %s10, %s8
  loop: start=0, step=1, limit=194
  $region2: #{encoder_forward.8} parent=0 // loop_pre_header
    _
  $region3: #{encoder_forward.8} parent=0 // loop_header
    %s13 = sphi 0, %s17
    %p14 = scmp.ge.s32.totalorder %s13, 194
    %s20 = sphi 0, %s46
    %s21 = sphi 0, %s42
    %s22 = sphi 0, %s38
    %s23 = sphi 0, %s34
    %s24 = sphi 0, %s20
    %s25 = sphi 0, %s21
    %s26 = sphi 0, %s22
    %s27 = sphi 0, %s23
    %s28 = sphi 0, %s24
    %s29 = sphi 0, %s25
    %s30 = sphi 0, %s26
    %s31 = sphi 0, %s27
    %s55 = sphi 0, %s57
    %s58 = sphi 0, %s55
    %s59 = sphi 0, %s58
    %s75 = sphi 0, %s59
    %s89 = sphi 0, %s91
    %s92 = sphi 0, %s89
    %s93 = sphi 0, %s92
    %s109 = sphi 0, %s93
    %s123 = sphi 0, %s125
    %s126 = sphi 0, %s123
    %s127 = sphi 0, %s126
    %s143 = sphi 0, %s127
    %s149 = sphi 0, %s151
    %s152 = sphi 0, %s149
    %s153 = sphi 0, %s152
    %s169 = sphi 0, %s153
    %s173 = sphi 0, %s173
    %s175 = sphi 0, %s173
    %s176 = sphi 0, %s175
    %s190 = sphi 0, %s176
    %s194 = sphi 0, %s194
    %s196 = sphi 0, %s194
    %s197 = sphi 0, %s196
    %s211 = sphi 0, %s197
    %s221 = sphi 0, %s223
    %s224 = sphi 0, %s221
    %s225 = sphi 0, %s224
    %s241 = sphi 0, %s225
    %s251 = sphi 0, %s253
    %s254 = sphi 0, %s251
    %s255 = sphi 0, %s254
    %s271 = sphi 0, %s255
  $region4: #{encoder_forward.8} parent=0 // loop_header_branch
    %16 = sbr.rel (%p14) target = $region8
  $region5: #{encoder_forward.8} parent=0 // loop_body
    %s18 = ssub.s32 %s13, 1
    %s19 = ssub.s32 %s13, 2
    %s32 = sadd.s32 1, %s23
    %p33 = scmp.ge.s32.totalorder %s32, 3
    %s34 = scalar_select %p33, 0, %s32
    %s35 = sadd.s32 1, %s22
    %s36 = scalar_select %p33, %s35, %s22
    %p37 = scmp.ge.s32.totalorder %s36, 8
    %s38 = scalar_select %p37, 0, %s36
    %s39 = sadd.s32 1, %s21
    %s40 = scalar_select %p37, %s39, %s21
    %p41 = scmp.ge.s32.totalorder %s40, 4
    %s42 = scalar_select %p41, 0, %s40
    %s43 = sadd.s32 1, %s20
    %s44 = scalar_select %p41, %s43, %s20
    %p45 = scmp.ge.s32.totalorder %s44, 2
    %s46 = scalar_select %p45, 0, %s44
    %s47 = sadd.s32 %s21, %s23
    %s48 = sadd.s32 %s42, %s34
    %s49 = ssub.s32 %s20, %s46
    %s50 = ssub.s32 %s47, %s48
    %s51 = sor.u32 %s49, %s50
    %s52 = ssub.s32 %s22, %s38
    %s53 = sor.u32 %s51, %s52
    %p54 = scmp.eq.s32.totalorder %s53, 0
    %s56 = sadd.s32 %s55, 1
    %s57 = scalar_select %p54, %s55, %s56
    %p60 = pneg %p54
    %p61 = scmp.eq.s32.totalorder %s13, 191
    %p62 = por %p60, %p61
    %p63 = scmp.ne.s32.totalorder %s55, %s58
    %p64 = scmp.eq.s32.totalorder %s13, 0
    %p65 = por %p63, %p64
    %p66 = scmp.ne.s32.totalorder %s55, %s58
    %p67 = scmp.eq.s32.totalorder %s18, 191
    %p68 = por %p66, %p67
    %p69 = scmp.ne.s32.totalorder %s58, %s59
    %p70 = scmp.eq.s32.totalorder %s18, 0
    %p71 = por %p69, %p70
    %p72 = scmp.ne.s32.totalorder %s58, %s59
    %p73 = scmp.eq.s32.totalorder %s19, 191
    %p74 = por %p72, %p73
    %p76 = scmp.ne.s32.totalorder %s59, %s75
    %p77 = scmp.eq.s32.totalorder %s19, 0
    %p78 = por %p76, %p77
    %s79 = sadd.s32 %s21, %s23
    %s80 = sadd.s32 %s22, 1
    %s81 = sadd.s32 %s42, %s34
    %s82 = sadd.s32 %s38, 1
    %s83 = ssub.s32 %s20, %s46
    %s84 = ssub.s32 %s79, %s81
    %s85 = sor.u32 %s83, %s84
    %s86 = ssub.s32 %s80, %s82
    %s87 = sor.u32 %s85, %s86
    %p88 = scmp.eq.s32.totalorder %s87, 0
    %s90 = sadd.s32 %s89, 1
    %s91 = scalar_select %p88, %s89, %s90
    %p94 = pneg %p88
    %p95 = scmp.eq.s32.totalorder %s13, 191
    %p96 = por %p94, %p95
    %p97 = scmp.ne.s32.totalorder %s89, %s92
    %p98 = scmp.eq.s32.totalorder %s13, 0
    %p99 = por %p97, %p98
    %p100 = scmp.ne.s32.totalorder %s89, %s92
    %p101 = scmp.eq.s32.totalorder %s18, 191
    %p102 = por %p100, %p101
    %p103 = scmp.ne.s32.totalorder %s92, %s93
    %p104 = scmp.eq.s32.totalorder %s18, 0
    %p105 = por %p103, %p104
    %p106 = scmp.ne.s32.totalorder %s92, %s93
    %p107 = scmp.eq.s32.totalorder %s19, 191
    %p108 = por %p106, %p107
    %p110 = scmp.ne.s32.totalorder %s93, %s109
    %p111 = scmp.eq.s32.totalorder %s19, 0
    %p112 = por %p110, %p111
    %s113 = sadd.s32 %s21, %s23
    %s114 = sadd.s32 %s22, 2
    %s115 = sadd.s32 %s42, %s34
    %s116 = sadd.s32 %s38, 2
    %s117 = ssub.s32 %s20, %s46
    %s118 = ssub.s32 %s113, %s115
    %s119 = sor.u32 %s117, %s118
    %s120 = ssub.s32 %s114, %s116
    %s121 = sor.u32 %s119, %s120
    %p122 = scmp.eq.s32.totalorder %s121, 0
    %s124 = sadd.s32 %s123, 1
    %s125 = scalar_select %p122, %s123, %s124
    %p128 = pneg %p122
    %p129 = scmp.eq.s32.totalorder %s13, 191
    %p130 = por %p128, %p129
    %p131 = scmp.ne.s32.totalorder %s123, %s126
    %p132 = scmp.eq.s32.totalorder %s13, 0
    %p133 = por %p131, %p132
    %p134 = scmp.ne.s32.totalorder %s123, %s126
    %p135 = scmp.eq.s32.totalorder %s18, 191
    %p136 = por %p134, %p135
    %p137 = scmp.ne.s32.totalorder %s126, %s127
    %p138 = scmp.eq.s32.totalorder %s18, 0
    %p139 = por %p137, %p138
    %p140 = scmp.ne.s32.totalorder %s126, %s127
    %p141 = scmp.eq.s32.totalorder %s19, 191
    %p142 = por %p140, %p141
    %p144 = scmp.ne.s32.totalorder %s127, %s143
    %p145 = scmp.eq.s32.totalorder %s19, 0
    %p146 = por %p144, %p145
    %s147 = ssub.s32 %s23, %s34
    %p148 = scmp.eq.s32.totalorder %s147, 0
    %s150 = sadd.s32 %s149, 1
    %s151 = scalar_select %p148, %s149, %s150
    %p154 = pneg %p148
    %p155 = scmp.eq.s32.totalorder %s13, 191
    %p156 = por %p154, %p155
    %p157 = scmp.ne.s32.totalorder %s149, %s152
    %p158 = scmp.eq.s32.totalorder %s13, 0
    %p159 = por %p157, %p158
    %p160 = scmp.ne.s32.totalorder %s149, %s152
    %p161 = scmp.eq.s32.totalorder %s18, 191
    %p162 = por %p160, %p161
    %p163 = scmp.ne.s32.totalorder %s152, %s153
    %p164 = scmp.eq.s32.totalorder %s18, 0
    %p165 = por %p163, %p164
    %p166 = scmp.ne.s32.totalorder %s152, %s153
    %p167 = scmp.eq.s32.totalorder %s19, 191
    %p168 = por %p166, %p167
    %p170 = scmp.ne.s32.totalorder %s153, %s169
    %p171 = scmp.eq.s32.totalorder %s19, 0
    %p172 = por %p170, %p171
    %s174 = sadd.s32 %s173, 1
    %p177 = scmp.eq.s32.totalorder %s13, 191
    %p178 = scmp.ne.s32.totalorder %s173, %s175
    %p179 = scmp.eq.s32.totalorder %s13, 0
    %p180 = por %p178, %p179
    %p181 = scmp.ne.s32.totalorder %s173, %s175
    %p182 = scmp.eq.s32.totalorder %s18, 191
    %p183 = por %p181, %p182
    %p184 = scmp.ne.s32.totalorder %s175, %s176
    %p185 = scmp.eq.s32.totalorder %s18, 0
    %p186 = por %p184, %p185
    %p187 = scmp.ne.s32.totalorder %s175, %s176
    %p188 = scmp.eq.s32.totalorder %s19, 191
    %p189 = por %p187, %p188
    %p191 = scmp.ne.s32.totalorder %s176, %s190
    %p192 = scmp.eq.s32.totalorder %s19, 0
    %p193 = por %p191, %p192
    %s195 = sadd.s32 %s194, 1
    %p198 = scmp.eq.s32.totalorder %s13, 191
    %p199 = scmp.ne.s32.totalorder %s194, %s196
    %p200 = scmp.eq.s32.totalorder %s13, 0
    %p201 = por %p199, %p200
    %p202 = scmp.ne.s32.totalorder %s194, %s196
    %p203 = scmp.eq.s32.totalorder %s18, 191
    %p204 = por %p202, %p203
    %p205 = scmp.ne.s32.totalorder %s196, %s197
    %p206 = scmp.eq.s32.totalorder %s18, 0
    %p207 = por %p205, %p206
    %p208 = scmp.ne.s32.totalorder %s196, %s197
    %p209 = scmp.eq.s32.totalorder %s19, 191
    %p210 = por %p208, %p209
    %p212 = scmp.ne.s32.totalorder %s197, %s211
    %p213 = scmp.eq.s32.totalorder %s19, 0
    %p214 = por %p212, %p213
    %s215 = ssub.s32 %s20, %s46
    %s216 = ssub.s32 %s21, %s42
    %s217 = sor.u32 %s215, %s216
    %s218 = ssub.s32 %s22, %s38
    %s219 = sor.u32 %s217, %s218
    %p220 = scmp.eq.s32.totalorder %s219, 0
    %s222 = sadd.s32 %s221, 1
    %s223 = scalar_select %p220, %s221, %s222
    %p226 = pneg %p220
    %p227 = scmp.eq.s32.totalorder %s13, 191
    %p228 = por %p226, %p227
    %p229 = scmp.ne.s32.totalorder %s221, %s224
    %p230 = scmp.eq.s32.totalorder %s13, 0
    %p231 = por %p229, %p230
    %p232 = scmp.ne.s32.totalorder %s221, %s224
    %p233 = scmp.eq.s32.totalorder %s18, 191
    %p234 = por %p232, %p233
    %p235 = scmp.ne.s32.totalorder %s224, %s225
    %p236 = scmp.eq.s32.totalorder %s18, 0
    %p237 = por %p235, %p236
    %p238 = scmp.ne.s32.totalorder %s224, %s225
    %p239 = scmp.eq.s32.totalorder %s19, 191
    %p240 = por %p238, %p239
    %p242 = scmp.ne.s32.totalorder %s225, %s241
    %p243 = scmp.eq.s32.totalorder %s19, 0
    %p244 = por %p242, %p243
    %s245 = ssub.s32 %s20, %s46
    %s246 = ssub.s32 %s21, %s42
    %s247 = sor.u32 %s245, %s246
    %s248 = ssub.s32 %s22, %s38
    %s249 = sor.u32 %s247, %s248
    %p250 = scmp.eq.s32.totalorder %s249, 0
    %s252 = sadd.s32 %s251, 1
    %s253 = scalar_select %p250, %s251, %s252
    %p256 = pneg %p250
    %p257 = scmp.eq.s32.totalorder %s13, 191
    %p258 = por %p256, %p257
    %p259 = scmp.ne.s32.totalorder %s251, %s254
    %p260 = scmp.eq.s32.totalorder %s13, 0
    %p261 = por %p259, %p260
    %p262 = scmp.ne.s32.totalorder %s251, %s254
    %p263 = scmp.eq.s32.totalorder %s18, 191
    %p264 = por %p262, %p263
    %p265 = scmp.ne.s32.totalorder %s254, %s255
    %p266 = scmp.eq.s32.totalorder %s18, 0
    %p267 = por %p265, %p266
    %p268 = scmp.ne.s32.totalorder %s254, %s255
    %p269 = scmp.eq.s32.totalorder %s19, 191
    %p270 = por %p268, %p269
    %p272 = scmp.ne.s32.totalorder %s255, %s271
    %p273 = scmp.eq.s32.totalorder %s19, 0
    %p274 = por %p272, %p273
    %p275 = scmp.le.s32.totalorder 1, %s13
    %p276 = scmp.lt.s32.totalorder %s13, 193
    %p277 = pnand %p275, %p276
    %p278 = pneg %p277
    // Predicated region
    $region9: #{encoder_forward.8} parent=5 // pred_check
      _
    $region10: #{encoder_forward.8} parent=5 // pred_check_branch
      %280 = sbr.rel (%p277) target = $region12
    $region11: #{encoder_forward.8} parent=5 // pred_region
      %s281 = ssub.s32 %s13, 1
      // Predicated region
      $region13: #{encoder_forward.8} parent=11 // pred_check
        %p282 = pneg %p186
      $region14: #{encoder_forward.8} parent=11 // pred_check_branch
        %284 = sbr.rel (%p282) target = $region16
      $region15: #{encoder_forward.8} parent=11 // pred_region
        _
      $region16: #{encoder_forward.8} parent=11 // pred_fallthru
        _
      // Predicated region
      $region17: #{encoder_forward.8} parent=11 // pred_check
        %p285 = pneg %p207
      $region18: #{encoder_forward.8} parent=11 // pred_check_branch
        %287 = sbr.rel (%p285) target = $region20
      $region19: #{encoder_forward.8} parent=11 // pred_region
        _
      $region20: #{encoder_forward.8} parent=11 // pred_fallthru
        _
    $region12: #{encoder_forward.8} parent=5 // pred_fallthru
      _
    %p288 = scmp.lt.s32.totalorder %s13, 192
    // Predicated region
    $region21: #{encoder_forward.8} parent=5 // pred_check
      %p289 = pneg %p288
    $region22: #{encoder_forward.8} parent=5 // pred_check_branch
      %291 = sbr.rel (%p289) target = $region24
    $region23: #{encoder_forward.8} parent=5 // pred_region
      // Predicated region
      $region25: #{encoder_forward.8} parent=23 // pred_check
        %p292 = pneg %p65
      $region26: #{encoder_forward.8} parent=23 // pred_check_branch
        %294 = sbr.rel (%p292) target = $region28
      $region27: #{encoder_forward.8} parent=23 // pred_region
        %s295 = sadd.s32 %s21, %s23
        %p296 = scmp.lt.s32.totalorder %s20, 1
        %s297 = scalar_select %p296, %s20, 1
        %p298 = scmp.lt.s32.totalorder %s295, 5
        %s299 = scalar_select %p298, %s295, 5
        %p300 = scmp.lt.s32.totalorder %s22, 9
        %s301 = scalar_select %p300, %s22, 9
        %s302 = smul.addr %s301, 2
        %s303 = smul.addr %s299, 20
        %s304 = sadd.s32 %s302, %s303
        %s305 = smul.addr %s297, 120
        %s306 = sadd.s32 %s304, %s305
        %s307 = smul.addr %s306, 4
        %s308 = scalar_lea.vmem %s0, %s307
        %s309 = sadd.s32 %s21, %s23
      $region28: #{encoder_forward.8} parent=23 // pred_fallthru
        _
      // Predicated region
      $region29: #{encoder_forward.8} parent=23 // pred_check
        %p310 = pneg %p99
      $region30: #{encoder_forward.8} parent=23 // pred_check_branch
        %312 = sbr.rel (%p310) target = $region32
      $region31: #{encoder_forward.8} parent=23 // pred_region
        %s313 = sadd.s32 %s21, %s23
        %s314 = sadd.s32 %s22, 1
        %p315 = scmp.lt.s32.totalorder %s20, 1
        %s316 = scalar_select %p315, %s20, 1
        %p317 = scmp.lt.s32.totalorder %s313, 5
        %s318 = scalar_select %p317, %s313, 5
        %p319 = scmp.lt.s32.totalorder %s314, 9
        %s320 = scalar_select %p319, %s314, 9
        %s321 = smul.addr %s320, 2
        %s322 = smul.addr %s318, 20
        %s323 = sadd.s32 %s321, %s322
        %s324 = smul.addr %s316, 120
        %s325 = sadd.s32 %s323, %s324
        %s326 = smul.addr %s325, 4
        %s327 = scalar_lea.vmem %s1, %s326
        %s328 = sadd.s32 %s21, %s23
        %s329 = sadd.s32 %s22, 1
      $region32: #{encoder_forward.8} parent=23 // pred_fallthru
        _
      // Predicated region
      $region33: #{encoder_forward.8} parent=23 // pred_check
        %p330 = pneg %p133
      $region34: #{encoder_forward.8} parent=23 // pred_check_branch
        %332 = sbr.rel (%p330) target = $region36
      $region35: #{encoder_forward.8} parent=23 // pred_region
        %s333 = sadd.s32 %s21, %s23
        %s334 = sadd.s32 %s22, 2
        %p335 = scmp.lt.s32.totalorder %s20, 1
        %s336 = scalar_select %p335, %s20, 1
        %p337 = scmp.lt.s32.totalorder %s333, 5
        %s338 = scalar_select %p337, %s333, 5
        %p339 = scmp.lt.s32.totalorder %s334, 9
        %s340 = scalar_select %p339, %s334, 9
        %s341 = smul.addr %s340, 2
        %s342 = smul.addr %s338, 20
        %s343 = sadd.s32 %s341, %s342
        %s344 = smul.addr %s336, 120
        %s345 = sadd.s32 %s343, %s344
        %s346 = smul.addr %s345, 4
        %s347 = scalar_lea.vmem %s2, %s346
        %s348 = sadd.s32 %s21, %s23
        %s349 = sadd.s32 %s22, 2
      $region36: #{encoder_forward.8} parent=23 // pred_fallthru
        _
      // Predicated region
      $region37: #{encoder_forward.8} parent=23 // pred_check
        %p350 = pneg %p159
      $region38: #{encoder_forward.8} parent=23 // pred_check_branch
        %352 = sbr.rel (%p350) target = $region40
      $region39: #{encoder_forward.8} parent=23 // pred_region
        %p353 = scmp.lt.s32.totalorder %s23, 2
        %s354 = scalar_select %p353, %s23, 2
        %s355 = smul.addr %s354, 9
        %s356 = smul.addr %s355, 4
        %s357 = scalar_lea.vmem %s3, %s356
      $region40: #{encoder_forward.8} parent=23 // pred_fallthru
        _
      // Predicated region
      $region41: #{encoder_forward.8} parent=23 // pred_check
        %p358 = pneg %p231
      $region42: #{encoder_forward.8} parent=23 // pred_check_branch
        %360 = sbr.rel (%p358) target = $region44
      $region43: #{encoder_forward.8} parent=23 // pred_region
        %p361 = scmp.lt.s32.totalorder %s20, 1
        %s362 = scalar_select %p361, %s20, 1
        %p363 = scmp.lt.s32.totalorder %s21, 3
        %s364 = scalar_select %p363, %s21, 3
        %p365 = scmp.lt.s32.totalorder %s22, 7
        %s366 = scalar_select %p365, %s22, 7
        %s367 = smul.addr %s364, 8
        %s368 = sadd.s32 %s366, %s367
        %s369 = smul.addr %s362, 32
        %s370 = sadd.s32 %s368, %s369
        %s371 = smul.addr %s370, 4
        %s372 = scalar_lea.vmem %s6, %s371
      $region44: #{encoder_forward.8} parent=23 // pred_fallthru
        _
    $region24: #{encoder_forward.8} parent=5 // pred_fallthru
      _
    %p373 = scmp.le.s32.totalorder 1, %s13
    %p374 = scmp.lt.s32.totalorder %s13, 193
    %p375 = pnand %p373, %p374
    %p376 = pneg %p375
    // Predicated region
    $region45: #{encoder_forward.8} parent=5 // pred_check
      _
    $region46: #{encoder_forward.8} parent=5 // pred_check_branch
      %378 = sbr.rel (%p375) target = $region48
    $region47: #{encoder_forward.8} parent=5 // pred_region
      %s379 = ssub.s32 %s13, 1
      %s380 = sadd.s32 %s25, %s27
      %p381 = scmp.lt.s32.totalorder %s24, 1
      %s382 = scalar_select %p381, %s24, 1
      %p383 = scmp.lt.s32.totalorder %s380, 5
      %s384 = scalar_select %p383, %s380, 5
      %p385 = scmp.lt.s32.totalorder %s26, 9
      %s386 = scalar_select %p385, %s26, 9
      %s387 = smul.addr %s386, 2
      %s388 = smul.addr %s384, 20
      %s389 = sadd.s32 %s387, %s388
      %s390 = smul.addr %s382, 120
      %s391 = sadd.s32 %s389, %s390
      %s392 = smul.addr %s391, 4
      %s393 = scalar_lea.vmem %s0, %s392
      %p394 = pneg %p71
      %p395 = pneg %p68
      %s396 = sadd.s32 %s25, %s27
      %s397 = sadd.s32 %s26, 1
      %p398 = scmp.lt.s32.totalorder %s24, 1
      %s399 = scalar_select %p398, %s24, 1
      %p400 = scmp.lt.s32.totalorder %s396, 5
      %s401 = scalar_select %p400, %s396, 5
      %p402 = scmp.lt.s32.totalorder %s397, 9
      %s403 = scalar_select %p402, %s397, 9
      %s404 = smul.addr %s403, 2
      %s405 = smul.addr %s401, 20
      %s406 = sadd.s32 %s404, %s405
      %s407 = smul.addr %s399, 120
      %s408 = sadd.s32 %s406, %s407
      %s409 = smul.addr %s408, 4
      %s410 = scalar_lea.vmem %s1, %s409
      %p411 = pneg %p105
      %p412 = pneg %p102
      %s413 = sadd.s32 %s25, %s27
      %s414 = sadd.s32 %s26, 2
      %p415 = scmp.lt.s32.totalorder %s24, 1
      %s416 = scalar_select %p415, %s24, 1
      %p417 = scmp.lt.s32.totalorder %s413, 5
      %s418 = scalar_select %p417, %s413, 5
      %p419 = scmp.lt.s32.totalorder %s414, 9
      %s420 = scalar_select %p419, %s414, 9
      %s421 = smul.addr %s420, 2
      %s422 = smul.addr %s418, 20
      %s423 = sadd.s32 %s421, %s422
      %s424 = smul.addr %s416, 120
      %s425 = sadd.s32 %s423, %s424
      %s426 = smul.addr %s425, 4
      %s427 = scalar_lea.vmem %s2, %s426
      %p428 = pneg %p139
      %p429 = pneg %p136
      %p430 = scmp.lt.s32.totalorder %s27, 2
      %s431 = scalar_select %p430, %s27, 2
      %s432 = smul.addr %s431, 9
      %s433 = smul.addr %s432, 4
      %s434 = scalar_lea.vmem %s3, %s433
      %p435 = pneg %p165
      %p436 = pneg %p162
      %p437 = pneg %p186
      %p438 = pneg %p183
      %p439 = pneg %p207
      %p440 = pneg %p204
      %p441 = scmp.lt.s32.totalorder %s24, 1
      %s442 = scalar_select %p441, %s24, 1
      %p443 = scmp.lt.s32.totalorder %s25, 3
      %s444 = scalar_select %p443, %s25, 3
      %p445 = scmp.lt.s32.totalorder %s26, 7
      %s446 = scalar_select %p445, %s26, 7
      %s447 = smul.addr %s444, 8
      %s448 = sadd.s32 %s446, %s447
      %s449 = smul.addr %s442, 32
      %s450 = sadd.s32 %s448, %s449
      %s451 = smul.addr %s450, 4
      %s452 = scalar_lea.vmem %s6, %s451
      %p453 = pneg %p237
      %p454 = pneg %p234
      %p455 = pneg %p267
      %p456 = pneg %p264
      %p457 = scmp.lt.s32.totalorder %s24, 1
      %s458 = scalar_select %p457, %s24, 1
      %p459 = scmp.lt.s32.totalorder %s25, 3
      %s460 = scalar_select %p459, %s25, 3
      %p461 = scmp.lt.s32.totalorder %s26, 7
      %s462 = scalar_select %p461, %s26, 7
      %s463 = smul.addr %s460, 8
      %s464 = sadd.s32 %s462, %s463
      %s465 = smul.addr %s458, 32
      %s466 = sadd.s32 %s464, %s465
      %s467 = smul.addr %s466, 4
      %s468 = scalar_lea.vmem %s7, %s467
      %s469 = sadd.s32 %s25, %s27
      %p470 = scmp.lt.s32.totalorder %s24, 1
      %s471 = scalar_select %p470, %s24, 1
      %p472 = scmp.lt.s32.totalorder %s469, 5
      %s473 = scalar_select %p472, %s469, 5
      %p474 = scmp.lt.s32.totalorder %s26, 9
      %s475 = scalar_select %p474, %s26, 9
      %s476 = smul.addr %s475, 2
      %s477 = smul.addr %s473, 20
      %s478 = sadd.s32 %s476, %s477
      %s479 = smul.addr %s471, 120
      %s480 = sadd.s32 %s478, %s479
      %s481 = smul.addr %s480, 4
      %s482 = scalar_lea.vmem %s0, %s481
      %s483 = sadd.s32 %s25, %s27
      %s484 = sadd.s32 %s25, %s27
      %s485 = sadd.s32 %s26, 1
      %p486 = scmp.lt.s32.totalorder %s24, 1
      %s487 = scalar_select %p486, %s24, 1
      %p488 = scmp.lt.s32.totalorder %s484, 5
      %s489 = scalar_select %p488, %s484, 5
      %p490 = scmp.lt.s32.totalorder %s485, 9
      %s491 = scalar_select %p490, %s485, 9
      %s492 = smul.addr %s491, 2
      %s493 = smul.addr %s489, 20
      %s494 = sadd.s32 %s492, %s493
      %s495 = smul.addr %s487, 120
      %s496 = sadd.s32 %s494, %s495
      %s497 = smul.addr %s496, 4
      %s498 = scalar_lea.vmem %s1, %s497
      %s499 = sadd.s32 %s25, %s27
      %s500 = sadd.s32 %s26, 1
      %s501 = sadd.s32 %s25, %s27
      %s502 = sadd.s32 %s26, 2
      %p503 = scmp.lt.s32.totalorder %s24, 1
      %s504 = scalar_select %p503, %s24, 1
      %p505 = scmp.lt.s32.totalorder %s501, 5
      %s506 = scalar_select %p505, %s501, 5
      %p507 = scmp.lt.s32.totalorder %s502, 9
      %s508 = scalar_select %p507, %s502, 9
      %s509 = smul.addr %s508, 2
      %s510 = smul.addr %s506, 20
      %s511 = sadd.s32 %s509, %s510
      %s512 = smul.addr %s504, 120
      %s513 = sadd.s32 %s511, %s512
      %s514 = smul.addr %s513, 4
      %s515 = scalar_lea.vmem %s2, %s514
      %s516 = sadd.s32 %s25, %s27
      %s517 = sadd.s32 %s26, 2
      %p518 = scmp.lt.s32.totalorder %s27, 2
      %s519 = scalar_select %p518, %s27, 2
      %s520 = smul.addr %s519, 9
      %s521 = smul.addr %s520, 4
      %s522 = scalar_lea.vmem %s3, %s521
      %p523 = scmp.lt.s32.totalorder %s24, 1
      %s524 = scalar_select %p523, %s24, 1
      %p525 = scmp.lt.s32.totalorder %s25, 3
      %s526 = scalar_select %p525, %s25, 3
      %p527 = scmp.lt.s32.totalorder %s26, 7
      %s528 = scalar_select %p527, %s26, 7
      %s529 = smul.addr %s526, 8
      %s530 = sadd.s32 %s528, %s529
      %s531 = smul.addr %s524, 32
      %s532 = sadd.s32 %s530, %s531
      %s533 = smul.addr %s532, 4
      %s534 = scalar_lea.vmem %s6, %s533
      %p535 = scmp.lt.s32.totalorder %s24, 1
      %s536 = scalar_select %p535, %s24, 1
      %p537 = scmp.lt.s32.totalorder %s25, 3
      %s538 = scalar_select %p537, %s25, 3
      %p539 = scmp.lt.s32.totalorder %s26, 7
      %s540 = scalar_select %p539, %s26, 7
      %s541 = smul.addr %s538, 8
      %s542 = sadd.s32 %s540, %s541
      %s543 = smul.addr %s536, 32
      %s544 = sadd.s32 %s542, %s543
      %s545 = smul.addr %s544, 4
      %s546 = scalar_lea.vmem %s7, %s545
      %p548 = scmp.eq.s32.totalorder %s27, 0
      // Predicated region
      $region49: #{encoder_forward.8} parent=47 // pred_check
        %p549 = pneg %p548
      $region50: #{encoder_forward.8} parent=47 // pred_check_branch
        %551 = sbr.rel (%p549) target = $region52
      $region51: #{encoder_forward.8} parent=47 // pred_region
        %vm552 = vcmask 64512
        %553 = vst.msk [vmem:[#allocation2] sm:$0xff] %vm552, 0.0
      $region52: #{encoder_forward.8} parent=47 // pred_fallthru
        _
      %v554 = vld [vmem:[%s522] sm:$0xf]
      %v555 = vld [vmem:[%s522 + $0x4] sm:$0xf]
      %v556 = vld [vmem:[%s522 + $0x8] sm:$0xf]
      %v557 = vld [vmem:[%s522 + $0xc] sm:$0xf]
      %v558 = vld [vmem:[%s522 + $0x10] sm:$0xf]
      %v559 = vld [vmem:[%s522 + $0x14] sm:$0xf]
      %v560 = vld [vmem:[%s522 + $0x18] sm:$0xf]
      %v561 = vld [vmem:[%s522 + $0x1c] sm:$0xf]
      %v562 = vld [vmem:[%s522 + $0x20] sm:$0xf]
      %v563 = vld [vmem:[%s482] sm:$0xf]
      %v564 = vld [vmem:[%s482 + $0x4] sm:$0x1]
      %v565 = vld [vmem:[%s498] sm:$0xf]
      %v566 = vld [vmem:[%s498 + $0x4] sm:$0x1]
      %v567 = vld [vmem:[%s515] sm:$0xf]
      %v568 = vld [vmem:[%s515 + $0x4] sm:$0x1]
      %v571 = vunpack.c.l.b16 %v563
      %v572 = vunpack.c.l.b16 %v564
      %v573 = vpack.c.b16 %v572, %v571
      %v575 = vshrl.u32 %v573, 16
      %v577 = vshll.u32 %v573, 16
      %v579 = vrot.slane %v577, 1
      %v580 = vor.u32 %v575, %v579
      %vm581 = vcmask 64512
      %v583 = vsel %vm581, %v580, 0
      %vm585 = vcmask 1043456
      %v587 = vsel %vm585, %v555, 0
      %589 = vmatpush.bf16.msra.mxu0 0
      %590 = vmatpush.bf16.msra.mxu0 0
      %591 = vmatpush.bf16.msra.mxu0 0
      %592 = vmatpush.bf16.msra.mxu0 0
      %593 = vmatpush.bf16.msra.mxu0 0
      %594 = vmatpush.bf16.msra.mxu0 0
      %595 = vmatpush.bf16.msra.mxu0 0
      %596 = vmatpush.bf16.msra.mxu0 %v587
      %597 = vmatmul.bf16.gmra.mxu0 %v583
      %v598 = vpop.f32.mrf.mxu0
      %v599 = vadd.f32 0.0, %v598
      %v600 = vpop.f32.mrf.mxu0
      %601 = vdwg.mxu0
      %v603 = vsel %vm581, %v563, 0
      %v606 = vsel %vm585, %v554, 0
      %608 = vmatpush.bf16.msra.mxu0 0
      %609 = vmatpush.bf16.msra.mxu0 0
      %610 = vmatpush.bf16.msra.mxu0 0
      %611 = vmatpush.bf16.msra.mxu0 0
      %612 = vmatpush.bf16.msra.mxu0 0
      %613 = vmatpush.bf16.msra.mxu0 0
      %614 = vmatpush.bf16.msra.mxu0 0
      %615 = vmatpush.bf16.msra.mxu0 %v606
      %616 = vmatmul.bf16.gmra.mxu0 %v603
      %v617 = vpop.f32.mrf.mxu0
      %v618 = vadd.f32 %v599, %v617
      %v619 = vpop.f32.mrf.mxu0
      %620 = vdwg.mxu0
      %v621 = vrot.slane %v573, 1
      %v623 = vsel %vm581, %v621, 0
      %v626 = vsel %vm585, %v556, 0
      %628 = vmatpush.bf16.msra.mxu0 0
      %629 = vmatpush.bf16.msra.mxu0 0
      %630 = vmatpush.bf16.msra.mxu0 0
      %631 = vmatpush.bf16.msra.mxu0 0
      %632 = vmatpush.bf16.msra.mxu0 0
      %633 = vmatpush.bf16.msra.mxu0 0
      %634 = vmatpush.bf16.msra.mxu0 0
      %635 = vmatpush.bf16.msra.mxu0 %v626
      %636 = vmatmul.bf16.gmra.mxu0 %v623
      %v637 = vpop.f32.mrf.mxu0
      %v638 = vadd.f32 0.0, %v637
      %v639 = vpop.f32.mrf.mxu0
      %640 = vdwg.mxu0
      %v641 = vadd.f32 %v618, %v638
      %v643 = vsel %vm581, %v565, 0
      %v646 = vsel %vm585, %v557, 0
      %648 = vmatpush.bf16.msra.mxu0 0
      %649 = vmatpush.bf16.msra.mxu0 0
      %650 = vmatpush.bf16.msra.mxu0 0
      %651 = vmatpush.bf16.msra.mxu0 0
      %652 = vmatpush.bf16.msra.mxu0 0
      %653 = vmatpush.bf16.msra.mxu0 0
      %654 = vmatpush.bf16.msra.mxu0 0
      %655 = vmatpush.bf16.msra.mxu0 %v646
      %656 = vmatmul.bf16.gmra.mxu0 %v643
      %v657 = vpop.f32.mrf.mxu0
      %v658 = vadd.f32 0.0, %v657
      %v659 = vpop.f32.mrf.mxu0
      %660 = vdwg.mxu0
      %v661 = vadd.f32 %v641, %v658
      %v664 = vunpack.c.l.b16 %v565
      %v665 = vunpack.c.l.b16 %v566
      %v666 = vpack.c.b16 %v665, %v664
      %v668 = vshrl.u32 %v666, 16
      %v670 = vshll.u32 %v666, 16
      %v672 = vrot.slane %v670, 1
      %v673 = vor.u32 %v668, %v672
      %v675 = vsel %vm581, %v673, 0
      %v678 = vsel %vm585, %v558, 0
      %680 = vmatpush.bf16.msra.mxu0 0
      %681 = vmatpush.bf16.msra.mxu0 0
      %682 = vmatpush.bf16.msra.mxu0 0
      %683 = vmatpush.bf16.msra.mxu0 0
      %684 = vmatpush.bf16.msra.mxu0 0
      %685 = vmatpush.bf16.msra.mxu0 0
      %686 = vmatpush.bf16.msra.mxu0 0
      %687 = vmatpush.bf16.msra.mxu0 %v678
      %688 = vmatmul.bf16.gmra.mxu0 %v675
      %v689 = vpop.f32.mrf.mxu0
      %v690 = vadd.f32 0.0, %v689
      %v691 = vpop.f32.mrf.mxu0
      %692 = vdwg.mxu0
      %v693 = vadd.f32 %v661, %v690
      %v694 = vrot.slane %v666, 1
      %v696 = vsel %vm581, %v694, 0
      %v699 = vsel %vm585, %v559, 0
      %701 = vmatpush.bf16.msra.mxu0 0
      %702 = vmatpush.bf16.msra.mxu0 0
      %703 = vmatpush.bf16.msra.mxu0 0
      %704 = vmatpush.bf16.msra.mxu0 0
      %705 = vmatpush.bf16.msra.mxu0 0
      %706 = vmatpush.bf16.msra.mxu0 0
      %707 = vmatpush.bf16.msra.mxu0 0
      %708 = vmatpush.bf16.msra.mxu0 %v699
      %709 = vmatmul.bf16.gmra.mxu0 %v696
      %v710 = vpop.f32.mrf.mxu0
      %v711 = vadd.f32 0.0, %v710
      %v712 = vpop.f32.mrf.mxu0
      %713 = vdwg.mxu0
      %v714 = vadd.f32 %v693, %v711
      %v716 = vsel %vm581, %v567, 0
      %v719 = vsel %vm585, %v560, 0
      %721 = vmatpush.bf16.msra.mxu0 0
      %722 = vmatpush.bf16.msra.mxu0 0
      %723 = vmatpush.bf16.msra.mxu0 0
      %724 = vmatpush.bf16.msra.mxu0 0
      %725 = vmatpush.bf16.msra.mxu0 0
      %726 = vmatpush.bf16.msra.mxu0 0
      %727 = vmatpush.bf16.msra.mxu0 0
      %728 = vmatpush.bf16.msra.mxu0 %v719
      %729 = vmatmul.bf16.gmra.mxu0 %v716
      %v730 = vpop.f32.mrf.mxu0
      %v731 = vadd.f32 0.0, %v730
      %v732 = vpop.f32.mrf.mxu0
      %733 = vdwg.mxu0
      %v734 = vadd.f32 %v714, %v731
      %v737 = vunpack.c.l.b16 %v567
      %v738 = vunpack.c.l.b16 %v568
      %v739 = vpack.c.b16 %v738, %v737
      %v741 = vshrl.u32 %v739, 16
      %v743 = vshll.u32 %v739, 16
      %v745 = vrot.slane %v743, 1
      %v746 = vor.u32 %v741, %v745
      %v748 = vsel %vm581, %v746, 0
      %v751 = vsel %vm585, %v561, 0
      %753 = vmatpush.bf16.msra.mxu0 0
      %754 = vmatpush.bf16.msra.mxu0 0
      %755 = vmatpush.bf16.msra.mxu0 0
      %756 = vmatpush.bf16.msra.mxu0 0
      %757 = vmatpush.bf16.msra.mxu0 0
      %758 = vmatpush.bf16.msra.mxu0 0
      %759 = vmatpush.bf16.msra.mxu0 0
      %760 = vmatpush.bf16.msra.mxu0 %v751
      %761 = vmatmul.bf16.gmra.mxu0 %v748
      %v762 = vpop.f32.mrf.mxu0
      %v763 = vadd.f32 0.0, %v762
      %v764 = vpop.f32.mrf.mxu0
      %765 = vdwg.mxu0
      %v766 = vadd.f32 %v734, %v763
      %v767 = vrot.slane %v739, 1
      %v769 = vsel %vm581, %v767, 0
      %v772 = vsel %vm585, %v562, 0
      %774 = vmatpush.bf16.msra.mxu0 0
      %775 = vmatpush.bf16.msra.mxu0 0
      %776 = vmatpush.bf16.msra.mxu0 0
      %777 = vmatpush.bf16.msra.mxu0 0
      %778 = vmatpush.bf16.msra.mxu0 0
      %779 = vmatpush.bf16.msra.mxu0 0
      %780 = vmatpush.bf16.msra.mxu0 0
      %781 = vmatpush.bf16.msra.mxu0 %v772
      %782 = vmatmul.bf16.gmra.mxu0 %v769
      %v783 = vpop.f32.mrf.mxu0
      %v784 = vadd.f32 0.0, %v783
      %v785 = vpop.f32.mrf.mxu0
      %786 = vdwg.mxu0
      %v787 = vadd.f32 %v766, %v784
      %v788 = vld [vmem:[#allocation2] sm:$0xff]
      %v789 = vadd.f32 %v788, %v787
      %790 = vst.msk [vmem:[#allocation2] sm:$0xff] %vm581, %v789
      %p791 = scmp.eq.s32.totalorder %s27, 2
      // Predicated region
      $region53: #{encoder_forward.8} parent=47 // pred_check
        %p792 = pneg %p791
      $region54: #{encoder_forward.8} parent=47 // pred_check_branch
        %794 = sbr.rel (%p792) target = $region56
      $region55: #{encoder_forward.8} parent=47 // pred_region
        %v795 = vld [vmem:[#allocation2] sm:$0xff]
        %v796 = vld [vmem:[%s4] sm:$0x1]
        %v798 = vperm.slane %v796, 0
        %v800 = vadd.f32 %v795, %v798
        %vm801 = vcmp.ge.f32.partialorder %v800, 0.0
        %v802 = vld [vmem:[%s5] sm:$0x1]
        %v804 = vperm.slane %v802, 0
        %v806 = vmul.f32 %v804, %v800
        %v807 = vsel %vm801, %v800, %v806
        %v808 = vld [vmem:[%s534] sm:$0xf]
        %v809 = vunpack.c.l.bf16 %v808
        %v810 = vadd.f32 %v807, %v809
        %v811 = vpack.c.bf16 %v810, %v810
        %vm812 = vcmask 60416
        %813 = vst.msk [vmem:[%s546] sm:$0xf] %vm812, %v811
      $region56: #{encoder_forward.8} parent=47 // pred_fallthru
        _
      %p814 = scmp.lt.s32.totalorder %s24, 1
      %s815 = scalar_select %p814, %s24, 1
      %p816 = scmp.lt.s32.totalorder %s25, 3
      %s817 = scalar_select %p816, %s25, 3
      %p818 = scmp.lt.s32.totalorder %s26, 7
      %s819 = scalar_select %p818, %s26, 7
      %s820 = smul.addr %s817, 8
      %s821 = sadd.s32 %s819, %s820
      %s822 = smul.addr %s815, 32
      %s823 = sadd.s32 %s821, %s822
      %s824 = smul.addr %s823, 4
      %s825 = scalar_lea.vmem %s7, %s824
      // Predicated region
      $region57: #{encoder_forward.8} parent=47 // pred_check
        %p826 = pneg %p264
      $region58: #{encoder_forward.8} parent=47 // pred_check_branch
        %828 = sbr.rel (%p826) target = $region60
      $region59: #{encoder_forward.8} parent=47 // pred_region
        _
      $region60: #{encoder_forward.8} parent=47 // pred_fallthru
        _
    $region48: #{encoder_forward.8} parent=5 // pred_fallthru
      _
    %p829 = scmp.le.s32.totalorder 2, %s13
    // Predicated region
    $region61: #{encoder_forward.8} parent=5 // pred_check
      %p830 = pneg %p829
    $region62: #{encoder_forward.8} parent=5 // pred_check_branch
      %832 = sbr.rel (%p830) target = $region64
    $region63: #{encoder_forward.8} parent=5 // pred_region
      %s833 = ssub.s32 %s13, 2
      // Predicated region
      $region65: #{encoder_forward.8} parent=63 // pred_check
        %p834 = pneg %p270
      $region66: #{encoder_forward.8} parent=63 // pred_check_branch
        %836 = sbr.rel (%p834) target = $region68
      $region67: #{encoder_forward.8} parent=63 // pred_region
        %p837 = scmp.lt.s32.totalorder %s28, 1
        %s838 = scalar_select %p837, %s28, 1
        %p839 = scmp.lt.s32.totalorder %s29, 3
        %s840 = scalar_select %p839, %s29, 3
        %p841 = scmp.lt.s32.totalorder %s30, 7
        %s842 = scalar_select %p841, %s30, 7
        %s843 = smul.addr %s840, 8
        %s844 = sadd.s32 %s842, %s843
        %s845 = smul.addr %s838, 32
        %s846 = sadd.s32 %s844, %s845
        %s847 = smul.addr %s846, 4
        %s848 = scalar_lea.vmem %s7, %s847
      $region68: #{encoder_forward.8} parent=63 // pred_fallthru
        _
    $region64: #{encoder_forward.8} parent=5 // pred_fallthru
      _
  $region6: #{encoder_forward.8} parent=0 // loop_footer
    %s17 = sadd.s32 1, %s13
  $region7: #{encoder_forward.8} parent=0 // loop_footer_branch
    %12 = sbr.rel target = $region3
  $region8: #{encoder_forward.8} parent=0 // loop_exit
    _

// kernel: encoder_forward.9
$region0: #{encoder_forward.9}
  #allocation0 [shape = 'u32[]', space=smem, size = 0x4, offset = 0x4, fixed_abs, tag = 'smem constant byte address 0x4 - core index']
  #allocation1 [shape = 'u32[72,128]{1,0:T(1,128)}', space=vmem, size = 0x9000, scoped, tag = 'internal scratch']
  #allocation2 [shape = 'f32[4,48]{1,0:T(4,128)}', space=vmem, size = 0x800, scoped, tag = 'scratch operand']
  %s0 = inlined_call_operand.vmem [shape: bf16[2,6,10,5,8], index: 0, kind: input, shape index: {}, may-alias: {0,2,4}]
  %s1 = inlined_call_operand.vmem [shape: bf16[2,6,10,5,8], index: 1, kind: input, shape index: {}, may-alias: {1,3,5}]
  %s2 = inlined_call_operand.vmem [shape: bf16[2,6,10,5,8], index: 2, kind: input, shape index: {}, may-alias: {0,2,4}]
  %s3 = inlined_call_operand.vmem [shape: bf16[2,6,10,5,8], index: 3, kind: input, shape index: {}, may-alias: {1,3,5}]
  %s4 = inlined_call_operand.vmem [shape: bf16[2,6,10,5,8], index: 4, kind: input, shape index: {}, may-alias: {0,2,4}]
  %s5 = inlined_call_operand.vmem [shape: bf16[2,6,10,5,8], index: 5, kind: input, shape index: {}, may-alias: {1,3,5}]
  %s6 = inlined_call_operand.vmem [shape: bf16[3,72,48], index: 6, kind: input, shape index: {}]
  %s7 = inlined_call_operand.vmem [shape: f32[1,48], index: 7, kind: input, shape index: {}]
  %s8 = inlined_call_operand.vmem [shape: f32[1,48], index: 8, kind: input, shape index: {}]
  %s9 = inlined_call_operand.vmem [shape: bf16[2,4,4,4,8], index: 9, kind: output, shape index: {0}]
  %s10 = inlined_call_operand.vmem [shape: bf16[2,4,4,4,8], index: 10, kind: output, shape index: {1}]
  %s11 = inlined_call_operand.vmem [shape: bf16[2,4,4,4,16], index: 11, kind: output, shape index: {2}]
  %s12 = inlined_call_operand.vmem [shape: bf16[2,4,4,4,16], index: 12, kind: output, shape index: {3}]
  %13 = xla_tuple %s9, %s10, %s11, %s12
  %s14 = sld [smem:[#allocation0]]
  $region101: #{encoder_forward.9} parent=0
    _
  %s16 = ssub.s32 1, %s14
  %s17 = scalar_select 0, %s16, %s14
  loop: start=0, step=1, limit=98
  $region2: #{encoder_forward.9} parent=0 // loop_pre_header
    _
  $region3: #{encoder_forward.9} parent=0 // loop_header
    %s19 = sphi 0, %s23
    %p20 = scmp.ge.s32.totalorder %s19, 98
    %s26 = sphi 0, %s52
    %s27 = sphi 0, %s48
    %s28 = sphi 0, %s44
    %s29 = sphi 0, %s40
    %s30 = sphi 0, %s26
    %s31 = sphi 0, %s27
    %s32 = sphi 0, %s28
    %s33 = sphi 0, %s29
    %s34 = sphi 0, %s30
    %s35 = sphi 0, %s31
    %s36 = sphi 0, %s32
    %s37 = sphi 0, %s33
    %s63 = sphi 0, %s65
    %s66 = sphi 0, %s63
    %s67 = sphi 0, %s66
    %s83 = sphi 0, %s67
    %s97 = sphi 0, %s99
    %s100 = sphi 0, %s97
    %s101 = sphi 0, %s100
    %s117 = sphi 0, %s101
    %s133 = sphi 0, %s135
    %s136 = sphi 0, %s133
    %s137 = sphi 0, %s136
    %s153 = sphi 0, %s137
    %s169 = sphi 0, %s171
    %s172 = sphi 0, %s169
    %s173 = sphi 0, %s172
    %s189 = sphi 0, %s173
    %s205 = sphi 0, %s207
    %s208 = sphi 0, %s205
    %s209 = sphi 0, %s208
    %s225 = sphi 0, %s209
    %s241 = sphi 0, %s243
    %s244 = sphi 0, %s241
    %s245 = sphi 0, %s244
    %s261 = sphi 0, %s245
    %s267 = sphi 0, %s269
    %s270 = sphi 0, %s267
    %s271 = sphi 0, %s270
    %s287 = sphi 0, %s271
    %s291 = sphi 0, %s291
    %s293 = sphi 0, %s291
    %s294 = sphi 0, %s293
    %s308 = sphi 0, %s294
    %s312 = sphi 0, %s312
    %s314 = sphi 0, %s312
    %s315 = sphi 0, %s314
    %s329 = sphi 0, %s315
    %s339 = sphi 0, %s341
    %s342 = sphi 0, %s339
    %s343 = sphi 0, %s342
    %s359 = sphi 0, %s343
    %s369 = sphi 0, %s371
    %s372 = sphi 0, %s369
    %s373 = sphi 0, %s372
    %s389 = sphi 0, %s373
    %s399 = sphi 0, %s401
    %s402 = sphi 0, %s399
    %s403 = sphi 0, %s402
    %s419 = sphi 0, %s403
    %s429 = sphi 0, %s431
    %s432 = sphi 0, %s429
    %s433 = sphi 0, %s432
    %s449 = sphi 0, %s433
  $region4: #{encoder_forward.9} parent=0 // loop_header_branch
    %22 = sbr.rel (%p20) target = $region8
  $region5: #{encoder_forward.9} parent=0 // loop_body
    %s24 = ssub.s32 %s19, 1
    %s25 = ssub.s32 %s19, 2
    %s38 = sadd.s32 1, %s29
    %p39 = scmp.ge.s32.totalorder %s38, 3
    %s40 = scalar_select %p39, 0, %s38
    %s41 = sadd.s32 1, %s28
    %s42 = scalar_select %p39, %s41, %s28
    %p43 = scmp.ge.s32.totalorder %s42, 4
    %s44 = scalar_select %p43, 0, %s42
    %s45 = sadd.s32 1, %s27
    %s46 = scalar_select %p43, %s45, %s27
    %p47 = scmp.ge.s32.totalorder %s46, 4
    %s48 = scalar_select %p47, 0, %s46
    %s49 = sadd.s32 1, %s26
    %s50 = scalar_select %p47, %s49, %s26
    %p51 = scmp.ge.s32.totalorder %s50, 2
    %s52 = scalar_select %p51, 0, %s50
    %s53 = sadd.s32 %s27, %s29
    %s54 = smul.u32 %s28, 2
    %s55 = sadd.s32 %s48, %s40
    %s56 = smul.u32 %s44, 2
    %s57 = ssub.s32 %s26, %s52
    %s58 = ssub.s32 %s53, %s55
    %s59 = sor.u32 %s57, %s58
    %s60 = ssub.s32 %s54, %s56
    %s61 = sor.u32 %s59, %s60
    %p62 = scmp.eq.s32.totalorder %s61, 0
    %s64 = sadd.s32 %s63, 1
    %s65 = scalar_select %p62, %s63, %s64
    %p68 = pneg %p62
    %p69 = scmp.eq.s32.totalorder %s19, 95
    %p70 = por %p68, %p69
    %p71 = scmp.ne.s32.totalorder %s63, %s66
    %p72 = scmp.eq.s32.totalorder %s19, 0
    %p73 = por %p71, %p72
    %p74 = scmp.ne.s32.totalorder %s63, %s66
    %p75 = scmp.eq.s32.totalorder %s24, 95
    %p76 = por %p74, %p75
    %p77 = scmp.ne.s32.totalorder %s66, %s67
    %p78 = scmp.eq.s32.totalorder %s24, 0
    %p79 = por %p77, %p78
    %p80 = scmp.ne.s32.totalorder %s66, %s67
    %p81 = scmp.eq.s32.totalorder %s25, 95
    %p82 = por %p80, %p81
    %p84 = scmp.ne.s32.totalorder %s67, %s83
    %p85 = scmp.eq.s32.totalorder %s25, 0
    %p86 = por %p84, %p85
    %s87 = sadd.s32 %s27, %s29
    %s88 = smul.u32 %s28, 2
    %s89 = sadd.s32 %s48, %s40
    %s90 = smul.u32 %s44, 2
    %s91 = ssub.s32 %s26, %s52
    %s92 = ssub.s32 %s87, %s89
    %s93 = sor.u32 %s91, %s92
    %s94 = ssub.s32 %s88, %s90
    %s95 = sor.u32 %s93, %s94
    %p96 = scmp.eq.s32.totalorder %s95, 0
    %s98 = sadd.s32 %s97, 1
    %s99 = scalar_select %p96, %s97, %s98
    %p102 = pneg %p96
    %p103 = scmp.eq.s32.totalorder %s19, 95
    %p104 = por %p102, %p103
    %p105 = scmp.ne.s32.totalorder %s97, %s100
    %p106 = scmp.eq.s32.totalorder %s19, 0
    %p107 = por %p105, %p106
    %p108 = scmp.ne.s32.totalorder %s97, %s100
    %p109 = scmp.eq.s32.totalorder %s24, 95
    %p110 = por %p108, %p109
    %p111 = scmp.ne.s32.totalorder %s100, %s101
    %p112 = scmp.eq.s32.totalorder %s24, 0
    %p113 = por %p111, %p112
    %p114 = scmp.ne.s32.totalorder %s100, %s101
    %p115 = scmp.eq.s32.totalorder %s25, 95
    %p116 = por %p114, %p115
    %p118 = scmp.ne.s32.totalorder %s101, %s117
    %p119 = scmp.eq.s32.totalorder %s25, 0
    %p120 = por %p118, %p119
    %s121 = sadd.s32 %s27, %s29
    %s122 = smul.u32 %s28, 2
    %s123 = sadd.s32 %s122, 1
    %s124 = sadd.s32 %s48, %s40
    %s125 = smul.u32 %s44, 2
    %s126 = sadd.s32 %s125, 1
    %s127 = ssub.s32 %s26, %s52
    %s128 = ssub.s32 %s121, %s124
    %s129 = sor.u32 %s127, %s128
    %s130 = ssub.s32 %s123, %s126
    %s131 = sor.u32 %s129, %s130
    %p132 = scmp.eq.s32.totalorder %s131, 0
    %s134 = sadd.s32 %s133, 1
    %s135 = scalar_select %p132, %s133, %s134
    %p138 = pneg %p132
    %p139 = scmp.eq.s32.totalorder %s19, 95
    %p140 = por %p138, %p139
    %p141 = scmp.ne.s32.totalorder %s133, %s136
    %p142 = scmp.eq.s32.totalorder %s19, 0
    %p143 = por %p141, %p142
    %p144 = scmp.ne.s32.totalorder %s133, %s136
    %p145 = scmp.eq.s32.totalorder %s24, 95
    %p146 = por %p144, %p145
    %p147 = scmp.ne.s32.totalorder %s136, %s137
    %p148 = scmp.eq.s32.totalorder %s24, 0
    %p149 = por %p147, %p148
    %p150 = scmp.ne.s32.totalorder %s136, %s137
    %p151 = scmp.eq.s32.totalorder %s25, 95
    %p152 = por %p150, %p151
    %p154 = scmp.ne.s32.totalorder %s137, %s153
    %p155 = scmp.eq.s32.totalorder %s25, 0
    %p156 = por %p154, %p155
    %s157 = sadd.s32 %s27, %s29
    %s158 = smul.u32 %s28, 2
    %s159 = sadd.s32 %s158, 1
    %s160 = sadd.s32 %s48, %s40
    %s161 = smul.u32 %s44, 2
    %s162 = sadd.s32 %s161, 1
    %s163 = ssub.s32 %s26, %s52
    %s164 = ssub.s32 %s157, %s160
    %s165 = sor.u32 %s163, %s164
    %s166 = ssub.s32 %s159, %s162
    %s167 = sor.u32 %s165, %s166
    %p168 = scmp.eq.s32.totalorder %s167, 0
    %s170 = sadd.s32 %s169, 1
    %s171 = scalar_select %p168, %s169, %s170
    %p174 = pneg %p168
    %p175 = scmp.eq.s32.totalorder %s19, 95
    %p176 = por %p174, %p175
    %p177 = scmp.ne.s32.totalorder %s169, %s172
    %p178 = scmp.eq.s32.totalorder %s19, 0
    %p179 = por %p177, %p178
    %p180 = scmp.ne.s32.totalorder %s169, %s172
    %p181 = scmp.eq.s32.totalorder %s24, 95
    %p182 = por %p180, %p181
    %p183 = scmp.ne.s32.totalorder %s172, %s173
    %p184 = scmp.eq.s32.totalorder %s24, 0
    %p185 = por %p183, %p184
    %p186 = scmp.ne.s32.totalorder %s172, %s173
    %p187 = scmp.eq.s32.totalorder %s25, 95
    %p188 = por %p186, %p187
    %p190 = scmp.ne.s32.totalorder %s173, %s189
    %p191 = scmp.eq.s32.totalorder %s25, 0
    %p192 = por %p190, %p191
    %s193 = sadd.s32 %s27, %s29
    %s194 = smul.u32 %s28, 2
    %s195 = sadd.s32 %s194, 2
    %s196 = sadd.s32 %s48, %s40
    %s197 = smul.u32 %s44, 2
    %s198 = sadd.s32 %s197, 2
    %s199 = ssub.s32 %s26, %s52
    %s200 = ssub.s32 %s193, %s196
    %s201 = sor.u32 %s199, %s200
    %s202 = ssub.s32 %s195, %s198
    %s203 = sor.u32 %s201, %s202
    %p204 = scmp.eq.s32.totalorder %s203, 0
    %s206 = sadd.s32 %s205, 1
    %s207 = scalar_select %p204, %s205, %s206
    %p210 = pneg %p204
    %p211 = scmp.eq.s32.totalorder %s19, 95
    %p212 = por %p210, %p211
    %p213 = scmp.ne.s32.totalorder %s205, %s208
    %p214 = scmp.eq.s32.totalorder %s19, 0
    %p215 = por %p213, %p214
    %p216 = scmp.ne.s32.totalorder %s205, %s208
    %p217 = scmp.eq.s32.totalorder %s24, 95
    %p218 = por %p216, %p217
    %p219 = scmp.ne.s32.totalorder %s208, %s209
    %p220 = scmp.eq.s32.totalorder %s24, 0
    %p221 = por %p219, %p220
    %p222 = scmp.ne.s32.totalorder %s208, %s209
    %p223 = scmp.eq.s32.totalorder %s25, 95
    %p224 = por %p222, %p223
    %p226 = scmp.ne.s32.totalorder %s209, %s225
    %p227 = scmp.eq.s32.totalorder %s25, 0
    %p228 = por %p226, %p227
    %s229 = sadd.s32 %s27, %s29
    %s230 = smul.u32 %s28, 2
    %s231 = sadd.s32 %s230, 2
    %s232 = sadd.s32 %s48, %s40
    %s233 = smul.u32 %s44, 2
    %s234 = sadd.s32 %s233, 2
    %s235 = ssub.s32 %s26, %s52
    %s236 = ssub.s32 %s229, %s232
    %s237 = sor.u32 %s235, %s236
    %s238 = ssub.s32 %s231, %s234
    %s239 = sor.u32 %s237, %s238
    %p240 = scmp.eq.s32.totalorder %s239, 0
    %s242 = sadd.s32 %s241, 1
    %s243 = scalar_select %p240, %s241, %s242
    %p246 = pneg %p240
    %p247 = scmp.eq.s32.totalorder %s19, 95
    %p248 = por %p246, %p247
    %p249 = scmp.ne.s32.totalorder %s241, %s244
    %p250 = scmp.eq.s32.totalorder %s19, 0
    %p251 = por %p249, %p250
    %p252 = scmp.ne.s32.totalorder %s241, %s244
    %p253 = scmp.eq.s32.totalorder %s24, 95
    %p254 = por %p252, %p253
    %p255 = scmp.ne.s32.totalorder %s244, %s245
    %p256 = scmp.eq.s32.totalorder %s24, 0
    %p257 = por %p255, %p256
    %p258 = scmp.ne.s32.totalorder %s244, %s245
    %p259 = scmp.eq.s32.totalorder %s25, 95
    %p260 = por %p258, %p259
    %p262 = scmp.ne.s32.totalorder %s245, %s261
    %p263 = scmp.eq.s32.totalorder %s25, 0
    %p264 = por %p262, %p263
    %s265 = ssub.s32 %s29, %s40
    %p266 = scmp.eq.s32.totalorder %s265, 0
    %s268 = sadd.s32 %s267, 1
    %s269 = scalar_select %p266, %s267, %s268
    %p272 = pneg %p266
    %p273 = scmp.eq.s32.totalorder %s19, 95
    %p274 = por %p272, %p273
    %p275 = scmp.ne.s32.totalorder %s267, %s270
    %p276 = scmp.eq.s32.totalorder %s19, 0
    %p277 = por %p275, %p276
    %p278 = scmp.ne.s32.totalorder %s267, %s270
    %p279 = scmp.eq.s32.totalorder %s24, 95
    %p280 = por %p278, %p279
    %p281 = scmp.ne.s32.totalorder %s270, %s271
    %p282 = scmp.eq.s32.totalorder %s24, 0
    %p283 = por %p281, %p282
    %p284 = scmp.ne.s32.totalorder %s270, %s271
    %p285 = scmp.eq.s32.totalorder %s25, 95
    %p286 = por %p284, %p285
    %p288 = scmp.ne.s32.totalorder %s271, %s287
    %p289 = scmp.eq.s32.totalorder %s25, 0
    %p290 = por %p288, %p289
    %s292 = sadd.s32 %s291, 1
    %p295 = scmp.eq.s32.totalorder %s19, 95
    %p296 = scmp.ne.s32.totalorder %s291, %s293
    %p297 = scmp.eq.s32.totalorder %s19, 0
    %p298 = por %p296, %p297
    %p299 = scmp.ne.s32.totalorder %s291, %s293
    %p300 = scmp.eq.s32.totalorder %s24, 95
    %p301 = por %p299, %p300
    %p302 = scmp.ne.s32.totalorder %s293, %s294
    %p303 = scmp.eq.s32.totalorder %s24, 0
    %p304 = por %p302, %p303
    %p305 = scmp.ne.s32.totalorder %s293, %s294
    %p306 = scmp.eq.s32.totalorder %s25, 95
    %p307 = por %p305, %p306
    %p309 = scmp.ne.s32.totalorder %s294, %s308
    %p310 = scmp.eq.s32.totalorder %s25, 0
    %p311 = por %p309, %p310
    %s313 = sadd.s32 %s312, 1
    %p316 = scmp.eq.s32.totalorder %s19, 95
    %p317 = scmp.ne.s32.totalorder %s312, %s314
    %p318 = scmp.eq.s32.totalorder %s19, 0
    %p319 = por %p317, %p318
    %p320 = scmp.ne.s32.totalorder %s312, %s314
    %p321 = scmp.eq.s32.totalorder %s24, 95
    %p322 = por %p320, %p321
    %p323 = scmp.ne.s32.totalorder %s314, %s315
    %p324 = scmp.eq.s32.totalorder %s24, 0
    %p325 = por %p323, %p324
    %p326 = scmp.ne.s32.totalorder %s314, %s315
    %p327 = scmp.eq.s32.totalorder %s25, 95
    %p328 = por %p326, %p327
    %p330 = scmp.ne.s32.totalorder %s315, %s329
    %p331 = scmp.eq.s32.totalorder %s25, 0
    %p332 = por %p330, %p331
    %s333 = ssub.s32 %s26, %s52
    %s334 = ssub.s32 %s27, %s48
    %s335 = sor.u32 %s333, %s334
    %s336 = ssub.s32 %s28, %s44
    %s337 = sor.u32 %s335, %s336
    %p338 = scmp.eq.s32.totalorder %s337, 0
    %s340 = sadd.s32 %s339, 1
    %s341 = scalar_select %p338, %s339, %s340
    %p344 = pneg %p338
    %p345 = scmp.eq.s32.totalorder %s19, 95
    %p346 = por %p344, %p345
    %p347 = scmp.ne.s32.totalorder %s339, %s342
    %p348 = scmp.eq.s32.totalorder %s19, 0
    %p349 = por %p347, %p348
    %p350 = scmp.ne.s32.totalorder %s339, %s342
    %p351 = scmp.eq.s32.totalorder %s24, 95
    %p352 = por %p350, %p351
    %p353 = scmp.ne.s32.totalorder %s342, %s343
    %p354 = scmp.eq.s32.totalorder %s24, 0
    %p355 = por %p353, %p354
    %p356 = scmp.ne.s32.totalorder %s342, %s343
    %p357 = scmp.eq.s32.totalorder %s25, 95
    %p358 = por %p356, %p357
    %p360 = scmp.ne.s32.totalorder %s343, %s359
    %p361 = scmp.eq.s32.totalorder %s25, 0
    %p362 = por %p360, %p361
    %s363 = ssub.s32 %s26, %s52
    %s364 = ssub.s32 %s27, %s48
    %s365 = sor.u32 %s363, %s364
    %s366 = ssub.s32 %s28, %s44
    %s367 = sor.u32 %s365, %s366
    %p368 = scmp.eq.s32.totalorder %s367, 0
    %s370 = sadd.s32 %s369, 1
    %s371 = scalar_select %p368, %s369, %s370
    %p374 = pneg %p368
    %p375 = scmp.eq.s32.totalorder %s19, 95
    %p376 = por %p374, %p375
    %p377 = scmp.ne.s32.totalorder %s369, %s372
    %p378 = scmp.eq.s32.totalorder %s19, 0
    %p379 = por %p377, %p378
    %p380 = scmp.ne.s32.totalorder %s369, %s372
    %p381 = scmp.eq.s32.totalorder %s24, 95
    %p382 = por %p380, %p381
    %p383 = scmp.ne.s32.totalorder %s372, %s373
    %p384 = scmp.eq.s32.totalorder %s24, 0
    %p385 = por %p383, %p384
    %p386 = scmp.ne.s32.totalorder %s372, %s373
    %p387 = scmp.eq.s32.totalorder %s25, 95
    %p388 = por %p386, %p387
    %p390 = scmp.ne.s32.totalorder %s373, %s389
    %p391 = scmp.eq.s32.totalorder %s25, 0
    %p392 = por %p390, %p391
    %s393 = ssub.s32 %s26, %s52
    %s394 = ssub.s32 %s27, %s48
    %s395 = sor.u32 %s393, %s394
    %s396 = ssub.s32 %s28, %s44
    %s397 = sor.u32 %s395, %s396
    %p398 = scmp.eq.s32.totalorder %s397, 0
    %s400 = sadd.s32 %s399, 1
    %s401 = scalar_select %p398, %s399, %s400
    %p404 = pneg %p398
    %p405 = scmp.eq.s32.totalorder %s19, 95
    %p406 = por %p404, %p405
    %p407 = scmp.ne.s32.totalorder %s399, %s402
    %p408 = scmp.eq.s32.totalorder %s19, 0
    %p409 = por %p407, %p408
    %p410 = scmp.ne.s32.totalorder %s399, %s402
    %p411 = scmp.eq.s32.totalorder %s24, 95
    %p412 = por %p410, %p411
    %p413 = scmp.ne.s32.totalorder %s402, %s403
    %p414 = scmp.eq.s32.totalorder %s24, 0
    %p415 = por %p413, %p414
    %p416 = scmp.ne.s32.totalorder %s402, %s403
    %p417 = scmp.eq.s32.totalorder %s25, 95
    %p418 = por %p416, %p417
    %p420 = scmp.ne.s32.totalorder %s403, %s419
    %p421 = scmp.eq.s32.totalorder %s25, 0
    %p422 = por %p420, %p421
    %s423 = ssub.s32 %s26, %s52
    %s424 = ssub.s32 %s27, %s48
    %s425 = sor.u32 %s423, %s424
    %s426 = ssub.s32 %s28, %s44
    %s427 = sor.u32 %s425, %s426
    %p428 = scmp.eq.s32.totalorder %s427, 0
    %s430 = sadd.s32 %s429, 1
    %s431 = scalar_select %p428, %s429, %s430
    %p434 = pneg %p428
    %p435 = scmp.eq.s32.totalorder %s19, 95
    %p436 = por %p434, %p435
    %p437 = scmp.ne.s32.totalorder %s429, %s432
    %p438 = scmp.eq.s32.totalorder %s19, 0
    %p439 = por %p437, %p438
    %p440 = scmp.ne.s32.totalorder %s429, %s432
    %p441 = scmp.eq.s32.totalorder %s24, 95
    %p442 = por %p440, %p441
    %p443 = scmp.ne.s32.totalorder %s432, %s433
    %p444 = scmp.eq.s32.totalorder %s24, 0
    %p445 = por %p443, %p444
    %p446 = scmp.ne.s32.totalorder %s432, %s433
    %p447 = scmp.eq.s32.totalorder %s25, 95
    %p448 = por %p446, %p447
    %p450 = scmp.ne.s32.totalorder %s433, %s449
    %p451 = scmp.eq.s32.totalorder %s25, 0
    %p452 = por %p450, %p451
    %p453 = scmp.le.s32.totalorder 1, %s19
    %p454 = scmp.lt.s32.totalorder %s19, 97
    %p455 = pnand %p453, %p454
    %p456 = pneg %p455
    // Predicated region
    $region9: #{encoder_forward.9} parent=5 // pred_check
      _
    $region10: #{encoder_forward.9} parent=5 // pred_check_branch
      %458 = sbr.rel (%p455) target = $region12
    $region11: #{encoder_forward.9} parent=5 // pred_region
      %s459 = ssub.s32 %s19, 1
      // Predicated region
      $region13: #{encoder_forward.9} parent=11 // pred_check
        %p460 = pneg %p304
      $region14: #{encoder_forward.9} parent=11 // pred_check_branch
        %462 = sbr.rel (%p460) target = $region16
      $region15: #{encoder_forward.9} parent=11 // pred_region
        _
      $region16: #{encoder_forward.9} parent=11 // pred_fallthru
        _
      // Predicated region
      $region17: #{encoder_forward.9} parent=11 // pred_check
        %p463 = pneg %p325
      $region18: #{encoder_forward.9} parent=11 // pred_check_branch
        %465 = sbr.rel (%p463) target = $region20
      $region19: #{encoder_forward.9} parent=11 // pred_region
        _
      $region20: #{encoder_forward.9} parent=11 // pred_fallthru
        _
    $region12: #{encoder_forward.9} parent=5 // pred_fallthru
      _
    %p466 = scmp.lt.s32.totalorder %s19, 96
    // Predicated region
    $region21: #{encoder_forward.9} parent=5 // pred_check
      %p467 = pneg %p466
    $region22: #{encoder_forward.9} parent=5 // pred_check_branch
      %469 = sbr.rel (%p467) target = $region24
    $region23: #{encoder_forward.9} parent=5 // pred_region
      // Predicated region
      $region25: #{encoder_forward.9} parent=23 // pred_check
        %p470 = pneg %p73
      $region26: #{encoder_forward.9} parent=23 // pred_check_branch
        %472 = sbr.rel (%p470) target = $region28
      $region27: #{encoder_forward.9} parent=23 // pred_region
        %s473 = sadd.s32 %s27, %s29
        %s474 = smul.u32 %s28, 2
        %p475 = scmp.lt.s32.totalorder %s26, 1
        %s476 = scalar_select %p475, %s26, 1
        %p477 = scmp.lt.s32.totalorder %s473, 5
        %s478 = scalar_select %p477, %s473, 5
        %p479 = scmp.lt.s32.totalorder %s474, 9
        %s480 = scalar_select %p479, %s474, 9
        %s481 = smul.addr %s478, 10
        %s482 = sadd.s32 %s480, %s481
        %s483 = smul.addr %s476, 60
        %s484 = sadd.s32 %s482, %s483
        %s485 = smul.addr %s484, 4
        %s486 = scalar_lea.vmem %s0, %s485
        %s487 = sadd.s32 %s27, %s29
        %s488 = smul.u32 %s28, 2
      $region28: #{encoder_forward.9} parent=23 // pred_fallthru
        _
      // Predicated region
      $region29: #{encoder_forward.9} parent=23 // pred_check
        %p489 = pneg %p107
      $region30: #{encoder_forward.9} parent=23 // pred_check_branch
        %491 = sbr.rel (%p489) target = $region32
      $region31: #{encoder_forward.9} parent=23 // pred_region
        %s492 = sadd.s32 %s27, %s29
        %s493 = smul.u32 %s28, 2
        %p494 = scmp.lt.s32.totalorder %s26, 1
        %s495 = scalar_select %p494, %s26, 1
        %p496 = scmp.lt.s32.totalorder %s492, 5
        %s497 = scalar_select %p496, %s492, 5
        %p498 = scmp.lt.s32.totalorder %s493, 9
        %s499 = scalar_select %p498, %s493, 9
        %s500 = smul.addr %s497, 10
        %s501 = sadd.s32 %s499, %s500
        %s502 = smul.addr %s495, 60
        %s503 = sadd.s32 %s501, %s502
        %s504 = smul.addr %s503, 4
        %s505 = scalar_lea.vmem %s1, %s504
        %s506 = sadd.s32 %s27, %s29
        %s507 = smul.u32 %s28, 2
      $region32: #{encoder_forward.9} parent=23 // pred_fallthru
        _
      // Predicated region
      $region33: #{encoder_forward.9} parent=23 // pred_check
        %p508 = pneg %p143
      $region34: #{encoder_forward.9} parent=23 // pred_check_branch
        %510 = sbr.rel (%p508) target = $region36
      $region35: #{encoder_forward.9} parent=23 // pred_region
        %s511 = sadd.s32 %s27, %s29
        %s512 = smul.u32 %s28, 2
        %s513 = sadd.s32 %s512, 1
        %p514 = scmp.lt.s32.totalorder %s26, 1
        %s515 = scalar_select %p514, %s26, 1
        %p516 = scmp.lt.s32.totalorder %s511, 5
        %s517 = scalar_select %p516, %s511, 5
        %p518 = scmp.lt.s32.totalorder %s513, 9
        %s519 = scalar_select %p518, %s513, 9
        %s520 = smul.addr %s517, 10
        %s521 = sadd.s32 %s519, %s520
        %s522 = smul.addr %s515, 60
        %s523 = sadd.s32 %s521, %s522
        %s524 = smul.addr %s523, 4
        %s525 = scalar_lea.vmem %s2, %s524
        %s526 = sadd.s32 %s27, %s29
        %s527 = smul.u32 %s28, 2
        %s528 = sadd.s32 %s527, 1
      $region36: #{encoder_forward.9} parent=23 // pred_fallthru
        _
      // Predicated region
      $region37: #{encoder_forward.9} parent=23 // pred_check
        %p529 = pneg %p179
      $region38: #{encoder_forward.9} parent=23 // pred_check_branch
        %531 = sbr.rel (%p529) target = $region40
      $region39: #{encoder_forward.9} parent=23 // pred_region
        %s532 = sadd.s32 %s27, %s29
        %s533 = smul.u32 %s28, 2
        %s534 = sadd.s32 %s533, 1
        %p535 = scmp.lt.s32.totalorder %s26, 1
        %s536 = scalar_select %p535, %s26, 1
        %p537 = scmp.lt.s32.totalorder %s532, 5
        %s538 = scalar_select %p537, %s532, 5
        %p539 = scmp.lt.s32.totalorder %s534, 9
        %s540 = scalar_select %p539, %s534, 9
        %s541 = smul.addr %s538, 10
        %s542 = sadd.s32 %s540, %s541
        %s543 = smul.addr %s536, 60
        %s544 = sadd.s32 %s542, %s543
        %s545 = smul.addr %s544, 4
        %s546 = scalar_lea.vmem %s3, %s545
        %s547 = sadd.s32 %s27, %s29
        %s548 = smul.u32 %s28, 2
        %s549 = sadd.s32 %s548, 1
      $region40: #{encoder_forward.9} parent=23 // pred_fallthru
        _
      // Predicated region
      $region41: #{encoder_forward.9} parent=23 // pred_check
        %p550 = pneg %p215
      $region42: #{encoder_forward.9} parent=23 // pred_check_branch
        %552 = sbr.rel (%p550) target = $region44
      $region43: #{encoder_forward.9} parent=23 // pred_region
        %s553 = sadd.s32 %s27, %s29
        %s554 = smul.u32 %s28, 2
        %s555 = sadd.s32 %s554, 2
        %p556 = scmp.lt.s32.totalorder %s26, 1
        %s557 = scalar_select %p556, %s26, 1
        %p558 = scmp.lt.s32.totalorder %s553, 5
        %s559 = scalar_select %p558, %s553, 5
        %p560 = scmp.lt.s32.totalorder %s555, 9
        %s561 = scalar_select %p560, %s555, 9
        %s562 = smul.addr %s559, 10
        %s563 = sadd.s32 %s561, %s562
        %s564 = smul.addr %s557, 60
        %s565 = sadd.s32 %s563, %s564
        %s566 = smul.addr %s565, 4
        %s567 = scalar_lea.vmem %s4, %s566
        %s568 = sadd.s32 %s27, %s29
        %s569 = smul.u32 %s28, 2
        %s570 = sadd.s32 %s569, 2
      $region44: #{encoder_forward.9} parent=23 // pred_fallthru
        _
      // Predicated region
      $region45: #{encoder_forward.9} parent=23 // pred_check
        %p571 = pneg %p251
      $region46: #{encoder_forward.9} parent=23 // pred_check_branch
        %573 = sbr.rel (%p571) target = $region48
      $region47: #{encoder_forward.9} parent=23 // pred_region
        %s574 = sadd.s32 %s27, %s29
        %s575 = smul.u32 %s28, 2
        %s576 = sadd.s32 %s575, 2
        %p577 = scmp.lt.s32.totalorder %s26, 1
        %s578 = scalar_select %p577, %s26, 1
        %p579 = scmp.lt.s32.totalorder %s574, 5
        %s580 = scalar_select %p579, %s574, 5
        %p581 = scmp.lt.s32.totalorder %s576, 9
        %s582 = scalar_select %p581, %s576, 9
        %s583 = smul.addr %s580, 10
        %s584 = sadd.s32 %s582, %s583
        %s585 = smul.addr %s578, 60
        %s586 = sadd.s32 %s584, %s585
        %s587 = smul.addr %s586, 4
        %s588 = scalar_lea.vmem %s5, %s587
        %s589 = sadd.s32 %s27, %s29
        %s590 = smul.u32 %s28, 2
        %s591 = sadd.s32 %s590, 2
      $region48: #{encoder_forward.9} parent=23 // pred_fallthru
        _
      // Predicated region
      $region49: #{encoder_forward.9} parent=23 // pred_check
        %p592 = pneg %p277
      $region50: #{encoder_forward.9} parent=23 // pred_check_branch
        %594 = sbr.rel (%p592) target = $region52
      $region51: #{encoder_forward.9} parent=23 // pred_region
        %p595 = scmp.lt.s32.totalorder %s29, 2
        %s596 = scalar_select %p595, %s29, 2
        %s597 = smul.addr %s596, 9
        %s598 = smul.addr %s597, 4
        %s599 = scalar_lea.vmem %s6, %s598
      $region52: #{encoder_forward.9} parent=23 // pred_fallthru
        _
    $region24: #{encoder_forward.9} parent=5 // pred_fallthru
      _
    %p600 = scmp.le.s32.totalorder 1, %s19
    %p601 = scmp.lt.s32.totalorder %s19, 97
    %p602 = pnand %p600, %p601
    %p603 = pneg %p602
    // Predicated region
    $region53: #{encoder_forward.9} parent=5 // pred_check
      _
    $region54: #{encoder_forward.9} parent=5 // pred_check_branch
      %605 = sbr.rel (%p602) target = $region56
    $region55: #{encoder_forward.9} parent=5 // pred_region
      %s606 = ssub.s32 %s19, 1
      %s607 = sadd.s32 %s31, %s33
      %s608 = smul.u32 %s32, 2
      %p609 = scmp.lt.s32.totalorder %s30, 1
      %s610 = scalar_select %p609, %s30, 1
      %p611 = scmp.lt.s32.totalorder %s607, 5
      %s612 = scalar_select %p611, %s607, 5
      %p613 = scmp.lt.s32.totalorder %s608, 9
      %s614 = scalar_select %p613, %s608, 9
      %s615 = smul.addr %s612, 10
      %s616 = sadd.s32 %s614, %s615
      %s617 = smul.addr %s610, 60
      %s618 = sadd.s32 %s616, %s617
      %s619 = smul.addr %s618, 4
      %s620 = scalar_lea.vmem %s0, %s619
      %p621 = pneg %p79
      %p622 = pneg %p76
      %s623 = sadd.s32 %s31, %s33
      %s624 = smul.u32 %s32, 2
      %p625 = scmp.lt.s32.totalorder %s30, 1
      %s626 = scalar_select %p625, %s30, 1
      %p627 = scmp.lt.s32.totalorder %s623, 5
      %s628 = scalar_select %p627, %s623, 5
      %p629 = scmp.lt.s32.totalorder %s624, 9
      %s630 = scalar_select %p629, %s624, 9
      %s631 = smul.addr %s628, 10
      %s632 = sadd.s32 %s630, %s631
      %s633 = smul.addr %s626, 60
      %s634 = sadd.s32 %s632, %s633
      %s635 = smul.addr %s634, 4
      %s636 = scalar_lea.vmem %s1, %s635
      %p637 = pneg %p113
      %p638 = pneg %p110
      %s639 = sadd.s32 %s31, %s33
      %s640 = smul.u32 %s32, 2
      %s641 = sadd.s32 %s640, 1
      %p642 = scmp.lt.s32.totalorder %s30, 1
      %s643 = scalar_select %p642, %s30, 1
      %p644 = scmp.lt.s32.totalorder %s639, 5
      %s645 = scalar_select %p644, %s639, 5
      %p646 = scmp.lt.s32.totalorder %s641, 9
      %s647 = scalar_select %p646, %s641, 9
      %s648 = smul.addr %s645, 10
      %s649 = sadd.s32 %s647, %s648
      %s650 = smul.addr %s643, 60
      %s651 = sadd.s32 %s649, %s650
      %s652 = smul.addr %s651, 4
      %s653 = scalar_lea.vmem %s2, %s652
      %p654 = pneg %p149
      %p655 = pneg %p146
      %s656 = sadd.s32 %s31, %s33
      %s657 = smul.u32 %s32, 2
      %s658 = sadd.s32 %s657, 1
      %p659 = scmp.lt.s32.totalorder %s30, 1
      %s660 = scalar_select %p659, %s30, 1
      %p661 = scmp.lt.s32.totalorder %s656, 5
      %s662 = scalar_select %p661, %s656, 5
      %p663 = scmp.lt.s32.totalorder %s658, 9
      %s664 = scalar_select %p663, %s658, 9
      %s665 = smul.addr %s662, 10
      %s666 = sadd.s32 %s664, %s665
      %s667 = smul.addr %s660, 60
      %s668 = sadd.s32 %s666, %s667
      %s669 = smul.addr %s668, 4
      %s670 = scalar_lea.vmem %s3, %s669
      %p671 = pneg %p185
      %p672 = pneg %p182
      %s673 = sadd.s32 %s31, %s33
      %s674 = smul.u32 %s32, 2
      %s675 = sadd.s32 %s674, 2
      %p676 = scmp.lt.s32.totalorder %s30, 1
      %s677 = scalar_select %p676, %s30, 1
      %p678 = scmp.lt.s32.totalorder %s673, 5
      %s679 = scalar_select %p678, %s673, 5
      %p680 = scmp.lt.s32.totalorder %s675, 9
      %s681 = scalar_select %p680, %s675, 9
      %s682 = smul.addr %s679, 10
      %s683 = sadd.s32 %s681, %s682
      %s684 = smul.addr %s677, 60
      %s685 = sadd.s32 %s683, %s684
      %s686 = smul.addr %s685, 4
      %s687 = scalar_lea.vmem %s4, %s686
      %p688 = pneg %p221
      %p689 = pneg %p218
      %s690 = sadd.s32 %s31, %s33
      %s691 = smul.u32 %s32, 2
      %s692 = sadd.s32 %s691, 2
      %p693 = scmp.lt.s32.totalorder %s30, 1
      %s694 = scalar_select %p693, %s30, 1
      %p695 = scmp.lt.s32.totalorder %s690, 5
      %s696 = scalar_select %p695, %s690, 5
      %p697 = scmp.lt.s32.totalorder %s692, 9
      %s698 = scalar_select %p697, %s692, 9
      %s699 = smul.addr %s696, 10
      %s700 = sadd.s32 %s698, %s699
      %s701 = smul.addr %s694, 60
      %s702 = sadd.s32 %s700, %s701
      %s703 = smul.addr %s702, 4
      %s704 = scalar_lea.vmem %s5, %s703
      %p705 = pneg %p257
      %p706 = pneg %p254
      %p707 = scmp.lt.s32.totalorder %s33, 2
      %s708 = scalar_select %p707, %s33, 2
      %s709 = smul.addr %s708, 9
      %s710 = smul.addr %s709, 4
      %s711 = scalar_lea.vmem %s6, %s710
      %p712 = pneg %p283
      %p713 = pneg %p280
      %p714 = pneg %p304
      %p715 = pneg %p301
      %p716 = pneg %p325
      %p717 = pneg %p322
      %p718 = pneg %p355
      %p719 = pneg %p352
      %p720 = scmp.lt.s32.totalorder %s30, 1
      %s721 = scalar_select %p720, %s30, 1
      %p722 = scmp.lt.s32.totalorder %s31, 3
      %s723 = scalar_select %p722, %s31, 3
      %p724 = scmp.lt.s32.totalorder %s32, 3
      %s725 = scalar_select %p724, %s32, 3
      %s726 = smul.addr %s723, 4
      %s727 = sadd.s32 %s725, %s726
      %s728 = smul.addr %s721, 16
      %s729 = sadd.s32 %s727, %s728
      %s730 = smul.addr %s729, 2
      %s731 = scalar_lea.vmem %s9, %s730
      %p732 = pneg %p385
      %p733 = pneg %p382
      %p734 = scmp.lt.s32.totalorder %s30, 1
      %s735 = scalar_select %p734, %s30, 1
      %p736 = scmp.lt.s32.totalorder %s31, 3
      %s737 = scalar_select %p736, %s31, 3
      %p738 = scmp.lt.s32.totalorder %s32, 3
      %s739 = scalar_select %p738, %s32, 3
      %s740 = smul.addr %s737, 4
      %s741 = sadd.s32 %s739, %s740
      %s742 = smul.addr %s735, 16
      %s743 = sadd.s32 %s741, %s742
      %s744 = smul.addr %s743, 2
      %s745 = scalar_lea.vmem %s10, %s744
      %p746 = pneg %p415
      %p747 = pneg %p412
      %p748 = scmp.lt.s32.totalorder %s30, 1
      %s749 = scalar_select %p748, %s30, 1
      %p750 = scmp.lt.s32.totalorder %s31, 3
      %s751 = scalar_select %p750, %s31, 3
      %p752 = scmp.lt.s32.totalorder %s32, 3
      %s753 = scalar_select %p752, %s32, 3
      %s754 = smul.addr %s751, 4
      %s755 = sadd.s32 %s753, %s754
      %s756 = smul.addr %s749, 16
      %s757 = sadd.s32 %s755, %s756
      %s758 = smul.addr %s757, 2
      %s759 = scalar_lea.vmem %s11, %s758
      %p760 = pneg %p445
      %p761 = pneg %p442
      %p762 = scmp.lt.s32.totalorder %s30, 1
      %s763 = scalar_select %p762, %s30, 1
      %p764 = scmp.lt.s32.totalorder %s31, 3
      %s765 = scalar_select %p764, %s31, 3
      %p766 = scmp.lt.s32.totalorder %s32, 3
      %s767 = scalar_select %p766, %s32, 3
      %s768 = smul.addr %s765, 4
      %s769 = sadd.s32 %s767, %s768
      %s770 = smul.addr %s763, 16
      %s771 = sadd.s32 %s769, %s770
      %s772 = smul.addr %s771, 2
      %s773 = scalar_lea.vmem %s12, %s772
      %s774 = sadd.s32 %s31, %s33
      %s775 = smul.u32 %s32, 2
      %p776 = scmp.lt.s32.totalorder %s30, 1
      %s777 = scalar_select %p776, %s30, 1
      %p778 = scmp.lt.s32.totalorder %s774, 5
      %s779 = scalar_select %p778, %s774, 5
      %p780 = scmp.lt.s32.totalorder %s775, 9
      %s781 = scalar_select %p780, %s775, 9
      %s782 = smul.addr %s779, 10
      %s783 = sadd.s32 %s781, %s782
      %s784 = smul.addr %s777, 60
      %s785 = sadd.s32 %s783, %s784
      %s786 = smul.addr %s785, 4
      %s787 = scalar_lea.vmem %s0, %s786
      %s788 = sadd.s32 %s31, %s33
      %s789 = smul.u32 %s32, 2
      %s790 = sadd.s32 %s31, %s33
      %s791 = smul.u32 %s32, 2
      %p792 = scmp.lt.s32.totalorder %s30, 1
      %s793 = scalar_select %p792, %s30, 1
      %p794 = scmp.lt.s32.totalorder %s790, 5
      %s795 = scalar_select %p794, %s790, 5
      %p796 = scmp.lt.s32.totalorder %s791, 9
      %s797 = scalar_select %p796, %s791, 9
      %s798 = smul.addr %s795, 10
      %s799 = sadd.s32 %s797, %s798
      %s800 = smul.addr %s793, 60
      %s801 = sadd.s32 %s799, %s800
      %s802 = smul.addr %s801, 4
      %s803 = scalar_lea.vmem %s1, %s802
      %s804 = sadd.s32 %s31, %s33
      %s805 = smul.u32 %s32, 2
      %s806 = sadd.s32 %s31, %s33
      %s807 = smul.u32 %s32, 2
      %s808 = sadd.s32 %s807, 1
      %p809 = scmp.lt.s32.totalorder %s30, 1
      %s810 = scalar_select %p809, %s30, 1
      %p811 = scmp.lt.s32.totalorder %s806, 5
      %s812 = scalar_select %p811, %s806, 5
      %p813 = scmp.lt.s32.totalorder %s808, 9
      %s814 = scalar_select %p813, %s808, 9
      %s815 = smul.addr %s812, 10
      %s816 = sadd.s32 %s814, %s815
      %s817 = smul.addr %s810, 60
      %s818 = sadd.s32 %s816, %s817
      %s819 = smul.addr %s818, 4
      %s820 = scalar_lea.vmem %s2, %s819
      %s821 = sadd.s32 %s31, %s33
      %s822 = smul.u32 %s32, 2
      %s823 = sadd.s32 %s822, 1
      %s824 = sadd.s32 %s31, %s33
      %s825 = smul.u32 %s32, 2
      %s826 = sadd.s32 %s825, 1
      %p827 = scmp.lt.s32.totalorder %s30, 1
      %s828 = scalar_select %p827, %s30, 1
      %p829 = scmp.lt.s32.totalorder %s824, 5
      %s830 = scalar_select %p829, %s824, 5
      %p831 = scmp.lt.s32.totalorder %s826, 9
      %s832 = scalar_select %p831, %s826, 9
      %s833 = smul.addr %s830, 10
      %s834 = sadd.s32 %s832, %s833
      %s835 = smul.addr %s828, 60
      %s836 = sadd.s32 %s834, %s835
      %s837 = smul.addr %s836, 4
      %s838 = scalar_lea.vmem %s3, %s837
      %s839 = sadd.s32 %s31, %s33
      %s840 = smul.u32 %s32, 2
      %s841 = sadd.s32 %s840, 1
      %s842 = sadd.s32 %s31, %s33
      %s843 = smul.u32 %s32, 2
      %s844 = sadd.s32 %s843, 2
      %p845 = scmp.lt.s32.totalorder %s30, 1
      %s846 = scalar_select %p845, %s30, 1
      %p847 = scmp.lt.s32.totalorder %s842, 5
      %s848 = scalar_select %p847, %s842, 5
      %p849 = scmp.lt.s32.totalorder %s844, 9
      %s850 = scalar_select %p849, %s844, 9
      %s851 = smul.addr %s848, 10
      %s852 = sadd.s32 %s850, %s851
      %s853 = smul.addr %s846, 60
      %s854 = sadd.s32 %s852, %s853
      %s855 = smul.addr %s854, 4
      %s856 = scalar_lea.vmem %s4, %s855
      %s857 = sadd.s32 %s31, %s33
      %s858 = smul.u32 %s32, 2
      %s859 = sadd.s32 %s858, 2
      %s860 = sadd.s32 %s31, %s33
      %s861 = smul.u32 %s32, 2
      %s862 = sadd.s32 %s861, 2
      %p863 = scmp.lt.s32.totalorder %s30, 1
      %s864 = scalar_select %p863, %s30, 1
      %p865 = scmp.lt.s32.totalorder %s860, 5
      %s866 = scalar_select %p865, %s860, 5
      %p867 = scmp.lt.s32.totalorder %s862, 9
      %s868 = scalar_select %p867, %s862, 9
      %s869 = smul.addr %s866, 10
      %s870 = sadd.s32 %s868, %s869
      %s871 = smul.addr %s864, 60
      %s872 = sadd.s32 %s870, %s871
      %s873 = smul.addr %s872, 4
      %s874 = scalar_lea.vmem %s5, %s873
      %s875 = sadd.s32 %s31, %s33
      %s876 = smul.u32 %s32, 2
      %s877 = sadd.s32 %s876, 2
      %p878 = scmp.lt.s32.totalorder %s33, 2
      %s879 = scalar_select %p878, %s33, 2
      %s880 = smul.addr %s879, 9
      %s881 = smul.addr %s880, 4
      %s882 = scalar_lea.vmem %s6, %s881
      %p883 = scmp.lt.s32.totalorder %s30, 1
      %s884 = scalar_select %p883, %s30, 1
      %p885 = scmp.lt.s32.totalorder %s31, 3
      %s886 = scalar_select %p885, %s31, 3
      %p887 = scmp.lt.s32.totalorder %s32, 3
      %s888 = scalar_select %p887, %s32, 3
      %s889 = smul.addr %s886, 4
      %s890 = sadd.s32 %s888, %s889
      %s891 = smul.addr %s884, 16
      %s892 = sadd.s32 %s890, %s891
      %s893 = smul.addr %s892, 2
      %s894 = scalar_lea.vmem %s9, %s893
      %p895 = scmp.lt.s32.totalorder %s30, 1
      %s896 = scalar_select %p895, %s30, 1
      %p897 = scmp.lt.s32.totalorder %s31, 3
      %s898 = scalar_select %p897, %s31, 3
      %p899 = scmp.lt.s32.totalorder %s32, 3
      %s900 = scalar_select %p899, %s32, 3
      %s901 = smul.addr %s898, 4
      %s902 = sadd.s32 %s900, %s901
      %s903 = smul.addr %s896, 16
      %s904 = sadd.s32 %s902, %s903
      %s905 = smul.addr %s904, 2
      %s906 = scalar_lea.vmem %s10, %s905
      %p907 = scmp.lt.s32.totalorder %s30, 1
      %s908 = scalar_select %p907, %s30, 1
      %p909 = scmp.lt.s32.totalorder %s31, 3
      %s910 = scalar_select %p909, %s31, 3
      %p911 = scmp.lt.s32.totalorder %s32, 3
      %s912 = scalar_select %p911, %s32, 3
      %s913 = smul.addr %s910, 4
      %s914 = sadd.s32 %s912, %s913
      %s915 = smul.addr %s908, 16
      %s916 = sadd.s32 %s914, %s915
      %s917 = smul.addr %s916, 2
      %s918 = scalar_lea.vmem %s11, %s917
      %p919 = scmp.lt.s32.totalorder %s30, 1
      %s920 = scalar_select %p919, %s30, 1
      %p921 = scmp.lt.s32.totalorder %s31, 3
      %s922 = scalar_select %p921, %s31, 3
      %p923 = scmp.lt.s32.totalorder %s32, 3
      %s924 = scalar_select %p923, %s32, 3
      %s925 = smul.addr %s922, 4
      %s926 = sadd.s32 %s924, %s925
      %s927 = smul.addr %s920, 16
      %s928 = sadd.s32 %s926, %s927
      %s929 = smul.addr %s928, 2
      %s930 = scalar_lea.vmem %s12, %s929
      %p932 = scmp.eq.s32.totalorder %s33, 0
      // Predicated region
      $region57: #{encoder_forward.9} parent=55 // pred_check
        %p933 = pneg %p932
      $region58: #{encoder_forward.9} parent=55 // pred_check_branch
        %935 = sbr.rel (%p933) target = $region60
      $region59: #{encoder_forward.9} parent=55 // pred_region
        %vm936 = vcmask 388096
        %937 = vst.msk [vmem:[#allocation2] sm:$0xf] %vm936, 0.0
      $region60: #{encoder_forward.9} parent=55 // pred_fallthru
        _
      %v938 = vld [vmem:[%s882] sm:$0xf]
      %v939 = vld [vmem:[%s882 + $0x4] sm:$0xf]
      %v940 = vld [vmem:[%s882 + $0x8] sm:$0xf]
      %v941 = vld [vmem:[%s882 + $0xc] sm:$0xf]
      %v942 = vld [vmem:[%s882 + $0x10] sm:$0xf]
      %v943 = vld [vmem:[%s882 + $0x14] sm:$0xf]
      %v944 = vld [vmem:[%s882 + $0x18] sm:$0xf]
      %v945 = vld [vmem:[%s882 + $0x1c] sm:$0xf]
      %v946 = vld [vmem:[%s882 + $0x20] sm:$0xf]
      %v947 = vld [vmem:[%s787] sm:$0x7]
      %v948 = vld [vmem:[%s803] sm:$0x7]
      %v949 = vld [vmem:[%s820] sm:$0x7]
      %v950 = vld [vmem:[%s838] sm:$0x7]
      %v951 = vld [vmem:[%s856] sm:$0x7]
      %v952 = vld [vmem:[%s874] sm:$0x7]
      %vm953 = vcmask 64512
      %v955 = vsel %vm953, %v948, 0
      %vm957 = vcmask 1043456
      %v959 = vsel %vm957, %v939, 0
      %961 = vmatpush.bf16.msra.mxu0 0
      %962 = vmatpush.bf16.msra.mxu0 0
      %963 = vmatpush.bf16.msra.mxu0 0
      %964 = vmatpush.bf16.msra.mxu0 0
      %965 = vmatpush.bf16.msra.mxu0 0
      %966 = vmatpush.bf16.msra.mxu0 0
      %967 = vmatpush.bf16.msra.mxu0 0
      %968 = vmatpush.bf16.msra.mxu0 %v959
      %969 = vmatmul.bf16.gmra.mxu0 %v955
      %v970 = vpop.f32.mrf.mxu0
      %v971 = vadd.f32 0.0, %v970
      %v972 = vpop.f32.mrf.mxu0
      %973 = vdwg.mxu0
      %v975 = vsel %vm953, %v947, 0
      %v978 = vsel %vm957, %v938, 0
      %980 = vmatpush.bf16.msra.mxu0 0
      %981 = vmatpush.bf16.msra.mxu0 0
      %982 = vmatpush.bf16.msra.mxu0 0
      %983 = vmatpush.bf16.msra.mxu0 0
      %984 = vmatpush.bf16.msra.mxu0 0
      %985 = vmatpush.bf16.msra.mxu0 0
      %986 = vmatpush.bf16.msra.mxu0 0
      %987 = vmatpush.bf16.msra.mxu0 %v978
      %988 = vmatmul.bf16.gmra.mxu0 %v975
      %v989 = vpop.f32.mrf.mxu0
      %v990 = vadd.f32 %v971, %v989
      %v991 = vpop.f32.mrf.mxu0
      %992 = vdwg.mxu0
      %v994 = vunpack.c.l.b16 %v947
      %v995 = vpack.c.b16 %v994, %v994
      %v997 = vshrl.u32 %v995, 16
      %v999 = vshll.u32 %v995, 16
      %v1001 = vrot.slane %v999, 1
      %v1002 = vor.u32 %v997, %v1001
      %v1004 = vsel %vm953, %v1002, 0
      %v1007 = vsel %vm957, %v940, 0
      %1009 = vmatpush.bf16.msra.mxu0 0
      %1010 = vmatpush.bf16.msra.mxu0 0
      %1011 = vmatpush.bf16.msra.mxu0 0
      %1012 = vmatpush.bf16.msra.mxu0 0
      %1013 = vmatpush.bf16.msra.mxu0 0
      %1014 = vmatpush.bf16.msra.mxu0 0
      %1015 = vmatpush.bf16.msra.mxu0 0
      %1016 = vmatpush.bf16.msra.mxu0 %v1007
      %1017 = vmatmul.bf16.gmra.mxu0 %v1004
      %v1018 = vpop.f32.mrf.mxu0
      %v1019 = vadd.f32 0.0, %v1018
      %v1020 = vpop.f32.mrf.mxu0
      %1021 = vdwg.mxu0
      %v1022 = vadd.f32 %v990, %v1019
      %v1024 = vsel %vm953, %v949, 0
      %v1027 = vsel %vm957, %v941, 0
      %1029 = vmatpush.bf16.msra.mxu0 0
      %1030 = vmatpush.bf16.msra.mxu0 0
      %1031 = vmatpush.bf16.msra.mxu0 0
      %1032 = vmatpush.bf16.msra.mxu0 0
      %1033 = vmatpush.bf16.msra.mxu0 0
      %1034 = vmatpush.bf16.msra.mxu0 0
      %1035 = vmatpush.bf16.msra.mxu0 0
      %1036 = vmatpush.bf16.msra.mxu0 %v1027
      %1037 = vmatmul.bf16.gmra.mxu0 %v1024
      %v1038 = vpop.f32.mrf.mxu0
      %v1039 = vadd.f32 0.0, %v1038
      %v1040 = vpop.f32.mrf.mxu0
      %1041 = vdwg.mxu0
      %v1042 = vadd.f32 %v1022, %v1039
      %v1044 = vsel %vm953, %v950, 0
      %v1047 = vsel %vm957, %v942, 0
      %1049 = vmatpush.bf16.msra.mxu0 0
      %1050 = vmatpush.bf16.msra.mxu0 0
      %1051 = vmatpush.bf16.msra.mxu0 0
      %1052 = vmatpush.bf16.msra.mxu0 0
      %1053 = vmatpush.bf16.msra.mxu0 0
      %1054 = vmatpush.bf16.msra.mxu0 0
      %1055 = vmatpush.bf16.msra.mxu0 0
      %1056 = vmatpush.bf16.msra.mxu0 %v1047
      %1057 = vmatmul.bf16.gmra.mxu0 %v1044
      %v1058 = vpop.f32.mrf.mxu0
      %v1059 = vadd.f32 0.0, %v1058
      %v1060 = vpop.f32.mrf.mxu0
      %1061 = vdwg.mxu0
      %v1062 = vadd.f32 %v1042, %v1059
      %v1064 = vunpack.c.l.b16 %v949
      %v1065 = vpack.c.b16 %v1064, %v1064
      %v1067 = vshrl.u32 %v1065, 16
      %v1069 = vshll.u32 %v1065, 16
      %v1071 = vrot.slane %v1069, 1
      %v1072 = vor.u32 %v1067, %v1071
      %v1074 = vsel %vm953, %v1072, 0
      %v1077 = vsel %vm957, %v943, 0
      %1079 = vmatpush.bf16.msra.mxu0 0
      %1080 = vmatpush.bf16.msra.mxu0 0
      %1081 = vmatpush.bf16.msra.mxu0 0
      %1082 = vmatpush.bf16.msra.mxu0 0
      %1083 = vmatpush.bf16.msra.mxu0 0
      %1084 = vmatpush.bf16.msra.mxu0 0
      %1085 = vmatpush.bf16.msra.mxu0 0
      %1086 = vmatpush.bf16.msra.mxu0 %v1077
      %1087 = vmatmul.bf16.gmra.mxu0 %v1074
      %v1088 = vpop.f32.mrf.mxu0
      %v1089 = vadd.f32 0.0, %v1088
      %v1090 = vpop.f32.mrf.mxu0
      %1091 = vdwg.mxu0
      %v1092 = vadd.f32 %v1062, %v1089
      %v1094 = vsel %vm953, %v951, 0
      %v1097 = vsel %vm957, %v944, 0
      %1099 = vmatpush.bf16.msra.mxu0 0
      %1100 = vmatpush.bf16.msra.mxu0 0
      %1101 = vmatpush.bf16.msra.mxu0 0
      %1102 = vmatpush.bf16.msra.mxu0 0
      %1103 = vmatpush.bf16.msra.mxu0 0
      %1104 = vmatpush.bf16.msra.mxu0 0
      %1105 = vmatpush.bf16.msra.mxu0 0
      %1106 = vmatpush.bf16.msra.mxu0 %v1097
      %1107 = vmatmul.bf16.gmra.mxu0 %v1094
      %v1108 = vpop.f32.mrf.mxu0
      %v1109 = vadd.f32 0.0, %v1108
      %v1110 = vpop.f32.mrf.mxu0
      %1111 = vdwg.mxu0
      %v1112 = vadd.f32 %v1092, %v1109
      %v1114 = vsel %vm953, %v952, 0
      %v1117 = vsel %vm957, %v945, 0
      %1119 = vmatpush.bf16.msra.mxu0 0
      %1120 = vmatpush.bf16.msra.mxu0 0
      %1121 = vmatpush.bf16.msra.mxu0 0
      %1122 = vmatpush.bf16.msra.mxu0 0
      %1123 = vmatpush.bf16.msra.mxu0 0
      %1124 = vmatpush.bf16.msra.mxu0 0
      %1125 = vmatpush.bf16.msra.mxu0 0
      %1126 = vmatpush.bf16.msra.mxu0 %v1117
      %1127 = vmatmul.bf16.gmra.mxu0 %v1114
      %v1128 = vpop.f32.mrf.mxu0
      %v1129 = vadd.f32 0.0, %v1128
      %v1130 = vpop.f32.mrf.mxu0
      %1131 = vdwg.mxu0
      %v1132 = vadd.f32 %v1112, %v1129
      %v1134 = vunpack.c.l.b16 %v951
      %v1135 = vpack.c.b16 %v1134, %v1134
      %v1137 = vshrl.u32 %v1135, 16
      %v1139 = vshll.u32 %v1135, 16
      %v1141 = vrot.slane %v1139, 1
      %v1142 = vor.u32 %v1137, %v1141
      %v1144 = vsel %vm953, %v1142, 0
      %v1147 = vsel %vm957, %v946, 0
      %1149 = vmatpush.bf16.msra.mxu0 0
      %1150 = vmatpush.bf16.msra.mxu0 0
      %1151 = vmatpush.bf16.msra.mxu0 0
      %1152 = vmatpush.bf16.msra.mxu0 0
      %1153 = vmatpush.bf16.msra.mxu0 0
      %1154 = vmatpush.bf16.msra.mxu0 0
      %1155 = vmatpush.bf16.msra.mxu0 0
      %1156 = vmatpush.bf16.msra.mxu0 %v1147
      %1157 = vmatmul.bf16.gmra.mxu0 %v1144
      %v1158 = vpop.f32.mrf.mxu0
      %v1159 = vadd.f32 0.0, %v1158
      %v1160 = vpop.f32.mrf.mxu0
      %1161 = vdwg.mxu0
      %v1162 = vadd.f32 %v1132, %v1159
      %v1163 = vld [vmem:[#allocation2] sm:$0xf]
      %v1164 = vadd.f32 %v1163, %v1162
      %vm1165 = vcmask 388096
      %1166 = vst.msk [vmem:[#allocation2] sm:$0xf] %vm1165, %v1164
      %p1167 = scmp.eq.s32.totalorder %s33, 2
      // Predicated region
      $region61: #{encoder_forward.9} parent=55 // pred_check
        %p1168 = pneg %p1167
      $region62: #{encoder_forward.9} parent=55 // pred_check_branch
        %1170 = sbr.rel (%p1168) target = $region64
      $region63: #{encoder_forward.9} parent=55 // pred_region
        %v1171 = vld [vmem:[#allocation2] sm:$0xf]
        %v1172 = vld [vmem:[%s7] sm:$0x1]
        %v1174 = vperm.slane %v1172, 0
        %v1176 = vadd.f32 %v1171, %v1174
        %vm1177 = vcmp.ge.f32.partialorder %v1176, 0.0
        %v1178 = vld [vmem:[%s8] sm:$0x1]
        %v1180 = vperm.slane %v1178, 0
        %v1182 = vmul.f32 %v1180, %v1176
        %v1183 = vsel %vm1177, %v1176, %v1182
        %v1184 = vpack.c.bf16 %v1183, %v1183
        %vm1185 = vcmask 58368
        %1186 = vst.msk [vmem:[%s894] sm:$0x3] %vm1185, %v1184
        %v1188 = vrot.slane %v1184, 2
        %vm1189 = vcmask 1041408
        %v1192 = vsel %vm1189, %v1184, %v1188
        %1194 = vrot.lane.b32.xlu0 %v1192, 120
        %v1195 = vpop.permute.xlu0 %1194
        %1197 = vst.msk [vmem:[%s906] sm:$0x3] %vm1185, %v1195
        %1198 = vrot.lane.b32.xlu0 %v1192, 112
        %v1199 = vpop.permute.xlu0 %1198
        %vm1201 = vcmask 123904
        %1202 = vst.msk [vmem:[%s918] sm:$0x3] %vm1201, %v1199
        %1203 = vrot.lane.b32.xlu0 %v1192, 96
        %v1204 = vpop.permute.xlu0 %1203
        %1206 = vst.msk [vmem:[%s930] sm:$0x3] %vm1201, %v1204
      $region64: #{encoder_forward.9} parent=55 // pred_fallthru
        _
      %p1207 = scmp.lt.s32.totalorder %s30, 1
      %s1208 = scalar_select %p1207, %s30, 1
      %p1209 = scmp.lt.s32.totalorder %s31, 3
      %s1210 = scalar_select %p1209, %s31, 3
      %p1211 = scmp.lt.s32.totalorder %s32, 3
      %s1212 = scalar_select %p1211, %s32, 3
      %s1213 = smul.addr %s1210, 4
      %s1214 = sadd.s32 %s1212, %s1213
      %s1215 = smul.addr %s1208, 16
      %s1216 = sadd.s32 %s1214, %s1215
      %s1217 = smul.addr %s1216, 2
      %s1218 = scalar_lea.vmem %s9, %s1217
      %p1219 = scmp.lt.s32.totalorder %s30, 1
      %s1220 = scalar_select %p1219, %s30, 1
      %p1221 = scmp.lt.s32.totalorder %s31, 3
      %s1222 = scalar_select %p1221, %s31, 3
      %p1223 = scmp.lt.s32.totalorder %s32, 3
      %s1224 = scalar_select %p1223, %s32, 3
      %s1225 = smul.addr %s1222, 4
      %s1226 = sadd.s32 %s1224, %s1225
      %s1227 = smul.addr %s1220, 16
      %s1228 = sadd.s32 %s1226, %s1227
      %s1229 = smul.addr %s1228, 2
      %s1230 = scalar_lea.vmem %s10, %s1229
      %p1231 = scmp.lt.s32.totalorder %s30, 1
      %s1232 = scalar_select %p1231, %s30, 1
      %p1233 = scmp.lt.s32.totalorder %s31, 3
      %s1234 = scalar_select %p1233, %s31, 3
      %p1235 = scmp.lt.s32.totalorder %s32, 3
      %s1236 = scalar_select %p1235, %s32, 3
      %s1237 = smul.addr %s1234, 4
      %s1238 = sadd.s32 %s1236, %s1237
      %s1239 = smul.addr %s1232, 16
      %s1240 = sadd.s32 %s1238, %s1239
      %s1241 = smul.addr %s1240, 2
      %s1242 = scalar_lea.vmem %s11, %s1241
      %p1243 = scmp.lt.s32.totalorder %s30, 1
      %s1244 = scalar_select %p1243, %s30, 1
      %p1245 = scmp.lt.s32.totalorder %s31, 3
      %s1246 = scalar_select %p1245, %s31, 3
      %p1247 = scmp.lt.s32.totalorder %s32, 3
      %s1248 = scalar_select %p1247, %s32, 3
      %s1249 = smul.addr %s1246, 4
      %s1250 = sadd.s32 %s1248, %s1249
      %s1251 = smul.addr %s1244, 16
      %s1252 = sadd.s32 %s1250, %s1251
      %s1253 = smul.addr %s1252, 2
      %s1254 = scalar_lea.vmem %s12, %s1253
      // Predicated region
      $region65: #{encoder_forward.9} parent=55 // pred_check
        %p1255 = pneg %p352
      $region66: #{encoder_forward.9} parent=55 // pred_check_branch
        %1257 = sbr.rel (%p1255) target = $region68
      $region67: #{encoder_forward.9} parent=55 // pred_region
        _
      $region68: #{encoder_forward.9} parent=55 // pred_fallthru
        _
      // Predicated region
      $region69: #{encoder_forward.9} parent=55 // pred_check
        %p1258 = pneg %p382
      $region70: #{encoder_forward.9} parent=55 // pred_check_branch
        %1260 = sbr.rel (%p1258) target = $region72
      $region71: #{encoder_forward.9} parent=55 // pred_region
        _
      $region72: #{encoder_forward.9} parent=55 // pred_fallthru
        _
      // Predicated region
      $region73: #{encoder_forward.9} parent=55 // pred_check
        %p1261 = pneg %p412
      $region74: #{encoder_forward.9} parent=55 // pred_check_branch
        %1263 = sbr.rel (%p1261) target = $region76
      $region75: #{encoder_forward.9} parent=55 // pred_region
        _
      $region76: #{encoder_forward.9} parent=55 // pred_fallthru
        _
      // Predicated region
      $region77: #{encoder_forward.9} parent=55 // pred_check
        %p1264 = pneg %p442
      $region78: #{encoder_forward.9} parent=55 // pred_check_branch
        %1266 = sbr.rel (%p1264) target = $region80
      $region79: #{encoder_forward.9} parent=55 // pred_region
        _
      $region80: #{encoder_forward.9} parent=55 // pred_fallthru
        _
    $region56: #{encoder_forward.9} parent=5 // pred_fallthru
      _
    %p1267 = scmp.le.s32.totalorder 2, %s19
    // Predicated region
    $region81: #{encoder_forward.9} parent=5 // pred_check
      %p1268 = pneg %p1267
    $region82: #{encoder_forward.9} parent=5 // pred_check_branch
      %1270 = sbr.rel (%p1268) target = $region84
    $region83: #{encoder_forward.9} parent=5 // pred_region
      %s1271 = ssub.s32 %s19, 2
      // Predicated region
      $region85: #{encoder_forward.9} parent=83 // pred_check
        %p1272 = pneg %p358
      $region86: #{encoder_forward.9} parent=83 // pred_check_branch
        %1274 = sbr.rel (%p1272) target = $region88
      $region87: #{encoder_forward.9} parent=83 // pred_region
        %p1275 = scmp.lt.s32.totalorder %s34, 1
        %s1276 = scalar_select %p1275, %s34, 1
        %p1277 = scmp.lt.s32.totalorder %s35, 3
        %s1278 = scalar_select %p1277, %s35, 3
        %p1279 = scmp.lt.s32.totalorder %s36, 3
        %s1280 = scalar_select %p1279, %s36, 3
        %s1281 = smul.addr %s1278, 4
        %s1282 = sadd.s32 %s1280, %s1281
        %s1283 = smul.addr %s1276, 16
        %s1284 = sadd.s32 %s1282, %s1283
        %s1285 = smul.addr %s1284, 2
        %s1286 = scalar_lea.vmem %s9, %s1285
      $region88: #{encoder_forward.9} parent=83 // pred_fallthru
        _
      // Predicated region
      $region89: #{encoder_forward.9} parent=83 // pred_check
        %p1287 = pneg %p388
      $region90: #{encoder_forward.9} parent=83 // pred_check_branch
        %1289 = sbr.rel (%p1287) target = $region92
      $region91: #{encoder_forward.9} parent=83 // pred_region
        %p1290 = scmp.lt.s32.totalorder %s34, 1
        %s1291 = scalar_select %p1290, %s34, 1
        %p1292 = scmp.lt.s32.totalorder %s35, 3
        %s1293 = scalar_select %p1292, %s35, 3
        %p1294 = scmp.lt.s32.totalorder %s36, 3
        %s1295 = scalar_select %p1294, %s36, 3
        %s1296 = smul.addr %s1293, 4
        %s1297 = sadd.s32 %s1295, %s1296
        %s1298 = smul.addr %s1291, 16
        %s1299 = sadd.s32 %s1297, %s1298
        %s1300 = smul.addr %s1299, 2
        %s1301 = scalar_lea.vmem %s10, %s1300
      $region92: #{encoder_forward.9} parent=83 // pred_fallthru
        _
      // Predicated region
      $region93: #{encoder_forward.9} parent=83 // pred_check
        %p1302 = pneg %p418
      $region94: #{encoder_forward.9} parent=83 // pred_check_branch
        %1304 = sbr.rel (%p1302) target = $region96
      $region95: #{encoder_forward.9} parent=83 // pred_region
        %p1305 = scmp.lt.s32.totalorder %s34, 1
        %s1306 = scalar_select %p1305, %s34, 1
        %p1307 = scmp.lt.s32.totalorder %s35, 3
        %s1308 = scalar_select %p1307, %s35, 3
        %p1309 = scmp.lt.s32.totalorder %s36, 3
        %s1310 = scalar_select %p1309, %s36, 3
        %s1311 = smul.addr %s1308, 4
        %s1312 = sadd.s32 %s1310, %s1311
        %s1313 = smul.addr %s1306, 16
        %s1314 = sadd.s32 %s1312, %s1313
        %s1315 = smul.addr %s1314, 2
        %s1316 = scalar_lea.vmem %s11, %s1315
      $region96: #{encoder_forward.9} parent=83 // pred_fallthru
        _
      // Predicated region
      $region97: #{encoder_forward.9} parent=83 // pred_check
        %p1317 = pneg %p448
      $region98: #{encoder_forward.9} parent=83 // pred_check_branch
        %1319 = sbr.rel (%p1317) target = $region100
      $region99: #{encoder_forward.9} parent=83 // pred_region
        %p1320 = scmp.lt.s32.totalorder %s34, 1
        %s1321 = scalar_select %p1320, %s34, 1
        %p1322 = scmp.lt.s32.totalorder %s35, 3
        %s1323 = scalar_select %p1322, %s35, 3
        %p1324 = scmp.lt.s32.totalorder %s36, 3
        %s1325 = scalar_select %p1324, %s36, 3
        %s1326 = smul.addr %s1323, 4
        %s1327 = sadd.s32 %s1325, %s1326
        %s1328 = smul.addr %s1321, 16
        %s1329 = sadd.s32 %s1327, %s1328
        %s1330 = smul.addr %s1329, 2
        %s1331 = scalar_lea.vmem %s12, %s1330
      $region100: #{encoder_forward.9} parent=83 // pred_fallthru
        _
    $region84: #{encoder_forward.9} parent=5 // pred_fallthru
      _
  $region6: #{encoder_forward.9} parent=0 // loop_footer
    %s23 = sadd.s32 1, %s19
  $region7: #{encoder_forward.9} parent=0 // loop_footer_branch
    %18 = sbr.rel target = $region3
  $region8: #{encoder_forward.9} parent=0 // loop_exit
    _

// kernel: encoder_forward.10
$region0: #{encoder_forward.10}
  #allocation0 [shape = 'u32[]', space=smem, size = 0x4, offset = 0x4, fixed_abs, tag = 'smem constant byte address 0x4 - core index']
  #allocation1 [shape = 'u32[72,128]{1,0:T(1,128)}', space=vmem, size = 0x9000, scoped, tag = 'internal scratch']
  #allocation2 [shape = 'f32[4,16]{1,0:T(4,128)}', space=vmem, size = 0x800, scoped, tag = 'scratch operand']
  %s0 = inlined_call_operand.vmem [shape: bf16[2,6,6,6,8], index: 0, kind: input, shape index: {}, may-alias: {0,1,2}]
  %s1 = inlined_call_operand.vmem [shape: bf16[2,6,6,6,8], index: 1, kind: input, shape index: {}, may-alias: {0,1,2}]
  %s2 = inlined_call_operand.vmem [shape: bf16[2,6,6,6,8], index: 2, kind: input, shape index: {}, may-alias: {0,1,2}]
  %s3 = inlined_call_operand.vmem [shape: bf16[3,72,16], index: 3, kind: input, shape index: {}]
  %s4 = inlined_call_operand.vmem [shape: f32[1,16], index: 4, kind: input, shape index: {}]
  %s5 = inlined_call_operand.vmem [shape: f32[1,16], index: 5, kind: input, shape index: {}]
  %s6 = inlined_call_operand.vmem [shape: bf16[2,4,4,4,16], index: 6, kind: input, shape index: {}]
  %s7 = inlined_call_operand.vmem [shape: f32[2,4,4,4,16], index: 7, kind: output, shape index: {}]
  %s8 = sld [smem:[#allocation0]]
  $region69: #{encoder_forward.10} parent=0
    _
  %s10 = ssub.s32 1, %s8
  %s11 = scalar_select 0, %s10, %s8
  loop: start=0, step=1, limit=98
  $region2: #{encoder_forward.10} parent=0 // loop_pre_header
    _
  $region3: #{encoder_forward.10} parent=0 // loop_header
    %s13 = sphi 0, %s17
    %p14 = scmp.ge.s32.totalorder %s13, 98
    %s20 = sphi 0, %s46
    %s21 = sphi 0, %s42
    %s22 = sphi 0, %s38
    %s23 = sphi 0, %s34
    %s24 = sphi 0, %s20
    %s25 = sphi 0, %s21
    %s26 = sphi 0, %s22
    %s27 = sphi 0, %s23
    %s28 = sphi 0, %s24
    %s29 = sphi 0, %s25
    %s30 = sphi 0, %s26
    %s31 = sphi 0, %s27
    %s55 = sphi 0, %s57
    %s58 = sphi 0, %s55
    %s59 = sphi 0, %s58
    %s75 = sphi 0, %s59
    %s89 = sphi 0, %s91
    %s92 = sphi 0, %s89
    %s93 = sphi 0, %s92
    %s109 = sphi 0, %s93
    %s123 = sphi 0, %s125
    %s126 = sphi 0, %s123
    %s127 = sphi 0, %s126
    %s143 = sphi 0, %s127
    %s149 = sphi 0, %s151
    %s152 = sphi 0, %s149
    %s153 = sphi 0, %s152
    %s169 = sphi 0, %s153
    %s173 = sphi 0, %s173
    %s175 = sphi 0, %s173
    %s176 = sphi 0, %s175
    %s190 = sphi 0, %s176
    %s194 = sphi 0, %s194
    %s196 = sphi 0, %s194
    %s197 = sphi 0, %s196
    %s211 = sphi 0, %s197
    %s221 = sphi 0, %s223
    %s224 = sphi 0, %s221
    %s225 = sphi 0, %s224
    %s241 = sphi 0, %s225
    %s251 = sphi 0, %s253
    %s254 = sphi 0, %s251
    %s255 = sphi 0, %s254
    %s271 = sphi 0, %s255
  $region4: #{encoder_forward.10} parent=0 // loop_header_branch
    %16 = sbr.rel (%p14) target = $region8
  $region5: #{encoder_forward.10} parent=0 // loop_body
    %s18 = ssub.s32 %s13, 1
    %s19 = ssub.s32 %s13, 2
    %s32 = sadd.s32 1, %s23
    %p33 = scmp.ge.s32.totalorder %s32, 3
    %s34 = scalar_select %p33, 0, %s32
    %s35 = sadd.s32 1, %s22
    %s36 = scalar_select %p33, %s35, %s22
    %p37 = scmp.ge.s32.totalorder %s36, 4
    %s38 = scalar_select %p37, 0, %s36
    %s39 = sadd.s32 1, %s21
    %s40 = scalar_select %p37, %s39, %s21
    %p41 = scmp.ge.s32.totalorder %s40, 4
    %s42 = scalar_select %p41, 0, %s40
    %s43 = sadd.s32 1, %s20
    %s44 = scalar_select %p41, %s43, %s20
    %p45 = scmp.ge.s32.totalorder %s44, 2
    %s46 = scalar_select %p45, 0, %s44
    %s47 = sadd.s32 %s21, %s23
    %s48 = sadd.s32 %s42, %s34
    %s49 = ssub.s32 %s20, %s46
    %s50 = ssub.s32 %s47, %s48
    %s51 = sor.u32 %s49, %s50
    %s52 = ssub.s32 %s22, %s38
    %s53 = sor.u32 %s51, %s52
    %p54 = scmp.eq.s32.totalorder %s53, 0
    %s56 = sadd.s32 %s55, 1
    %s57 = scalar_select %p54, %s55, %s56
    %p60 = pneg %p54
    %p61 = scmp.eq.s32.totalorder %s13, 95
    %p62 = por %p60, %p61
    %p63 = scmp.ne.s32.totalorder %s55, %s58
    %p64 = scmp.eq.s32.totalorder %s13, 0
    %p65 = por %p63, %p64
    %p66 = scmp.ne.s32.totalorder %s55, %s58
    %p67 = scmp.eq.s32.totalorder %s18, 95
    %p68 = por %p66, %p67
    %p69 = scmp.ne.s32.totalorder %s58, %s59
    %p70 = scmp.eq.s32.totalorder %s18, 0
    %p71 = por %p69, %p70
    %p72 = scmp.ne.s32.totalorder %s58, %s59
    %p73 = scmp.eq.s32.totalorder %s19, 95
    %p74 = por %p72, %p73
    %p76 = scmp.ne.s32.totalorder %s59, %s75
    %p77 = scmp.eq.s32.totalorder %s19, 0
    %p78 = por %p76, %p77
    %s79 = sadd.s32 %s21, %s23
    %s80 = sadd.s32 %s22, 1
    %s81 = sadd.s32 %s42, %s34
    %s82 = sadd.s32 %s38, 1
    %s83 = ssub.s32 %s20, %s46
    %s84 = ssub.s32 %s79, %s81
    %s85 = sor.u32 %s83, %s84
    %s86 = ssub.s32 %s80, %s82
    %s87 = sor.u32 %s85, %s86
    %p88 = scmp.eq.s32.totalorder %s87, 0
    %s90 = sadd.s32 %s89, 1
    %s91 = scalar_select %p88, %s89, %s90
    %p94 = pneg %p88
    %p95 = scmp.eq.s32.totalorder %s13, 95
    %p96 = por %p94, %p95
    %p97 = scmp.ne.s32.totalorder %s89, %s92
    %p98 = scmp.eq.s32.totalorder %s13, 0
    %p99 = por %p97, %p98
    %p100 = scmp.ne.s32.totalorder %s89, %s92
    %p101 = scmp.eq.s32.totalorder %s18, 95
    %p102 = por %p100, %p101
    %p103 = scmp.ne.s32.totalorder %s92, %s93
    %p104 = scmp.eq.s32.totalorder %s18, 0
    %p105 = por %p103, %p104
    %p106 = scmp.ne.s32.totalorder %s92, %s93
    %p107 = scmp.eq.s32.totalorder %s19, 95
    %p108 = por %p106, %p107
    %p110 = scmp.ne.s32.totalorder %s93, %s109
    %p111 = scmp.eq.s32.totalorder %s19, 0
    %p112 = por %p110, %p111
    %s113 = sadd.s32 %s21, %s23
    %s114 = sadd.s32 %s22, 2
    %s115 = sadd.s32 %s42, %s34
    %s116 = sadd.s32 %s38, 2
    %s117 = ssub.s32 %s20, %s46
    %s118 = ssub.s32 %s113, %s115
    %s119 = sor.u32 %s117, %s118
    %s120 = ssub.s32 %s114, %s116
    %s121 = sor.u32 %s119, %s120
    %p122 = scmp.eq.s32.totalorder %s121, 0
    %s124 = sadd.s32 %s123, 1
    %s125 = scalar_select %p122, %s123, %s124
    %p128 = pneg %p122
    %p129 = scmp.eq.s32.totalorder %s13, 95
    %p130 = por %p128, %p129
    %p131 = scmp.ne.s32.totalorder %s123, %s126
    %p132 = scmp.eq.s32.totalorder %s13, 0
    %p133 = por %p131, %p132
    %p134 = scmp.ne.s32.totalorder %s123, %s126
    %p135 = scmp.eq.s32.totalorder %s18, 95
    %p136 = por %p134, %p135
    %p137 = scmp.ne.s32.totalorder %s126, %s127
    %p138 = scmp.eq.s32.totalorder %s18, 0
    %p139 = por %p137, %p138
    %p140 = scmp.ne.s32.totalorder %s126, %s127
    %p141 = scmp.eq.s32.totalorder %s19, 95
    %p142 = por %p140, %p141
    %p144 = scmp.ne.s32.totalorder %s127, %s143
    %p145 = scmp.eq.s32.totalorder %s19, 0
    %p146 = por %p144, %p145
    %s147 = ssub.s32 %s23, %s34
    %p148 = scmp.eq.s32.totalorder %s147, 0
    %s150 = sadd.s32 %s149, 1
    %s151 = scalar_select %p148, %s149, %s150
    %p154 = pneg %p148
    %p155 = scmp.eq.s32.totalorder %s13, 95
    %p156 = por %p154, %p155
    %p157 = scmp.ne.s32.totalorder %s149, %s152
    %p158 = scmp.eq.s32.totalorder %s13, 0
    %p159 = por %p157, %p158
    %p160 = scmp.ne.s32.totalorder %s149, %s152
    %p161 = scmp.eq.s32.totalorder %s18, 95
    %p162 = por %p160, %p161
    %p163 = scmp.ne.s32.totalorder %s152, %s153
    %p164 = scmp.eq.s32.totalorder %s18, 0
    %p165 = por %p163, %p164
    %p166 = scmp.ne.s32.totalorder %s152, %s153
    %p167 = scmp.eq.s32.totalorder %s19, 95
    %p168 = por %p166, %p167
    %p170 = scmp.ne.s32.totalorder %s153, %s169
    %p171 = scmp.eq.s32.totalorder %s19, 0
    %p172 = por %p170, %p171
    %s174 = sadd.s32 %s173, 1
    %p177 = scmp.eq.s32.totalorder %s13, 95
    %p178 = scmp.ne.s32.totalorder %s173, %s175
    %p179 = scmp.eq.s32.totalorder %s13, 0
    %p180 = por %p178, %p179
    %p181 = scmp.ne.s32.totalorder %s173, %s175
    %p182 = scmp.eq.s32.totalorder %s18, 95
    %p183 = por %p181, %p182
    %p184 = scmp.ne.s32.totalorder %s175, %s176
    %p185 = scmp.eq.s32.totalorder %s18, 0
    %p186 = por %p184, %p185
    %p187 = scmp.ne.s32.totalorder %s175, %s176
    %p188 = scmp.eq.s32.totalorder %s19, 95
    %p189 = por %p187, %p188
    %p191 = scmp.ne.s32.totalorder %s176, %s190
    %p192 = scmp.eq.s32.totalorder %s19, 0
    %p193 = por %p191, %p192
    %s195 = sadd.s32 %s194, 1
    %p198 = scmp.eq.s32.totalorder %s13, 95
    %p199 = scmp.ne.s32.totalorder %s194, %s196
    %p200 = scmp.eq.s32.totalorder %s13, 0
    %p201 = por %p199, %p200
    %p202 = scmp.ne.s32.totalorder %s194, %s196
    %p203 = scmp.eq.s32.totalorder %s18, 95
    %p204 = por %p202, %p203
    %p205 = scmp.ne.s32.totalorder %s196, %s197
    %p206 = scmp.eq.s32.totalorder %s18, 0
    %p207 = por %p205, %p206
    %p208 = scmp.ne.s32.totalorder %s196, %s197
    %p209 = scmp.eq.s32.totalorder %s19, 95
    %p210 = por %p208, %p209
    %p212 = scmp.ne.s32.totalorder %s197, %s211
    %p213 = scmp.eq.s32.totalorder %s19, 0
    %p214 = por %p212, %p213
    %s215 = ssub.s32 %s20, %s46
    %s216 = ssub.s32 %s21, %s42
    %s217 = sor.u32 %s215, %s216
    %s218 = ssub.s32 %s22, %s38
    %s219 = sor.u32 %s217, %s218
    %p220 = scmp.eq.s32.totalorder %s219, 0
    %s222 = sadd.s32 %s221, 1
    %s223 = scalar_select %p220, %s221, %s222
    %p226 = pneg %p220
    %p227 = scmp.eq.s32.totalorder %s13, 95
    %p228 = por %p226, %p227
    %p229 = scmp.ne.s32.totalorder %s221, %s224
    %p230 = scmp.eq.s32.totalorder %s13, 0
    %p231 = por %p229, %p230
    %p232 = scmp.ne.s32.totalorder %s221, %s224
    %p233 = scmp.eq.s32.totalorder %s18, 95
    %p234 = por %p232, %p233
    %p235 = scmp.ne.s32.totalorder %s224, %s225
    %p236 = scmp.eq.s32.totalorder %s18, 0
    %p237 = por %p235, %p236
    %p238 = scmp.ne.s32.totalorder %s224, %s225
    %p239 = scmp.eq.s32.totalorder %s19, 95
    %p240 = por %p238, %p239
    %p242 = scmp.ne.s32.totalorder %s225, %s241
    %p243 = scmp.eq.s32.totalorder %s19, 0
    %p244 = por %p242, %p243
    %s245 = ssub.s32 %s20, %s46
    %s246 = ssub.s32 %s21, %s42
    %s247 = sor.u32 %s245, %s246
    %s248 = ssub.s32 %s22, %s38
    %s249 = sor.u32 %s247, %s248
    %p250 = scmp.eq.s32.totalorder %s249, 0
    %s252 = sadd.s32 %s251, 1
    %s253 = scalar_select %p250, %s251, %s252
    %p256 = pneg %p250
    %p257 = scmp.eq.s32.totalorder %s13, 95
    %p258 = por %p256, %p257
    %p259 = scmp.ne.s32.totalorder %s251, %s254
    %p260 = scmp.eq.s32.totalorder %s13, 0
    %p261 = por %p259, %p260
    %p262 = scmp.ne.s32.totalorder %s251, %s254
    %p263 = scmp.eq.s32.totalorder %s18, 95
    %p264 = por %p262, %p263
    %p265 = scmp.ne.s32.totalorder %s254, %s255
    %p266 = scmp.eq.s32.totalorder %s18, 0
    %p267 = por %p265, %p266
    %p268 = scmp.ne.s32.totalorder %s254, %s255
    %p269 = scmp.eq.s32.totalorder %s19, 95
    %p270 = por %p268, %p269
    %p272 = scmp.ne.s32.totalorder %s255, %s271
    %p273 = scmp.eq.s32.totalorder %s19, 0
    %p274 = por %p272, %p273
    %p275 = scmp.le.s32.totalorder 1, %s13
    %p276 = scmp.lt.s32.totalorder %s13, 97
    %p277 = pnand %p275, %p276
    %p278 = pneg %p277
    // Predicated region
    $region9: #{encoder_forward.10} parent=5 // pred_check
      _
    $region10: #{encoder_forward.10} parent=5 // pred_check_branch
      %280 = sbr.rel (%p277) target = $region12
    $region11: #{encoder_forward.10} parent=5 // pred_region
      %s281 = ssub.s32 %s13, 1
      // Predicated region
      $region13: #{encoder_forward.10} parent=11 // pred_check
        %p282 = pneg %p186
      $region14: #{encoder_forward.10} parent=11 // pred_check_branch
        %284 = sbr.rel (%p282) target = $region16
      $region15: #{encoder_forward.10} parent=11 // pred_region
        _
      $region16: #{encoder_forward.10} parent=11 // pred_fallthru
        _
      // Predicated region
      $region17: #{encoder_forward.10} parent=11 // pred_check
        %p285 = pneg %p207
      $region18: #{encoder_forward.10} parent=11 // pred_check_branch
        %287 = sbr.rel (%p285) target = $region20
      $region19: #{encoder_forward.10} parent=11 // pred_region
        _
      $region20: #{encoder_forward.10} parent=11 // pred_fallthru
        _
    $region12: #{encoder_forward.10} parent=5 // pred_fallthru
      _
    %p288 = scmp.lt.s32.totalorder %s13, 96
    // Predicated region
    $region21: #{encoder_forward.10} parent=5 // pred_check
      %p289 = pneg %p288
    $region22: #{encoder_forward.10} parent=5 // pred_check_branch
      %291 = sbr.rel (%p289) target = $region24
    $region23: #{encoder_forward.10} parent=5 // pred_region
      // Predicated region
      $region25: #{encoder_forward.10} parent=23 // pred_check
        %p292 = pneg %p65
      $region26: #{encoder_forward.10} parent=23 // pred_check_branch
        %294 = sbr.rel (%p292) target = $region28
      $region27: #{encoder_forward.10} parent=23 // pred_region
        %s295 = sadd.s32 %s21, %s23
        %p296 = scmp.lt.s32.totalorder %s20, 1
        %s297 = scalar_select %p296, %s20, 1
        %p298 = scmp.lt.s32.totalorder %s295, 5
        %s299 = scalar_select %p298, %s295, 5
        %p300 = scmp.lt.s32.totalorder %s22, 5
        %s301 = scalar_select %p300, %s22, 5
        %s302 = smul.addr %s299, 6
        %s303 = sadd.s32 %s301, %s302
        %s304 = smul.addr %s297, 36
        %s305 = sadd.s32 %s303, %s304
        %s306 = smul.addr %s305, 4
        %s307 = scalar_lea.vmem %s0, %s306
        %s308 = sadd.s32 %s21, %s23
      $region28: #{encoder_forward.10} parent=23 // pred_fallthru
        _
      // Predicated region
      $region29: #{encoder_forward.10} parent=23 // pred_check
        %p309 = pneg %p99
      $region30: #{encoder_forward.10} parent=23 // pred_check_branch
        %311 = sbr.rel (%p309) target = $region32
      $region31: #{encoder_forward.10} parent=23 // pred_region
        %s312 = sadd.s32 %s21, %s23
        %s313 = sadd.s32 %s22, 1
        %p314 = scmp.lt.s32.totalorder %s20, 1
        %s315 = scalar_select %p314, %s20, 1
        %p316 = scmp.lt.s32.totalorder %s312, 5
        %s317 = scalar_select %p316, %s312, 5
        %p318 = scmp.lt.s32.totalorder %s313, 5
        %s319 = scalar_select %p318, %s313, 5
        %s320 = smul.addr %s317, 6
        %s321 = sadd.s32 %s319, %s320
        %s322 = smul.addr %s315, 36
        %s323 = sadd.s32 %s321, %s322
        %s324 = smul.addr %s323, 4
        %s325 = scalar_lea.vmem %s1, %s324
        %s326 = sadd.s32 %s21, %s23
        %s327 = sadd.s32 %s22, 1
      $region32: #{encoder_forward.10} parent=23 // pred_fallthru
        _
      // Predicated region
      $region33: #{encoder_forward.10} parent=23 // pred_check
        %p328 = pneg %p133
      $region34: #{encoder_forward.10} parent=23 // pred_check_branch
        %330 = sbr.rel (%p328) target = $region36
      $region35: #{encoder_forward.10} parent=23 // pred_region
        %s331 = sadd.s32 %s21, %s23
        %s332 = sadd.s32 %s22, 2
        %p333 = scmp.lt.s32.totalorder %s20, 1
        %s334 = scalar_select %p333, %s20, 1
        %p335 = scmp.lt.s32.totalorder %s331, 5
        %s336 = scalar_select %p335, %s331, 5
        %p337 = scmp.lt.s32.totalorder %s332, 5
        %s338 = scalar_select %p337, %s332, 5
        %s339 = smul.addr %s336, 6
        %s340 = sadd.s32 %s338, %s339
        %s341 = smul.addr %s334, 36
        %s342 = sadd.s32 %s340, %s341
        %s343 = smul.addr %s342, 4
        %s344 = scalar_lea.vmem %s2, %s343
        %s345 = sadd.s32 %s21, %s23
        %s346 = sadd.s32 %s22, 2
      $region36: #{encoder_forward.10} parent=23 // pred_fallthru
        _
      // Predicated region
      $region37: #{encoder_forward.10} parent=23 // pred_check
        %p347 = pneg %p159
      $region38: #{encoder_forward.10} parent=23 // pred_check_branch
        %349 = sbr.rel (%p347) target = $region40
      $region39: #{encoder_forward.10} parent=23 // pred_region
        %p350 = scmp.lt.s32.totalorder %s23, 2
        %s351 = scalar_select %p350, %s23, 2
        %s352 = smul.addr %s351, 9
        %s353 = smul.addr %s352, 4
        %s354 = scalar_lea.vmem %s3, %s353
      $region40: #{encoder_forward.10} parent=23 // pred_fallthru
        _
      // Predicated region
      $region41: #{encoder_forward.10} parent=23 // pred_check
        %p355 = pneg %p231
      $region42: #{encoder_forward.10} parent=23 // pred_check_branch
        %357 = sbr.rel (%p355) target = $region44
      $region43: #{encoder_forward.10} parent=23 // pred_region
        %p358 = scmp.lt.s32.totalorder %s20, 1
        %s359 = scalar_select %p358, %s20, 1
        %p360 = scmp.lt.s32.totalorder %s21, 3
        %s361 = scalar_select %p360, %s21, 3
        %p362 = scmp.lt.s32.totalorder %s22, 3
        %s363 = scalar_select %p362, %s22, 3
        %s364 = smul.addr %s361, 4
        %s365 = sadd.s32 %s363, %s364
        %s366 = smul.addr %s359, 16
        %s367 = sadd.s32 %s365, %s366
        %s368 = smul.addr %s367, 2
        %s369 = scalar_lea.vmem %s6, %s368
      $region44: #{encoder_forward.10} parent=23 // pred_fallthru
        _
    $region24: #{encoder_forward.10} parent=5 // pred_fallthru
      _
    %p370 = scmp.le.s32.totalorder 1, %s13
    %p371 = scmp.lt.s32.totalorder %s13, 97
    %p372 = pnand %p370, %p371
    %p373 = pneg %p372
    // Predicated region
    $region45: #{encoder_forward.10} parent=5 // pred_check
      _
    $region46: #{encoder_forward.10} parent=5 // pred_check_branch
      %375 = sbr.rel (%p372) target = $region48
    $region47: #{encoder_forward.10} parent=5 // pred_region
      %s376 = ssub.s32 %s13, 1
      %s377 = sadd.s32 %s25, %s27
      %p378 = scmp.lt.s32.totalorder %s24, 1
      %s379 = scalar_select %p378, %s24, 1
      %p380 = scmp.lt.s32.totalorder %s377, 5
      %s381 = scalar_select %p380, %s377, 5
      %p382 = scmp.lt.s32.totalorder %s26, 5
      %s383 = scalar_select %p382, %s26, 5
      %s384 = smul.addr %s381, 6
      %s385 = sadd.s32 %s383, %s384
      %s386 = smul.addr %s379, 36
      %s387 = sadd.s32 %s385, %s386
      %s388 = smul.addr %s387, 4
      %s389 = scalar_lea.vmem %s0, %s388
      %p390 = pneg %p71
      %p391 = pneg %p68
      %s392 = sadd.s32 %s25, %s27
      %s393 = sadd.s32 %s26, 1
      %p394 = scmp.lt.s32.totalorder %s24, 1
      %s395 = scalar_select %p394, %s24, 1
      %p396 = scmp.lt.s32.totalorder %s392, 5
      %s397 = scalar_select %p396, %s392, 5
      %p398 = scmp.lt.s32.totalorder %s393, 5
      %s399 = scalar_select %p398, %s393, 5
      %s400 = smul.addr %s397, 6
      %s401 = sadd.s32 %s399, %s400
      %s402 = smul.addr %s395, 36
      %s403 = sadd.s32 %s401, %s402
      %s404 = smul.addr %s403, 4
      %s405 = scalar_lea.vmem %s1, %s404
      %p406 = pneg %p105
      %p407 = pneg %p102
      %s408 = sadd.s32 %s25, %s27
      %s409 = sadd.s32 %s26, 2
      %p410 = scmp.lt.s32.totalorder %s24, 1
      %s411 = scalar_select %p410, %s24, 1
      %p412 = scmp.lt.s32.totalorder %s408, 5
      %s413 = scalar_select %p412, %s408, 5
      %p414 = scmp.lt.s32.totalorder %s409, 5
      %s415 = scalar_select %p414, %s409, 5
      %s416 = smul.addr %s413, 6
      %s417 = sadd.s32 %s415, %s416
      %s418 = smul.addr %s411, 36
      %s419 = sadd.s32 %s417, %s418
      %s420 = smul.addr %s419, 4
      %s421 = scalar_lea.vmem %s2, %s420
      %p422 = pneg %p139
      %p423 = pneg %p136
      %p424 = scmp.lt.s32.totalorder %s27, 2
      %s425 = scalar_select %p424, %s27, 2
      %s426 = smul.addr %s425, 9
      %s427 = smul.addr %s426, 4
      %s428 = scalar_lea.vmem %s3, %s427
      %p429 = pneg %p165
      %p430 = pneg %p162
      %p431 = pneg %p186
      %p432 = pneg %p183
      %p433 = pneg %p207
      %p434 = pneg %p204
      %p435 = scmp.lt.s32.totalorder %s24, 1
      %s436 = scalar_select %p435, %s24, 1
      %p437 = scmp.lt.s32.totalorder %s25, 3
      %s438 = scalar_select %p437, %s25, 3
      %p439 = scmp.lt.s32.totalorder %s26, 3
      %s440 = scalar_select %p439, %s26, 3
      %s441 = smul.addr %s438, 4
      %s442 = sadd.s32 %s440, %s441
      %s443 = smul.addr %s436, 16
      %s444 = sadd.s32 %s442, %s443
      %s445 = smul.addr %s444, 2
      %s446 = scalar_lea.vmem %s6, %s445
      %p447 = pneg %p237
      %p448 = pneg %p234
      %p449 = pneg %p267
      %p450 = pneg %p264
      %p451 = scmp.lt.s32.totalorder %s24, 1
      %s452 = scalar_select %p451, %s24, 1
      %p453 = scmp.lt.s32.totalorder %s25, 3
      %s454 = scalar_select %p453, %s25, 3
      %p455 = scmp.lt.s32.totalorder %s26, 3
      %s456 = scalar_select %p455, %s26, 3
      %s457 = smul.addr %s454, 4
      %s458 = sadd.s32 %s456, %s457
      %s459 = smul.addr %s452, 16
      %s460 = sadd.s32 %s458, %s459
      %s461 = smul.addr %s460, 4
      %s462 = scalar_lea.vmem %s7, %s461
      %s463 = sadd.s32 %s25, %s27
      %p464 = scmp.lt.s32.totalorder %s24, 1
      %s465 = scalar_select %p464, %s24, 1
      %p466 = scmp.lt.s32.totalorder %s463, 5
      %s467 = scalar_select %p466, %s463, 5
      %p468 = scmp.lt.s32.totalorder %s26, 5
      %s469 = scalar_select %p468, %s26, 5
      %s470 = smul.addr %s467, 6
      %s471 = sadd.s32 %s469, %s470
      %s472 = smul.addr %s465, 36
      %s473 = sadd.s32 %s471, %s472
      %s474 = smul.addr %s473, 4
      %s475 = scalar_lea.vmem %s0, %s474
      %s476 = sadd.s32 %s25, %s27
      %s477 = sadd.s32 %s25, %s27
      %s478 = sadd.s32 %s26, 1
      %p479 = scmp.lt.s32.totalorder %s24, 1
      %s480 = scalar_select %p479, %s24, 1
      %p481 = scmp.lt.s32.totalorder %s477, 5
      %s482 = scalar_select %p481, %s477, 5
      %p483 = scmp.lt.s32.totalorder %s478, 5
      %s484 = scalar_select %p483, %s478, 5
      %s485 = smul.addr %s482, 6
      %s486 = sadd.s32 %s484, %s485
      %s487 = smul.addr %s480, 36
      %s488 = sadd.s32 %s486, %s487
      %s489 = smul.addr %s488, 4
      %s490 = scalar_lea.vmem %s1, %s489
      %s491 = sadd.s32 %s25, %s27
      %s492 = sadd.s32 %s26, 1
      %s493 = sadd.s32 %s25, %s27
      %s494 = sadd.s32 %s26, 2
      %p495 = scmp.lt.s32.totalorder %s24, 1
      %s496 = scalar_select %p495, %s24, 1
      %p497 = scmp.lt.s32.totalorder %s493, 5
      %s498 = scalar_select %p497, %s493, 5
      %p499 = scmp.lt.s32.totalorder %s494, 5
      %s500 = scalar_select %p499, %s494, 5
      %s501 = smul.addr %s498, 6
      %s502 = sadd.s32 %s500, %s501
      %s503 = smul.addr %s496, 36
      %s504 = sadd.s32 %s502, %s503
      %s505 = smul.addr %s504, 4
      %s506 = scalar_lea.vmem %s2, %s505
      %s507 = sadd.s32 %s25, %s27
      %s508 = sadd.s32 %s26, 2
      %p509 = scmp.lt.s32.totalorder %s27, 2
      %s510 = scalar_select %p509, %s27, 2
      %s511 = smul.addr %s510, 9
      %s512 = smul.addr %s511, 4
      %s513 = scalar_lea.vmem %s3, %s512
      %p514 = scmp.lt.s32.totalorder %s24, 1
      %s515 = scalar_select %p514, %s24, 1
      %p516 = scmp.lt.s32.totalorder %s25, 3
      %s517 = scalar_select %p516, %s25, 3
      %p518 = scmp.lt.s32.totalorder %s26, 3
      %s519 = scalar_select %p518, %s26, 3
      %s520 = smul.addr %s517, 4
      %s521 = sadd.s32 %s519, %s520
      %s522 = smul.addr %s515, 16
      %s523 = sadd.s32 %s521, %s522
      %s524 = smul.addr %s523, 2
      %s525 = scalar_lea.vmem %s6, %s524
      %p526 = scmp.lt.s32.totalorder %s24, 1
      %s527 = scalar_select %p526, %s24, 1
      %p528 = scmp.lt.s32.totalorder %s25, 3
      %s529 = scalar_select %p528, %s25, 3
      %p530 = scmp.lt.s32.totalorder %s26, 3
      %s531 = scalar_select %p530, %s26, 3
      %s532 = smul.addr %s529, 4
      %s533 = sadd.s32 %s531, %s532
      %s534 = smul.addr %s527, 16
      %s535 = sadd.s32 %s533, %s534
      %s536 = smul.addr %s535, 4
      %s537 = scalar_lea.vmem %s7, %s536
      %p539 = scmp.eq.s32.totalorder %s27, 0
      // Predicated region
      $region49: #{encoder_forward.10} parent=47 // pred_check
        %p540 = pneg %p539
      $region50: #{encoder_forward.10} parent=47 // pred_check_branch
        %542 = sbr.rel (%p540) target = $region52
      $region51: #{encoder_forward.10} parent=47 // pred_region
        %vm543 = vcmask 125952
        %544 = vst.msk [vmem:[#allocation2] sm:$0xf] %vm543, 0.0
      $region52: #{encoder_forward.10} parent=47 // pred_fallthru
        _
      %v545 = vld [vmem:[%s513] sm:$0xf]
      %v546 = vld [vmem:[%s513 + $0x4] sm:$0xf]
      %v547 = vld [vmem:[%s513 + $0x8] sm:$0xf]
      %v548 = vld [vmem:[%s513 + $0xc] sm:$0xf]
      %v549 = vld [vmem:[%s513 + $0x10] sm:$0xf]
      %v550 = vld [vmem:[%s513 + $0x14] sm:$0xf]
      %v551 = vld [vmem:[%s513 + $0x18] sm:$0xf]
      %v552 = vld [vmem:[%s513 + $0x1c] sm:$0xf]
      %v553 = vld [vmem:[%s513 + $0x20] sm:$0xf]
      %v554 = vld [vmem:[%s475] sm:$0x7]
      %v555 = vld [vmem:[%s490] sm:$0x7]
      %v556 = vld [vmem:[%s506] sm:$0x7]
      %v558 = vunpack.c.l.b16 %v554
      %v559 = vpack.c.b16 %v558, %v558
      %v561 = vshrl.u32 %v559, 16
      %v563 = vshll.u32 %v559, 16
      %v565 = vrot.slane %v563, 1
      %v566 = vor.u32 %v561, %v565
      %vm567 = vcmask 64512
      %v569 = vsel %vm567, %v566, 0
      %vm571 = vcmask 1043456
      %v573 = vsel %vm571, %v546, 0
      %575 = vmatpush.bf16.msra.mxu0 0
      %576 = vmatpush.bf16.msra.mxu0 0
      %577 = vmatpush.bf16.msra.mxu0 0
      %578 = vmatpush.bf16.msra.mxu0 0
      %579 = vmatpush.bf16.msra.mxu0 0
      %580 = vmatpush.bf16.msra.mxu0 0
      %581 = vmatpush.bf16.msra.mxu0 0
      %582 = vmatpush.bf16.msra.mxu0 %v573
      %583 = vmatmul.bf16.gmra.mxu0 %v569
      %v584 = vpop.f32.mrf.mxu0
      %v585 = vadd.f32 0.0, %v584
      %v586 = vpop.f32.mrf.mxu0
      %587 = vdwg.mxu0
      %v589 = vsel %vm567, %v554, 0
      %v592 = vsel %vm571, %v545, 0
      %594 = vmatpush.bf16.msra.mxu0 0
      %595 = vmatpush.bf16.msra.mxu0 0
      %596 = vmatpush.bf16.msra.mxu0 0
      %597 = vmatpush.bf16.msra.mxu0 0
      %598 = vmatpush.bf16.msra.mxu0 0
      %599 = vmatpush.bf16.msra.mxu0 0
      %600 = vmatpush.bf16.msra.mxu0 0
      %601 = vmatpush.bf16.msra.mxu0 %v592
      %602 = vmatmul.bf16.gmra.mxu0 %v589
      %v603 = vpop.f32.mrf.mxu0
      %v604 = vadd.f32 %v585, %v603
      %v605 = vpop.f32.mrf.mxu0
      %606 = vdwg.mxu0
      %v607 = vrot.slane %v559, 1
      %v609 = vsel %vm567, %v607, 0
      %v612 = vsel %vm571, %v547, 0
      %614 = vmatpush.bf16.msra.mxu0 0
      %615 = vmatpush.bf16.msra.mxu0 0
      %616 = vmatpush.bf16.msra.mxu0 0
      %617 = vmatpush.bf16.msra.mxu0 0
      %618 = vmatpush.bf16.msra.mxu0 0
      %619 = vmatpush.bf16.msra.mxu0 0
      %620 = vmatpush.bf16.msra.mxu0 0
      %621 = vmatpush.bf16.msra.mxu0 %v612
      %622 = vmatmul.bf16.gmra.mxu0 %v609
      %v623 = vpop.f32.mrf.mxu0
      %v624 = vadd.f32 0.0, %v623
      %v625 = vpop.f32.mrf.mxu0
      %626 = vdwg.mxu0
      %v627 = vadd.f32 %v604, %v624
      %v629 = vsel %vm567, %v555, 0
      %v632 = vsel %vm571, %v548, 0
      %634 = vmatpush.bf16.msra.mxu0 0
      %635 = vmatpush.bf16.msra.mxu0 0
      %636 = vmatpush.bf16.msra.mxu0 0
      %637 = vmatpush.bf16.msra.mxu0 0
      %638 = vmatpush.bf16.msra.mxu0 0
      %639 = vmatpush.bf16.msra.mxu0 0
      %640 = vmatpush.bf16.msra.mxu0 0
      %641 = vmatpush.bf16.msra.mxu0 %v632
      %642 = vmatmul.bf16.gmra.mxu0 %v629
      %v643 = vpop.f32.mrf.mxu0
      %v644 = vadd.f32 0.0, %v643
      %v645 = vpop.f32.mrf.mxu0
      %646 = vdwg.mxu0
      %v647 = vadd.f32 %v627, %v644
      %v649 = vunpack.c.l.b16 %v555
      %v650 = vpack.c.b16 %v649, %v649
      %v652 = vshrl.u32 %v650, 16
      %v654 = vshll.u32 %v650, 16
      %v656 = vrot.slane %v654, 1
      %v657 = vor.u32 %v652, %v656
      %v659 = vsel %vm567, %v657, 0
      %v662 = vsel %vm571, %v549, 0
      %664 = vmatpush.bf16.msra.mxu0 0
      %665 = vmatpush.bf16.msra.mxu0 0
      %666 = vmatpush.bf16.msra.mxu0 0
      %667 = vmatpush.bf16.msra.mxu0 0
      %668 = vmatpush.bf16.msra.mxu0 0
      %669 = vmatpush.bf16.msra.mxu0 0
      %670 = vmatpush.bf16.msra.mxu0 0
      %671 = vmatpush.bf16.msra.mxu0 %v662
      %672 = vmatmul.bf16.gmra.mxu0 %v659
      %v673 = vpop.f32.mrf.mxu0
      %v674 = vadd.f32 0.0, %v673
      %v675 = vpop.f32.mrf.mxu0
      %676 = vdwg.mxu0
      %v677 = vadd.f32 %v647, %v674
      %v678 = vrot.slane %v650, 1
      %v680 = vsel %vm567, %v678, 0
      %v683 = vsel %vm571, %v550, 0
      %685 = vmatpush.bf16.msra.mxu0 0
      %686 = vmatpush.bf16.msra.mxu0 0
      %687 = vmatpush.bf16.msra.mxu0 0
      %688 = vmatpush.bf16.msra.mxu0 0
      %689 = vmatpush.bf16.msra.mxu0 0
      %690 = vmatpush.bf16.msra.mxu0 0
      %691 = vmatpush.bf16.msra.mxu0 0
      %692 = vmatpush.bf16.msra.mxu0 %v683
      %693 = vmatmul.bf16.gmra.mxu0 %v680
      %v694 = vpop.f32.mrf.mxu0
      %v695 = vadd.f32 0.0, %v694
      %v696 = vpop.f32.mrf.mxu0
      %697 = vdwg.mxu0
      %v698 = vadd.f32 %v677, %v695
      %v700 = vsel %vm567, %v556, 0
      %v703 = vsel %vm571, %v551, 0
      %705 = vmatpush.bf16.msra.mxu0 0
      %706 = vmatpush.bf16.msra.mxu0 0
      %707 = vmatpush.bf16.msra.mxu0 0
      %708 = vmatpush.bf16.msra.mxu0 0
      %709 = vmatpush.bf16.msra.mxu0 0
      %710 = vmatpush.bf16.msra.mxu0 0
      %711 = vmatpush.bf16.msra.mxu0 0
      %712 = vmatpush.bf16.msra.mxu0 %v703
      %713 = vmatmul.bf16.gmra.mxu0 %v700
      %v714 = vpop.f32.mrf.mxu0
      %v715 = vadd.f32 0.0, %v714
      %v716 = vpop.f32.mrf.mxu0
      %717 = vdwg.mxu0
      %v718 = vadd.f32 %v698, %v715
      %v720 = vunpack.c.l.b16 %v556
      %v721 = vpack.c.b16 %v720, %v720
      %v723 = vshrl.u32 %v721, 16
      %v725 = vshll.u32 %v721, 16
      %v727 = vrot.slane %v725, 1
      %v728 = vor.u32 %v723, %v727
      %v730 = vsel %vm567, %v728, 0
      %v733 = vsel %vm571, %v552, 0
      %735 = vmatpush.bf16.msra.mxu0 0
      %736 = vmatpush.bf16.msra.mxu0 0
      %737 = vmatpush.bf16.msra.mxu0 0
      %738 = vmatpush.bf16.msra.mxu0 0
      %739 = vmatpush.bf16.msra.mxu0 0
      %740 = vmatpush.bf16.msra.mxu0 0
      %741 = vmatpush.bf16.msra.mxu0 0
      %742 = vmatpush.bf16.msra.mxu0 %v733
      %743 = vmatmul.bf16.gmra.mxu0 %v730
      %v744 = vpop.f32.mrf.mxu0
      %v745 = vadd.f32 0.0, %v744
      %v746 = vpop.f32.mrf.mxu0
      %747 = vdwg.mxu0
      %v748 = vadd.f32 %v718, %v745
      %v749 = vrot.slane %v721, 1
      %v751 = vsel %vm567, %v749, 0
      %v754 = vsel %vm571, %v553, 0
      %756 = vmatpush.bf16.msra.mxu0 0
      %757 = vmatpush.bf16.msra.mxu0 0
      %758 = vmatpush.bf16.msra.mxu0 0
      %759 = vmatpush.bf16.msra.mxu0 0
      %760 = vmatpush.bf16.msra.mxu0 0
      %761 = vmatpush.bf16.msra.mxu0 0
      %762 = vmatpush.bf16.msra.mxu0 0
      %763 = vmatpush.bf16.msra.mxu0 %v754
      %764 = vmatmul.bf16.gmra.mxu0 %v751
      %v765 = vpop.f32.mrf.mxu0
      %v766 = vadd.f32 0.0, %v765
      %v767 = vpop.f32.mrf.mxu0
      %768 = vdwg.mxu0
      %v769 = vadd.f32 %v748, %v766
      %v770 = vld [vmem:[#allocation2] sm:$0xf]
      %v771 = vadd.f32 %v770, %v769
      %vm772 = vcmask 125952
      %773 = vst.msk [vmem:[#allocation2] sm:$0xf] %vm772, %v771
      %p774 = scmp.eq.s32.totalorder %s27, 2
      // Predicated region
      $region53: #{encoder_forward.10} parent=47 // pred_check
        %p775 = pneg %p774
      $region54: #{encoder_forward.10} parent=47 // pred_check_branch
        %777 = sbr.rel (%p775) target = $region56
      $region55: #{encoder_forward.10} parent=47 // pred_region
        %v778 = vld [vmem:[#allocation2] sm:$0xf]
        %v779 = vld [vmem:[%s4] sm:$0x1]
        %v781 = vperm.slane %v779, 0
        %v783 = vadd.f32 %v778, %v781
        %vm784 = vcmp.ge.f32.partialorder %v783, 0.0
        %v785 = vld [vmem:[%s5] sm:$0x1]
        %v787 = vperm.slane %v785, 0
        %v789 = vmul.f32 %v787, %v783
        %v790 = vsel %vm784, %v783, %v789
        %v791 = vld [vmem:[%s525] sm:$0x3]
        %v792 = vunpack.c.l.bf16 %v791
        %v793 = vadd.f32 %v790, %v792
        %794 = vst.msk [vmem:[%s537] sm:$0xf] %vm772, %v793
      $region56: #{encoder_forward.10} parent=47 // pred_fallthru
        _
      %p795 = scmp.lt.s32.totalorder %s24, 1
      %s796 = scalar_select %p795, %s24, 1
      %p797 = scmp.lt.s32.totalorder %s25, 3
      %s798 = scalar_select %p797, %s25, 3
      %p799 = scmp.lt.s32.totalorder %s26, 3
      %s800 = scalar_select %p799, %s26, 3
      %s801 = smul.addr %s798, 4
      %s802 = sadd.s32 %s800, %s801
      %s803 = smul.addr %s796, 16
      %s804 = sadd.s32 %s802, %s803
      %s805 = smul.addr %s804, 4
      %s806 = scalar_lea.vmem %s7, %s805
      // Predicated region
      $region57: #{encoder_forward.10} parent=47 // pred_check
        %p807 = pneg %p264
      $region58: #{encoder_forward.10} parent=47 // pred_check_branch
        %809 = sbr.rel (%p807) target = $region60
      $region59: #{encoder_forward.10} parent=47 // pred_region
        _
      $region60: #{encoder_forward.10} parent=47 // pred_fallthru
        _
    $region48: #{encoder_forward.10} parent=5 // pred_fallthru
      _
    %p810 = scmp.le.s32.totalorder 2, %s13
    // Predicated region
    $region61: #{encoder_forward.10} parent=5 // pred_check
      %p811 = pneg %p810
    $region62: #{encoder_forward.10} parent=5 // pred_check_branch
      %813 = sbr.rel (%p811) target = $region64
    $region63: #{encoder_forward.10} parent=5 // pred_region
      %s814 = ssub.s32 %s13, 2
      // Predicated region
      $region65: #{encoder_forward.10} parent=63 // pred_check
        %p815 = pneg %p270
      $region66: #{encoder_forward.10} parent=63 // pred_check_branch
        %817 = sbr.rel (%p815) target = $region68
      $region67: #{encoder_forward.10} parent=63 // pred_region
        %p818 = scmp.lt.s32.totalorder %s28, 1
        %s819 = scalar_select %p818, %s28, 1
        %p820 = scmp.lt.s32.totalorder %s29, 3
        %s821 = scalar_select %p820, %s29, 3
        %p822 = scmp.lt.s32.totalorder %s30, 3
        %s823 = scalar_select %p822, %s30, 3
        %s824 = smul.addr %s821, 4
        %s825 = sadd.s32 %s823, %s824
        %s826 = smul.addr %s819, 16
        %s827 = sadd.s32 %s825, %s826
        %s828 = smul.addr %s827, 4
        %s829 = scalar_lea.vmem %s7, %s828
      $region68: #{encoder_forward.10} parent=63 // pred_fallthru
        _
    $region64: #{encoder_forward.10} parent=5 // pred_fallthru
      _
  $region6: #{encoder_forward.10} parent=0 // loop_footer
    %s17 = sadd.s32 1, %s13
  $region7: #{encoder_forward.10} parent=0 // loop_footer_branch
    %12 = sbr.rel target = $region3
  $region8: #{encoder_forward.10} parent=0 // loop_exit
    _

// kernel: encoder_forward.11
$region0: #{encoder_forward.11}
  #allocation0 [shape = 'u32[]', space=smem, size = 0x4, offset = 0x4, fixed_abs, tag = 'smem constant byte address 0x4 - core index']
  #allocation1 [shape = 'u32[72,128]{1,0:T(1,128)}', space=vmem, size = 0x9000, scoped, tag = 'internal scratch']
  #allocation2 [shape = 'f32[4,16]{1,0:T(4,128)}', space=vmem, size = 0x800, scoped, tag = 'scratch operand']
  %s0 = inlined_call_operand.vmem [shape: bf16[2,6,6,6,8], index: 0, kind: input, shape index: {}, may-alias: {0,1,2}]
  %s1 = inlined_call_operand.vmem [shape: bf16[2,6,6,6,8], index: 1, kind: input, shape index: {}, may-alias: {0,1,2}]
  %s2 = inlined_call_operand.vmem [shape: bf16[2,6,6,6,8], index: 2, kind: input, shape index: {}, may-alias: {0,1,2}]
  %s3 = inlined_call_operand.vmem [shape: bf16[3,72,16], index: 3, kind: input, shape index: {}]
  %s4 = inlined_call_operand.vmem [shape: f32[1,16], index: 4, kind: input, shape index: {}]
  %s5 = inlined_call_operand.vmem [shape: bf16[2,4,4,4,16], index: 5, kind: input, shape index: {}]
  %s6 = inlined_call_operand.vmem [shape: f32[2,4,4,4,16], index: 6, kind: input, shape index: {}]
  %s7 = inlined_call_operand.vmem [shape: f32[2,4,4,4,16], index: 7, kind: input, shape index: {}]
  %s8 = inlined_call_operand.hbm [shape: f32[2,4,4,4,16], index: 8, kind: output, shape index: {0}]
  %s9 = inlined_call_operand.hbm [shape: f32[2,4,4,4,16], index: 9, kind: output, shape index: {1}]
  %10 = xla_tuple %s8, %s9
  %s11 = sld [smem:[#allocation0]]
  $region81: #{encoder_forward.11} parent=0
    _
  %s13 = ssub.s32 1, %s11
  %s14 = scalar_select 0, %s13, %s11
  $region1: #{encoder_forward.11} parent=0
    #allocation3 [shape = 'u8[4096]{0}', space=vmem, size = 0x1000, scoped, tag = 'output window, operand 0']
    #allocation4 [shape = 's32[2]{0}', space=sflag, size = 0x8, scoped, tag = 'scoped memory for encoder_forward.11']
    #allocation5 [shape = 'u8[4096]{0}', space=vmem, size = 0x1000, scoped, tag = 'output window, operand 1']
    #allocation6 [shape = 's32[2]{0}', space=sflag, size = 0x8, scoped, tag = 'scoped memory for encoder_forward.11']
    %15 = vsyncpa [#allocation4], 0
    %s16 = scalar_lea.sflag [#allocation4], 1
    %17 = vsyncpa %s16, 0
    %18 = vsyncpa [#allocation6], 0
    %s19 = scalar_lea.sflag [#allocation6], 1
    %20 = vsyncpa %s19, 0
    loop: start=0, step=1, limit=98
    $region2: #{encoder_forward.11} parent=1 // loop_pre_header
      _
    $region3: #{encoder_forward.11} parent=1 // loop_header
      %s22 = sphi 0, %s26
      %p23 = scmp.ge.s32.totalorder %s22, 98
      %s29 = sphi 0, %s55
      %s30 = sphi 0, %s51
      %s31 = sphi 0, %s47
      %s32 = sphi 0, %s43
      %s33 = sphi 0, %s29
      %s34 = sphi 0, %s30
      %s35 = sphi 0, %s31
      %s36 = sphi 0, %s32
      %s37 = sphi 0, %s33
      %s38 = sphi 0, %s34
      %s39 = sphi 0, %s35
      %s40 = sphi 0, %s36
      %s64 = sphi 0, %s66
      %s67 = sphi 0, %s64
      %s68 = sphi 0, %s67
      %s84 = sphi 0, %s68
      %s98 = sphi 0, %s100
      %s101 = sphi 0, %s98
      %s102 = sphi 0, %s101
      %s118 = sphi 0, %s102
      %s132 = sphi 0, %s134
      %s135 = sphi 0, %s132
      %s136 = sphi 0, %s135
      %s152 = sphi 0, %s136
      %s158 = sphi 0, %s160
      %s161 = sphi 0, %s158
      %s162 = sphi 0, %s161
      %s178 = sphi 0, %s162
      %s182 = sphi 0, %s182
      %s184 = sphi 0, %s182
      %s185 = sphi 0, %s184
      %s199 = sphi 0, %s185
      %s209 = sphi 0, %s211
      %s212 = sphi 0, %s209
      %s213 = sphi 0, %s212
      %s229 = sphi 0, %s213
      %s239 = sphi 0, %s241
      %s242 = sphi 0, %s239
      %s243 = sphi 0, %s242
      %s259 = sphi 0, %s243
      %s269 = sphi 0, %s271
      %s272 = sphi 0, %s269
      %s273 = sphi 0, %s272
      %s289 = sphi 0, %s273
      %s299 = sphi 0, %s301
      %s302 = sphi 0, %s299
      %s303 = sphi 0, %s302
      %s319 = sphi 0, %s303
      %s329 = sphi 0, %s331
      %s332 = sphi 0, %s329
      %s333 = sphi 0, %s332
      %s349 = sphi 0, %s333
    $region4: #{encoder_forward.11} parent=1 // loop_header_branch
      %25 = sbr.rel (%p23) target = $region8
    $region5: #{encoder_forward.11} parent=1 // loop_body
      %s27 = ssub.s32 %s22, 1
      %s28 = ssub.s32 %s22, 2
      %s41 = sadd.s32 1, %s32
      %p42 = scmp.ge.s32.totalorder %s41, 3
      %s43 = scalar_select %p42, 0, %s41
      %s44 = sadd.s32 1, %s31
      %s45 = scalar_select %p42, %s44, %s31
      %p46 = scmp.ge.s32.totalorder %s45, 4
      %s47 = scalar_select %p46, 0, %s45
      %s48 = sadd.s32 1, %s30
      %s49 = scalar_select %p46, %s48, %s30
      %p50 = scmp.ge.s32.totalorder %s49, 4
      %s51 = scalar_select %p50, 0, %s49
      %s52 = sadd.s32 1, %s29
      %s53 = scalar_select %p50, %s52, %s29
      %p54 = scmp.ge.s32.totalorder %s53, 2
      %s55 = scalar_select %p54, 0, %s53
      %s56 = sadd.s32 %s30, %s32
      %s57 = sadd.s32 %s51, %s43
      %s58 = ssub.s32 %s29, %s55
      %s59 = ssub.s32 %s56, %s57
      %s60 = sor.u32 %s58, %s59
      %s61 = ssub.s32 %s31, %s47
      %s62 = sor.u32 %s60, %s61
      %p63 = scmp.eq.s32.totalorder %s62, 0
      %s65 = sadd.s32 %s64, 1
      %s66 = scalar_select %p63, %s64, %s65
      %p69 = pneg %p63
      %p70 = scmp.eq.s32.totalorder %s22, 95
      %p71 = por %p69, %p70
      %p72 = scmp.ne.s32.totalorder %s64, %s67
      %p73 = scmp.eq.s32.totalorder %s22, 0
      %p74 = por %p72, %p73
      %p75 = scmp.ne.s32.totalorder %s64, %s67
      %p76 = scmp.eq.s32.totalorder %s27, 95
      %p77 = por %p75, %p76
      %p78 = scmp.ne.s32.totalorder %s67, %s68
      %p79 = scmp.eq.s32.totalorder %s27, 0
      %p80 = por %p78, %p79
      %p81 = scmp.ne.s32.totalorder %s67, %s68
      %p82 = scmp.eq.s32.totalorder %s28, 95
      %p83 = por %p81, %p82
      %p85 = scmp.ne.s32.totalorder %s68, %s84
      %p86 = scmp.eq.s32.totalorder %s28, 0
      %p87 = por %p85, %p86
      %s88 = sadd.s32 %s30, %s32
      %s89 = sadd.s32 %s31, 1
      %s90 = sadd.s32 %s51, %s43
      %s91 = sadd.s32 %s47, 1
      %s92 = ssub.s32 %s29, %s55
      %s93 = ssub.s32 %s88, %s90
      %s94 = sor.u32 %s92, %s93
      %s95 = ssub.s32 %s89, %s91
      %s96 = sor.u32 %s94, %s95
      %p97 = scmp.eq.s32.totalorder %s96, 0
      %s99 = sadd.s32 %s98, 1
      %s100 = scalar_select %p97, %s98, %s99
      %p103 = pneg %p97
      %p104 = scmp.eq.s32.totalorder %s22, 95
      %p105 = por %p103, %p104
      %p106 = scmp.ne.s32.totalorder %s98, %s101
      %p107 = scmp.eq.s32.totalorder %s22, 0
      %p108 = por %p106, %p107
      %p109 = scmp.ne.s32.totalorder %s98, %s101
      %p110 = scmp.eq.s32.totalorder %s27, 95
      %p111 = por %p109, %p110
      %p112 = scmp.ne.s32.totalorder %s101, %s102
      %p113 = scmp.eq.s32.totalorder %s27, 0
      %p114 = por %p112, %p113
      %p115 = scmp.ne.s32.totalorder %s101, %s102
      %p116 = scmp.eq.s32.totalorder %s28, 95
      %p117 = por %p115, %p116
      %p119 = scmp.ne.s32.totalorder %s102, %s118
      %p120 = scmp.eq.s32.totalorder %s28, 0
      %p121 = por %p119, %p120
      %s122 = sadd.s32 %s30, %s32
      %s123 = sadd.s32 %s31, 2
      %s124 = sadd.s32 %s51, %s43
      %s125 = sadd.s32 %s47, 2
      %s126 = ssub.s32 %s29, %s55
      %s127 = ssub.s32 %s122, %s124
      %s128 = sor.u32 %s126, %s127
      %s129 = ssub.s32 %s123, %s125
      %s130 = sor.u32 %s128, %s129
      %p131 = scmp.eq.s32.totalorder %s130, 0
      %s133 = sadd.s32 %s132, 1
      %s134 = scalar_select %p131, %s132, %s133
      %p137 = pneg %p131
      %p138 = scmp.eq.s32.totalorder %s22, 95
      %p139 = por %p137, %p138
      %p140 = scmp.ne.s32.totalorder %s132, %s135
      %p141 = scmp.eq.s32.totalorder %s22, 0
      %p142 = por %p140, %p141
      %p143 = scmp.ne.s32.totalorder %s132, %s135
      %p144 = scmp.eq.s32.totalorder %s27, 95
      %p145 = por %p143, %p144
      %p146 = scmp.ne.s32.totalorder %s135, %s136
      %p147 = scmp.eq.s32.totalorder %s27, 0
      %p148 = por %p146, %p147
      %p149 = scmp.ne.s32.totalorder %s135, %s136
      %p150 = scmp.eq.s32.totalorder %s28, 95
      %p151 = por %p149, %p150
      %p153 = scmp.ne.s32.totalorder %s136, %s152
      %p154 = scmp.eq.s32.totalorder %s28, 0
      %p155 = por %p153, %p154
      %s156 = ssub.s32 %s32, %s43
      %p157 = scmp.eq.s32.totalorder %s156, 0
      %s159 = sadd.s32 %s158, 1
      %s160 = scalar_select %p157, %s158, %s159
      %p163 = pneg %p157
      %p164 = scmp.eq.s32.totalorder %s22, 95
      %p165 = por %p163, %p164
      %p166 = scmp.ne.s32.totalorder %s158, %s161
      %p167 = scmp.eq.s32.totalorder %s22, 0
      %p168 = por %p166, %p167
      %p169 = scmp.ne.s32.totalorder %s158, %s161
      %p170 = scmp.eq.s32.totalorder %s27, 95
      %p171 = por %p169, %p170
      %p172 = scmp.ne.s32.totalorder %s161, %s162
      %p173 = scmp.eq.s32.totalorder %s27, 0
      %p174 = por %p172, %p173
      %p175 = scmp.ne.s32.totalorder %s161, %s162
      %p176 = scmp.eq.s32.totalorder %s28, 95
      %p177 = por %p175, %p176
      %p179 = scmp.ne.s32.totalorder %s162, %s178
      %p180 = scmp.eq.s32.totalorder %s28, 0
      %p181 = por %p179, %p180
      %s183 = sadd.s32 %s182, 1
      %p186 = scmp.eq.s32.totalorder %s22, 95
      %p187 = scmp.ne.s32.totalorder %s182, %s184
      %p188 = scmp.eq.s32.totalorder %s22, 0
      %p189 = por %p187, %p188
      %p190 = scmp.ne.s32.totalorder %s182, %s184
      %p191 = scmp.eq.s32.totalorder %s27, 95
      %p192 = por %p190, %p191
      %p193 = scmp.ne.s32.totalorder %s184, %s185
      %p194 = scmp.eq.s32.totalorder %s27, 0
      %p195 = por %p193, %p194
      %p196 = scmp.ne.s32.totalorder %s184, %s185
      %p197 = scmp.eq.s32.totalorder %s28, 95
      %p198 = por %p196, %p197
      %p200 = scmp.ne.s32.totalorder %s185, %s199
      %p201 = scmp.eq.s32.totalorder %s28, 0
      %p202 = por %p200, %p201
      %s203 = ssub.s32 %s29, %s55
      %s204 = ssub.s32 %s30, %s51
      %s205 = sor.u32 %s203, %s204
      %s206 = ssub.s32 %s31, %s47
      %s207 = sor.u32 %s205, %s206
      %p208 = scmp.eq.s32.totalorder %s207, 0
      %s210 = sadd.s32 %s209, 1
      %s211 = scalar_select %p208, %s209, %s210
      %p214 = pneg %p208
      %p215 = scmp.eq.s32.totalorder %s22, 95
      %p216 = por %p214, %p215
      %p217 = scmp.ne.s32.totalorder %s209, %s212
      %p218 = scmp.eq.s32.totalorder %s22, 0
      %p219 = por %p217, %p218
      %p220 = scmp.ne.s32.totalorder %s209, %s212
      %p221 = scmp.eq.s32.totalorder %s27, 95
      %p222 = por %p220, %p221
      %p223 = scmp.ne.s32.totalorder %s212, %s213
      %p224 = scmp.eq.s32.totalorder %s27, 0
      %p225 = por %p223, %p224
      %p226 = scmp.ne.s32.totalorder %s212, %s213
      %p227 = scmp.eq.s32.totalorder %s28, 95
      %p228 = por %p226, %p227
      %p230 = scmp.ne.s32.totalorder %s213, %s229
      %p231 = scmp.eq.s32.totalorder %s28, 0
      %p232 = por %p230, %p231
      %s233 = ssub.s32 %s29, %s55
      %s234 = ssub.s32 %s30, %s51
      %s235 = sor.u32 %s233, %s234
      %s236 = ssub.s32 %s31, %s47
      %s237 = sor.u32 %s235, %s236
      %p238 = scmp.eq.s32.totalorder %s237, 0
      %s240 = sadd.s32 %s239, 1
      %s241 = scalar_select %p238, %s239, %s240
      %p244 = pneg %p238
      %p245 = scmp.eq.s32.totalorder %s22, 95
      %p246 = por %p244, %p245
      %p247 = scmp.ne.s32.totalorder %s239, %s242
      %p248 = scmp.eq.s32.totalorder %s22, 0
      %p249 = por %p247, %p248
      %p250 = scmp.ne.s32.totalorder %s239, %s242
      %p251 = scmp.eq.s32.totalorder %s27, 95
      %p252 = por %p250, %p251
      %p253 = scmp.ne.s32.totalorder %s242, %s243
      %p254 = scmp.eq.s32.totalorder %s27, 0
      %p255 = por %p253, %p254
      %p256 = scmp.ne.s32.totalorder %s242, %s243
      %p257 = scmp.eq.s32.totalorder %s28, 95
      %p258 = por %p256, %p257
      %p260 = scmp.ne.s32.totalorder %s243, %s259
      %p261 = scmp.eq.s32.totalorder %s28, 0
      %p262 = por %p260, %p261
      %s263 = ssub.s32 %s29, %s55
      %s264 = ssub.s32 %s30, %s51
      %s265 = sor.u32 %s263, %s264
      %s266 = ssub.s32 %s31, %s47
      %s267 = sor.u32 %s265, %s266
      %p268 = scmp.eq.s32.totalorder %s267, 0
      %s270 = sadd.s32 %s269, 1
      %s271 = scalar_select %p268, %s269, %s270
      %p274 = pneg %p268
      %p275 = scmp.eq.s32.totalorder %s22, 95
      %p276 = por %p274, %p275
      %p277 = scmp.ne.s32.totalorder %s269, %s272
      %p278 = scmp.eq.s32.totalorder %s22, 0
      %p279 = por %p277, %p278
      %p280 = scmp.ne.s32.totalorder %s269, %s272
      %p281 = scmp.eq.s32.totalorder %s27, 95
      %p282 = por %p280, %p281
      %p283 = scmp.ne.s32.totalorder %s272, %s273
      %p284 = scmp.eq.s32.totalorder %s27, 0
      %p285 = por %p283, %p284
      %p286 = scmp.ne.s32.totalorder %s272, %s273
      %p287 = scmp.eq.s32.totalorder %s28, 95
      %p288 = por %p286, %p287
      %p290 = scmp.ne.s32.totalorder %s273, %s289
      %p291 = scmp.eq.s32.totalorder %s28, 0
      %p292 = por %p290, %p291
      %s293 = ssub.s32 %s29, %s55
      %s294 = ssub.s32 %s30, %s51
      %s295 = sor.u32 %s293, %s294
      %s296 = ssub.s32 %s31, %s47
      %s297 = sor.u32 %s295, %s296
      %p298 = scmp.eq.s32.totalorder %s297, 0
      %s300 = sadd.s32 %s299, 1
      %s301 = scalar_select %p298, %s299, %s300
      %p304 = pneg %p298
      %p305 = scmp.eq.s32.totalorder %s22, 95
      %p306 = por %p304, %p305
      %p307 = scmp.ne.s32.totalorder %s299, %s302
      %p308 = scmp.eq.s32.totalorder %s22, 0
      %p309 = por %p307, %p308
      %p310 = scmp.ne.s32.totalorder %s299, %s302
      %p311 = scmp.eq.s32.totalorder %s27, 95
      %p312 = por %p310, %p311
      %p313 = scmp.ne.s32.totalorder %s302, %s303
      %p314 = scmp.eq.s32.totalorder %s27, 0
      %p315 = por %p313, %p314
      %p316 = scmp.ne.s32.totalorder %s302, %s303
      %p317 = scmp.eq.s32.totalorder %s28, 95
      %p318 = por %p316, %p317
      %p320 = scmp.ne.s32.totalorder %s303, %s319
      %p321 = scmp.eq.s32.totalorder %s28, 0
      %p322 = por %p320, %p321
      %s323 = ssub.s32 %s29, %s55
      %s324 = ssub.s32 %s30, %s51
      %s325 = sor.u32 %s323, %s324
      %s326 = ssub.s32 %s31, %s47
      %s327 = sor.u32 %s325, %s326
      %p328 = scmp.eq.s32.totalorder %s327, 0
      %s330 = sadd.s32 %s329, 1
      %s331 = scalar_select %p328, %s329, %s330
      %p334 = pneg %p328
      %p335 = scmp.eq.s32.totalorder %s22, 95
      %p336 = por %p334, %p335
      %p337 = scmp.ne.s32.totalorder %s329, %s332
      %p338 = scmp.eq.s32.totalorder %s22, 0
      %p339 = por %p337, %p338
      %p340 = scmp.ne.s32.totalorder %s329, %s332
      %p341 = scmp.eq.s32.totalorder %s27, 95
      %p342 = por %p340, %p341
      %p343 = scmp.ne.s32.totalorder %s332, %s333
      %p344 = scmp.eq.s32.totalorder %s27, 0
      %p345 = por %p343, %p344
      %p346 = scmp.ne.s32.totalorder %s332, %s333
      %p347 = scmp.eq.s32.totalorder %s28, 95
      %p348 = por %p346, %p347
      %p350 = scmp.ne.s32.totalorder %s333, %s349
      %p351 = scmp.eq.s32.totalorder %s28, 0
      %p352 = por %p350, %p351
      %p353 = scmp.le.s32.totalorder 1, %s22
      %p354 = scmp.lt.s32.totalorder %s22, 97
      %p355 = pnand %p353, %p354
      %p356 = pneg %p355
      // Predicated region
      $region9: #{encoder_forward.11} parent=5 // pred_check
        _
      $region10: #{encoder_forward.11} parent=5 // pred_check_branch
        %358 = sbr.rel (%p355) target = $region12
      $region11: #{encoder_forward.11} parent=5 // pred_region
        %s359 = ssub.s32 %s22, 1
        // Predicated region
        $region13: #{encoder_forward.11} parent=11 // pred_check
          %p360 = pneg %p195
        $region14: #{encoder_forward.11} parent=11 // pred_check_branch
          %362 = sbr.rel (%p360) target = $region16
        $region15: #{encoder_forward.11} parent=11 // pred_region
          _
        $region16: #{encoder_forward.11} parent=11 // pred_fallthru
          _
      $region12: #{encoder_forward.11} parent=5 // pred_fallthru
        _
      %p363 = scmp.lt.s32.totalorder %s22, 96
      // Predicated region
      $region17: #{encoder_forward.11} parent=5 // pred_check
        %p364 = pneg %p363
      $region18: #{encoder_forward.11} parent=5 // pred_check_branch
        %366 = sbr.rel (%p364) target = $region20
      $region19: #{encoder_forward.11} parent=5 // pred_region
        // Predicated region
        $region21: #{encoder_forward.11} parent=19 // pred_check
          %p367 = pneg %p74
        $region22: #{encoder_forward.11} parent=19 // pred_check_branch
          %369 = sbr.rel (%p367) target = $region24
        $region23: #{encoder_forward.11} parent=19 // pred_region
          %s370 = sadd.s32 %s30, %s32
          %p371 = scmp.lt.s32.totalorder %s29, 1
          %s372 = scalar_select %p371, %s29, 1
          %p373 = scmp.lt.s32.totalorder %s370, 5
          %s374 = scalar_select %p373, %s370, 5
          %p375 = scmp.lt.s32.totalorder %s31, 5
          %s376 = scalar_select %p375, %s31, 5
          %s377 = smul.addr %s374, 6
          %s378 = sadd.s32 %s376, %s377
          %s379 = smul.addr %s372, 36
          %s380 = sadd.s32 %s378, %s379
          %s381 = smul.addr %s380, 4
          %s382 = scalar_lea.vmem %s0, %s381
          %s383 = sadd.s32 %s30, %s32
        $region24: #{encoder_forward.11} parent=19 // pred_fallthru
          _
        // Predicated region
        $region25: #{encoder_forward.11} parent=19 // pred_check
          %p384 = pneg %p108
        $region26: #{encoder_forward.11} parent=19 // pred_check_branch
          %386 = sbr.rel (%p384) target = $region28
        $region27: #{encoder_forward.11} parent=19 // pred_region
          %s387 = sadd.s32 %s30, %s32
          %s388 = sadd.s32 %s31, 1
          %p389 = scmp.lt.s32.totalorder %s29, 1
          %s390 = scalar_select %p389, %s29, 1
          %p391 = scmp.lt.s32.totalorder %s387, 5
          %s392 = scalar_select %p391, %s387, 5
          %p393 = scmp.lt.s32.totalorder %s388, 5
          %s394 = scalar_select %p393, %s388, 5
          %s395 = smul.addr %s392, 6
          %s396 = sadd.s32 %s394, %s395
          %s397 = smul.addr %s390, 36
          %s398 = sadd.s32 %s396, %s397
          %s399 = smul.addr %s398, 4
          %s400 = scalar_lea.vmem %s1, %s399
          %s401 = sadd.s32 %s30, %s32
          %s402 = sadd.s32 %s31, 1
        $region28: #{encoder_forward.11} parent=19 // pred_fallthru
          _
        // Predicated region
        $region29: #{encoder_forward.11} parent=19 // pred_check
          %p403 = pneg %p142
        $region30: #{encoder_forward.11} parent=19 // pred_check_branch
          %405 = sbr.rel (%p403) target = $region32
        $region31: #{encoder_forward.11} parent=19 // pred_region
          %s406 = sadd.s32 %s30, %s32
          %s407 = sadd.s32 %s31, 2
          %p408 = scmp.lt.s32.totalorder %s29, 1
          %s409 = scalar_select %p408, %s29, 1
          %p410 = scmp.lt.s32.totalorder %s406, 5
          %s411 = scalar_select %p410, %s406, 5
          %p412 = scmp.lt.s32.totalorder %s407, 5
          %s413 = scalar_select %p412, %s407, 5
          %s414 = smul.addr %s411, 6
          %s415 = sadd.s32 %s413, %s414
          %s416 = smul.addr %s409, 36
          %s417 = sadd.s32 %s415, %s416
          %s418 = smul.addr %s417, 4
          %s419 = scalar_lea.vmem %s2, %s418
          %s420 = sadd.s32 %s30, %s32
          %s421 = sadd.s32 %s31, 2
        $region32: #{encoder_forward.11} parent=19 // pred_fallthru
          _
        // Predicated region
        $region33: #{encoder_forward.11} parent=19 // pred_check
          %p422 = pneg %p168
        $region34: #{encoder_forward.11} parent=19 // pred_check_branch
          %424 = sbr.rel (%p422) target = $region36
        $region35: #{encoder_forward.11} parent=19 // pred_region
          %p425 = scmp.lt.s32.totalorder %s32, 2
          %s426 = scalar_select %p425, %s32, 2
          %s427 = smul.addr %s426, 9
          %s428 = smul.addr %s427, 4
          %s429 = scalar_lea.vmem %s3, %s428
        $region36: #{encoder_forward.11} parent=19 // pred_fallthru
          _
        // Predicated region
        $region37: #{encoder_forward.11} parent=19 // pred_check
          %p430 = pneg %p219
        $region38: #{encoder_forward.11} parent=19 // pred_check_branch
          %432 = sbr.rel (%p430) target = $region40
        $region39: #{encoder_forward.11} parent=19 // pred_region
          %p433 = scmp.lt.s32.totalorder %s29, 1
          %s434 = scalar_select %p433, %s29, 1
          %p435 = scmp.lt.s32.totalorder %s30, 3
          %s436 = scalar_select %p435, %s30, 3
          %p437 = scmp.lt.s32.totalorder %s31, 3
          %s438 = scalar_select %p437, %s31, 3
          %s439 = smul.addr %s436, 4
          %s440 = sadd.s32 %s438, %s439
          %s441 = smul.addr %s434, 16
          %s442 = sadd.s32 %s440, %s441
          %s443 = smul.addr %s442, 2
          %s444 = scalar_lea.vmem %s5, %s443
        $region40: #{encoder_forward.11} parent=19 // pred_fallthru
          _
        // Predicated region
        $region41: #{encoder_forward.11} parent=19 // pred_check
          %p445 = pneg %p249
        $region42: #{encoder_forward.11} parent=19 // pred_check_branch
          %447 = sbr.rel (%p445) target = $region44
        $region43: #{encoder_forward.11} parent=19 // pred_region
          %p448 = scmp.lt.s32.totalorder %s29, 1
          %s449 = scalar_select %p448, %s29, 1
          %p450 = scmp.lt.s32.totalorder %s30, 3
          %s451 = scalar_select %p450, %s30, 3
          %p452 = scmp.lt.s32.totalorder %s31, 3
          %s453 = scalar_select %p452, %s31, 3
          %s454 = smul.addr %s451, 4
          %s455 = sadd.s32 %s453, %s454
          %s456 = smul.addr %s449, 16
          %s457 = sadd.s32 %s455, %s456
          %s458 = smul.addr %s457, 4
          %s459 = scalar_lea.vmem %s6, %s458
        $region44: #{encoder_forward.11} parent=19 // pred_fallthru
          _
        // Predicated region
        $region45: #{encoder_forward.11} parent=19 // pred_check
          %p460 = pneg %p279
        $region46: #{encoder_forward.11} parent=19 // pred_check_branch
          %462 = sbr.rel (%p460) target = $region48
        $region47: #{encoder_forward.11} parent=19 // pred_region
          %p463 = scmp.lt.s32.totalorder %s29, 1
          %s464 = scalar_select %p463, %s29, 1
          %p465 = scmp.lt.s32.totalorder %s30, 3
          %s466 = scalar_select %p465, %s30, 3
          %p467 = scmp.lt.s32.totalorder %s31, 3
          %s468 = scalar_select %p467, %s31, 3
          %s469 = smul.addr %s466, 4
          %s470 = sadd.s32 %s468, %s469
          %s471 = smul.addr %s464, 16
          %s472 = sadd.s32 %s470, %s471
          %s473 = smul.addr %s472, 4
          %s474 = scalar_lea.vmem %s7, %s473
        $region48: #{encoder_forward.11} parent=19 // pred_fallthru
          _
      $region20: #{encoder_forward.11} parent=5 // pred_fallthru
        _
      %p475 = scmp.le.s32.totalorder 1, %s22
      %p476 = scmp.lt.s32.totalorder %s22, 97
      %p477 = pnand %p475, %p476
      %p478 = pneg %p477
      // Predicated region
      $region49: #{encoder_forward.11} parent=5 // pred_check
        _
      $region50: #{encoder_forward.11} parent=5 // pred_check_branch
        %480 = sbr.rel (%p477) target = $region52
      $region51: #{encoder_forward.11} parent=5 // pred_region
        %s481 = ssub.s32 %s22, 1
        %s482 = sadd.s32 %s34, %s36
        %p483 = scmp.lt.s32.totalorder %s33, 1
        %s484 = scalar_select %p483, %s33, 1
        %p485 = scmp.lt.s32.totalorder %s482, 5
        %s486 = scalar_select %p485, %s482, 5
        %p487 = scmp.lt.s32.totalorder %s35, 5
        %s488 = scalar_select %p487, %s35, 5
        %s489 = smul.addr %s486, 6
        %s490 = sadd.s32 %s488, %s489
        %s491 = smul.addr %s484, 36
        %s492 = sadd.s32 %s490, %s491
        %s493 = smul.addr %s492, 4
        %s494 = scalar_lea.vmem %s0, %s493
        %p495 = pneg %p80
        %p496 = pneg %p77
        %s497 = sadd.s32 %s34, %s36
        %s498 = sadd.s32 %s35, 1
        %p499 = scmp.lt.s32.totalorder %s33, 1
        %s500 = scalar_select %p499, %s33, 1
        %p501 = scmp.lt.s32.totalorder %s497, 5
        %s502 = scalar_select %p501, %s497, 5
        %p503 = scmp.lt.s32.totalorder %s498, 5
        %s504 = scalar_select %p503, %s498, 5
        %s505 = smul.addr %s502, 6
        %s506 = sadd.s32 %s504, %s505
        %s507 = smul.addr %s500, 36
        %s508 = sadd.s32 %s506, %s507
        %s509 = smul.addr %s508, 4
        %s510 = scalar_lea.vmem %s1, %s509
        %p511 = pneg %p114
        %p512 = pneg %p111
        %s513 = sadd.s32 %s34, %s36
        %s514 = sadd.s32 %s35, 2
        %p515 = scmp.lt.s32.totalorder %s33, 1
        %s516 = scalar_select %p515, %s33, 1
        %p517 = scmp.lt.s32.totalorder %s513, 5
        %s518 = scalar_select %p517, %s513, 5
        %p519 = scmp.lt.s32.totalorder %s514, 5
        %s520 = scalar_select %p519, %s514, 5
        %s521 = smul.addr %s518, 6
        %s522 = sadd.s32 %s520, %s521
        %s523 = smul.addr %s516, 36
        %s524 = sadd.s32 %s522, %s523
        %s525 = smul.addr %s524, 4
        %s526 = scalar_lea.vmem %s2, %s525
        %p527 = pneg %p148
        %p528 = pneg %p145
        %p529 = scmp.lt.s32.totalorder %s36, 2
        %s530 = scalar_select %p529, %s36, 2
        %s531 = smul.addr %s530, 9
        %s532 = smul.addr %s531, 4
        %s533 = scalar_lea.vmem %s3, %s532
        %p534 = pneg %p174
        %p535 = pneg %p171
        %p536 = pneg %p195
        %p537 = pneg %p192
        %p538 = scmp.lt.s32.totalorder %s33, 1
        %s539 = scalar_select %p538, %s33, 1
        %p540 = scmp.lt.s32.totalorder %s34, 3
        %s541 = scalar_select %p540, %s34, 3
        %p542 = scmp.lt.s32.totalorder %s35, 3
        %s543 = scalar_select %p542, %s35, 3
        %s544 = smul.addr %s541, 4
        %s545 = sadd.s32 %s543, %s544
        %s546 = smul.addr %s539, 16
        %s547 = sadd.s32 %s545, %s546
        %s548 = smul.addr %s547, 2
        %s549 = scalar_lea.vmem %s5, %s548
        %p550 = pneg %p225
        %p551 = pneg %p222
        %p552 = scmp.lt.s32.totalorder %s33, 1
        %s553 = scalar_select %p552, %s33, 1
        %p554 = scmp.lt.s32.totalorder %s34, 3
        %s555 = scalar_select %p554, %s34, 3
        %p556 = scmp.lt.s32.totalorder %s35, 3
        %s557 = scalar_select %p556, %s35, 3
        %s558 = smul.addr %s555, 4
        %s559 = sadd.s32 %s557, %s558
        %s560 = smul.addr %s553, 16
        %s561 = sadd.s32 %s559, %s560
        %s562 = smul.addr %s561, 4
        %s563 = scalar_lea.vmem %s6, %s562
        %p564 = pneg %p255
        %p565 = pneg %p252
        %p566 = scmp.lt.s32.totalorder %s33, 1
        %s567 = scalar_select %p566, %s33, 1
        %p568 = scmp.lt.s32.totalorder %s34, 3
        %s569 = scalar_select %p568, %s34, 3
        %p570 = scmp.lt.s32.totalorder %s35, 3
        %s571 = scalar_select %p570, %s35, 3
        %s572 = smul.addr %s569, 4
        %s573 = sadd.s32 %s571, %s572
        %s574 = smul.addr %s567, 16
        %s575 = sadd.s32 %s573, %s574
        %s576 = smul.addr %s575, 4
        %s577 = scalar_lea.vmem %s7, %s576
        %p578 = pneg %p285
        %p579 = pneg %p282
        %p580 = pneg %p315
        %p581 = pneg %p312
        %s582 = sand.u32 %s302, 1
        %s583 = scalar_lea.sflag [#allocation4], %s582
        %s584 = sand.u32 %s302, 1
        %s585 = smul.addr %s584, 4
        %s586 = scalar_lea.vmem [#allocation3], %s585
        %p587 = pneg %p345
        %p588 = pneg %p342
        %s589 = sand.u32 %s332, 1
        %s590 = scalar_lea.sflag [#allocation6], %s589
        %s591 = sand.u32 %s332, 1
        %s592 = smul.addr %s591, 4
        %s593 = scalar_lea.vmem [#allocation5], %s592
        %s594 = sadd.s32 %s34, %s36
        %p595 = scmp.lt.s32.totalorder %s33, 1
        %s596 = scalar_select %p595, %s33, 1
        %p597 = scmp.lt.s32.totalorder %s594, 5
        %s598 = scalar_select %p597, %s594, 5
        %p599 = scmp.lt.s32.totalorder %s35, 5
        %s600 = scalar_select %p599, %s35, 5
        %s601 = smul.addr %s598, 6
        %s602 = sadd.s32 %s600, %s601
        %s603 = smul.addr %s596, 36
        %s604 = sadd.s32 %s602, %s603
        %s605 = smul.addr %s604, 4
        %s606 = scalar_lea.vmem %s0, %s605
        %s607 = sadd.s32 %s34, %s36
        %s608 = sadd.s32 %s34, %s36
        %s609 = sadd.s32 %s35, 1
        %p610 = scmp.lt.s32.totalorder %s33, 1
        %s611 = scalar_select %p610, %s33, 1
        %p612 = scmp.lt.s32.totalorder %s608, 5
        %s613 = scalar_select %p612, %s608, 5
        %p614 = scmp.lt.s32.totalorder %s609, 5
        %s615 = scalar_select %p614, %s609, 5
        %s616 = smul.addr %s613, 6
        %s617 = sadd.s32 %s615, %s616
        %s618 = smul.addr %s611, 36
        %s619 = sadd.s32 %s617, %s618
        %s620 = smul.addr %s619, 4
        %s621 = scalar_lea.vmem %s1, %s620
        %s622 = sadd.s32 %s34, %s36
        %s623 = sadd.s32 %s35, 1
        %s624 = sadd.s32 %s34, %s36
        %s625 = sadd.s32 %s35, 2
        %p626 = scmp.lt.s32.totalorder %s33, 1
        %s627 = scalar_select %p626, %s33, 1
        %p628 = scmp.lt.s32.totalorder %s624, 5
        %s629 = scalar_select %p628, %s624, 5
        %p630 = scmp.lt.s32.totalorder %s625, 5
        %s631 = scalar_select %p630, %s625, 5
        %s632 = smul.addr %s629, 6
        %s633 = sadd.s32 %s631, %s632
        %s634 = smul.addr %s627, 36
        %s635 = sadd.s32 %s633, %s634
        %s636 = smul.addr %s635, 4
        %s637 = scalar_lea.vmem %s2, %s636
        %s638 = sadd.s32 %s34, %s36
        %s639 = sadd.s32 %s35, 2
        %p640 = scmp.lt.s32.totalorder %s36, 2
        %s641 = scalar_select %p640, %s36, 2
        %s642 = smul.addr %s641, 9
        %s643 = smul.addr %s642, 4
        %s644 = scalar_lea.vmem %s3, %s643
        %p645 = scmp.lt.s32.totalorder %s33, 1
        %s646 = scalar_select %p645, %s33, 1
        %p647 = scmp.lt.s32.totalorder %s34, 3
        %s648 = scalar_select %p647, %s34, 3
        %p649 = scmp.lt.s32.totalorder %s35, 3
        %s650 = scalar_select %p649, %s35, 3
        %s651 = smul.addr %s648, 4
        %s652 = sadd.s32 %s650, %s651
        %s653 = smul.addr %s646, 16
        %s654 = sadd.s32 %s652, %s653
        %s655 = smul.addr %s654, 2
        %s656 = scalar_lea.vmem %s5, %s655
        %p657 = scmp.lt.s32.totalorder %s33, 1
        %s658 = scalar_select %p657, %s33, 1
        %p659 = scmp.lt.s32.totalorder %s34, 3
        %s660 = scalar_select %p659, %s34, 3
        %p661 = scmp.lt.s32.totalorder %s35, 3
        %s662 = scalar_select %p661, %s35, 3
        %s663 = smul.addr %s660, 4
        %s664 = sadd.s32 %s662, %s663
        %s665 = smul.addr %s658, 16
        %s666 = sadd.s32 %s664, %s665
        %s667 = smul.addr %s666, 4
        %s668 = scalar_lea.vmem %s6, %s667
        %p669 = scmp.lt.s32.totalorder %s33, 1
        %s670 = scalar_select %p669, %s33, 1
        %p671 = scmp.lt.s32.totalorder %s34, 3
        %s672 = scalar_select %p671, %s34, 3
        %p673 = scmp.lt.s32.totalorder %s35, 3
        %s674 = scalar_select %p673, %s35, 3
        %s675 = smul.addr %s672, 4
        %s676 = sadd.s32 %s674, %s675
        %s677 = smul.addr %s670, 16
        %s678 = sadd.s32 %s676, %s677
        %s679 = smul.addr %s678, 4
        %s680 = scalar_lea.vmem %s7, %s679
        %p682 = scmp.eq.s32.totalorder %s36, 0
        // Predicated region
        $region53: #{encoder_forward.11} parent=51 // pred_check
          %p683 = pneg %p682
        $region54: #{encoder_forward.11} parent=51 // pred_check_branch
          %685 = sbr.rel (%p683) target = $region56
        $region55: #{encoder_forward.11} parent=51 // pred_region
          %vm686 = vcmask 125952
          %687 = vst.msk [vmem:[#allocation2] sm:$0xf] %vm686, 0.0
        $region56: #{encoder_forward.11} parent=51 // pred_fallthru
          _
        %v688 = vld [vmem:[%s644] sm:$0xf]
        %v689 = vld [vmem:[%s644 + $0x4] sm:$0xf]
        %v690 = vld [vmem:[%s644 + $0x8] sm:$0xf]
        %v691 = vld [vmem:[%s644 + $0xc] sm:$0xf]
        %v692 = vld [vmem:[%s644 + $0x10] sm:$0xf]
        %v693 = vld [vmem:[%s644 + $0x14] sm:$0xf]
        %v694 = vld [vmem:[%s644 + $0x18] sm:$0xf]
        %v695 = vld [vmem:[%s644 + $0x1c] sm:$0xf]
        %v696 = vld [vmem:[%s644 + $0x20] sm:$0xf]
        %v697 = vld [vmem:[%s606] sm:$0x7]
        %v698 = vld [vmem:[%s621] sm:$0x7]
        %v699 = vld [vmem:[%s637] sm:$0x7]
        %v701 = vunpack.c.l.b16 %v697
        %v702 = vpack.c.b16 %v701, %v701
        %v704 = vshrl.u32 %v702, 16
        %v706 = vshll.u32 %v702, 16
        %v708 = vrot.slane %v706, 1
        %v709 = vor.u32 %v704, %v708
        %vm710 = vcmask 64512
        %v712 = vsel %vm710, %v709, 0
        %vm714 = vcmask 1043456
        %v716 = vsel %vm714, %v689, 0
        %718 = vmatpush.bf16.msra.mxu0 0
        %719 = vmatpush.bf16.msra.mxu0 0
        %720 = vmatpush.bf16.msra.mxu0 0
        %721 = vmatpush.bf16.msra.mxu0 0
        %722 = vmatpush.bf16.msra.mxu0 0
        %723 = vmatpush.bf16.msra.mxu0 0
        %724 = vmatpush.bf16.msra.mxu0 0
        %725 = vmatpush.bf16.msra.mxu0 %v716
        %726 = vmatmul.bf16.gmra.mxu0 %v712
        %v727 = vpop.f32.mrf.mxu0
        %v728 = vadd.f32 0.0, %v727
        %v729 = vpop.f32.mrf.mxu0
        %730 = vdwg.mxu0
        %v732 = vsel %vm710, %v697, 0
        %v735 = vsel %vm714, %v688, 0
        %737 = vmatpush.bf16.msra.mxu0 0
        %738 = vmatpush.bf16.msra.mxu0 0
        %739 = vmatpush.bf16.msra.mxu0 0
        %740 = vmatpush.bf16.msra.mxu0 0
        %741 = vmatpush.bf16.msra.mxu0 0
        %742 = vmatpush.bf16.msra.mxu0 0
        %743 = vmatpush.bf16.msra.mxu0 0
        %744 = vmatpush.bf16.msra.mxu0 %v735
        %745 = vmatmul.bf16.gmra.mxu0 %v732
        %v746 = vpop.f32.mrf.mxu0
        %v747 = vadd.f32 %v728, %v746
        %v748 = vpop.f32.mrf.mxu0
        %749 = vdwg.mxu0
        %v750 = vrot.slane %v702, 1
        %v752 = vsel %vm710, %v750, 0
        %v755 = vsel %vm714, %v690, 0
        %757 = vmatpush.bf16.msra.mxu0 0
        %758 = vmatpush.bf16.msra.mxu0 0
        %759 = vmatpush.bf16.msra.mxu0 0
        %760 = vmatpush.bf16.msra.mxu0 0
        %761 = vmatpush.bf16.msra.mxu0 0
        %762 = vmatpush.bf16.msra.mxu0 0
        %763 = vmatpush.bf16.msra.mxu0 0
        %764 = vmatpush.bf16.msra.mxu0 %v755
        %765 = vmatmul.bf16.gmra.mxu0 %v752
        %v766 = vpop.f32.mrf.mxu0
        %v767 = vadd.f32 0.0, %v766
        %v768 = vpop.f32.mrf.mxu0
        %769 = vdwg.mxu0
        %v770 = vadd.f32 %v747, %v767
        %v772 = vsel %vm710, %v698, 0
        %v775 = vsel %vm714, %v691, 0
        %777 = vmatpush.bf16.msra.mxu0 0
        %778 = vmatpush.bf16.msra.mxu0 0
        %779 = vmatpush.bf16.msra.mxu0 0
        %780 = vmatpush.bf16.msra.mxu0 0
        %781 = vmatpush.bf16.msra.mxu0 0
        %782 = vmatpush.bf16.msra.mxu0 0
        %783 = vmatpush.bf16.msra.mxu0 0
        %784 = vmatpush.bf16.msra.mxu0 %v775
        %785 = vmatmul.bf16.gmra.mxu0 %v772
        %v786 = vpop.f32.mrf.mxu0
        %v787 = vadd.f32 0.0, %v786
        %v788 = vpop.f32.mrf.mxu0
        %789 = vdwg.mxu0
        %v790 = vadd.f32 %v770, %v787
        %v792 = vunpack.c.l.b16 %v698
        %v793 = vpack.c.b16 %v792, %v792
        %v795 = vshrl.u32 %v793, 16
        %v797 = vshll.u32 %v793, 16
        %v799 = vrot.slane %v797, 1
        %v800 = vor.u32 %v795, %v799
        %v802 = vsel %vm710, %v800, 0
        %v805 = vsel %vm714, %v692, 0
        %807 = vmatpush.bf16.msra.mxu0 0
        %808 = vmatpush.bf16.msra.mxu0 0
        %809 = vmatpush.bf16.msra.mxu0 0
        %810 = vmatpush.bf16.msra.mxu0 0
        %811 = vmatpush.bf16.msra.mxu0 0
        %812 = vmatpush.bf16.msra.mxu0 0
        %813 = vmatpush.bf16.msra.mxu0 0
        %814 = vmatpush.bf16.msra.mxu0 %v805
        %815 = vmatmul.bf16.gmra.mxu0 %v802
        %v816 = vpop.f32.mrf.mxu0
        %v817 = vadd.f32 0.0, %v816
        %v818 = vpop.f32.mrf.mxu0
        %819 = vdwg.mxu0
        %v820 = vadd.f32 %v790, %v817
        %v821 = vrot.slane %v793, 1
        %v823 = vsel %vm710, %v821, 0
        %v826 = vsel %vm714, %v693, 0
        %828 = vmatpush.bf16.msra.mxu0 0
        %829 = vmatpush.bf16.msra.mxu0 0
        %830 = vmatpush.bf16.msra.mxu0 0
        %831 = vmatpush.bf16.msra.mxu0 0
        %832 = vmatpush.bf16.msra.mxu0 0
        %833 = vmatpush.bf16.msra.mxu0 0
        %834 = vmatpush.bf16.msra.mxu0 0
        %835 = vmatpush.bf16.msra.mxu0 %v826
        %836 = vmatmul.bf16.gmra.mxu0 %v823
        %v837 = vpop.f32.mrf.mxu0
        %v838 = vadd.f32 0.0, %v837
        %v839 = vpop.f32.mrf.mxu0
        %840 = vdwg.mxu0
        %v841 = vadd.f32 %v820, %v838
        %v843 = vsel %vm710, %v699, 0
        %v846 = vsel %vm714, %v694, 0
        %848 = vmatpush.bf16.msra.mxu0 0
        %849 = vmatpush.bf16.msra.mxu0 0
        %850 = vmatpush.bf16.msra.mxu0 0
        %851 = vmatpush.bf16.msra.mxu0 0
        %852 = vmatpush.bf16.msra.mxu0 0
        %853 = vmatpush.bf16.msra.mxu0 0
        %854 = vmatpush.bf16.msra.mxu0 0
        %855 = vmatpush.bf16.msra.mxu0 %v846
        %856 = vmatmul.bf16.gmra.mxu0 %v843
        %v857 = vpop.f32.mrf.mxu0
        %v858 = vadd.f32 0.0, %v857
        %v859 = vpop.f32.mrf.mxu0
        %860 = vdwg.mxu0
        %v861 = vadd.f32 %v841, %v858
        %v863 = vunpack.c.l.b16 %v699
        %v864 = vpack.c.b16 %v863, %v863
        %v866 = vshrl.u32 %v864, 16
        %v868 = vshll.u32 %v864, 16
        %v870 = vrot.slane %v868, 1
        %v871 = vor.u32 %v866, %v870
        %v873 = vsel %vm710, %v871, 0
        %v876 = vsel %vm714, %v695, 0
        %878 = vmatpush.bf16.msra.mxu0 0
        %879 = vmatpush.bf16.msra.mxu0 0
        %880 = vmatpush.bf16.msra.mxu0 0
        %881 = vmatpush.bf16.msra.mxu0 0
        %882 = vmatpush.bf16.msra.mxu0 0
        %883 = vmatpush.bf16.msra.mxu0 0
        %884 = vmatpush.bf16.msra.mxu0 0
        %885 = vmatpush.bf16.msra.mxu0 %v876
        %886 = vmatmul.bf16.gmra.mxu0 %v873
        %v887 = vpop.f32.mrf.mxu0
        %v888 = vadd.f32 0.0, %v887
        %v889 = vpop.f32.mrf.mxu0
        %890 = vdwg.mxu0
        %v891 = vadd.f32 %v861, %v888
        %v892 = vrot.slane %v864, 1
        %v894 = vsel %vm710, %v892, 0
        %v897 = vsel %vm714, %v696, 0
        %899 = vmatpush.bf16.msra.mxu0 0
        %900 = vmatpush.bf16.msra.mxu0 0
        %901 = vmatpush.bf16.msra.mxu0 0
        %902 = vmatpush.bf16.msra.mxu0 0
        %903 = vmatpush.bf16.msra.mxu0 0
        %904 = vmatpush.bf16.msra.mxu0 0
        %905 = vmatpush.bf16.msra.mxu0 0
        %906 = vmatpush.bf16.msra.mxu0 %v897
        %907 = vmatmul.bf16.gmra.mxu0 %v894
        %v908 = vpop.f32.mrf.mxu0
        %v909 = vadd.f32 0.0, %v908
        %v910 = vpop.f32.mrf.mxu0
        %911 = vdwg.mxu0
        %v912 = vadd.f32 %v891, %v909
        %v913 = vld [vmem:[#allocation2] sm:$0xf]
        %v914 = vadd.f32 %v913, %v912
        %vm915 = vcmask 125952
        %916 = vst.msk [vmem:[#allocation2] sm:$0xf] %vm915, %v914
        %p917 = scmp.eq.s32.totalorder %s36, 2
        // Predicated region
        $region57: #{encoder_forward.11} parent=51 // pred_check
          %p918 = pneg %p917
        $region58: #{encoder_forward.11} parent=51 // pred_check_branch
          %920 = sbr.rel (%p918) target = $region60
        $region59: #{encoder_forward.11} parent=51 // pred_region
          %v921 = vld [vmem:[#allocation2] sm:$0xf]
          %v922 = vld [vmem:[%s4] sm:$0x1]
          %v924 = vperm.slane %v922, 0
          %v926 = vadd.f32 %v921, %v924
          %v927 = vld [vmem:[%s656] sm:$0x3]
          %v928 = vunpack.c.l.bf16 %v927
          %v929 = vadd.f32 %v926, %v928
          %930 = vst.msk [vmem:[%s586] sm:$0xf] %vm915, %v929
          %v931 = vld [vmem:[%s668] sm:$0xf]
          %v932 = vld [vmem:[%s680] sm:$0xf]
          %v933 = vmul.f32 %v929, 1.442695
          %v934 = vpow.pop %v933
          %v935 = vmul.f32 %v932, %v934
          %v936 = vadd.f32 %v931, %v935
          %937 = vst.msk [vmem:[%s593] sm:$0xf] %vm915, %v936
        $region60: #{encoder_forward.11} parent=51 // pred_fallthru
          _
        %s938 = sand.u32 %s302, 1
        %s939 = scalar_lea.sflag [#allocation4], %s938
        %s940 = sand.u32 %s302, 1
        %s941 = smul.addr %s940, 4
        %s942 = scalar_lea.vmem [#allocation3], %s941
        %s943 = sand.u32 %s332, 1
        %s944 = scalar_lea.sflag [#allocation6], %s943
        %s945 = sand.u32 %s332, 1
        %s946 = smul.addr %s945, 4
        %s947 = scalar_lea.vmem [#allocation5], %s946
        // Predicated region
        $region61: #{encoder_forward.11} parent=51 // pred_check
          %p948 = pneg %p312
        $region62: #{encoder_forward.11} parent=51 // pred_check_branch
          %950 = sbr.rel (%p948) target = $region64
        $region63: #{encoder_forward.11} parent=51 // pred_region
          %952 = vsyncadd %s939, 0
          %s953 = smul.addr %s34, 4
          %s954 = sadd.s32 %s35, %s953
          %s955 = smul.addr %s33, 16
          %s956 = sadd.s32 %s954, %s955
          %s957 = smul.addr %s956, 4
          %s958 = scalar_lea.hbm %s8, %s957
          %s960 = sshll.u32 %s942, 4
          %s961 = int_to_ptr.vmem [resolvable:$true] %s960
          %s962 = sshll.u32 %s958, 4
          %s963 = int_to_ptr.hbm [resolvable:$true] %s962
          %965 = dma.vmem_to_hbm [thread:$0]  %s961, 64, %s963, %s939
        $region64: #{encoder_forward.11} parent=51 // pred_fallthru
          _
        // Predicated region
        $region65: #{encoder_forward.11} parent=51 // pred_check
          %p966 = pneg %p342
        $region66: #{encoder_forward.11} parent=51 // pred_check_branch
          %968 = sbr.rel (%p966) target = $region68
        $region67: #{encoder_forward.11} parent=51 // pred_region
          %970 = vsyncadd %s944, 0
          %s971 = smul.addr %s34, 4
          %s972 = sadd.s32 %s35, %s971
          %s973 = smul.addr %s33, 16
          %s974 = sadd.s32 %s972, %s973
          %s975 = smul.addr %s974, 4
          %s976 = scalar_lea.hbm %s9, %s975
          %s978 = sshll.u32 %s947, 4
          %s979 = int_to_ptr.vmem [resolvable:$true] %s978
          %s980 = sshll.u32 %s976, 4
          %s981 = int_to_ptr.hbm [resolvable:$true] %s980
          %983 = dma.vmem_to_hbm [thread:$0]  %s979, 64, %s981, %s944
        $region68: #{encoder_forward.11} parent=51 // pred_fallthru
          _
      $region52: #{encoder_forward.11} parent=5 // pred_fallthru
        _
      %p984 = scmp.le.s32.totalorder 2, %s22
      // Predicated region
      $region69: #{encoder_forward.11} parent=5 // pred_check
        %p985 = pneg %p984
      $region70: #{encoder_forward.11} parent=5 // pred_check_branch
        %987 = sbr.rel (%p985) target = $region72
      $region71: #{encoder_forward.11} parent=5 // pred_region
        %s988 = ssub.s32 %s22, 2
        // Predicated region
        $region73: #{encoder_forward.11} parent=71 // pred_check
          %p989 = pneg %p318
        $region74: #{encoder_forward.11} parent=71 // pred_check_branch
          %991 = sbr.rel (%p989) target = $region76
        $region75: #{encoder_forward.11} parent=71 // pred_region
          %s992 = sand.u32 %s303, 1
          %s993 = scalar_lea.sflag [#allocation4], %s992
          %s994 = sand.u32 %s303, 1
          %s995 = smul.addr %s994, 4
          %s996 = scalar_lea.vmem [#allocation3], %s995
          %998 = dma.done %s993, 64
        $region76: #{encoder_forward.11} parent=71 // pred_fallthru
          _
        // Predicated region
        $region77: #{encoder_forward.11} parent=71 // pred_check
          %p999 = pneg %p348
        $region78: #{encoder_forward.11} parent=71 // pred_check_branch
          %1001 = sbr.rel (%p999) target = $region80
        $region79: #{encoder_forward.11} parent=71 // pred_region
          %s1002 = sand.u32 %s333, 1
          %s1003 = scalar_lea.sflag [#allocation6], %s1002
          %s1004 = sand.u32 %s333, 1
          %s1005 = smul.addr %s1004, 4
          %s1006 = scalar_lea.vmem [#allocation5], %s1005
          %1008 = dma.done %s1003, 64
        $region80: #{encoder_forward.11} parent=71 // pred_fallthru
          _
      $region72: #{encoder_forward.11} parent=5 // pred_fallthru
        _
    $region6: #{encoder_forward.11} parent=1 // loop_footer
      %s26 = sadd.s32 1, %s22
    $region7: #{encoder_forward.11} parent=1 // loop_footer_branch
      %21 = sbr.rel target = $region3
    $region8: #{encoder_forward.11} parent=1 // loop_exit
      _
    %1009 = vsyncpa [#allocation4], 1
    %s1010 = scalar_lea.sflag [#allocation4], 1
    %1011 = vsyncpa %s1010, 1
    %1012 = vsyncpa [#allocation6], 1
    %s1013 = scalar_lea.sflag [#allocation6], 1
    %1014 = vsyncpa %s1013, 1

</llo_original>
